<compile_context>
chip_gen: v6e
topology: v6e:2x2x1
jax: 0.10.0
libtpu: 0.0.40
codegen_flags: <defaults>
</compile_context>

<pallas_src>
import functools

import jax
import jax.numpy as jnp
from jax.experimental import pallas as pl
from jax.experimental.pallas import tpu as pltpu

BN_EPS = 1e-5
K_SIZE = 5
STRIDE = 2
LANES = 128
C_PAD = 128          # conv output channels padded to one full lane tile


def _round_up(x, m):
    return ((x + m - 1) // m) * m


@functools.lru_cache(maxsize=1)
def _vmem_limit_bytes():
    """Per-generation VMEM budget: ~75% of physical VMEM (96 MiB on v5e/v6e's
    128 MiB, 48 MiB on v7x's 64 MiB).  Falls back to 48 MiB if the query is
    unavailable."""
    try:
        cap = int(pltpu.get_tpu_info().vmem_capacity_bytes)
    except Exception:  # non-TPU backend / older jax
        cap = 64 * 1024 * 1024
    return max(48 * 1024 * 1024, cap * 3 // 4)


# ----------------------------- Pallas kernels -----------------------------

def _accumulate_stats(y, i, tile_p, p_real, sum_ref, sq_ref):
    """Accumulate per-channel sum / sum-of-squares, masking rows past the real
    row count (partial last tile: the partially-DMA'd rows are garbage and may
    even decode as NaN, so use a select rather than a multiply)."""
    rows = jax.lax.broadcasted_iota(jnp.int32, (tile_p, 1), 0) + i * tile_p
    y_valid = jnp.where(rows < p_real, y, 0.0)
    sum_ref[...] += jnp.sum(y_valid, axis=0, keepdims=True)
    sq_ref[...] += jnp.sum(y_valid * y_valid, axis=0, keepdims=True)


def _bn_scale_shift(sum_ref, sq_ref, gamma_ref, beta_ref, inv_p):
    """Training-mode BN: per-channel scale/shift from global batch statistics."""
    # TODO(synk): one-pass E[y^2]-E[y]^2 in f32 can cancel for |mean| >> std;
    # switch to a shifted / Welford update if that ever becomes an issue.
    mean = sum_ref[...] * inv_p
    var = jnp.maximum(sq_ref[...] * inv_p - mean * mean, 0.0)   # biased variance
    inv_std = jax.lax.rsqrt(var + BN_EPS)
    scale = gamma_ref[...] * inv_std                            # [1, C_PAD]
    shift = beta_ref[...] - mean * scale                        # [1, C_PAD]
    return scale, shift


def conv_bn_kernel(p_ref, w_ref, gamma_ref, beta_ref, o_ref, sum_ref, sq_ref,
                   *, inv_p, tile_p, p_real):
    """One P-tile of y = patches @ W (bf16 MXU operands, f32 accumulate) with
    training-mode BatchNorm fused across the whole grid.

    - Conv bias omitted: training-mode BN's batch-mean subtraction cancels it
      exactly (eval-mode BN with running stats would need it back).
    - The [P_pad, 128] bf16 output stays VMEM-resident (constant out index map)
      and is normalized with a single lane-dense scale/shift pass after the
      last tile, so BN statistics are *global*, not per-tile.
    """
    i = pl.program_id(0)

    @pl.when(i == 0)
    def _init():
        sum_ref[...] = jnp.zeros_like(sum_ref)
        sq_ref[...] = jnp.zeros_like(sq_ref)

    # MXU: bf16 operands, f32 accumulation.
    y = jnp.dot(p_ref[...], w_ref[...], preferred_element_type=jnp.float32)
    _accumulate_stats(y, i, tile_p, p_real, sum_ref, sq_ref)

    row0 = pl.multiple_of(i * tile_p, 16)
    o_ref[pl.ds(row0, tile_p), :] = y.astype(o_ref.dtype)

    @pl.when(i == pl.num_programs(0) - 1)
    def _finalize():
        scale, shift = _bn_scale_shift(sum_ref, sq_ref, gamma_ref, beta_ref, inv_p)
        o_ref[...] = (o_ref[...].astype(jnp.float32) * scale + shift
                      ).astype(o_ref.dtype)


def conv_bn_head_kernel(p_ref, w_ref, gamma_ref, beta_ref, wl_ref, bl_ref,
                        head_ref, y_ref, sum_ref, sq_ref,
                        *, inv_p, tile_p, p_real):
    """conv3 + bn3 + flatten + linear fused (valid when conv3's spatial output
    is 1x1, so the NHWC flatten of the bn3 activation is exactly [N, C]).
    The pre-BN activation is staged in VMEM scratch; only the [N, O] head
    output goes back to HBM."""
    i = pl.program_id(0)

    @pl.when(i == 0)
    def _init():
        sum_ref[...] = jnp.zeros_like(sum_ref)
        sq_ref[...] = jnp.zeros_like(sq_ref)

    y = jnp.dot(p_ref[...], w_ref[...], preferred_element_type=jnp.float32)
    _accumulate_stats(y, i, tile_p, p_real, sum_ref, sq_ref)

    row0 = pl.multiple_of(i * tile_p, 16)
    y_ref[pl.ds(row0, tile_p), :] = y.astype(y_ref.dtype)

    @pl.when(i == pl.num_programs(0) - 1)
    def _finalize():
        scale, shift = _bn_scale_shift(sum_ref, sq_ref, gamma_ref, beta_ref, inv_p)
        a = y_ref[...].astype(jnp.float32) * scale + shift   # bn3 output (f32)
        head_ref[...] = (
            jnp.dot(a.astype(jnp.bfloat16), wl_ref[...],
                    preferred_element_type=jnp.float32)
            + bl_ref[...]
        )


def linear_kernel(x_ref, w_ref, b_ref, o_ref):
    # x: [N, F] bf16, w: [F, O_pad] bf16, b: [1, O_pad] f32 -> o: [N, O_pad] f32
    o_ref[...] = (
        jnp.dot(x_ref[...], w_ref[...], preferred_element_type=jnp.float32)
        + b_ref[...]
    )


# ----------------------------- pallas_call wrappers ------------------------

def _pad_bn_params(w, gamma, beta):
    """Zero-pad conv weight columns / gamma / beta to 128 lanes.  Padded lanes
    produce y == 0, scale == 0, shift == 0, i.e. normalize to exactly 0."""
    c = w.shape[1]
    assert c <= C_PAD
    w_p = jnp.pad(w, ((0, 0), (0, C_PAD - c)))
    g_p = jnp.pad(gamma, ((0, 0), (0, C_PAD - c)))
    b_p = jnp.pad(beta, ((0, 0), (0, C_PAD - c)))
    return w_p, g_p, b_p


# NOTE: K (= k*k*C_in -> 75/400/800) is deliberately left un-padded to a lane
# multiple: the patch matrix is the dominant HBM stream and padding it would
# inflate it by up to ~70% (conv1), costing more than the masked lane loads it
# would save.  Only the small resident [K, 128] weight sees the raggedness.

def conv_bn_pallas(patches, w, gamma, beta, *, tile_p=1024):
    """patches: [P, K] bf16, w: [K, C] bf16, gamma/beta: [1, C] f32
    -> training-mode batch-norm output [P, C] bf16."""
    P, K = patches.shape
    C = w.shape[1]
    tp = _round_up(min(tile_p, P), 16)          # bf16 sublane-pack aligned
    num_tiles = -(-P // tp)
    P_pad = num_tiles * tp

    w_p, g_p, b_p = _pad_bn_params(w, gamma, beta)
    kernel = functools.partial(conv_bn_kernel, inv_p=1.0 / P, tile_p=tp, p_real=P)

    out = pl.pallas_call(
        kernel,
        out_shape=jax.ShapeDtypeStruct((P_pad, C_PAD), jnp.bfloat16),
        grid_spec=pltpu.PrefetchScalarGridSpec(
            num_scalar_prefetch=0,
            grid=(num_tiles,),
            in_specs=[
                pl.BlockSpec((tp, K), lambda i: (i, 0)),       # streamed patches
                pl.BlockSpec((K, C_PAD), lambda i: (0, 0)),    # weights resident
                pl.BlockSpec((1, C_PAD), lambda i: (0, 0)),    # gamma
                pl.BlockSpec((1, C_PAD), lambda i: (0, 0)),    # beta
            ],
            out_specs=pl.BlockSpec((P_pad, C_PAD), lambda i: (0, 0)),  # resident
            scratch_shapes=[pltpu.VMEM((1, C_PAD), jnp.float32),       # sum
                            pltpu.VMEM((1, C_PAD), jnp.float32)],      # sum sq
        ),
        compiler_params=pltpu.CompilerParams(
            dimension_semantics=("arbitrary",),
            vmem_limit_bytes=_vmem_limit_bytes(),
        ),
    )(patches, w_p, g_p, b_p)
    return out[:P, :C]


def conv_bn_head_pallas(patches, w, gamma, beta, wl, bl, *, tile_p=1024):
    """Fused conv3 + bn3 + flatten + linear for the 1x1-spatial head case.
    patches: [P=N, K] bf16, w: [K, C] bf16, gamma/beta: [1, C] f32,
    wl: [C, O] bf16, bl: [1, O] f32  ->  [N, O] f32."""
    P, K = patches.shape
    C = w.shape[1]
    O = wl.shape[1]
    O_pad = _round_up(O, LANES)                 # lane-dense head output
    tp = _round_up(min(tile_p, P), 16)
    num_tiles = -(-P // tp)
    P_pad = num_tiles * tp

    w_p, g_p, b_p = _pad_bn_params(w, gamma, beta)
    wl_p = jnp.pad(wl, ((0, C_PAD - C), (0, O_pad - O)))
    bl_p = jnp.pad(bl, ((0, 0), (0, O_pad - O)))

    kernel = functools.partial(conv_bn_head_kernel, inv_p=1.0 / P, tile_p=tp,
                               p_real=P)

    head = pl.pallas_call(
        kernel,
        out_shape=jax.ShapeDtypeStruct((P_pad, O_pad), jnp.float32),
        grid_spec=pltpu.PrefetchScalarGridSpec(
            num_scalar_prefetch=0,
            grid=(num_tiles,),
            in_specs=[
                pl.BlockSpec((tp, K), lambda i: (i, 0)),
                pl.BlockSpec((K, C_PAD), lambda i: (0, 0)),
                pl.BlockSpec((1, C_PAD), lambda i: (0, 0)),
                pl.BlockSpec((1, C_PAD), lambda i: (0, 0)),
                pl.BlockSpec((C_PAD, O_pad), lambda i: (0, 0)),  # linear weight
                pl.BlockSpec((1, O_pad), lambda i: (0, 0)),      # linear bias
            ],
            out_specs=pl.BlockSpec((P_pad, O_pad), lambda i: (0, 0)),
            scratch_shapes=[pltpu.VMEM((P_pad, C_PAD), jnp.bfloat16),  # pre-BN y
                            pltpu.VMEM((1, C_PAD), jnp.float32),       # sum
                            pltpu.VMEM((1, C_PAD), jnp.float32)],      # sum sq
        ),
        compiler_params=pltpu.CompilerParams(
            dimension_semantics=("arbitrary",),
            vmem_limit_bytes=_vmem_limit_bytes(),
        ),
    )(patches, w_p, g_p, b_p, wl_p, bl_p)
    return head[:P, :O]


def linear_pallas(x, w, b):
    """Fallback head (conv3 spatial > 1x1).  x: [N, F] bf16, w: [F, O] bf16,
    b: [1, O] f32 -> [N, O] f32."""
    N = x.shape[0]
    O = w.shape[1]
    O_pad = _round_up(O, LANES)                 # lane-dense output store
    if O_pad != O:
        w = jnp.pad(w, ((0, 0), (0, O_pad - O)))
        b = jnp.pad(b, ((0, 0), (0, O_pad - O)))
    out = pl.pallas_call(
        linear_kernel,
        out_shape=jax.ShapeDtypeStruct((N, O_pad), jnp.float32),
        in_specs=[pl.BlockSpec(memory_space=pltpu.MemorySpace.VMEM)] * 3,
        out_specs=pl.BlockSpec(memory_space=pltpu.MemorySpace.VMEM),
        compiler_params=pltpu.CompilerParams(vmem_limit_bytes=_vmem_limit_bytes()),
    )(x, w, b)
    return out[:, :O]


# ----------------------------- JAX glue -----------------------------------

def conv_out_size(size, kernel_size=K_SIZE, stride=STRIDE):
    return (size - (kernel_size - 1) - 1) // stride + 1


def im2col(x_nhwc, k=K_SIZE, s=STRIDE):
    """Extract conv patches (XLA ops inside the same jit).
    Returns ([N*OH*OW, k*k*C], OH, OW); columns ordered (kh, kw, c_in)."""
    N, H, W, C = x_nhwc.shape
    OH = conv_out_size(H, k, s)
    OW = conv_out_size(W, k, s)
    cols = []
    for i in range(k):
        for j in range(k):
            cols.append(x_nhwc[:, i:i + s * OH:s, j:j + s * OW:s, :])  # [N,OH,OW,C]
    p = jnp.stack(cols, axis=3)                 # [N, OH, OW, k*k, C]
    p = p.reshape(N * OH * OW, k * k * C)
    return p, OH, OW


def conv_weight_to_matrix(w_oikk):
    """PyTorch conv weight [O, C_in, kh, kw] -> matmul weight [kh*kw*C_in, O]."""
    O, C, kh, kw = w_oikk.shape
    return jnp.transpose(w_oikk, (2, 3, 1, 0)).reshape(kh * kw * C, O)


def linear_weight_to_nhwc(w_out_in, c, h, w):
    """PyTorch Linear weight [O, C*H*W] (NCHW flatten order) -> [H*W*C, O]
    with rows reordered to NHWC flatten order, so the forward pass needs no
    NHWC->NCHW transpose before the linear layer."""
    O = w_out_in.shape[0]
    wt = w_out_in.reshape(O, c, h, w)
    wt = jnp.transpose(wt, (2, 3, 1, 0))        # [H, W, C, O]
    return wt.reshape(h * w * c, O)


def dqn_forward(params, x_nchw, *, tile_p=1024):
    N = x_nchw.shape[0]
    # NCHW -> NHWC; bf16 feeds the MXU and halves the im2col HBM traffic.
    x = jnp.transpose(x_nchw, (0, 2, 3, 1)).astype(jnp.bfloat16)

    # conv1 + bn1  (kernel output is already bf16)
    p, oh, ow = im2col(x)
    y = conv_bn_pallas(p, params["w1"], params["g1"], params["be1"], tile_p=tile_p)
    x = y.reshape(N, oh, ow, -1)

    # conv2 + bn2
    p, oh, ow = im2col(x)
    y = conv_bn_pallas(p, params["w2"], params["g2"], params["be2"], tile_p=tile_p)
    x = y.reshape(N, oh, ow, -1)

    # conv3 + bn3 (+ fused linear head when the spatial output collapses to 1x1)
    p, oh, ow = im2col(x)
    if oh == 1 and ow == 1:
        return conv_bn_head_pallas(p, params["w3"], params["g3"], params["be3"],
                                   params["wl"], params["bl"], tile_p=tile_p)

    y = conv_bn_pallas(p, params["w3"], params["g3"], params["be3"], tile_p=tile_p)
    # NHWC flatten; linear weight rows are pre-permuted, so no transpose needed.
    x = y.reshape(N, -1)
    return linear_pallas(x, params["wl"], params["bl"])


def init_params(key, h, w, outputs):
    ks = jax.random.split(key, 5)
    lh = conv_out_size(conv_out_size(conv_out_size(h)))
    lw = conv_out_size(conv_out_size(conv_out_size(w)))
    feat = 32 * lh * lw

    def conv_w(k, o, c):
        return jax.random.normal(k, (o, c, K_SIZE, K_SIZE), jnp.float32) * 0.05

    # NOTE: conv biases are intentionally omitted — under training-mode BN the
    # per-channel bias is exactly cancelled by the batch-mean subtraction.
    wl_torch = jax.random.normal(ks[3], (outputs, feat), jnp.float32) * 0.05

    params = {
        "w1": conv_weight_to_matrix(conv_w(ks[0], 16, 3)).astype(jnp.bfloat16),
        "g1": jnp.ones((1, 16), jnp.float32),
        "be1": jnp.zeros((1, 16), jnp.float32),
        "w2": conv_weight_to_matrix(conv_w(ks[1], 32, 16)).astype(jnp.bfloat16),
        "g2": jnp.ones((1, 32), jnp.float32),
        "be2": jnp.zeros((1, 32), jnp.float32),
        "w3": conv_weight_to_matrix(conv_w(ks[2], 32, 32)).astype(jnp.bfloat16),
        "g3": jnp.ones((1, 32), jnp.float32),
        "be3": jnp.zeros((1, 32), jnp.float32),
        # [feat, O] in NHWC-flatten row order, bf16 for the MXU.
        "wl": linear_weight_to_nhwc(wl_torch, 32, lh, lw).astype(jnp.bfloat16),
        "bl": jax.random.normal(ks[4], (1, outputs), jnp.float32) * 0.05,
    }
    return params


if __name__ == "__main__":
    # 32x32 input survives three k5/s2 convs: 32 -> 14 -> 5 -> 1 spatial, so the
    # fused conv3+bn3+linear head path is exercised.  Batch 8 gives conv1 a
    # 2-step grid (P = 8*14*14 = 1568 > tile_p = 1024) with a masked partial
    # last tile, exercising the cross-tile BN-stat accumulation at runtime.
    N, H, W, OUT = 8, 32, 32, 4
    key = jax.random.PRNGKey(0)
    kx, kp = jax.random.split(key)
    x = jax.random.normal(kx, (N, 3, H, W), jnp.float32)   # NCHW like PyTorch
    params = init_params(kp, H, W, OUT)

    fwd = jax.jit(dqn_forward)                 # default tile_p = 1024
    out = jax.block_until_ready(fwd(params, x))
    assert out.shape == (N, OUT), out.shape
    assert bool(jnp.all(jnp.isfinite(out))), "non-finite output"
    print("KERNEL_OK")
</pallas_src>

<mosaic_0001>
module attributes {stable_mosaic.version = 11 : i64} {
  func.func @conv_bn_kernel(%arg0: i32, %arg1: memref<1024x75xbf16, #tpu.memory_space<vmem>>, %arg2: memref<75x128xbf16, #tpu.memory_space<vmem>>, %arg3: memref<1x128xf32, #tpu.memory_space<vmem>>, %arg4: memref<1x128xf32, #tpu.memory_space<vmem>>, %arg5: memref<2048x128xbf16, #tpu.memory_space<vmem>>, %arg6: memref<1x128xf32, #tpu.memory_space<vmem>>, %arg7: memref<1x128xf32, #tpu.memory_space<vmem>>) attributes {dimension_semantics = [#tpu.dimension_semantics<arbitrary>], iteration_bounds = array<i64: 2>, scalar_prefetch = 0 : i64, scratch_operands = 2 : i64, tpu.core_type = #tpu.core_type<tc>, window_params = [{transform_indices = @transform_0, window_bounds = array<i64: 1024, 75>}, {pipeline_mode = #tpu.pipeline_mode<synchronous>, transform_indices = @transform_1, window_bounds = array<i64: 75, 128>}, {pipeline_mode = #tpu.pipeline_mode<synchronous>, transform_indices = @transform_2, window_bounds = array<i64: 1, 128>}, {pipeline_mode = #tpu.pipeline_mode<synchronous>, transform_indices = @transform_3, window_bounds = array<i64: 1, 128>}, {pipeline_mode = #tpu.pipeline_mode<synchronous>, transform_indices = @transform_4, window_bounds = array<i64: 2048, 128>}]} {
    %c0_i32 = arith.constant 0 : i32
    %0 = arith.cmpi eq, %arg0, %c0_i32 : i32
    %1 = arith.extui %0 : i1 to i32
    %c0_i32_0 = arith.constant 0 : i32
    %2 = arith.cmpi ne, %1, %c0_i32_0 : i32
    scf.if %2 {
      %cst_18 = arith.constant 0.000000e+00 : f32
      %35 = vector.broadcast %cst_18 : f32 to vector<1x128xf32>
      %c0_19 = arith.constant 0 : index
      %c0_20 = arith.constant 0 : index
      %36 = vector.load %arg6[%c0_19, %c0_20] : memref<1x128xf32, #tpu.memory_space<vmem>>, vector<1x128xf32>
      tpu.vector_store %arg6[%c0_19, %c0_20], %35 {strides = array<i32>} : memref<1x128xf32, #tpu.memory_space<vmem>>, vector<1x128xf32>,
      %cst_21 = arith.constant 0.000000e+00 : f32
      %37 = vector.broadcast %cst_21 : f32 to vector<1x128xf32>
      %c0_22 = arith.constant 0 : index
      %c0_23 = arith.constant 0 : index
      %38 = vector.load %arg7[%c0_22, %c0_23] : memref<1x128xf32, #tpu.memory_space<vmem>>, vector<1x128xf32>
      tpu.vector_store %arg7[%c0_22, %c0_23], %37 {strides = array<i32>} : memref<1x128xf32, #tpu.memory_space<vmem>>, vector<1x128xf32>,
    } else {
    }
    %c0 = arith.constant 0 : index
    %c0_1 = arith.constant 0 : index
    %3 = vector.load %arg1[%c0, %c0_1] : memref<1024x75xbf16, #tpu.memory_space<vmem>>, vector<1024x75xbf16>
    %c0_2 = arith.constant 0 : index
    %c0_3 = arith.constant 0 : index
    %4 = vector.load %arg2[%c0_2, %c0_3] : memref<75x128xbf16, #tpu.memory_space<vmem>>, vector<75x128xbf16>
    %cst = arith.constant dense<0.000000e+00> : vector<1024x128xf32>
    %5 = tpu.matmul %3, %4, %cst {dimension_numbers = #tpu.dot_dimension_numbers<[1], [0], [0], [1], [0, 0, 1, 1], [], []>} : vector<1024x75xbf16>, vector<75x128xbf16>, vector<1024x128xf32> -> vector<1024x128xf32>
    %6 = tpu.iota {dimensions = array<i32: 0>} : vector<1024x1xi32>
    %c1024_i32 = arith.constant 1024 : i32
    %7 = arith.muli %arg0, %c1024_i32 : i32
    %8 = vector.broadcast %7 : i32 to vector<1024x1xi32>
    %9 = arith.addi %6, %8 : vector<1024x1xi32>
    %c1568_i32 = arith.constant 1568 : i32
    %10 = vector.broadcast %c1568_i32 : i32 to vector<1024x1xi32>
    %11 = arith.cmpi slt, %9, %10 : vector<1024x1xi32>
    %cst_4 = arith.constant 0.000000e+00 : f32
    %12 = vector.shape_cast %11 : vector<1024x1xi1> to vector<1024x1xi1>
    %13 = vector.broadcast %12 : vector<1024x1xi1> to vector<1024x128xi1>
    %14 = vector.broadcast %cst_4 : f32 to vector<1024x128xf32>
    %15 = arith.select %13, %5, %14 : vector<1024x128xi1>, vector<1024x128xf32>
    %c0_5 = arith.constant 0 : index
    %c0_6 = arith.constant 0 : index
    %16 = vector.load %arg6[%c0_5, %c0_6] : memref<1x128xf32, #tpu.memory_space<vmem>>, vector<1x128xf32>
    %cst_7 = arith.constant dense<0.000000e+00> : vector<128xf32>
    %17 = vector.multi_reduction <add>, %15, %cst_7 [0] : vector<1024x128xf32> to vector<128xf32>
    %18 = vector.shape_cast %17 : vector<128xf32> to vector<1x128xf32>
    %19 = arith.addf %16, %18 : vector<1x128xf32>
    %c0_8 = arith.constant 0 : index
    %c0_9 = arith.constant 0 : index
    %20 = vector.load %arg6[%c0_8, %c0_9] : memref<1x128xf32, #tpu.memory_space<vmem>>, vector<1x128xf32>
    tpu.vector_store %arg6[%c0_8, %c0_9], %19 {strides = array<i32>} : memref<1x128xf32, #tpu.memory_space<vmem>>, vector<1x128xf32>,
    %c0_10 = arith.constant 0 : index
    %c0_11 = arith.constant 0 : index
    %21 = vector.load %arg7[%c0_10, %c0_11] : memref<1x128xf32, #tpu.memory_space<vmem>>, vector<1x128xf32>
    %22 = arith.mulf %15, %15 : vector<1024x128xf32>
    %cst_12 = arith.constant dense<0.000000e+00> : vector<128xf32>
    %23 = vector.multi_reduction <add>, %22, %cst_12 [0] : vector<1024x128xf32> to vector<128xf32>
    %24 = vector.shape_cast %23 : vector<128xf32> to vector<1x128xf32>
    %25 = arith.addf %21, %24 : vector<1x128xf32>
    %c0_13 = arith.constant 0 : index
    %c0_14 = arith.constant 0 : index
    %26 = vector.load %arg7[%c0_13, %c0_14] : memref<1x128xf32, #tpu.memory_space<vmem>>, vector<1x128xf32>
    tpu.vector_store %arg7[%c0_13, %c0_14], %25 {strides = array<i32>} : memref<1x128xf32, #tpu.memory_space<vmem>>, vector<1x128xf32>,
    %c1024_i32_15 = arith.constant 1024 : i32
    %27 = arith.muli %arg0, %c1024_i32_15 : i32
    %28 = tpu.assume_multiple %27, 16 : i32
    %29 = arith.truncf %5 : vector<1024x128xf32> to vector<1024x128xbf16>
    %30 = arith.index_cast %28 : i32 to index
    %c0_16 = arith.constant 0 : index
    %31 = vector.load %arg5[%30, %c0_16] : memref<2048x128xbf16, #tpu.memory_space<vmem>>, vector<1024x128xbf16>
    tpu.vector_store %arg5[%30, %c0_16], %29 {strides = array<i32>} : memref<2048x128xbf16, #tpu.memory_space<vmem>>, vector<1024x128xbf16>,
    %c1_i32 = arith.constant 1 : i32
    %32 = arith.cmpi eq, %arg0, %c1_i32 : i32
    %33 = arith.extui %32 : i1 to i32
    %c0_i32_17 = arith.constant 0 : i32
    %34 = arith.cmpi ne, %33, %c0_i32_17 : i32
    scf.if %34 {
      %c0_18 = arith.constant 0 : index
      %c0_19 = arith.constant 0 : index
      %35 = vector.load %arg6[%c0_18, %c0_19] : memref<1x128xf32, #tpu.memory_space<vmem>>, vector<1x128xf32>
      %cst_20 = arith.constant 6.37755089E-4 : f32
      %36 = vector.broadcast %cst_20 : f32 to vector<1x128xf32>
      %37 = arith.mulf %35, %36 : vector<1x128xf32>
      %c0_21 = arith.constant 0 : index
      %c0_22 = arith.constant 0 : index
      %38 = vector.load %arg7[%c0_21, %c0_22] : memref<1x128xf32, #tpu.memory_space<vmem>>, vector<1x128xf32>
      %cst_23 = arith.constant 6.37755089E-4 : f32
      %39 = vector.broadcast %cst_23 : f32 to vector<1x128xf32>
      %40 = arith.mulf %38, %39 : vector<1x128xf32>
      %41 = arith.mulf %37, %37 : vector<1x128xf32>
      %42 = arith.subf %40, %41 : vector<1x128xf32>
      %cst_24 = arith.constant 0.000000e+00 : f32
      %43 = vector.broadcast %cst_24 : f32 to vector<1x128xf32>
      %44 = arith.maximumf %42, %43 : vector<1x128xf32>
      %cst_25 = arith.constant 9.99999974E-6 : f32
      %45 = vector.broadcast %cst_25 : f32 to vector<1x128xf32>
      %46 = arith.addf %44, %45 : vector<1x128xf32>
      %47 = math.rsqrt %46 : vector<1x128xf32>
      %c0_26 = arith.constant 0 : index
      %c0_27 = arith.constant 0 : index
      %48 = vector.load %arg3[%c0_26, %c0_27] : memref<1x128xf32, #tpu.memory_space<vmem>>, vector<1x128xf32>
      %49 = arith.mulf %48, %47 : vector<1x128xf32>
      %c0_28 = arith.constant 0 : index
      %c0_29 = arith.constant 0 : index
      %50 = vector.load %arg4[%c0_28, %c0_29] : memref<1x128xf32, #tpu.memory_space<vmem>>, vector<1x128xf32>
      %51 = arith.mulf %37, %49 : vector<1x128xf32>
      %52 = arith.subf %50, %51 : vector<1x128xf32>
      %c0_30 = arith.constant 0 : index
      %c0_31 = arith.constant 0 : index
      %53 = vector.load %arg5[%c0_30, %c0_31] : memref<2048x128xbf16, #tpu.memory_space<vmem>>, vector<2048x128xbf16>
      %54 = arith.extf %53 : vector<2048x128xbf16> to vector<2048x128xf32>
      %55 = vector.broadcast %49 : vector<1x128xf32> to vector<2048x128xf32>
      %56 = arith.mulf %54, %55 : vector<2048x128xf32>
      %57 = vector.broadcast %52 : vector<1x128xf32> to vector<2048x128xf32>
      %58 = arith.addf %56, %57 : vector<2048x128xf32>
      %59 = arith.truncf %58 : vector<2048x128xf32> to vector<2048x128xbf16>
      %c0_32 = arith.constant 0 : index
      %c0_33 = arith.constant 0 : index
      %60 = vector.load %arg5[%c0_32, %c0_33] : memref<2048x128xbf16, #tpu.memory_space<vmem>>, vector<2048x128xbf16>
      tpu.vector_store %arg5[%c0_32, %c0_33], %59 {strides = array<i32>} : memref<2048x128xbf16, #tpu.memory_space<vmem>>, vector<2048x128xbf16>,
    } else {
    }
    return
  }
  func.func @transform_0(%arg0: i32) -> (i32, i32) {
    %c0_i32 = arith.constant 0 : i32
    %c0_i32_0 = arith.constant 0 : i32
    return %arg0, %c0_i32 : i32, i32
  }
  func.func @transform_1(%arg0: i32) -> (i32, i32) {
    %c0_i32 = arith.constant 0 : i32
    %c0_i32_0 = arith.constant 0 : i32
    %c0_i32_1 = arith.constant 0 : i32
    return %c0_i32, %c0_i32_0 : i32, i32
  }
  func.func @transform_2(%arg0: i32) -> (i32, i32) {
    %c0_i32 = arith.constant 0 : i32
    %c0_i32_0 = arith.constant 0 : i32
    %c0_i32_1 = arith.constant 0 : i32
    return %c0_i32, %c0_i32_0 : i32, i32
  }
  func.func @transform_3(%arg0: i32) -> (i32, i32) {
    %c0_i32 = arith.constant 0 : i32
    %c0_i32_0 = arith.constant 0 : i32
    %c0_i32_1 = arith.constant 0 : i32
    return %c0_i32, %c0_i32_0 : i32, i32
  }
  func.func @transform_4(%arg0: i32) -> (i32, i32) {
    %c0_i32 = arith.constant 0 : i32
    %c0_i32_0 = arith.constant 0 : i32
    %c0_i32_1 = arith.constant 0 : i32
    return %c0_i32, %c0_i32_0 : i32, i32
  }
}

module attributes {stable_mosaic.version = 11 : i64} {
  func.func @conv_bn_kernel(%arg0: i32, %arg1: memref<208x400xbf16, #tpu.memory_space<vmem>>, %arg2: memref<400x128xbf16, #tpu.memory_space<vmem>>, %arg3: memref<1x128xf32, #tpu.memory_space<vmem>>, %arg4: memref<1x128xf32, #tpu.memory_space<vmem>>, %arg5: memref<208x128xbf16, #tpu.memory_space<vmem>>, %arg6: memref<1x128xf32, #tpu.memory_space<vmem>>, %arg7: memref<1x128xf32, #tpu.memory_space<vmem>>) attributes {dimension_semantics = [#tpu.dimension_semantics<arbitrary>], iteration_bounds = array<i64: 1>, scalar_prefetch = 0 : i64, scratch_operands = 2 : i64, tpu.core_type = #tpu.core_type<tc>, window_params = [{transform_indices = @transform_0, window_bounds = array<i64: 208, 400>}, {pipeline_mode = #tpu.pipeline_mode<synchronous>, transform_indices = @transform_1, window_bounds = array<i64: 400, 128>}, {pipeline_mode = #tpu.pipeline_mode<synchronous>, transform_indices = @transform_2, window_bounds = array<i64: 1, 128>}, {pipeline_mode = #tpu.pipeline_mode<synchronous>, transform_indices = @transform_3, window_bounds = array<i64: 1, 128>}, {pipeline_mode = #tpu.pipeline_mode<synchronous>, transform_indices = @transform_4, window_bounds = array<i64: 208, 128>}]} {
    %c0_i32 = arith.constant 0 : i32
    %0 = arith.cmpi eq, %arg0, %c0_i32 : i32
    %1 = arith.extui %0 : i1 to i32
    %c0_i32_0 = arith.constant 0 : i32
    %2 = arith.cmpi ne, %1, %c0_i32_0 : i32
    scf.if %2 {
      %cst_19 = arith.constant 0.000000e+00 : f32
      %35 = vector.broadcast %cst_19 : f32 to vector<1x128xf32>
      %c0_20 = arith.constant 0 : index
      %c0_21 = arith.constant 0 : index
      %36 = vector.load %arg6[%c0_20, %c0_21] : memref<1x128xf32, #tpu.memory_space<vmem>>, vector<1x128xf32>
      tpu.vector_store %arg6[%c0_20, %c0_21], %35 {strides = array<i32>} : memref<1x128xf32, #tpu.memory_space<vmem>>, vector<1x128xf32>,
      %cst_22 = arith.constant 0.000000e+00 : f32
      %37 = vector.broadcast %cst_22 : f32 to vector<1x128xf32>
      %c0_23 = arith.constant 0 : index
      %c0_24 = arith.constant 0 : index
      %38 = vector.load %arg7[%c0_23, %c0_24] : memref<1x128xf32, #tpu.memory_space<vmem>>, vector<1x128xf32>
      tpu.vector_store %arg7[%c0_23, %c0_24], %37 {strides = array<i32>} : memref<1x128xf32, #tpu.memory_space<vmem>>, vector<1x128xf32>,
    } else {
    }
    %c0 = arith.constant 0 : index
    %c0_1 = arith.constant 0 : index
    %3 = vector.load %arg1[%c0, %c0_1] : memref<208x400xbf16, #tpu.memory_space<vmem>>, vector<208x400xbf16>
    %c0_2 = arith.constant 0 : index
    %c0_3 = arith.constant 0 : index
    %4 = vector.load %arg2[%c0_2, %c0_3] : memref<400x128xbf16, #tpu.memory_space<vmem>>, vector<400x128xbf16>
    %cst = arith.constant dense<0.000000e+00> : vector<208x128xf32>
    %5 = tpu.matmul %3, %4, %cst {dimension_numbers = #tpu.dot_dimension_numbers<[1], [0], [0], [1], [0, 0, 1, 1], [], []>} : vector<208x400xbf16>, vector<400x128xbf16>, vector<208x128xf32> -> vector<208x128xf32>
    %6 = tpu.iota {dimensions = array<i32: 0>} : vector<208x1xi32>
    %c208_i32 = arith.constant 208 : i32
    %7 = arith.muli %arg0, %c208_i32 : i32
    %8 = vector.broadcast %7 : i32 to vector<208x1xi32>
    %9 = arith.addi %6, %8 : vector<208x1xi32>
    %c200_i32 = arith.constant 200 : i32
    %10 = vector.broadcast %c200_i32 : i32 to vector<208x1xi32>
    %11 = arith.cmpi slt, %9, %10 : vector<208x1xi32>
    %cst_4 = arith.constant 0.000000e+00 : f32
    %12 = vector.shape_cast %11 : vector<208x1xi1> to vector<208x1xi1>
    %13 = vector.broadcast %12 : vector<208x1xi1> to vector<208x128xi1>
    %14 = vector.broadcast %cst_4 : f32 to vector<208x128xf32>
    %15 = arith.select %13, %5, %14 : vector<208x128xi1>, vector<208x128xf32>
    %c0_5 = arith.constant 0 : index
    %c0_6 = arith.constant 0 : index
    %16 = vector.load %arg6[%c0_5, %c0_6] : memref<1x128xf32, #tpu.memory_space<vmem>>, vector<1x128xf32>
    %cst_7 = arith.constant dense<0.000000e+00> : vector<128xf32>
    %17 = vector.multi_reduction <add>, %15, %cst_7 [0] : vector<208x128xf32> to vector<128xf32>
    %18 = vector.shape_cast %17 : vector<128xf32> to vector<1x128xf32>
    %19 = arith.addf %16, %18 : vector<1x128xf32>
    %c0_8 = arith.constant 0 : index
    %c0_9 = arith.constant 0 : index
    %20 = vector.load %arg6[%c0_8, %c0_9] : memref<1x128xf32, #tpu.memory_space<vmem>>, vector<1x128xf32>
    tpu.vector_store %arg6[%c0_8, %c0_9], %19 {strides = array<i32>} : memref<1x128xf32, #tpu.memory_space<vmem>>, vector<1x128xf32>,
    %c0_10 = arith.constant 0 : index
    %c0_11 = arith.constant 0 : index
    %21 = vector.load %arg7[%c0_10, %c0_11] : memref<1x128xf32, #tpu.memory_space<vmem>>, vector<1x128xf32>
    %22 = arith.mulf %15, %15 : vector<208x128xf32>
    %cst_12 = arith.constant dense<0.000000e+00> : vector<128xf32>
    %23 = vector.multi_reduction <add>, %22, %cst_12 [0] : vector<208x128xf32> to vector<128xf32>
    %24 = vector.shape_cast %23 : vector<128xf32> to vector<1x128xf32>
    %25 = arith.addf %21, %24 : vector<1x128xf32>
    %c0_13 = arith.constant 0 : index
    %c0_14 = arith.constant 0 : index
    %26 = vector.load %arg7[%c0_13, %c0_14] : memref<1x128xf32, #tpu.memory_space<vmem>>, vector<1x128xf32>
    tpu.vector_store %arg7[%c0_13, %c0_14], %25 {strides = array<i32>} : memref<1x128xf32, #tpu.memory_space<vmem>>, vector<1x128xf32>,
    %c208_i32_15 = arith.constant 208 : i32
    %27 = arith.muli %arg0, %c208_i32_15 : i32
    %28 = tpu.assume_multiple %27, 16 : i32
    %29 = arith.truncf %5 : vector<208x128xf32> to vector<208x128xbf16>
    %30 = arith.index_cast %28 : i32 to index
    %c0_16 = arith.constant 0 : index
    %31 = vector.load %arg5[%30, %c0_16] : memref<208x128xbf16, #tpu.memory_space<vmem>>, vector<208x128xbf16>
    tpu.vector_store %arg5[%30, %c0_16], %29 {strides = array<i32>} : memref<208x128xbf16, #tpu.memory_space<vmem>>, vector<208x128xbf16>,
    %c0_i32_17 = arith.constant 0 : i32
    %32 = arith.cmpi eq, %arg0, %c0_i32_17 : i32
    %33 = arith.extui %32 : i1 to i32
    %c0_i32_18 = arith.constant 0 : i32
    %34 = arith.cmpi ne, %33, %c0_i32_18 : i32
    scf.if %34 {
      %c0_19 = arith.constant 0 : index
      %c0_20 = arith.constant 0 : index
      %35 = vector.load %arg6[%c0_19, %c0_20] : memref<1x128xf32, #tpu.memory_space<vmem>>, vector<1x128xf32>
      %cst_21 = arith.constant 5.000000e-03 : f32
      %36 = vector.broadcast %cst_21 : f32 to vector<1x128xf32>
      %37 = arith.mulf %35, %36 : vector<1x128xf32>
      %c0_22 = arith.constant 0 : index
      %c0_23 = arith.constant 0 : index
      %38 = vector.load %arg7[%c0_22, %c0_23] : memref<1x128xf32, #tpu.memory_space<vmem>>, vector<1x128xf32>
      %cst_24 = arith.constant 5.000000e-03 : f32
      %39 = vector.broadcast %cst_24 : f32 to vector<1x128xf32>
      %40 = arith.mulf %38, %39 : vector<1x128xf32>
      %41 = arith.mulf %37, %37 : vector<1x128xf32>
      %42 = arith.subf %40, %41 : vector<1x128xf32>
      %cst_25 = arith.constant 0.000000e+00 : f32
      %43 = vector.broadcast %cst_25 : f32 to vector<1x128xf32>
      %44 = arith.maximumf %42, %43 : vector<1x128xf32>
      %cst_26 = arith.constant 9.99999974E-6 : f32
      %45 = vector.broadcast %cst_26 : f32 to vector<1x128xf32>
      %46 = arith.addf %44, %45 : vector<1x128xf32>
      %47 = math.rsqrt %46 : vector<1x128xf32>
      %c0_27 = arith.constant 0 : index
      %c0_28 = arith.constant 0 : index
      %48 = vector.load %arg3[%c0_27, %c0_28] : memref<1x128xf32, #tpu.memory_space<vmem>>, vector<1x128xf32>
      %49 = arith.mulf %48, %47 : vector<1x128xf32>
      %c0_29 = arith.constant 0 : index
      %c0_30 = arith.constant 0 : index
      %50 = vector.load %arg4[%c0_29, %c0_30] : memref<1x128xf32, #tpu.memory_space<vmem>>, vector<1x128xf32>
      %51 = arith.mulf %37, %49 : vector<1x128xf32>
      %52 = arith.subf %50, %51 : vector<1x128xf32>
      %c0_31 = arith.constant 0 : index
      %c0_32 = arith.constant 0 : index
      %53 = vector.load %arg5[%c0_31, %c0_32] : memref<208x128xbf16, #tpu.memory_space<vmem>>, vector<208x128xbf16>
      %54 = arith.extf %53 : vector<208x128xbf16> to vector<208x128xf32>
      %55 = vector.broadcast %49 : vector<1x128xf32> to vector<208x128xf32>
      %56 = arith.mulf %54, %55 : vector<208x128xf32>
      %57 = vector.broadcast %52 : vector<1x128xf32> to vector<208x128xf32>
      %58 = arith.addf %56, %57 : vector<208x128xf32>
      %59 = arith.truncf %58 : vector<208x128xf32> to vector<208x128xbf16>
      %c0_33 = arith.constant 0 : index
      %c0_34 = arith.constant 0 : index
      %60 = vector.load %arg5[%c0_33, %c0_34] : memref<208x128xbf16, #tpu.memory_space<vmem>>, vector<208x128xbf16>
      tpu.vector_store %arg5[%c0_33, %c0_34], %59 {strides = array<i32>} : memref<208x128xbf16, #tpu.memory_space<vmem>>, vector<208x128xbf16>,
    } else {
    }
    return
  }
  func.func @transform_0(%arg0: i32) -> (i32, i32) {
    %c0_i32 = arith.constant 0 : i32
    %c0_i32_0 = arith.constant 0 : i32
    return %arg0, %c0_i32 : i32, i32
  }
  func.func @transform_1(%arg0: i32) -> (i32, i32) {
    %c0_i32 = arith.constant 0 : i32
    %c0_i32_0 = arith.constant 0 : i32
    %c0_i32_1 = arith.constant 0 : i32
    return %c0_i32, %c0_i32_0 : i32, i32
  }
  func.func @transform_2(%arg0: i32) -> (i32, i32) {
    %c0_i32 = arith.constant 0 : i32
    %c0_i32_0 = arith.constant 0 : i32
    %c0_i32_1 = arith.constant 0 : i32
    return %c0_i32, %c0_i32_0 : i32, i32
  }
  func.func @transform_3(%arg0: i32) -> (i32, i32) {
    %c0_i32 = arith.constant 0 : i32
    %c0_i32_0 = arith.constant 0 : i32
    %c0_i32_1 = arith.constant 0 : i32
    return %c0_i32, %c0_i32_0 : i32, i32
  }
  func.func @transform_4(%arg0: i32) -> (i32, i32) {
    %c0_i32 = arith.constant 0 : i32
    %c0_i32_0 = arith.constant 0 : i32
    %c0_i32_1 = arith.constant 0 : i32
    return %c0_i32, %c0_i32_0 : i32, i32
  }
}

module attributes {stable_mosaic.version = 11 : i64} {
  func.func @conv_bn_head_kernel(%arg0: i32, %arg1: memref<16x800xbf16, #tpu.memory_space<vmem>>, %arg2: memref<800x128xbf16, #tpu.memory_space<vmem>>, %arg3: memref<1x128xf32, #tpu.memory_space<vmem>>, %arg4: memref<1x128xf32, #tpu.memory_space<vmem>>, %arg5: memref<128x128xbf16, #tpu.memory_space<vmem>>, %arg6: memref<1x128xf32, #tpu.memory_space<vmem>>, %arg7: memref<16x128xf32, #tpu.memory_space<vmem>>, %arg8: memref<16x128xbf16, #tpu.memory_space<vmem>>, %arg9: memref<1x128xf32, #tpu.memory_space<vmem>>, %arg10: memref<1x128xf32, #tpu.memory_space<vmem>>) attributes {dimension_semantics = [#tpu.dimension_semantics<arbitrary>], iteration_bounds = array<i64: 1>, scalar_prefetch = 0 : i64, scratch_operands = 3 : i64, tpu.core_type = #tpu.core_type<tc>, window_params = [{transform_indices = @transform_0, window_bounds = array<i64: 16, 800>}, {pipeline_mode = #tpu.pipeline_mode<synchronous>, transform_indices = @transform_1, window_bounds = array<i64: 800, 128>}, {pipeline_mode = #tpu.pipeline_mode<synchronous>, transform_indices = @transform_2, window_bounds = array<i64: 1, 128>}, {pipeline_mode = #tpu.pipeline_mode<synchronous>, transform_indices = @transform_3, window_bounds = array<i64: 1, 128>}, {pipeline_mode = #tpu.pipeline_mode<synchronous>, transform_indices = @transform_4, window_bounds = array<i64: 128, 128>}, {pipeline_mode = #tpu.pipeline_mode<synchronous>, transform_indices = @transform_5, window_bounds = array<i64: 1, 128>}, {pipeline_mode = #tpu.pipeline_mode<synchronous>, transform_indices = @transform_6, window_bounds = array<i64: 16, 128>}]} {
    %c0_i32 = arith.constant 0 : i32
    %0 = arith.cmpi eq, %arg0, %c0_i32 : i32
    %1 = arith.extui %0 : i1 to i32
    %c0_i32_0 = arith.constant 0 : i32
    %2 = arith.cmpi ne, %1, %c0_i32_0 : i32
    scf.if %2 {
      %cst_19 = arith.constant 0.000000e+00 : f32
      %35 = vector.broadcast %cst_19 : f32 to vector<1x128xf32>
      %c0_20 = arith.constant 0 : index
      %c0_21 = arith.constant 0 : index
      %36 = vector.load %arg9[%c0_20, %c0_21] : memref<1x128xf32, #tpu.memory_space<vmem>>, vector<1x128xf32>
      tpu.vector_store %arg9[%c0_20, %c0_21], %35 {strides = array<i32>} : memref<1x128xf32, #tpu.memory_space<vmem>>, vector<1x128xf32>,
      %cst_22 = arith.constant 0.000000e+00 : f32
      %37 = vector.broadcast %cst_22 : f32 to vector<1x128xf32>
      %c0_23 = arith.constant 0 : index
      %c0_24 = arith.constant 0 : index
      %38 = vector.load %arg10[%c0_23, %c0_24] : memref<1x128xf32, #tpu.memory_space<vmem>>, vector<1x128xf32>
      tpu.vector_store %arg10[%c0_23, %c0_24], %37 {strides = array<i32>} : memref<1x128xf32, #tpu.memory_space<vmem>>, vector<1x128xf32>,
    } else {
    }
    %c0 = arith.constant 0 : index
    %c0_1 = arith.constant 0 : index
    %3 = vector.load %arg1[%c0, %c0_1] : memref<16x800xbf16, #tpu.memory_space<vmem>>, vector<16x800xbf16>
    %c0_2 = arith.constant 0 : index
    %c0_3 = arith.constant 0 : index
    %4 = vector.load %arg2[%c0_2, %c0_3] : memref<800x128xbf16, #tpu.memory_space<vmem>>, vector<800x128xbf16>
    %cst = arith.constant dense<0.000000e+00> : vector<16x128xf32>
    %5 = tpu.matmul %3, %4, %cst {dimension_numbers = #tpu.dot_dimension_numbers<[1], [0], [0], [1], [0, 0, 1, 1], [], []>} : vector<16x800xbf16>, vector<800x128xbf16>, vector<16x128xf32> -> vector<16x128xf32>
    %6 = tpu.iota {dimensions = array<i32: 0>} : vector<16x1xi32>
    %c16_i32 = arith.constant 16 : i32
    %7 = arith.muli %arg0, %c16_i32 : i32
    %8 = vector.broadcast %7 : i32 to vector<16x1xi32>
    %9 = arith.addi %6, %8 : vector<16x1xi32>
    %c8_i32 = arith.constant 8 : i32
    %10 = vector.broadcast %c8_i32 : i32 to vector<16x1xi32>
    %11 = arith.cmpi slt, %9, %10 : vector<16x1xi32>
    %cst_4 = arith.constant 0.000000e+00 : f32
    %12 = vector.shape_cast %11 : vector<16x1xi1> to vector<16x1xi1>
    %13 = vector.broadcast %12 : vector<16x1xi1> to vector<16x128xi1>
    %14 = vector.broadcast %cst_4 : f32 to vector<16x128xf32>
    %15 = arith.select %13, %5, %14 : vector<16x128xi1>, vector<16x128xf32>
    %c0_5 = arith.constant 0 : index
    %c0_6 = arith.constant 0 : index
    %16 = vector.load %arg9[%c0_5, %c0_6] : memref<1x128xf32, #tpu.memory_space<vmem>>, vector<1x128xf32>
    %cst_7 = arith.constant dense<0.000000e+00> : vector<128xf32>
    %17 = vector.multi_reduction <add>, %15, %cst_7 [0] : vector<16x128xf32> to vector<128xf32>
    %18 = vector.shape_cast %17 : vector<128xf32> to vector<1x128xf32>
    %19 = arith.addf %16, %18 : vector<1x128xf32>
    %c0_8 = arith.constant 0 : index
    %c0_9 = arith.constant 0 : index
    %20 = vector.load %arg9[%c0_8, %c0_9] : memref<1x128xf32, #tpu.memory_space<vmem>>, vector<1x128xf32>
    tpu.vector_store %arg9[%c0_8, %c0_9], %19 {strides = array<i32>} : memref<1x128xf32, #tpu.memory_space<vmem>>, vector<1x128xf32>,
    %c0_10 = arith.constant 0 : index
    %c0_11 = arith.constant 0 : index
    %21 = vector.load %arg10[%c0_10, %c0_11] : memref<1x128xf32, #tpu.memory_space<vmem>>, vector<1x128xf32>
    %22 = arith.mulf %15, %15 : vector<16x128xf32>
    %cst_12 = arith.constant dense<0.000000e+00> : vector<128xf32>
    %23 = vector.multi_reduction <add>, %22, %cst_12 [0] : vector<16x128xf32> to vector<128xf32>
    %24 = vector.shape_cast %23 : vector<128xf32> to vector<1x128xf32>
    %25 = arith.addf %21, %24 : vector<1x128xf32>
    %c0_13 = arith.constant 0 : index
    %c0_14 = arith.constant 0 : index
    %26 = vector.load %arg10[%c0_13, %c0_14] : memref<1x128xf32, #tpu.memory_space<vmem>>, vector<1x128xf32>
    tpu.vector_store %arg10[%c0_13, %c0_14], %25 {strides = array<i32>} : memref<1x128xf32, #tpu.memory_space<vmem>>, vector<1x128xf32>,
    %c16_i32_15 = arith.constant 16 : i32
    %27 = arith.muli %arg0, %c16_i32_15 : i32
    %28 = tpu.assume_multiple %27, 16 : i32
    %29 = arith.truncf %5 : vector<16x128xf32> to vector<16x128xbf16>
    %30 = arith.index_cast %28 : i32 to index
    %c0_16 = arith.constant 0 : index
    %31 = vector.load %arg8[%30, %c0_16] : memref<16x128xbf16, #tpu.memory_space<vmem>>, vector<16x128xbf16>
    tpu.vector_store %arg8[%30, %c0_16], %29 {strides = array<i32>} : memref<16x128xbf16, #tpu.memory_space<vmem>>, vector<16x128xbf16>,
    %c0_i32_17 = arith.constant 0 : i32
    %32 = arith.cmpi eq, %arg0, %c0_i32_17 : i32
    %33 = arith.extui %32 : i1 to i32
    %c0_i32_18 = arith.constant 0 : i32
    %34 = arith.cmpi ne, %33, %c0_i32_18 : i32
    scf.if %34 {
      %c0_19 = arith.constant 0 : index
      %c0_20 = arith.constant 0 : index
      %35 = vector.load %arg9[%c0_19, %c0_20] : memref<1x128xf32, #tpu.memory_space<vmem>>, vector<1x128xf32>
      %cst_21 = arith.constant 1.250000e-01 : f32
      %36 = vector.broadcast %cst_21 : f32 to vector<1x128xf32>
      %37 = arith.mulf %35, %36 : vector<1x128xf32>
      %c0_22 = arith.constant 0 : index
      %c0_23 = arith.constant 0 : index
      %38 = vector.load %arg10[%c0_22, %c0_23] : memref<1x128xf32, #tpu.memory_space<vmem>>, vector<1x128xf32>
      %cst_24 = arith.constant 1.250000e-01 : f32
      %39 = vector.broadcast %cst_24 : f32 to vector<1x128xf32>
      %40 = arith.mulf %38, %39 : vector<1x128xf32>
      %41 = arith.mulf %37, %37 : vector<1x128xf32>
      %42 = arith.subf %40, %41 : vector<1x128xf32>
      %cst_25 = arith.constant 0.000000e+00 : f32
      %43 = vector.broadcast %cst_25 : f32 to vector<1x128xf32>
      %44 = arith.maximumf %42, %43 : vector<1x128xf32>
      %cst_26 = arith.constant 9.99999974E-6 : f32
      %45 = vector.broadcast %cst_26 : f32 to vector<1x128xf32>
      %46 = arith.addf %44, %45 : vector<1x128xf32>
      %47 = math.rsqrt %46 : vector<1x128xf32>
      %c0_27 = arith.constant 0 : index
      %c0_28 = arith.constant 0 : index
      %48 = vector.load %arg3[%c0_27, %c0_28] : memref<1x128xf32, #tpu.memory_space<vmem>>, vector<1x128xf32>
      %49 = arith.mulf %48, %47 : vector<1x128xf32>
      %c0_29 = arith.constant 0 : index
      %c0_30 = arith.constant 0 : index
      %50 = vector.load %arg4[%c0_29, %c0_30] : memref<1x128xf32, #tpu.memory_space<vmem>>, vector<1x128xf32>
      %51 = arith.mulf %37, %49 : vector<1x128xf32>
      %52 = arith.subf %50, %51 : vector<1x128xf32>
      %c0_31 = arith.constant 0 : index
      %c0_32 = arith.constant 0 : index
      %53 = vector.load %arg8[%c0_31, %c0_32] : memref<16x128xbf16, #tpu.memory_space<vmem>>, vector<16x128xbf16>
      %54 = arith.extf %53 : vector<16x128xbf16> to vector<16x128xf32>
      %55 = vector.broadcast %49 : vector<1x128xf32> to vector<16x128xf32>
      %56 = arith.mulf %54, %55 : vector<16x128xf32>
      %57 = vector.broadcast %52 : vector<1x128xf32> to vector<16x128xf32>
      %58 = arith.addf %56, %57 : vector<16x128xf32>
      %59 = arith.truncf %58 : vector<16x128xf32> to vector<16x128xbf16>
      %c0_33 = arith.constant 0 : index
      %c0_34 = arith.constant 0 : index
      %60 = vector.load %arg5[%c0_33, %c0_34] : memref<128x128xbf16, #tpu.memory_space<vmem>>, vector<128x128xbf16>
      %cst_35 = arith.constant dense<0.000000e+00> : vector<16x128xf32>
      %61 = tpu.matmul %59, %60, %cst_35 {dimension_numbers = #tpu.dot_dimension_numbers<[1], [0], [0], [1], [0, 0, 1, 1], [], []>} : vector<16x128xbf16>, vector<128x128xbf16>, vector<16x128xf32> -> vector<16x128xf32>
      %c0_36 = arith.constant 0 : index
      %c0_37 = arith.constant 0 : index
      %62 = vector.load %arg6[%c0_36, %c0_37] : memref<1x128xf32, #tpu.memory_space<vmem>>, vector<1x128xf32>
      %63 = vector.broadcast %62 : vector<1x128xf32> to vector<16x128xf32>
      %64 = arith.addf %61, %63 : vector<16x128xf32>
      %c0_38 = arith.constant 0 : index
      %c0_39 = arith.constant 0 : index
      %65 = vector.load %arg7[%c0_38, %c0_39] : memref<16x128xf32, #tpu.memory_space<vmem>>, vector<16x128xf32>
      tpu.vector_store %arg7[%c0_38, %c0_39], %64 {strides = array<i32>} : memref<16x128xf32, #tpu.memory_space<vmem>>, vector<16x128xf32>,
    } else {
    }
    return
  }
  func.func @transform_0(%arg0: i32) -> (i32, i32) {
    %c0_i32 = arith.constant 0 : i32
    %c0_i32_0 = arith.constant 0 : i32
    return %arg0, %c0_i32 : i32, i32
  }
  func.func @transform_1(%arg0: i32) -> (i32, i32) {
    %c0_i32 = arith.constant 0 : i32
    %c0_i32_0 = arith.constant 0 : i32
    %c0_i32_1 = arith.constant 0 : i32
    return %c0_i32, %c0_i32_0 : i32, i32
  }
  func.func @transform_2(%arg0: i32) -> (i32, i32) {
    %c0_i32 = arith.constant 0 : i32
    %c0_i32_0 = arith.constant 0 : i32
    %c0_i32_1 = arith.constant 0 : i32
    return %c0_i32, %c0_i32_0 : i32, i32
  }
  func.func @transform_3(%arg0: i32) -> (i32, i32) {
    %c0_i32 = arith.constant 0 : i32
    %c0_i32_0 = arith.constant 0 : i32
    %c0_i32_1 = arith.constant 0 : i32
    return %c0_i32, %c0_i32_0 : i32, i32
  }
  func.func @transform_4(%arg0: i32) -> (i32, i32) {
    %c0_i32 = arith.constant 0 : i32
    %c0_i32_0 = arith.constant 0 : i32
    %c0_i32_1 = arith.constant 0 : i32
    return %c0_i32, %c0_i32_0 : i32, i32
  }
  func.func @transform_5(%arg0: i32) -> (i32, i32) {
    %c0_i32 = arith.constant 0 : i32
    %c0_i32_0 = arith.constant 0 : i32
    %c0_i32_1 = arith.constant 0 : i32
    return %c0_i32, %c0_i32_0 : i32, i32
  }
  func.func @transform_6(%arg0: i32) -> (i32, i32) {
    %c0_i32 = arith.constant 0 : i32
    %c0_i32_0 = arith.constant 0 : i32
    %c0_i32_1 = arith.constant 0 : i32
    return %c0_i32, %c0_i32_0 : i32, i32
  }
}

</mosaic_0001>

<llo_original>
// kernel: dqn_forward.3
$region0: #{dqn_forward.3}
  #allocation0 [shape = 'u32[]', space=smem, size = 0x4, offset = 0x4, fixed_abs, tag = 'smem constant byte address 0x4 - core index']
  #allocation1 [shape = 'u32[144,128]{1,0:T(1,128)}', space=vmem, size = 0x12000, scoped, tag = 'internal scratch']
  #allocation2 [shape = 'f32[1,128]{1,0:T(1,128)}', space=vmem, size = 0x200, scoped, tag = 'scratch operand']
  #allocation3 [shape = 'f32[1,128]{1,0:T(1,128)}', space=vmem, size = 0x200, scoped, tag = 'scratch operand']
  %s0 = inlined_call_operand.vmem [shape: bf16[1568,75], index: 0, kind: input, shape index: {}]
  %s1 = inlined_call_operand.vmem [shape: bf16[75,128], index: 1, kind: input, shape index: {}]
  %s2 = inlined_call_operand.vmem [shape: f32[1,128], index: 2, kind: input, shape index: {}]
  %s3 = inlined_call_operand.vmem [shape: f32[1,128], index: 3, kind: input, shape index: {}]
  %s4 = inlined_call_operand.vmem [shape: bf16[2048,128], index: 4, kind: output, shape index: {}]
  %s5 = sld [smem:[#allocation0]]
  $region57: #{dqn_forward.3} parent=0
    _
  %s7 = ssub.s32 1, %s5
  %s8 = scalar_select 0, %s7, %s5
  loop: start=0, step=1, limit=4
  $region2: #{dqn_forward.3} parent=0 // loop_pre_header
    _
  $region3: #{dqn_forward.3} parent=0 // loop_header
    %s10 = sphi 0, %s14
    %p11 = scmp.ge.s32.totalorder %s10, 4
    %s20 = sphi 0, %s22
    %s23 = sphi 0, %s20
    %s24 = sphi 0, %s23
    %s40 = sphi 0, %s24
    %s44 = sphi 0, %s44
    %s46 = sphi 0, %s44
    %s47 = sphi 0, %s46
    %s61 = sphi 0, %s47
    %s65 = sphi 0, %s65
    %s67 = sphi 0, %s65
    %s68 = sphi 0, %s67
    %s82 = sphi 0, %s68
    %s86 = sphi 0, %s86
    %s88 = sphi 0, %s86
    %s89 = sphi 0, %s88
    %s103 = sphi 0, %s89
    %s107 = sphi 0, %s107
    %s109 = sphi 0, %s107
    %s110 = sphi 0, %s109
    %s124 = sphi 0, %s110
  $region4: #{dqn_forward.3} parent=0 // loop_header_branch
    %13 = sbr.rel (%p11) target = $region8
  $region5: #{dqn_forward.3} parent=0 // loop_body
    %s15 = ssub.s32 %s10, 1
    %s16 = ssub.s32 %s10, 2
    %s17 = sadd.s32 %s10, 1
    %s18 = ssub.s32 %s10, %s17
    %p19 = scmp.eq.s32.totalorder %s18, 0
    %s21 = sadd.s32 %s20, 1
    %s22 = scalar_select %p19, %s20, %s21
    %p25 = pneg %p19
    %p26 = scmp.eq.s32.totalorder %s10, 1
    %p27 = por %p25, %p26
    %p28 = scmp.ne.s32.totalorder %s20, %s23
    %p29 = scmp.eq.s32.totalorder %s10, 0
    %p30 = por %p28, %p29
    %p31 = scmp.ne.s32.totalorder %s20, %s23
    %p32 = scmp.eq.s32.totalorder %s15, 1
    %p33 = por %p31, %p32
    %p34 = scmp.ne.s32.totalorder %s23, %s24
    %p35 = scmp.eq.s32.totalorder %s15, 0
    %p36 = por %p34, %p35
    %p37 = scmp.ne.s32.totalorder %s23, %s24
    %p38 = scmp.eq.s32.totalorder %s16, 1
    %p39 = por %p37, %p38
    %p41 = scmp.ne.s32.totalorder %s24, %s40
    %p42 = scmp.eq.s32.totalorder %s16, 0
    %p43 = por %p41, %p42
    %s45 = sadd.s32 %s44, 1
    %p48 = scmp.eq.s32.totalorder %s10, 1
    %p49 = scmp.ne.s32.totalorder %s44, %s46
    %p50 = scmp.eq.s32.totalorder %s10, 0
    %p51 = por %p49, %p50
    %p52 = scmp.ne.s32.totalorder %s44, %s46
    %p53 = scmp.eq.s32.totalorder %s15, 1
    %p54 = por %p52, %p53
    %p55 = scmp.ne.s32.totalorder %s46, %s47
    %p56 = scmp.eq.s32.totalorder %s15, 0
    %p57 = por %p55, %p56
    %p58 = scmp.ne.s32.totalorder %s46, %s47
    %p59 = scmp.eq.s32.totalorder %s16, 1
    %p60 = por %p58, %p59
    %p62 = scmp.ne.s32.totalorder %s47, %s61
    %p63 = scmp.eq.s32.totalorder %s16, 0
    %p64 = por %p62, %p63
    %s66 = sadd.s32 %s65, 1
    %p69 = scmp.eq.s32.totalorder %s10, 1
    %p70 = scmp.ne.s32.totalorder %s65, %s67
    %p71 = scmp.eq.s32.totalorder %s10, 0
    %p72 = por %p70, %p71
    %p73 = scmp.ne.s32.totalorder %s65, %s67
    %p74 = scmp.eq.s32.totalorder %s15, 1
    %p75 = por %p73, %p74
    %p76 = scmp.ne.s32.totalorder %s67, %s68
    %p77 = scmp.eq.s32.totalorder %s15, 0
    %p78 = por %p76, %p77
    %p79 = scmp.ne.s32.totalorder %s67, %s68
    %p80 = scmp.eq.s32.totalorder %s16, 1
    %p81 = por %p79, %p80
    %p83 = scmp.ne.s32.totalorder %s68, %s82
    %p84 = scmp.eq.s32.totalorder %s16, 0
    %p85 = por %p83, %p84
    %s87 = sadd.s32 %s86, 1
    %p90 = scmp.eq.s32.totalorder %s10, 1
    %p91 = scmp.ne.s32.totalorder %s86, %s88
    %p92 = scmp.eq.s32.totalorder %s10, 0
    %p93 = por %p91, %p92
    %p94 = scmp.ne.s32.totalorder %s86, %s88
    %p95 = scmp.eq.s32.totalorder %s15, 1
    %p96 = por %p94, %p95
    %p97 = scmp.ne.s32.totalorder %s88, %s89
    %p98 = scmp.eq.s32.totalorder %s15, 0
    %p99 = por %p97, %p98
    %p100 = scmp.ne.s32.totalorder %s88, %s89
    %p101 = scmp.eq.s32.totalorder %s16, 1
    %p102 = por %p100, %p101
    %p104 = scmp.ne.s32.totalorder %s89, %s103
    %p105 = scmp.eq.s32.totalorder %s16, 0
    %p106 = por %p104, %p105
    %s108 = sadd.s32 %s107, 1
    %p111 = scmp.eq.s32.totalorder %s10, 1
    %p112 = scmp.ne.s32.totalorder %s107, %s109
    %p113 = scmp.eq.s32.totalorder %s10, 0
    %p114 = por %p112, %p113
    %p115 = scmp.ne.s32.totalorder %s107, %s109
    %p116 = scmp.eq.s32.totalorder %s15, 1
    %p117 = por %p115, %p116
    %p118 = scmp.ne.s32.totalorder %s109, %s110
    %p119 = scmp.eq.s32.totalorder %s15, 0
    %p120 = por %p118, %p119
    %p121 = scmp.ne.s32.totalorder %s109, %s110
    %p122 = scmp.eq.s32.totalorder %s16, 1
    %p123 = por %p121, %p122
    %p125 = scmp.ne.s32.totalorder %s110, %s124
    %p126 = scmp.eq.s32.totalorder %s16, 0
    %p127 = por %p125, %p126
    %p128 = scmp.le.s32.totalorder 1, %s10
    %p129 = scmp.lt.s32.totalorder %s10, 3
    %p130 = pnand %p128, %p129
    %p131 = pneg %p130
    // Predicated region
    $region9: #{dqn_forward.3} parent=5 // pred_check
      _
    $region10: #{dqn_forward.3} parent=5 // pred_check_branch
      %133 = sbr.rel (%p130) target = $region12
    $region11: #{dqn_forward.3} parent=5 // pred_region
      %s134 = ssub.s32 %s10, 1
      // Predicated region
      $region13: #{dqn_forward.3} parent=11 // pred_check
        %p135 = pneg %p57
      $region14: #{dqn_forward.3} parent=11 // pred_check_branch
        %137 = sbr.rel (%p135) target = $region16
      $region15: #{dqn_forward.3} parent=11 // pred_region
        _
      $region16: #{dqn_forward.3} parent=11 // pred_fallthru
        _
      // Predicated region
      $region17: #{dqn_forward.3} parent=11 // pred_check
        %p138 = pneg %p78
      $region18: #{dqn_forward.3} parent=11 // pred_check_branch
        %140 = sbr.rel (%p138) target = $region20
      $region19: #{dqn_forward.3} parent=11 // pred_region
        _
      $region20: #{dqn_forward.3} parent=11 // pred_fallthru
        _
      // Predicated region
      $region21: #{dqn_forward.3} parent=11 // pred_check
        %p141 = pneg %p99
      $region22: #{dqn_forward.3} parent=11 // pred_check_branch
        %143 = sbr.rel (%p141) target = $region24
      $region23: #{dqn_forward.3} parent=11 // pred_region
        _
      $region24: #{dqn_forward.3} parent=11 // pred_fallthru
        _
    $region12: #{dqn_forward.3} parent=5 // pred_fallthru
      _
    %p144 = scmp.lt.s32.totalorder %s10, 2
    // Predicated region
    $region25: #{dqn_forward.3} parent=5 // pred_check
      %p145 = pneg %p144
    $region26: #{dqn_forward.3} parent=5 // pred_check_branch
      %147 = sbr.rel (%p145) target = $region28
    $region27: #{dqn_forward.3} parent=5 // pred_region
      // Predicated region
      $region29: #{dqn_forward.3} parent=27 // pred_check
        %p148 = pneg %p30
      $region30: #{dqn_forward.3} parent=27 // pred_check_branch
        %150 = sbr.rel (%p148) target = $region32
      $region31: #{dqn_forward.3} parent=27 // pred_region
        %s151 = smul.u32 128, %s10
        %s152 = ssub.s32 196, %s151
        %p153 = scmp.lt.s32.totalorder %s152, 128
        %s154 = scalar_select %p153, %s152, 128
        %s155 = smul.u32 64, %s154
        %p156 = scmp.lt.s32.totalorder %s151, 195
        %s157 = scalar_select %p156, %s151, 195
        %s158 = smul.addr %s157, 4
        %s159 = scalar_lea.vmem %s0, %s158
        %s160 = smul.u32 128, %s10
        %s161 = ssub.s32 196, %s160
        %p162 = scmp.lt.s32.totalorder %s161, 128
        %s163 = scalar_select %p162, %s161, 128
        %s164 = smul.u32 64, %s163
      $region32: #{dqn_forward.3} parent=27 // pred_fallthru
        _
    $region28: #{dqn_forward.3} parent=5 // pred_fallthru
      _
    %p165 = scmp.le.s32.totalorder 1, %s10
    %p166 = scmp.lt.s32.totalorder %s10, 3
    %p167 = pnand %p165, %p166
    %p168 = pneg %p167
    // Predicated region
    $region33: #{dqn_forward.3} parent=5 // pred_check
      _
    $region34: #{dqn_forward.3} parent=5 // pred_check_branch
      %170 = sbr.rel (%p167) target = $region36
    $region35: #{dqn_forward.3} parent=5 // pred_region
      %s171 = ssub.s32 %s10, 1
      %s172 = smul.u32 128, %s15
      %s173 = ssub.s32 196, %s172
      %p174 = scmp.lt.s32.totalorder %s173, 128
      %s175 = scalar_select %p174, %s173, 128
      %s176 = smul.u32 64, %s175
      %p177 = scmp.lt.s32.totalorder %s172, 195
      %s178 = scalar_select %p177, %s172, 195
      %s179 = smul.addr %s178, 4
      %s180 = scalar_lea.vmem %s0, %s179
      %p181 = pneg %p36
      %p182 = pneg %p33
      %p183 = pneg %p57
      %p184 = pneg %p54
      %p185 = pneg %p78
      %p186 = pneg %p75
      %p187 = pneg %p99
      %p188 = pneg %p96
      %p189 = pneg %p120
      %p190 = pneg %p117
      %s191 = smul.u32 128, %s15
      %s192 = ssub.s32 196, %s191
      %p193 = scmp.lt.s32.totalorder %s192, 128
      %s194 = scalar_select %p193, %s192, 128
      %s195 = smul.u32 64, %s194
      %p196 = scmp.lt.s32.totalorder %s191, 195
      %s197 = scalar_select %p196, %s191, 195
      %s198 = smul.addr %s197, 4
      %s199 = scalar_lea.vmem %s0, %s198
      %s200 = smul.u32 128, %s15
      %s201 = ssub.s32 196, %s200
      %p202 = scmp.lt.s32.totalorder %s201, 128
      %s203 = scalar_select %p202, %s201, 128
      %s204 = smul.u32 64, %s203
      %p206 = scmp.eq.s32.totalorder %s15, 0
      // Predicated region
      $region37: #{dqn_forward.3} parent=35 // pred_check
        %p207 = pneg %p206
      $region38: #{dqn_forward.3} parent=35 // pred_check_branch
        %209 = sbr.rel (%p207) target = $region40
      $region39: #{dqn_forward.3} parent=35 // pred_region
        %210 = vst [vmem:[#allocation2] sm:$0x1] 0.0
        %211 = vst [vmem:[#allocation3] sm:$0x1] 0.0
      $region40: #{dqn_forward.3} parent=35 // pred_fallthru
        _
      %v212 = vld [vmem:[%s199] sm:$0xf]
      %v213 = vld [vmem:[%s199 + $0x4] sm:$0xf]
      %v214 = vld [vmem:[%s199 + $0x8] sm:$0xf]
      %v215 = vld [vmem:[%s199 + $0xc] sm:$0xf]
      %v216 = vld [vmem:[%s199 + $0x10] sm:$0xf]
      %v217 = vld [vmem:[%s199 + $0x14] sm:$0xf]
      %v218 = vld [vmem:[%s199 + $0x18] sm:$0xf]
      %v219 = vld [vmem:[%s199 + $0x1c] sm:$0xf]
      %v220 = vld [vmem:[%s199 + $0x20] sm:$0xf]
      %v221 = vld [vmem:[%s199 + $0x24] sm:$0xf]
      %v222 = vld [vmem:[%s199 + $0x28] sm:$0xf]
      %v223 = vld [vmem:[%s199 + $0x2c] sm:$0xf]
      %v224 = vld [vmem:[%s199 + $0x30] sm:$0xf]
      %v225 = vld [vmem:[%s199 + $0x34] sm:$0xf]
      %v226 = vld [vmem:[%s199 + $0x38] sm:$0xf]
      %v227 = vld [vmem:[%s199 + $0x3c] sm:$0xf]
      %v228 = vld [vmem:[%s199 + $0x40] sm:$0xf]
      %v229 = vld [vmem:[%s199 + $0x44] sm:$0xf]
      %v230 = vld [vmem:[%s199 + $0x48] sm:$0xf]
      %v231 = vld [vmem:[%s199 + $0x4c] sm:$0xf]
      %v232 = vld [vmem:[%s199 + $0x50] sm:$0xf]
      %v233 = vld [vmem:[%s199 + $0x54] sm:$0xf]
      %v234 = vld [vmem:[%s199 + $0x58] sm:$0xf]
      %v235 = vld [vmem:[%s199 + $0x5c] sm:$0xf]
      %v236 = vld [vmem:[%s199 + $0x60] sm:$0xf]
      %v237 = vld [vmem:[%s199 + $0x64] sm:$0xf]
      %v238 = vld [vmem:[%s199 + $0x68] sm:$0xf]
      %v239 = vld [vmem:[%s199 + $0x6c] sm:$0xf]
      %v240 = vld [vmem:[%s199 + $0x70] sm:$0xf]
      %v241 = vld [vmem:[%s199 + $0x74] sm:$0xf]
      %v242 = vld [vmem:[%s199 + $0x78] sm:$0xf]
      %v243 = vld [vmem:[%s199 + $0x7c] sm:$0xf]
      %v244 = vld [vmem:[%s199 + $0x80] sm:$0xf]
      %v245 = vld [vmem:[%s199 + $0x84] sm:$0xf]
      %v246 = vld [vmem:[%s199 + $0x88] sm:$0xf]
      %v247 = vld [vmem:[%s199 + $0x8c] sm:$0xf]
      %v248 = vld [vmem:[%s199 + $0x90] sm:$0xf]
      %v249 = vld [vmem:[%s199 + $0x94] sm:$0xf]
      %v250 = vld [vmem:[%s199 + $0x98] sm:$0xf]
      %v251 = vld [vmem:[%s199 + $0x9c] sm:$0xf]
      %v252 = vld [vmem:[%s199 + $0xa0] sm:$0xf]
      %v253 = vld [vmem:[%s199 + $0xa4] sm:$0xf]
      %v254 = vld [vmem:[%s199 + $0xa8] sm:$0xf]
      %v255 = vld [vmem:[%s199 + $0xac] sm:$0xf]
      %v256 = vld [vmem:[%s199 + $0xb0] sm:$0xf]
      %v257 = vld [vmem:[%s199 + $0xb4] sm:$0xf]
      %v258 = vld [vmem:[%s199 + $0xb8] sm:$0xf]
      %v259 = vld [vmem:[%s199 + $0xbc] sm:$0xf]
      %v260 = vld [vmem:[%s199 + $0xc0] sm:$0xf]
      %v261 = vld [vmem:[%s199 + $0xc4] sm:$0xf]
      %v262 = vld [vmem:[%s199 + $0xc8] sm:$0xf]
      %v263 = vld [vmem:[%s199 + $0xcc] sm:$0xf]
      %v264 = vld [vmem:[%s199 + $0xd0] sm:$0xf]
      %v265 = vld [vmem:[%s199 + $0xd4] sm:$0xf]
      %v266 = vld [vmem:[%s199 + $0xd8] sm:$0xf]
      %v267 = vld [vmem:[%s199 + $0xdc] sm:$0xf]
      %v268 = vld [vmem:[%s199 + $0xe0] sm:$0xf]
      %v269 = vld [vmem:[%s199 + $0xe4] sm:$0xf]
      %v270 = vld [vmem:[%s199 + $0xe8] sm:$0xf]
      %v271 = vld [vmem:[%s199 + $0xec] sm:$0xf]
      %v272 = vld [vmem:[%s199 + $0xf0] sm:$0xf]
      %v273 = vld [vmem:[%s199 + $0xf4] sm:$0xf]
      %v274 = vld [vmem:[%s199 + $0xf8] sm:$0xf]
      %v275 = vld [vmem:[%s199 + $0xfc] sm:$0xf]
      %v276 = vld [vmem:[%s199 + $0x100] sm:$0xf]
      %v277 = vld [vmem:[%s199 + $0x104] sm:$0xf]
      %v278 = vld [vmem:[%s199 + $0x108] sm:$0xf]
      %v279 = vld [vmem:[%s199 + $0x10c] sm:$0xf]
      %v280 = vld [vmem:[%s199 + $0x110] sm:$0xf]
      %v281 = vld [vmem:[%s199 + $0x114] sm:$0xf]
      %v282 = vld [vmem:[%s199 + $0x118] sm:$0xf]
      %v283 = vld [vmem:[%s199 + $0x11c] sm:$0xf]
      %v284 = vld [vmem:[%s199 + $0x120] sm:$0xf]
      %v285 = vld [vmem:[%s199 + $0x124] sm:$0xf]
      %v286 = vld [vmem:[%s199 + $0x128] sm:$0xf]
      %v287 = vld [vmem:[%s199 + $0x12c] sm:$0xf]
      %v288 = vld [vmem:[%s199 + $0x130] sm:$0xf]
      %v289 = vld [vmem:[%s199 + $0x134] sm:$0xf]
      %v290 = vld [vmem:[%s199 + $0x138] sm:$0xf]
      %v291 = vld [vmem:[%s199 + $0x13c] sm:$0xf]
      %v292 = vld [vmem:[%s199 + $0x140] sm:$0xf]
      %v293 = vld [vmem:[%s199 + $0x144] sm:$0xf]
      %v294 = vld [vmem:[%s199 + $0x148] sm:$0xf]
      %v295 = vld [vmem:[%s199 + $0x14c] sm:$0xf]
      %v296 = vld [vmem:[%s199 + $0x150] sm:$0xf]
      %v297 = vld [vmem:[%s199 + $0x154] sm:$0xf]
      %v298 = vld [vmem:[%s199 + $0x158] sm:$0xf]
      %v299 = vld [vmem:[%s199 + $0x15c] sm:$0xf]
      %v300 = vld [vmem:[%s199 + $0x160] sm:$0xf]
      %v301 = vld [vmem:[%s199 + $0x164] sm:$0xf]
      %v302 = vld [vmem:[%s199 + $0x168] sm:$0xf]
      %v303 = vld [vmem:[%s199 + $0x16c] sm:$0xf]
      %v304 = vld [vmem:[%s199 + $0x170] sm:$0xf]
      %v305 = vld [vmem:[%s199 + $0x174] sm:$0xf]
      %v306 = vld [vmem:[%s199 + $0x178] sm:$0xf]
      %v307 = vld [vmem:[%s199 + $0x17c] sm:$0xf]
      %v308 = vld [vmem:[%s199 + $0x180] sm:$0xf]
      %v309 = vld [vmem:[%s199 + $0x184] sm:$0xf]
      %v310 = vld [vmem:[%s199 + $0x188] sm:$0xf]
      %v311 = vld [vmem:[%s199 + $0x18c] sm:$0xf]
      %v312 = vld [vmem:[%s199 + $0x190] sm:$0xf]
      %v313 = vld [vmem:[%s199 + $0x194] sm:$0xf]
      %v314 = vld [vmem:[%s199 + $0x198] sm:$0xf]
      %v315 = vld [vmem:[%s199 + $0x19c] sm:$0xf]
      %v316 = vld [vmem:[%s199 + $0x1a0] sm:$0xf]
      %v317 = vld [vmem:[%s199 + $0x1a4] sm:$0xf]
      %v318 = vld [vmem:[%s199 + $0x1a8] sm:$0xf]
      %v319 = vld [vmem:[%s199 + $0x1ac] sm:$0xf]
      %v320 = vld [vmem:[%s199 + $0x1b0] sm:$0xf]
      %v321 = vld [vmem:[%s199 + $0x1b4] sm:$0xf]
      %v322 = vld [vmem:[%s199 + $0x1b8] sm:$0xf]
      %v323 = vld [vmem:[%s199 + $0x1bc] sm:$0xf]
      %v324 = vld [vmem:[%s199 + $0x1c0] sm:$0xf]
      %v325 = vld [vmem:[%s199 + $0x1c4] sm:$0xf]
      %v326 = vld [vmem:[%s199 + $0x1c8] sm:$0xf]
      %v327 = vld [vmem:[%s199 + $0x1cc] sm:$0xf]
      %v328 = vld [vmem:[%s199 + $0x1d0] sm:$0xf]
      %v329 = vld [vmem:[%s199 + $0x1d4] sm:$0xf]
      %v330 = vld [vmem:[%s199 + $0x1d8] sm:$0xf]
      %v331 = vld [vmem:[%s199 + $0x1dc] sm:$0xf]
      %v332 = vld [vmem:[%s199 + $0x1e0] sm:$0xf]
      %v333 = vld [vmem:[%s199 + $0x1e4] sm:$0xf]
      %v334 = vld [vmem:[%s199 + $0x1e8] sm:$0xf]
      %v335 = vld [vmem:[%s199 + $0x1ec] sm:$0xf]
      %v336 = vld [vmem:[%s199 + $0x1f0] sm:$0xf]
      %v337 = vld [vmem:[%s199 + $0x1f4] sm:$0xf]
      %v338 = vld [vmem:[%s199 + $0x1f8] sm:$0xf]
      %v339 = vld [vmem:[%s199 + $0x1fc] sm:$0xf]
      %v340 = vld [vmem:[%s1] sm:$0xf]
      %v341 = vld [vmem:[%s1 + $0x4] sm:$0xf]
      %v342 = vld [vmem:[%s1 + $0x8] sm:$0xf]
      %v343 = vld [vmem:[%s1 + $0xc] sm:$0xf]
      %v344 = vld [vmem:[%s1 + $0x10] sm:$0xf]
      %v345 = vld [vmem:[%s1 + $0x14] sm:$0xf]
      %v346 = vld [vmem:[%s1 + $0x18] sm:$0xf]
      %v347 = vld [vmem:[%s1 + $0x1c] sm:$0xf]
      %v348 = vld [vmem:[%s1 + $0x20] sm:$0xf]
      %v349 = vld [vmem:[%s1 + $0x24] sm:$0x3]
      %v478 = vunpack.c.l.b16 %v212
      %v479 = vunpack.c.l.b16 %v213
      %v480 = vunpack.c.l.b16 %v214
      %v481 = vunpack.c.l.b16 %v215
      %v482 = vunpack.c.l.b16 %v216
      %v483 = vunpack.c.l.b16 %v217
      %v484 = vunpack.c.l.b16 %v218
      %v485 = vunpack.c.l.b16 %v219
      %v486 = vunpack.c.l.b16 %v220
      %v487 = vunpack.c.l.b16 %v221
      %v488 = vunpack.c.l.b16 %v222
      %v489 = vunpack.c.l.b16 %v223
      %v490 = vunpack.c.l.b16 %v224
      %v491 = vunpack.c.l.b16 %v225
      %v492 = vunpack.c.l.b16 %v226
      %v493 = vunpack.c.l.b16 %v227
      %v494 = vunpack.c.l.b16 %v228
      %v495 = vunpack.c.l.b16 %v229
      %v496 = vunpack.c.l.b16 %v230
      %v497 = vunpack.c.l.b16 %v231
      %v498 = vunpack.c.l.b16 %v232
      %v499 = vunpack.c.l.b16 %v233
      %v500 = vunpack.c.l.b16 %v234
      %v501 = vunpack.c.l.b16 %v235
      %v502 = vunpack.c.l.b16 %v236
      %v503 = vunpack.c.l.b16 %v237
      %v504 = vunpack.c.l.b16 %v238
      %v505 = vunpack.c.l.b16 %v239
      %v506 = vunpack.c.l.b16 %v240
      %v507 = vunpack.c.l.b16 %v241
      %v508 = vunpack.c.l.b16 %v242
      %v509 = vunpack.c.l.b16 %v243
      %v510 = vunpack.c.l.b16 %v244
      %v511 = vunpack.c.l.b16 %v245
      %v512 = vunpack.c.l.b16 %v246
      %v513 = vunpack.c.l.b16 %v247
      %v514 = vunpack.c.l.b16 %v248
      %v515 = vunpack.c.l.b16 %v249
      %v516 = vunpack.c.l.b16 %v250
      %v517 = vunpack.c.l.b16 %v251
      %v518 = vunpack.c.l.b16 %v252
      %v519 = vunpack.c.l.b16 %v253
      %v520 = vunpack.c.l.b16 %v254
      %v521 = vunpack.c.l.b16 %v255
      %v522 = vunpack.c.l.b16 %v256
      %v523 = vunpack.c.l.b16 %v257
      %v524 = vunpack.c.l.b16 %v258
      %v525 = vunpack.c.l.b16 %v259
      %v526 = vunpack.c.l.b16 %v260
      %v527 = vunpack.c.l.b16 %v261
      %v528 = vunpack.c.l.b16 %v262
      %v529 = vunpack.c.l.b16 %v263
      %v530 = vunpack.c.l.b16 %v264
      %v531 = vunpack.c.l.b16 %v265
      %v532 = vunpack.c.l.b16 %v266
      %v533 = vunpack.c.l.b16 %v267
      %v534 = vunpack.c.l.b16 %v268
      %v535 = vunpack.c.l.b16 %v269
      %v536 = vunpack.c.l.b16 %v270
      %v537 = vunpack.c.l.b16 %v271
      %v538 = vunpack.c.l.b16 %v272
      %v539 = vunpack.c.l.b16 %v273
      %v540 = vunpack.c.l.b16 %v274
      %v541 = vunpack.c.l.b16 %v275
      %v542 = vunpack.c.l.b16 %v276
      %v543 = vunpack.c.l.b16 %v277
      %v544 = vunpack.c.l.b16 %v278
      %v545 = vunpack.c.l.b16 %v279
      %v546 = vunpack.c.l.b16 %v280
      %v547 = vunpack.c.l.b16 %v281
      %v548 = vunpack.c.l.b16 %v282
      %v549 = vunpack.c.l.b16 %v283
      %v550 = vunpack.c.l.b16 %v284
      %v551 = vunpack.c.l.b16 %v285
      %v552 = vunpack.c.l.b16 %v286
      %v553 = vunpack.c.l.b16 %v287
      %v554 = vunpack.c.l.b16 %v288
      %v555 = vunpack.c.l.b16 %v289
      %v556 = vunpack.c.l.b16 %v290
      %v557 = vunpack.c.l.b16 %v291
      %v558 = vunpack.c.l.b16 %v292
      %v559 = vunpack.c.l.b16 %v293
      %v560 = vunpack.c.l.b16 %v294
      %v561 = vunpack.c.l.b16 %v295
      %v562 = vunpack.c.l.b16 %v296
      %v563 = vunpack.c.l.b16 %v297
      %v564 = vunpack.c.l.b16 %v298
      %v565 = vunpack.c.l.b16 %v299
      %v566 = vunpack.c.l.b16 %v300
      %v567 = vunpack.c.l.b16 %v301
      %v568 = vunpack.c.l.b16 %v302
      %v569 = vunpack.c.l.b16 %v303
      %v570 = vunpack.c.l.b16 %v304
      %v571 = vunpack.c.l.b16 %v305
      %v572 = vunpack.c.l.b16 %v306
      %v573 = vunpack.c.l.b16 %v307
      %v574 = vunpack.c.l.b16 %v308
      %v575 = vunpack.c.l.b16 %v309
      %v576 = vunpack.c.l.b16 %v310
      %v577 = vunpack.c.l.b16 %v311
      %v578 = vunpack.c.l.b16 %v312
      %v579 = vunpack.c.l.b16 %v313
      %v580 = vunpack.c.l.b16 %v314
      %v581 = vunpack.c.l.b16 %v315
      %v582 = vunpack.c.l.b16 %v316
      %v583 = vunpack.c.l.b16 %v317
      %v584 = vunpack.c.l.b16 %v318
      %v585 = vunpack.c.l.b16 %v319
      %v586 = vunpack.c.l.b16 %v320
      %v587 = vunpack.c.l.b16 %v321
      %v588 = vunpack.c.l.b16 %v322
      %v589 = vunpack.c.l.b16 %v323
      %v590 = vunpack.c.l.b16 %v324
      %v591 = vunpack.c.l.b16 %v325
      %v592 = vunpack.c.l.b16 %v326
      %v593 = vunpack.c.l.b16 %v327
      %v594 = vunpack.c.l.b16 %v328
      %v595 = vunpack.c.l.b16 %v329
      %v596 = vunpack.c.l.b16 %v330
      %v597 = vunpack.c.l.b16 %v331
      %v598 = vunpack.c.l.b16 %v332
      %v599 = vunpack.c.l.b16 %v333
      %v600 = vunpack.c.l.b16 %v334
      %v601 = vunpack.c.l.b16 %v335
      %v602 = vunpack.c.l.b16 %v336
      %v603 = vunpack.c.l.b16 %v337
      %v604 = vunpack.c.l.b16 %v338
      %v605 = vunpack.c.l.b16 %v339
      %v606 = vpack.c.b16 %v479, %v478
      %v607 = vpack.c.b16 %v481, %v480
      %v608 = vpack.c.b16 %v483, %v482
      %v609 = vpack.c.b16 %v485, %v484
      %v610 = vpack.c.b16 %v487, %v486
      %v611 = vpack.c.b16 %v489, %v488
      %v612 = vpack.c.b16 %v491, %v490
      %v613 = vpack.c.b16 %v493, %v492
      %v614 = vpack.c.b16 %v495, %v494
      %v615 = vpack.c.b16 %v497, %v496
      %v616 = vpack.c.b16 %v499, %v498
      %v617 = vpack.c.b16 %v501, %v500
      %v618 = vpack.c.b16 %v503, %v502
      %v619 = vpack.c.b16 %v505, %v504
      %v620 = vpack.c.b16 %v507, %v506
      %v621 = vpack.c.b16 %v509, %v508
      %v622 = vpack.c.b16 %v511, %v510
      %v623 = vpack.c.b16 %v513, %v512
      %v624 = vpack.c.b16 %v515, %v514
      %v625 = vpack.c.b16 %v517, %v516
      %v626 = vpack.c.b16 %v519, %v518
      %v627 = vpack.c.b16 %v521, %v520
      %v628 = vpack.c.b16 %v523, %v522
      %v629 = vpack.c.b16 %v525, %v524
      %v630 = vpack.c.b16 %v527, %v526
      %v631 = vpack.c.b16 %v529, %v528
      %v632 = vpack.c.b16 %v531, %v530
      %v633 = vpack.c.b16 %v533, %v532
      %v634 = vpack.c.b16 %v535, %v534
      %v635 = vpack.c.b16 %v537, %v536
      %v636 = vpack.c.b16 %v539, %v538
      %v637 = vpack.c.b16 %v541, %v540
      %v638 = vpack.c.b16 %v543, %v542
      %v639 = vpack.c.b16 %v545, %v544
      %v640 = vpack.c.b16 %v547, %v546
      %v641 = vpack.c.b16 %v549, %v548
      %v642 = vpack.c.b16 %v551, %v550
      %v643 = vpack.c.b16 %v553, %v552
      %v644 = vpack.c.b16 %v555, %v554
      %v645 = vpack.c.b16 %v557, %v556
      %v646 = vpack.c.b16 %v559, %v558
      %v647 = vpack.c.b16 %v561, %v560
      %v648 = vpack.c.b16 %v563, %v562
      %v649 = vpack.c.b16 %v565, %v564
      %v650 = vpack.c.b16 %v567, %v566
      %v651 = vpack.c.b16 %v569, %v568
      %v652 = vpack.c.b16 %v571, %v570
      %v653 = vpack.c.b16 %v573, %v572
      %v654 = vpack.c.b16 %v575, %v574
      %v655 = vpack.c.b16 %v577, %v576
      %v656 = vpack.c.b16 %v579, %v578
      %v657 = vpack.c.b16 %v581, %v580
      %v658 = vpack.c.b16 %v583, %v582
      %v659 = vpack.c.b16 %v585, %v584
      %v660 = vpack.c.b16 %v587, %v586
      %v661 = vpack.c.b16 %v589, %v588
      %v662 = vpack.c.b16 %v591, %v590
      %v663 = vpack.c.b16 %v593, %v592
      %v664 = vpack.c.b16 %v595, %v594
      %v665 = vpack.c.b16 %v597, %v596
      %v666 = vpack.c.b16 %v599, %v598
      %v667 = vpack.c.b16 %v601, %v600
      %v668 = vpack.c.b16 %v603, %v602
      %v669 = vpack.c.b16 %v605, %v604
      %v680 = vunpack.c.l.b16 %v340
      %v681 = vunpack.c.l.b16 %v341
      %v682 = vunpack.c.l.b16 %v342
      %v683 = vunpack.c.l.b16 %v343
      %v684 = vunpack.c.l.b16 %v344
      %v685 = vunpack.c.l.b16 %v345
      %v686 = vunpack.c.l.b16 %v346
      %v687 = vunpack.c.l.b16 %v347
      %v688 = vunpack.c.l.b16 %v348
      %v689 = vunpack.c.l.b16 %v349
      %v690 = vpack.c.b16 %v681, %v680
      %v691 = vpack.c.b16 %v683, %v682
      %v692 = vpack.c.b16 %v685, %v684
      %v693 = vpack.c.b16 %v687, %v686
      %v694 = vpack.c.b16 %v689, %v688
      %vm699 = vcmask 613376
      %v701 = vsel %vm699, %v606, 0
      %v704 = vsel %vm699, %v607, 0
      %v707 = vsel %vm699, %v608, 0
      %v710 = vsel %vm699, %v609, 0
      %v713 = vsel %vm699, %v610, 0
      %v716 = vsel %vm699, %v611, 0
      %v719 = vsel %vm699, %v612, 0
      %v722 = vsel %vm699, %v613, 0
      %v725 = vsel %vm699, %v614, 0
      %v728 = vsel %vm699, %v615, 0
      %v731 = vsel %vm699, %v616, 0
      %v734 = vsel %vm699, %v617, 0
      %v737 = vsel %vm699, %v618, 0
      %v740 = vsel %vm699, %v619, 0
      %v743 = vsel %vm699, %v620, 0
      %v746 = vsel %vm699, %v621, 0
      %v749 = vsel %vm699, %v622, 0
      %v752 = vsel %vm699, %v623, 0
      %v755 = vsel %vm699, %v624, 0
      %v758 = vsel %vm699, %v625, 0
      %v761 = vsel %vm699, %v626, 0
      %v764 = vsel %vm699, %v627, 0
      %v767 = vsel %vm699, %v628, 0
      %v770 = vsel %vm699, %v629, 0
      %v773 = vsel %vm699, %v630, 0
      %v776 = vsel %vm699, %v631, 0
      %v779 = vsel %vm699, %v632, 0
      %v782 = vsel %vm699, %v633, 0
      %v785 = vsel %vm699, %v634, 0
      %v788 = vsel %vm699, %v635, 0
      %v791 = vsel %vm699, %v636, 0
      %v794 = vsel %vm699, %v637, 0
      %v797 = vsel %vm699, %v638, 0
      %v800 = vsel %vm699, %v639, 0
      %v803 = vsel %vm699, %v640, 0
      %v806 = vsel %vm699, %v641, 0
      %v809 = vsel %vm699, %v642, 0
      %v812 = vsel %vm699, %v643, 0
      %v815 = vsel %vm699, %v644, 0
      %v818 = vsel %vm699, %v645, 0
      %v821 = vsel %vm699, %v646, 0
      %v824 = vsel %vm699, %v647, 0
      %v827 = vsel %vm699, %v648, 0
      %v830 = vsel %vm699, %v649, 0
      %v833 = vsel %vm699, %v650, 0
      %v836 = vsel %vm699, %v651, 0
      %v839 = vsel %vm699, %v652, 0
      %v842 = vsel %vm699, %v653, 0
      %v845 = vsel %vm699, %v654, 0
      %v848 = vsel %vm699, %v655, 0
      %v851 = vsel %vm699, %v656, 0
      %v854 = vsel %vm699, %v657, 0
      %v857 = vsel %vm699, %v658, 0
      %v860 = vsel %vm699, %v659, 0
      %v863 = vsel %vm699, %v660, 0
      %v866 = vsel %vm699, %v661, 0
      %v869 = vsel %vm699, %v662, 0
      %v872 = vsel %vm699, %v663, 0
      %v875 = vsel %vm699, %v664, 0
      %v878 = vsel %vm699, %v665, 0
      %v881 = vsel %vm699, %v666, 0
      %v884 = vsel %vm699, %v667, 0
      %v887 = vsel %vm699, %v668, 0
      %v890 = vsel %vm699, %v669, 0
      %vm892 = vcmask 1044480
      %vm893 = vcmask 1045504
      %v894 = vsel %vm892, 4294967295, 65535
      %v895 = vsel %vm893, %v894, 0
      %v897 = vand.u32 %v694, %v895
      %899 = vmatprep.subr.bf16.mxu0 0
      %900 = vmatpush1.bf16.msra.mxu0 0
      %901 = vmatprep.subr.bf16.mxu0 0
      %902 = vmatpush1.bf16.msra.mxu0 0
      %903 = vmatprep.subr.bf16.mxu0 0
      %904 = vmatpush1.bf16.msra.mxu0 0
      %905 = vmatprep.subr.bf16.mxu0 0
      %906 = vmatpush1.bf16.msra.mxu0 %v897
      %907 = vmatprep.subr.bf16.mxu0 0
      %908 = vmatpush1.bf16.msra.mxu0 %v693
      %909 = vmatprep.subr.bf16.mxu0 0
      %910 = vmatpush1.bf16.msra.mxu0 %v692
      %911 = vmatprep.subr.bf16.mxu0 0
      %912 = vmatpush1.bf16.msra.mxu0 %v691
      %913 = vmatprep.subr.bf16.mxu0 0
      %914 = vmatpush1.bf16.msra.mxu0 %v690
      %915 = vmatprep.subr.bf16.mxu0 0
      %916 = vmatpush2.bf16.msra.mxu0 0
      %917 = vmatprep.subr.bf16.mxu0 0
      %918 = vmatpush2.bf16.msra.mxu0 0
      %919 = vmatprep.subr.bf16.mxu0 0
      %920 = vmatpush2.bf16.msra.mxu0 0
      %921 = vmatprep.subr.bf16.mxu0 0
      %922 = vmatpush2.bf16.msra.mxu0 0
      %923 = vmatprep.subr.bf16.mxu0 0
      %924 = vmatpush2.bf16.msra.mxu0 0
      %925 = vmatprep.subr.bf16.mxu0 0
      %926 = vmatpush2.bf16.msra.mxu0 0
      %927 = vmatprep.subr.bf16.mxu0 0
      %928 = vmatpush2.bf16.msra.mxu0 0
      %929 = vmatprep.subr.bf16.mxu0 0
      %930 = vmatpush2.bf16.msra.mxu0 0
      %931 = vmatprep.mubr.bf16.mxu0 0
      %932 = vmatmul.mubr.bf16.gmra.mxu0 %v701
      %v933 = vpop.f32.mrf.mxu0
      %v934 = vadd.f32 0.0, %v933
      %v935 = vpop.f32.mrf.mxu0
      %v936 = vpop.f32.mrf.mxu0
      %v937 = vadd.f32 0.0, %v936
      %v938 = vpop.f32.mrf.mxu0
      %939 = vmatprep.mubr.bf16.mxu0 0
      %940 = vmatmul.mubr.bf16.gmra.mxu0 %v704
      %v941 = vpop.f32.mrf.mxu0
      %v942 = vadd.f32 0.0, %v941
      %v943 = vpop.f32.mrf.mxu0
      %v944 = vpop.f32.mrf.mxu0
      %v945 = vadd.f32 0.0, %v944
      %v946 = vpop.f32.mrf.mxu0
      %947 = vmatprep.mubr.bf16.mxu0 0
      %948 = vmatmul.mubr.bf16.gmra.mxu0 %v707
      %v949 = vpop.f32.mrf.mxu0
      %v950 = vadd.f32 0.0, %v949
      %v951 = vpop.f32.mrf.mxu0
      %v952 = vpop.f32.mrf.mxu0
      %v953 = vadd.f32 0.0, %v952
      %v954 = vpop.f32.mrf.mxu0
      %955 = vmatprep.mubr.bf16.mxu0 0
      %956 = vmatmul.mubr.bf16.gmra.mxu0 %v710
      %v957 = vpop.f32.mrf.mxu0
      %v958 = vadd.f32 0.0, %v957
      %v959 = vpop.f32.mrf.mxu0
      %v960 = vpop.f32.mrf.mxu0
      %v961 = vadd.f32 0.0, %v960
      %v962 = vpop.f32.mrf.mxu0
      %963 = vmatprep.mubr.bf16.mxu0 0
      %964 = vmatmul.mubr.bf16.gmra.mxu0 %v713
      %v965 = vpop.f32.mrf.mxu0
      %v966 = vadd.f32 0.0, %v965
      %v967 = vpop.f32.mrf.mxu0
      %v968 = vpop.f32.mrf.mxu0
      %v969 = vadd.f32 0.0, %v968
      %v970 = vpop.f32.mrf.mxu0
      %971 = vmatprep.mubr.bf16.mxu0 0
      %972 = vmatmul.mubr.bf16.gmra.mxu0 %v716
      %v973 = vpop.f32.mrf.mxu0
      %v974 = vadd.f32 0.0, %v973
      %v975 = vpop.f32.mrf.mxu0
      %v976 = vpop.f32.mrf.mxu0
      %v977 = vadd.f32 0.0, %v976
      %v978 = vpop.f32.mrf.mxu0
      %979 = vmatprep.mubr.bf16.mxu0 0
      %980 = vmatmul.mubr.bf16.gmra.mxu0 %v719
      %v981 = vpop.f32.mrf.mxu0
      %v982 = vadd.f32 0.0, %v981
      %v983 = vpop.f32.mrf.mxu0
      %v984 = vpop.f32.mrf.mxu0
      %v985 = vadd.f32 0.0, %v984
      %v986 = vpop.f32.mrf.mxu0
      %987 = vmatprep.mubr.bf16.mxu0 0
      %988 = vmatmul.mubr.bf16.gmra.mxu0 %v722
      %v989 = vpop.f32.mrf.mxu0
      %v990 = vadd.f32 0.0, %v989
      %v991 = vpop.f32.mrf.mxu0
      %v992 = vpop.f32.mrf.mxu0
      %v993 = vadd.f32 0.0, %v992
      %v994 = vpop.f32.mrf.mxu0
      %995 = vmatprep.mubr.bf16.mxu0 0
      %996 = vmatmul.mubr.bf16.gmra.mxu0 %v725
      %v997 = vpop.f32.mrf.mxu0
      %v998 = vadd.f32 0.0, %v997
      %v999 = vpop.f32.mrf.mxu0
      %v1000 = vpop.f32.mrf.mxu0
      %v1001 = vadd.f32 0.0, %v1000
      %v1002 = vpop.f32.mrf.mxu0
      %1003 = vmatprep.mubr.bf16.mxu0 0
      %1004 = vmatmul.mubr.bf16.gmra.mxu0 %v728
      %v1005 = vpop.f32.mrf.mxu0
      %v1006 = vadd.f32 0.0, %v1005
      %v1007 = vpop.f32.mrf.mxu0
      %v1008 = vpop.f32.mrf.mxu0
      %v1009 = vadd.f32 0.0, %v1008
      %v1010 = vpop.f32.mrf.mxu0
      %1011 = vmatprep.mubr.bf16.mxu0 0
      %1012 = vmatmul.mubr.bf16.gmra.mxu0 %v731
      %v1013 = vpop.f32.mrf.mxu0
      %v1014 = vadd.f32 0.0, %v1013
      %v1015 = vpop.f32.mrf.mxu0
      %v1016 = vpop.f32.mrf.mxu0
      %v1017 = vadd.f32 0.0, %v1016
      %v1018 = vpop.f32.mrf.mxu0
      %1019 = vmatprep.mubr.bf16.mxu0 0
      %1020 = vmatmul.mubr.bf16.gmra.mxu0 %v734
      %v1021 = vpop.f32.mrf.mxu0
      %v1022 = vadd.f32 0.0, %v1021
      %v1023 = vpop.f32.mrf.mxu0
      %v1024 = vpop.f32.mrf.mxu0
      %v1025 = vadd.f32 0.0, %v1024
      %v1026 = vpop.f32.mrf.mxu0
      %1027 = vmatprep.mubr.bf16.mxu0 0
      %1028 = vmatmul.mubr.bf16.gmra.mxu0 %v737
      %v1029 = vpop.f32.mrf.mxu0
      %v1030 = vadd.f32 0.0, %v1029
      %v1031 = vpop.f32.mrf.mxu0
      %v1032 = vpop.f32.mrf.mxu0
      %v1033 = vadd.f32 0.0, %v1032
      %v1034 = vpop.f32.mrf.mxu0
      %1035 = vmatprep.mubr.bf16.mxu0 0
      %1036 = vmatmul.mubr.bf16.gmra.mxu0 %v740
      %v1037 = vpop.f32.mrf.mxu0
      %v1038 = vadd.f32 0.0, %v1037
      %v1039 = vpop.f32.mrf.mxu0
      %v1040 = vpop.f32.mrf.mxu0
      %v1041 = vadd.f32 0.0, %v1040
      %v1042 = vpop.f32.mrf.mxu0
      %1043 = vmatprep.mubr.bf16.mxu0 0
      %1044 = vmatmul.mubr.bf16.gmra.mxu0 %v743
      %v1045 = vpop.f32.mrf.mxu0
      %v1046 = vadd.f32 0.0, %v1045
      %v1047 = vpop.f32.mrf.mxu0
      %v1048 = vpop.f32.mrf.mxu0
      %v1049 = vadd.f32 0.0, %v1048
      %v1050 = vpop.f32.mrf.mxu0
      %1051 = vmatprep.mubr.bf16.mxu0 0
      %1052 = vmatmul.mubr.bf16.gmra.mxu0 %v746
      %v1053 = vpop.f32.mrf.mxu0
      %v1054 = vadd.f32 0.0, %v1053
      %v1055 = vpop.f32.mrf.mxu0
      %v1056 = vpop.f32.mrf.mxu0
      %v1057 = vadd.f32 0.0, %v1056
      %v1058 = vpop.f32.mrf.mxu0
      %1059 = vmatprep.mubr.bf16.mxu0 0
      %1060 = vmatmul.mubr.bf16.gmra.mxu0 %v749
      %v1061 = vpop.f32.mrf.mxu0
      %v1062 = vadd.f32 0.0, %v1061
      %v1063 = vpop.f32.mrf.mxu0
      %v1064 = vpop.f32.mrf.mxu0
      %v1065 = vadd.f32 0.0, %v1064
      %v1066 = vpop.f32.mrf.mxu0
      %1067 = vmatprep.mubr.bf16.mxu0 0
      %1068 = vmatmul.mubr.bf16.gmra.mxu0 %v752
      %v1069 = vpop.f32.mrf.mxu0
      %v1070 = vadd.f32 0.0, %v1069
      %v1071 = vpop.f32.mrf.mxu0
      %v1072 = vpop.f32.mrf.mxu0
      %v1073 = vadd.f32 0.0, %v1072
      %v1074 = vpop.f32.mrf.mxu0
      %1075 = vmatprep.mubr.bf16.mxu0 0
      %1076 = vmatmul.mubr.bf16.gmra.mxu0 %v755
      %v1077 = vpop.f32.mrf.mxu0
      %v1078 = vadd.f32 0.0, %v1077
      %v1079 = vpop.f32.mrf.mxu0
      %v1080 = vpop.f32.mrf.mxu0
      %v1081 = vadd.f32 0.0, %v1080
      %v1082 = vpop.f32.mrf.mxu0
      %1083 = vmatprep.mubr.bf16.mxu0 0
      %1084 = vmatmul.mubr.bf16.gmra.mxu0 %v758
      %v1085 = vpop.f32.mrf.mxu0
      %v1086 = vadd.f32 0.0, %v1085
      %v1087 = vpop.f32.mrf.mxu0
      %v1088 = vpop.f32.mrf.mxu0
      %v1089 = vadd.f32 0.0, %v1088
      %v1090 = vpop.f32.mrf.mxu0
      %1091 = vmatprep.mubr.bf16.mxu0 0
      %1092 = vmatmul.mubr.bf16.gmra.mxu0 %v761
      %v1093 = vpop.f32.mrf.mxu0
      %v1094 = vadd.f32 0.0, %v1093
      %v1095 = vpop.f32.mrf.mxu0
      %v1096 = vpop.f32.mrf.mxu0
      %v1097 = vadd.f32 0.0, %v1096
      %v1098 = vpop.f32.mrf.mxu0
      %1099 = vmatprep.mubr.bf16.mxu0 0
      %1100 = vmatmul.mubr.bf16.gmra.mxu0 %v764
      %v1101 = vpop.f32.mrf.mxu0
      %v1102 = vadd.f32 0.0, %v1101
      %v1103 = vpop.f32.mrf.mxu0
      %v1104 = vpop.f32.mrf.mxu0
      %v1105 = vadd.f32 0.0, %v1104
      %v1106 = vpop.f32.mrf.mxu0
      %1107 = vmatprep.mubr.bf16.mxu0 0
      %1108 = vmatmul.mubr.bf16.gmra.mxu0 %v767
      %v1109 = vpop.f32.mrf.mxu0
      %v1110 = vadd.f32 0.0, %v1109
      %v1111 = vpop.f32.mrf.mxu0
      %v1112 = vpop.f32.mrf.mxu0
      %v1113 = vadd.f32 0.0, %v1112
      %v1114 = vpop.f32.mrf.mxu0
      %1115 = vmatprep.mubr.bf16.mxu0 0
      %1116 = vmatmul.mubr.bf16.gmra.mxu0 %v770
      %v1117 = vpop.f32.mrf.mxu0
      %v1118 = vadd.f32 0.0, %v1117
      %v1119 = vpop.f32.mrf.mxu0
      %v1120 = vpop.f32.mrf.mxu0
      %v1121 = vadd.f32 0.0, %v1120
      %v1122 = vpop.f32.mrf.mxu0
      %1123 = vmatprep.mubr.bf16.mxu0 0
      %1124 = vmatmul.mubr.bf16.gmra.mxu0 %v773
      %v1125 = vpop.f32.mrf.mxu0
      %v1126 = vadd.f32 0.0, %v1125
      %v1127 = vpop.f32.mrf.mxu0
      %v1128 = vpop.f32.mrf.mxu0
      %v1129 = vadd.f32 0.0, %v1128
      %v1130 = vpop.f32.mrf.mxu0
      %1131 = vmatprep.mubr.bf16.mxu0 0
      %1132 = vmatmul.mubr.bf16.gmra.mxu0 %v776
      %v1133 = vpop.f32.mrf.mxu0
      %v1134 = vadd.f32 0.0, %v1133
      %v1135 = vpop.f32.mrf.mxu0
      %v1136 = vpop.f32.mrf.mxu0
      %v1137 = vadd.f32 0.0, %v1136
      %v1138 = vpop.f32.mrf.mxu0
      %1139 = vmatprep.mubr.bf16.mxu0 0
      %1140 = vmatmul.mubr.bf16.gmra.mxu0 %v779
      %v1141 = vpop.f32.mrf.mxu0
      %v1142 = vadd.f32 0.0, %v1141
      %v1143 = vpop.f32.mrf.mxu0
      %v1144 = vpop.f32.mrf.mxu0
      %v1145 = vadd.f32 0.0, %v1144
      %v1146 = vpop.f32.mrf.mxu0
      %1147 = vmatprep.mubr.bf16.mxu0 0
      %1148 = vmatmul.mubr.bf16.gmra.mxu0 %v782
      %v1149 = vpop.f32.mrf.mxu0
      %v1150 = vadd.f32 0.0, %v1149
      %v1151 = vpop.f32.mrf.mxu0
      %v1152 = vpop.f32.mrf.mxu0
      %v1153 = vadd.f32 0.0, %v1152
      %v1154 = vpop.f32.mrf.mxu0
      %1155 = vmatprep.mubr.bf16.mxu0 0
      %1156 = vmatmul.mubr.bf16.gmra.mxu0 %v785
      %v1157 = vpop.f32.mrf.mxu0
      %v1158 = vadd.f32 0.0, %v1157
      %v1159 = vpop.f32.mrf.mxu0
      %v1160 = vpop.f32.mrf.mxu0
      %v1161 = vadd.f32 0.0, %v1160
      %v1162 = vpop.f32.mrf.mxu0
      %1163 = vmatprep.mubr.bf16.mxu0 0
      %1164 = vmatmul.mubr.bf16.gmra.mxu0 %v788
      %v1165 = vpop.f32.mrf.mxu0
      %v1166 = vadd.f32 0.0, %v1165
      %v1167 = vpop.f32.mrf.mxu0
      %v1168 = vpop.f32.mrf.mxu0
      %v1169 = vadd.f32 0.0, %v1168
      %v1170 = vpop.f32.mrf.mxu0
      %1171 = vmatprep.mubr.bf16.mxu0 0
      %1172 = vmatmul.mubr.bf16.gmra.mxu0 %v791
      %v1173 = vpop.f32.mrf.mxu0
      %v1174 = vadd.f32 0.0, %v1173
      %v1175 = vpop.f32.mrf.mxu0
      %v1176 = vpop.f32.mrf.mxu0
      %v1177 = vadd.f32 0.0, %v1176
      %v1178 = vpop.f32.mrf.mxu0
      %1179 = vmatprep.mubr.bf16.mxu0 0
      %1180 = vmatmul.mubr.bf16.gmra.mxu0 %v794
      %v1181 = vpop.f32.mrf.mxu0
      %v1182 = vadd.f32 0.0, %v1181
      %v1183 = vpop.f32.mrf.mxu0
      %v1184 = vpop.f32.mrf.mxu0
      %v1185 = vadd.f32 0.0, %v1184
      %v1186 = vpop.f32.mrf.mxu0
      %1187 = vmatprep.mubr.bf16.mxu0 0
      %1188 = vmatmul.mubr.bf16.gmra.mxu0 %v797
      %v1189 = vpop.f32.mrf.mxu0
      %v1190 = vadd.f32 0.0, %v1189
      %v1191 = vpop.f32.mrf.mxu0
      %v1192 = vpop.f32.mrf.mxu0
      %v1193 = vadd.f32 0.0, %v1192
      %v1194 = vpop.f32.mrf.mxu0
      %1195 = vmatprep.mubr.bf16.mxu0 0
      %1196 = vmatmul.mubr.bf16.gmra.mxu0 %v800
      %v1197 = vpop.f32.mrf.mxu0
      %v1198 = vadd.f32 0.0, %v1197
      %v1199 = vpop.f32.mrf.mxu0
      %v1200 = vpop.f32.mrf.mxu0
      %v1201 = vadd.f32 0.0, %v1200
      %v1202 = vpop.f32.mrf.mxu0
      %1203 = vmatprep.mubr.bf16.mxu0 0
      %1204 = vmatmul.mubr.bf16.gmra.mxu0 %v803
      %v1205 = vpop.f32.mrf.mxu0
      %v1206 = vadd.f32 0.0, %v1205
      %v1207 = vpop.f32.mrf.mxu0
      %v1208 = vpop.f32.mrf.mxu0
      %v1209 = vadd.f32 0.0, %v1208
      %v1210 = vpop.f32.mrf.mxu0
      %1211 = vmatprep.mubr.bf16.mxu0 0
      %1212 = vmatmul.mubr.bf16.gmra.mxu0 %v806
      %v1213 = vpop.f32.mrf.mxu0
      %v1214 = vadd.f32 0.0, %v1213
      %v1215 = vpop.f32.mrf.mxu0
      %v1216 = vpop.f32.mrf.mxu0
      %v1217 = vadd.f32 0.0, %v1216
      %v1218 = vpop.f32.mrf.mxu0
      %1219 = vmatprep.mubr.bf16.mxu0 0
      %1220 = vmatmul.mubr.bf16.gmra.mxu0 %v809
      %v1221 = vpop.f32.mrf.mxu0
      %v1222 = vadd.f32 0.0, %v1221
      %v1223 = vpop.f32.mrf.mxu0
      %v1224 = vpop.f32.mrf.mxu0
      %v1225 = vadd.f32 0.0, %v1224
      %v1226 = vpop.f32.mrf.mxu0
      %1227 = vmatprep.mubr.bf16.mxu0 0
      %1228 = vmatmul.mubr.bf16.gmra.mxu0 %v812
      %v1229 = vpop.f32.mrf.mxu0
      %v1230 = vadd.f32 0.0, %v1229
      %v1231 = vpop.f32.mrf.mxu0
      %v1232 = vpop.f32.mrf.mxu0
      %v1233 = vadd.f32 0.0, %v1232
      %v1234 = vpop.f32.mrf.mxu0
      %1235 = vmatprep.mubr.bf16.mxu0 0
      %1236 = vmatmul.mubr.bf16.gmra.mxu0 %v815
      %v1237 = vpop.f32.mrf.mxu0
      %v1238 = vadd.f32 0.0, %v1237
      %v1239 = vpop.f32.mrf.mxu0
      %v1240 = vpop.f32.mrf.mxu0
      %v1241 = vadd.f32 0.0, %v1240
      %v1242 = vpop.f32.mrf.mxu0
      %1243 = vmatprep.mubr.bf16.mxu0 0
      %1244 = vmatmul.mubr.bf16.gmra.mxu0 %v818
      %v1245 = vpop.f32.mrf.mxu0
      %v1246 = vadd.f32 0.0, %v1245
      %v1247 = vpop.f32.mrf.mxu0
      %v1248 = vpop.f32.mrf.mxu0
      %v1249 = vadd.f32 0.0, %v1248
      %v1250 = vpop.f32.mrf.mxu0
      %1251 = vmatprep.mubr.bf16.mxu0 0
      %1252 = vmatmul.mubr.bf16.gmra.mxu0 %v821
      %v1253 = vpop.f32.mrf.mxu0
      %v1254 = vadd.f32 0.0, %v1253
      %v1255 = vpop.f32.mrf.mxu0
      %v1256 = vpop.f32.mrf.mxu0
      %v1257 = vadd.f32 0.0, %v1256
      %v1258 = vpop.f32.mrf.mxu0
      %1259 = vmatprep.mubr.bf16.mxu0 0
      %1260 = vmatmul.mubr.bf16.gmra.mxu0 %v824
      %v1261 = vpop.f32.mrf.mxu0
      %v1262 = vadd.f32 0.0, %v1261
      %v1263 = vpop.f32.mrf.mxu0
      %v1264 = vpop.f32.mrf.mxu0
      %v1265 = vadd.f32 0.0, %v1264
      %v1266 = vpop.f32.mrf.mxu0
      %1267 = vmatprep.mubr.bf16.mxu0 0
      %1268 = vmatmul.mubr.bf16.gmra.mxu0 %v827
      %v1269 = vpop.f32.mrf.mxu0
      %v1270 = vadd.f32 0.0, %v1269
      %v1271 = vpop.f32.mrf.mxu0
      %v1272 = vpop.f32.mrf.mxu0
      %v1273 = vadd.f32 0.0, %v1272
      %v1274 = vpop.f32.mrf.mxu0
      %1275 = vmatprep.mubr.bf16.mxu0 0
      %1276 = vmatmul.mubr.bf16.gmra.mxu0 %v830
      %v1277 = vpop.f32.mrf.mxu0
      %v1278 = vadd.f32 0.0, %v1277
      %v1279 = vpop.f32.mrf.mxu0
      %v1280 = vpop.f32.mrf.mxu0
      %v1281 = vadd.f32 0.0, %v1280
      %v1282 = vpop.f32.mrf.mxu0
      %1283 = vmatprep.mubr.bf16.mxu0 0
      %1284 = vmatmul.mubr.bf16.gmra.mxu0 %v833
      %v1285 = vpop.f32.mrf.mxu0
      %v1286 = vadd.f32 0.0, %v1285
      %v1287 = vpop.f32.mrf.mxu0
      %v1288 = vpop.f32.mrf.mxu0
      %v1289 = vadd.f32 0.0, %v1288
      %v1290 = vpop.f32.mrf.mxu0
      %1291 = vmatprep.mubr.bf16.mxu0 0
      %1292 = vmatmul.mubr.bf16.gmra.mxu0 %v836
      %v1293 = vpop.f32.mrf.mxu0
      %v1294 = vadd.f32 0.0, %v1293
      %v1295 = vpop.f32.mrf.mxu0
      %v1296 = vpop.f32.mrf.mxu0
      %v1297 = vadd.f32 0.0, %v1296
      %v1298 = vpop.f32.mrf.mxu0
      %1299 = vmatprep.mubr.bf16.mxu0 0
      %1300 = vmatmul.mubr.bf16.gmra.mxu0 %v839
      %v1301 = vpop.f32.mrf.mxu0
      %v1302 = vadd.f32 0.0, %v1301
      %v1303 = vpop.f32.mrf.mxu0
      %v1304 = vpop.f32.mrf.mxu0
      %v1305 = vadd.f32 0.0, %v1304
      %v1306 = vpop.f32.mrf.mxu0
      %1307 = vmatprep.mubr.bf16.mxu0 0
      %1308 = vmatmul.mubr.bf16.gmra.mxu0 %v842
      %v1309 = vpop.f32.mrf.mxu0
      %v1310 = vadd.f32 0.0, %v1309
      %v1311 = vpop.f32.mrf.mxu0
      %v1312 = vpop.f32.mrf.mxu0
      %v1313 = vadd.f32 0.0, %v1312
      %v1314 = vpop.f32.mrf.mxu0
      %1315 = vmatprep.mubr.bf16.mxu0 0
      %1316 = vmatmul.mubr.bf16.gmra.mxu0 %v845
      %v1317 = vpop.f32.mrf.mxu0
      %v1318 = vadd.f32 0.0, %v1317
      %v1319 = vpop.f32.mrf.mxu0
      %v1320 = vpop.f32.mrf.mxu0
      %v1321 = vadd.f32 0.0, %v1320
      %v1322 = vpop.f32.mrf.mxu0
      %1323 = vmatprep.mubr.bf16.mxu0 0
      %1324 = vmatmul.mubr.bf16.gmra.mxu0 %v848
      %v1325 = vpop.f32.mrf.mxu0
      %v1326 = vadd.f32 0.0, %v1325
      %v1327 = vpop.f32.mrf.mxu0
      %v1328 = vpop.f32.mrf.mxu0
      %v1329 = vadd.f32 0.0, %v1328
      %v1330 = vpop.f32.mrf.mxu0
      %1331 = vmatprep.mubr.bf16.mxu0 0
      %1332 = vmatmul.mubr.bf16.gmra.mxu0 %v851
      %v1333 = vpop.f32.mrf.mxu0
      %v1334 = vadd.f32 0.0, %v1333
      %v1335 = vpop.f32.mrf.mxu0
      %v1336 = vpop.f32.mrf.mxu0
      %v1337 = vadd.f32 0.0, %v1336
      %v1338 = vpop.f32.mrf.mxu0
      %1339 = vmatprep.mubr.bf16.mxu0 0
      %1340 = vmatmul.mubr.bf16.gmra.mxu0 %v854
      %v1341 = vpop.f32.mrf.mxu0
      %v1342 = vadd.f32 0.0, %v1341
      %v1343 = vpop.f32.mrf.mxu0
      %v1344 = vpop.f32.mrf.mxu0
      %v1345 = vadd.f32 0.0, %v1344
      %v1346 = vpop.f32.mrf.mxu0
      %1347 = vmatprep.mubr.bf16.mxu0 0
      %1348 = vmatmul.mubr.bf16.gmra.mxu0 %v857
      %v1349 = vpop.f32.mrf.mxu0
      %v1350 = vadd.f32 0.0, %v1349
      %v1351 = vpop.f32.mrf.mxu0
      %v1352 = vpop.f32.mrf.mxu0
      %v1353 = vadd.f32 0.0, %v1352
      %v1354 = vpop.f32.mrf.mxu0
      %1355 = vmatprep.mubr.bf16.mxu0 0
      %1356 = vmatmul.mubr.bf16.gmra.mxu0 %v860
      %v1357 = vpop.f32.mrf.mxu0
      %v1358 = vadd.f32 0.0, %v1357
      %v1359 = vpop.f32.mrf.mxu0
      %v1360 = vpop.f32.mrf.mxu0
      %v1361 = vadd.f32 0.0, %v1360
      %v1362 = vpop.f32.mrf.mxu0
      %1363 = vmatprep.mubr.bf16.mxu0 0
      %1364 = vmatmul.mubr.bf16.gmra.mxu0 %v863
      %v1365 = vpop.f32.mrf.mxu0
      %v1366 = vadd.f32 0.0, %v1365
      %v1367 = vpop.f32.mrf.mxu0
      %v1368 = vpop.f32.mrf.mxu0
      %v1369 = vadd.f32 0.0, %v1368
      %v1370 = vpop.f32.mrf.mxu0
      %1371 = vmatprep.mubr.bf16.mxu0 0
      %1372 = vmatmul.mubr.bf16.gmra.mxu0 %v866
      %v1373 = vpop.f32.mrf.mxu0
      %v1374 = vadd.f32 0.0, %v1373
      %v1375 = vpop.f32.mrf.mxu0
      %v1376 = vpop.f32.mrf.mxu0
      %v1377 = vadd.f32 0.0, %v1376
      %v1378 = vpop.f32.mrf.mxu0
      %1379 = vmatprep.mubr.bf16.mxu0 0
      %1380 = vmatmul.mubr.bf16.gmra.mxu0 %v869
      %v1381 = vpop.f32.mrf.mxu0
      %v1382 = vadd.f32 0.0, %v1381
      %v1383 = vpop.f32.mrf.mxu0
      %v1384 = vpop.f32.mrf.mxu0
      %v1385 = vadd.f32 0.0, %v1384
      %v1386 = vpop.f32.mrf.mxu0
      %1387 = vmatprep.mubr.bf16.mxu0 0
      %1388 = vmatmul.mubr.bf16.gmra.mxu0 %v872
      %v1389 = vpop.f32.mrf.mxu0
      %v1390 = vadd.f32 0.0, %v1389
      %v1391 = vpop.f32.mrf.mxu0
      %v1392 = vpop.f32.mrf.mxu0
      %v1393 = vadd.f32 0.0, %v1392
      %v1394 = vpop.f32.mrf.mxu0
      %1395 = vmatprep.mubr.bf16.mxu0 0
      %1396 = vmatmul.mubr.bf16.gmra.mxu0 %v875
      %v1397 = vpop.f32.mrf.mxu0
      %v1398 = vadd.f32 0.0, %v1397
      %v1399 = vpop.f32.mrf.mxu0
      %v1400 = vpop.f32.mrf.mxu0
      %v1401 = vadd.f32 0.0, %v1400
      %v1402 = vpop.f32.mrf.mxu0
      %1403 = vmatprep.mubr.bf16.mxu0 0
      %1404 = vmatmul.mubr.bf16.gmra.mxu0 %v878
      %v1405 = vpop.f32.mrf.mxu0
      %v1406 = vadd.f32 0.0, %v1405
      %v1407 = vpop.f32.mrf.mxu0
      %v1408 = vpop.f32.mrf.mxu0
      %v1409 = vadd.f32 0.0, %v1408
      %v1410 = vpop.f32.mrf.mxu0
      %1411 = vmatprep.mubr.bf16.mxu0 0
      %1412 = vmatmul.mubr.bf16.gmra.mxu0 %v881
      %v1413 = vpop.f32.mrf.mxu0
      %v1414 = vadd.f32 0.0, %v1413
      %v1415 = vpop.f32.mrf.mxu0
      %v1416 = vpop.f32.mrf.mxu0
      %v1417 = vadd.f32 0.0, %v1416
      %v1418 = vpop.f32.mrf.mxu0
      %1419 = vmatprep.mubr.bf16.mxu0 0
      %1420 = vmatmul.mubr.bf16.gmra.mxu0 %v884
      %v1421 = vpop.f32.mrf.mxu0
      %v1422 = vadd.f32 0.0, %v1421
      %v1423 = vpop.f32.mrf.mxu0
      %v1424 = vpop.f32.mrf.mxu0
      %v1425 = vadd.f32 0.0, %v1424
      %v1426 = vpop.f32.mrf.mxu0
      %1427 = vmatprep.mubr.bf16.mxu0 0
      %1428 = vmatmul.mubr.bf16.gmra.mxu0 %v887
      %v1429 = vpop.f32.mrf.mxu0
      %v1430 = vadd.f32 0.0, %v1429
      %v1431 = vpop.f32.mrf.mxu0
      %v1432 = vpop.f32.mrf.mxu0
      %v1433 = vadd.f32 0.0, %v1432
      %v1434 = vpop.f32.mrf.mxu0
      %1435 = vmatprep.mubr.bf16.mxu0 0
      %1436 = vmatmul.mubr.bf16.gmra.mxu0 %v890
      %v1437 = vpop.f32.mrf.mxu0
      %v1438 = vadd.f32 0.0, %v1437
      %v1439 = vpop.f32.mrf.mxu0
      %v1440 = vpop.f32.mrf.mxu0
      %v1441 = vadd.f32 0.0, %v1440
      %v1442 = vpop.f32.mrf.mxu0
      %1443 = vdwg.mxu0
      %v1444 = vlaneseq
      %v1445 = vshrl.u32 %v1444, 7
      %v1446 = vadd.s32 %v1445, 8
      %v1447 = vadd.s32 %v1445, 16
      %v1448 = vadd.s32 %v1445, 24
      %v1449 = vadd.s32 %v1445, 32
      %v1450 = vadd.s32 %v1445, 40
      %v1451 = vadd.s32 %v1445, 48
      %v1452 = vadd.s32 %v1445, 56
      %v1453 = vadd.s32 %v1445, 64
      %v1454 = vadd.s32 %v1445, 72
      %v1455 = vadd.s32 %v1445, 80
      %v1456 = vadd.s32 %v1445, 88
      %v1457 = vadd.s32 %v1445, 96
      %v1458 = vadd.s32 %v1445, 104
      %v1459 = vadd.s32 %v1445, 112
      %v1460 = vadd.s32 %v1445, 120
      %v1461 = vadd.s32 %v1445, 128
      %v1462 = vadd.s32 %v1445, 136
      %v1463 = vadd.s32 %v1445, 144
      %v1464 = vadd.s32 %v1445, 152
      %v1465 = vadd.s32 %v1445, 160
      %v1466 = vadd.s32 %v1445, 168
      %v1467 = vadd.s32 %v1445, 176
      %v1468 = vadd.s32 %v1445, 184
      %v1469 = vadd.s32 %v1445, 192
      %v1470 = vadd.s32 %v1445, 200
      %v1471 = vadd.s32 %v1445, 208
      %v1472 = vadd.s32 %v1445, 216
      %v1473 = vadd.s32 %v1445, 224
      %v1474 = vadd.s32 %v1445, 232
      %v1475 = vadd.s32 %v1445, 240
      %v1476 = vadd.s32 %v1445, 248
      %v1477 = vadd.s32 %v1445, 256
      %v1478 = vadd.s32 %v1445, 264
      %v1479 = vadd.s32 %v1445, 272
      %v1480 = vadd.s32 %v1445, 280
      %v1481 = vadd.s32 %v1445, 288
      %v1482 = vadd.s32 %v1445, 296
      %v1483 = vadd.s32 %v1445, 304
      %v1484 = vadd.s32 %v1445, 312
      %v1485 = vadd.s32 %v1445, 320
      %v1486 = vadd.s32 %v1445, 328
      %v1487 = vadd.s32 %v1445, 336
      %v1488 = vadd.s32 %v1445, 344
      %v1489 = vadd.s32 %v1445, 352
      %v1490 = vadd.s32 %v1445, 360
      %v1491 = vadd.s32 %v1445, 368
      %v1492 = vadd.s32 %v1445, 376
      %v1493 = vadd.s32 %v1445, 384
      %v1494 = vadd.s32 %v1445, 392
      %v1495 = vadd.s32 %v1445, 400
      %v1496 = vadd.s32 %v1445, 408
      %v1497 = vadd.s32 %v1445, 416
      %v1498 = vadd.s32 %v1445, 424
      %v1499 = vadd.s32 %v1445, 432
      %v1500 = vadd.s32 %v1445, 440
      %v1501 = vadd.s32 %v1445, 448
      %v1502 = vadd.s32 %v1445, 456
      %v1503 = vadd.s32 %v1445, 464
      %v1504 = vadd.s32 %v1445, 472
      %v1505 = vadd.s32 %v1445, 480
      %v1506 = vadd.s32 %v1445, 488
      %v1507 = vadd.s32 %v1445, 496
      %v1508 = vadd.s32 %v1445, 504
      %v1509 = vadd.s32 %v1445, 512
      %v1510 = vadd.s32 %v1445, 520
      %v1511 = vadd.s32 %v1445, 528
      %v1512 = vadd.s32 %v1445, 536
      %v1513 = vadd.s32 %v1445, 544
      %v1514 = vadd.s32 %v1445, 552
      %v1515 = vadd.s32 %v1445, 560
      %v1516 = vadd.s32 %v1445, 568
      %v1517 = vadd.s32 %v1445, 576
      %v1518 = vadd.s32 %v1445, 584
      %v1519 = vadd.s32 %v1445, 592
      %v1520 = vadd.s32 %v1445, 600
      %v1521 = vadd.s32 %v1445, 608
      %v1522 = vadd.s32 %v1445, 616
      %v1523 = vadd.s32 %v1445, 624
      %v1524 = vadd.s32 %v1445, 632
      %v1525 = vadd.s32 %v1445, 640
      %v1526 = vadd.s32 %v1445, 648
      %v1527 = vadd.s32 %v1445, 656
      %v1528 = vadd.s32 %v1445, 664
      %v1529 = vadd.s32 %v1445, 672
      %v1530 = vadd.s32 %v1445, 680
      %v1531 = vadd.s32 %v1445, 688
      %v1532 = vadd.s32 %v1445, 696
      %v1533 = vadd.s32 %v1445, 704
      %v1534 = vadd.s32 %v1445, 712
      %v1535 = vadd.s32 %v1445, 720
      %v1536 = vadd.s32 %v1445, 728
      %v1537 = vadd.s32 %v1445, 736
      %v1538 = vadd.s32 %v1445, 744
      %v1539 = vadd.s32 %v1445, 752
      %v1540 = vadd.s32 %v1445, 760
      %v1541 = vadd.s32 %v1445, 768
      %v1542 = vadd.s32 %v1445, 776
      %v1543 = vadd.s32 %v1445, 784
      %v1544 = vadd.s32 %v1445, 792
      %v1545 = vadd.s32 %v1445, 800
      %v1546 = vadd.s32 %v1445, 808
      %v1547 = vadd.s32 %v1445, 816
      %v1548 = vadd.s32 %v1445, 824
      %v1549 = vadd.s32 %v1445, 832
      %v1550 = vadd.s32 %v1445, 840
      %v1551 = vadd.s32 %v1445, 848
      %v1552 = vadd.s32 %v1445, 856
      %v1553 = vadd.s32 %v1445, 864
      %v1554 = vadd.s32 %v1445, 872
      %v1555 = vadd.s32 %v1445, 880
      %v1556 = vadd.s32 %v1445, 888
      %v1557 = vadd.s32 %v1445, 896
      %v1558 = vadd.s32 %v1445, 904
      %v1559 = vadd.s32 %v1445, 912
      %v1560 = vadd.s32 %v1445, 920
      %v1561 = vadd.s32 %v1445, 928
      %v1562 = vadd.s32 %v1445, 936
      %v1563 = vadd.s32 %v1445, 944
      %v1564 = vadd.s32 %v1445, 952
      %v1565 = vadd.s32 %v1445, 960
      %v1566 = vadd.s32 %v1445, 968
      %v1567 = vadd.s32 %v1445, 976
      %v1568 = vadd.s32 %v1445, 984
      %v1569 = vadd.s32 %v1445, 992
      %v1570 = vadd.s32 %v1445, 1000
      %v1571 = vadd.s32 %v1445, 1008
      %v1572 = vadd.s32 %v1445, 1016
      %s1573 = smul.u32 %s15, 1024
      %v1574 = vstv %s1573
      %v1575 = vadd.s32 %v1445, %v1574
      %v1576 = vadd.s32 %v1446, %v1574
      %v1577 = vadd.s32 %v1447, %v1574
      %v1578 = vadd.s32 %v1448, %v1574
      %v1579 = vadd.s32 %v1449, %v1574
      %v1580 = vadd.s32 %v1450, %v1574
      %v1581 = vadd.s32 %v1451, %v1574
      %v1582 = vadd.s32 %v1452, %v1574
      %v1583 = vadd.s32 %v1453, %v1574
      %v1584 = vadd.s32 %v1454, %v1574
      %v1585 = vadd.s32 %v1455, %v1574
      %v1586 = vadd.s32 %v1456, %v1574
      %v1587 = vadd.s32 %v1457, %v1574
      %v1588 = vadd.s32 %v1458, %v1574
      %v1589 = vadd.s32 %v1459, %v1574
      %v1590 = vadd.s32 %v1460, %v1574
      %v1591 = vadd.s32 %v1461, %v1574
      %v1592 = vadd.s32 %v1462, %v1574
      %v1593 = vadd.s32 %v1463, %v1574
      %v1594 = vadd.s32 %v1464, %v1574
      %v1595 = vadd.s32 %v1465, %v1574
      %v1596 = vadd.s32 %v1466, %v1574
      %v1597 = vadd.s32 %v1467, %v1574
      %v1598 = vadd.s32 %v1468, %v1574
      %v1599 = vadd.s32 %v1469, %v1574
      %v1600 = vadd.s32 %v1470, %v1574
      %v1601 = vadd.s32 %v1471, %v1574
      %v1602 = vadd.s32 %v1472, %v1574
      %v1603 = vadd.s32 %v1473, %v1574
      %v1604 = vadd.s32 %v1474, %v1574
      %v1605 = vadd.s32 %v1475, %v1574
      %v1606 = vadd.s32 %v1476, %v1574
      %v1607 = vadd.s32 %v1477, %v1574
      %v1608 = vadd.s32 %v1478, %v1574
      %v1609 = vadd.s32 %v1479, %v1574
      %v1610 = vadd.s32 %v1480, %v1574
      %v1611 = vadd.s32 %v1481, %v1574
      %v1612 = vadd.s32 %v1482, %v1574
      %v1613 = vadd.s32 %v1483, %v1574
      %v1614 = vadd.s32 %v1484, %v1574
      %v1615 = vadd.s32 %v1485, %v1574
      %v1616 = vadd.s32 %v1486, %v1574
      %v1617 = vadd.s32 %v1487, %v1574
      %v1618 = vadd.s32 %v1488, %v1574
      %v1619 = vadd.s32 %v1489, %v1574
      %v1620 = vadd.s32 %v1490, %v1574
      %v1621 = vadd.s32 %v1491, %v1574
      %v1622 = vadd.s32 %v1492, %v1574
      %v1623 = vadd.s32 %v1493, %v1574
      %v1624 = vadd.s32 %v1494, %v1574
      %v1625 = vadd.s32 %v1495, %v1574
      %v1626 = vadd.s32 %v1496, %v1574
      %v1627 = vadd.s32 %v1497, %v1574
      %v1628 = vadd.s32 %v1498, %v1574
      %v1629 = vadd.s32 %v1499, %v1574
      %v1630 = vadd.s32 %v1500, %v1574
      %v1631 = vadd.s32 %v1501, %v1574
      %v1632 = vadd.s32 %v1502, %v1574
      %v1633 = vadd.s32 %v1503, %v1574
      %v1634 = vadd.s32 %v1504, %v1574
      %v1635 = vadd.s32 %v1505, %v1574
      %v1636 = vadd.s32 %v1506, %v1574
      %v1637 = vadd.s32 %v1507, %v1574
      %v1638 = vadd.s32 %v1508, %v1574
      %v1639 = vadd.s32 %v1509, %v1574
      %v1640 = vadd.s32 %v1510, %v1574
      %v1641 = vadd.s32 %v1511, %v1574
      %v1642 = vadd.s32 %v1512, %v1574
      %v1643 = vadd.s32 %v1513, %v1574
      %v1644 = vadd.s32 %v1514, %v1574
      %v1645 = vadd.s32 %v1515, %v1574
      %v1646 = vadd.s32 %v1516, %v1574
      %v1647 = vadd.s32 %v1517, %v1574
      %v1648 = vadd.s32 %v1518, %v1574
      %v1649 = vadd.s32 %v1519, %v1574
      %v1650 = vadd.s32 %v1520, %v1574
      %v1651 = vadd.s32 %v1521, %v1574
      %v1652 = vadd.s32 %v1522, %v1574
      %v1653 = vadd.s32 %v1523, %v1574
      %v1654 = vadd.s32 %v1524, %v1574
      %v1655 = vadd.s32 %v1525, %v1574
      %v1656 = vadd.s32 %v1526, %v1574
      %v1657 = vadd.s32 %v1527, %v1574
      %v1658 = vadd.s32 %v1528, %v1574
      %v1659 = vadd.s32 %v1529, %v1574
      %v1660 = vadd.s32 %v1530, %v1574
      %v1661 = vadd.s32 %v1531, %v1574
      %v1662 = vadd.s32 %v1532, %v1574
      %v1663 = vadd.s32 %v1533, %v1574
      %v1664 = vadd.s32 %v1534, %v1574
      %v1665 = vadd.s32 %v1535, %v1574
      %v1666 = vadd.s32 %v1536, %v1574
      %v1667 = vadd.s32 %v1537, %v1574
      %v1668 = vadd.s32 %v1538, %v1574
      %v1669 = vadd.s32 %v1539, %v1574
      %v1670 = vadd.s32 %v1540, %v1574
      %v1671 = vadd.s32 %v1541, %v1574
      %v1672 = vadd.s32 %v1542, %v1574
      %v1673 = vadd.s32 %v1543, %v1574
      %v1674 = vadd.s32 %v1544, %v1574
      %v1675 = vadd.s32 %v1545, %v1574
      %v1676 = vadd.s32 %v1546, %v1574
      %v1677 = vadd.s32 %v1547, %v1574
      %v1678 = vadd.s32 %v1548, %v1574
      %v1679 = vadd.s32 %v1549, %v1574
      %v1680 = vadd.s32 %v1550, %v1574
      %v1681 = vadd.s32 %v1551, %v1574
      %v1682 = vadd.s32 %v1552, %v1574
      %v1683 = vadd.s32 %v1553, %v1574
      %v1684 = vadd.s32 %v1554, %v1574
      %v1685 = vadd.s32 %v1555, %v1574
      %v1686 = vadd.s32 %v1556, %v1574
      %v1687 = vadd.s32 %v1557, %v1574
      %v1688 = vadd.s32 %v1558, %v1574
      %v1689 = vadd.s32 %v1559, %v1574
      %v1690 = vadd.s32 %v1560, %v1574
      %v1691 = vadd.s32 %v1561, %v1574
      %v1692 = vadd.s32 %v1562, %v1574
      %v1693 = vadd.s32 %v1563, %v1574
      %v1694 = vadd.s32 %v1564, %v1574
      %v1695 = vadd.s32 %v1565, %v1574
      %v1696 = vadd.s32 %v1566, %v1574
      %v1697 = vadd.s32 %v1567, %v1574
      %v1698 = vadd.s32 %v1568, %v1574
      %v1699 = vadd.s32 %v1569, %v1574
      %v1700 = vadd.s32 %v1570, %v1574
      %v1701 = vadd.s32 %v1571, %v1574
      %v1702 = vadd.s32 %v1572, %v1574
      %vm1703 = vcmp.lt.s32.totalorder %v1575, 1568
      %vm1704 = vcmp.lt.s32.totalorder %v1576, 1568
      %vm1705 = vcmp.lt.s32.totalorder %v1577, 1568
      %vm1706 = vcmp.lt.s32.totalorder %v1578, 1568
      %vm1707 = vcmp.lt.s32.totalorder %v1579, 1568
      %vm1708 = vcmp.lt.s32.totalorder %v1580, 1568
      %vm1709 = vcmp.lt.s32.totalorder %v1581, 1568
      %vm1710 = vcmp.lt.s32.totalorder %v1582, 1568
      %vm1711 = vcmp.lt.s32.totalorder %v1583, 1568
      %vm1712 = vcmp.lt.s32.totalorder %v1584, 1568
      %vm1713 = vcmp.lt.s32.totalorder %v1585, 1568
      %vm1714 = vcmp.lt.s32.totalorder %v1586, 1568
      %vm1715 = vcmp.lt.s32.totalorder %v1587, 1568
      %vm1716 = vcmp.lt.s32.totalorder %v1588, 1568
      %vm1717 = vcmp.lt.s32.totalorder %v1589, 1568
      %vm1718 = vcmp.lt.s32.totalorder %v1590, 1568
      %vm1719 = vcmp.lt.s32.totalorder %v1591, 1568
      %vm1720 = vcmp.lt.s32.totalorder %v1592, 1568
      %vm1721 = vcmp.lt.s32.totalorder %v1593, 1568
      %vm1722 = vcmp.lt.s32.totalorder %v1594, 1568
      %vm1723 = vcmp.lt.s32.totalorder %v1595, 1568
      %vm1724 = vcmp.lt.s32.totalorder %v1596, 1568
      %vm1725 = vcmp.lt.s32.totalorder %v1597, 1568
      %vm1726 = vcmp.lt.s32.totalorder %v1598, 1568
      %vm1727 = vcmp.lt.s32.totalorder %v1599, 1568
      %vm1728 = vcmp.lt.s32.totalorder %v1600, 1568
      %vm1729 = vcmp.lt.s32.totalorder %v1601, 1568
      %vm1730 = vcmp.lt.s32.totalorder %v1602, 1568
      %vm1731 = vcmp.lt.s32.totalorder %v1603, 1568
      %vm1732 = vcmp.lt.s32.totalorder %v1604, 1568
      %vm1733 = vcmp.lt.s32.totalorder %v1605, 1568
      %vm1734 = vcmp.lt.s32.totalorder %v1606, 1568
      %vm1735 = vcmp.lt.s32.totalorder %v1607, 1568
      %vm1736 = vcmp.lt.s32.totalorder %v1608, 1568
      %vm1737 = vcmp.lt.s32.totalorder %v1609, 1568
      %vm1738 = vcmp.lt.s32.totalorder %v1610, 1568
      %vm1739 = vcmp.lt.s32.totalorder %v1611, 1568
      %vm1740 = vcmp.lt.s32.totalorder %v1612, 1568
      %vm1741 = vcmp.lt.s32.totalorder %v1613, 1568
      %vm1742 = vcmp.lt.s32.totalorder %v1614, 1568
      %vm1743 = vcmp.lt.s32.totalorder %v1615, 1568
      %vm1744 = vcmp.lt.s32.totalorder %v1616, 1568
      %vm1745 = vcmp.lt.s32.totalorder %v1617, 1568
      %vm1746 = vcmp.lt.s32.totalorder %v1618, 1568
      %vm1747 = vcmp.lt.s32.totalorder %v1619, 1568
      %vm1748 = vcmp.lt.s32.totalorder %v1620, 1568
      %vm1749 = vcmp.lt.s32.totalorder %v1621, 1568
      %vm1750 = vcmp.lt.s32.totalorder %v1622, 1568
      %vm1751 = vcmp.lt.s32.totalorder %v1623, 1568
      %vm1752 = vcmp.lt.s32.totalorder %v1624, 1568
      %vm1753 = vcmp.lt.s32.totalorder %v1625, 1568
      %vm1754 = vcmp.lt.s32.totalorder %v1626, 1568
      %vm1755 = vcmp.lt.s32.totalorder %v1627, 1568
      %vm1756 = vcmp.lt.s32.totalorder %v1628, 1568
      %vm1757 = vcmp.lt.s32.totalorder %v1629, 1568
      %vm1758 = vcmp.lt.s32.totalorder %v1630, 1568
      %vm1759 = vcmp.lt.s32.totalorder %v1631, 1568
      %vm1760 = vcmp.lt.s32.totalorder %v1632, 1568
      %vm1761 = vcmp.lt.s32.totalorder %v1633, 1568
      %vm1762 = vcmp.lt.s32.totalorder %v1634, 1568
      %vm1763 = vcmp.lt.s32.totalorder %v1635, 1568
      %vm1764 = vcmp.lt.s32.totalorder %v1636, 1568
      %vm1765 = vcmp.lt.s32.totalorder %v1637, 1568
      %vm1766 = vcmp.lt.s32.totalorder %v1638, 1568
      %vm1767 = vcmp.lt.s32.totalorder %v1639, 1568
      %vm1768 = vcmp.lt.s32.totalorder %v1640, 1568
      %vm1769 = vcmp.lt.s32.totalorder %v1641, 1568
      %vm1770 = vcmp.lt.s32.totalorder %v1642, 1568
      %vm1771 = vcmp.lt.s32.totalorder %v1643, 1568
      %vm1772 = vcmp.lt.s32.totalorder %v1644, 1568
      %vm1773 = vcmp.lt.s32.totalorder %v1645, 1568
      %vm1774 = vcmp.lt.s32.totalorder %v1646, 1568
      %vm1775 = vcmp.lt.s32.totalorder %v1647, 1568
      %vm1776 = vcmp.lt.s32.totalorder %v1648, 1568
      %vm1777 = vcmp.lt.s32.totalorder %v1649, 1568
      %vm1778 = vcmp.lt.s32.totalorder %v1650, 1568
      %vm1779 = vcmp.lt.s32.totalorder %v1651, 1568
      %vm1780 = vcmp.lt.s32.totalorder %v1652, 1568
      %vm1781 = vcmp.lt.s32.totalorder %v1653, 1568
      %vm1782 = vcmp.lt.s32.totalorder %v1654, 1568
      %vm1783 = vcmp.lt.s32.totalorder %v1655, 1568
      %vm1784 = vcmp.lt.s32.totalorder %v1656, 1568
      %vm1785 = vcmp.lt.s32.totalorder %v1657, 1568
      %vm1786 = vcmp.lt.s32.totalorder %v1658, 1568
      %vm1787 = vcmp.lt.s32.totalorder %v1659, 1568
      %vm1788 = vcmp.lt.s32.totalorder %v1660, 1568
      %vm1789 = vcmp.lt.s32.totalorder %v1661, 1568
      %vm1790 = vcmp.lt.s32.totalorder %v1662, 1568
      %vm1791 = vcmp.lt.s32.totalorder %v1663, 1568
      %vm1792 = vcmp.lt.s32.totalorder %v1664, 1568
      %vm1793 = vcmp.lt.s32.totalorder %v1665, 1568
      %vm1794 = vcmp.lt.s32.totalorder %v1666, 1568
      %vm1795 = vcmp.lt.s32.totalorder %v1667, 1568
      %vm1796 = vcmp.lt.s32.totalorder %v1668, 1568
      %vm1797 = vcmp.lt.s32.totalorder %v1669, 1568
      %vm1798 = vcmp.lt.s32.totalorder %v1670, 1568
      %vm1799 = vcmp.lt.s32.totalorder %v1671, 1568
      %vm1800 = vcmp.lt.s32.totalorder %v1672, 1568
      %vm1801 = vcmp.lt.s32.totalorder %v1673, 1568
      %vm1802 = vcmp.lt.s32.totalorder %v1674, 1568
      %vm1803 = vcmp.lt.s32.totalorder %v1675, 1568
      %vm1804 = vcmp.lt.s32.totalorder %v1676, 1568
      %vm1805 = vcmp.lt.s32.totalorder %v1677, 1568
      %vm1806 = vcmp.lt.s32.totalorder %v1678, 1568
      %vm1807 = vcmp.lt.s32.totalorder %v1679, 1568
      %vm1808 = vcmp.lt.s32.totalorder %v1680, 1568
      %vm1809 = vcmp.lt.s32.totalorder %v1681, 1568
      %vm1810 = vcmp.lt.s32.totalorder %v1682, 1568
      %vm1811 = vcmp.lt.s32.totalorder %v1683, 1568
      %vm1812 = vcmp.lt.s32.totalorder %v1684, 1568
      %vm1813 = vcmp.lt.s32.totalorder %v1685, 1568
      %vm1814 = vcmp.lt.s32.totalorder %v1686, 1568
      %vm1815 = vcmp.lt.s32.totalorder %v1687, 1568
      %vm1816 = vcmp.lt.s32.totalorder %v1688, 1568
      %vm1817 = vcmp.lt.s32.totalorder %v1689, 1568
      %vm1818 = vcmp.lt.s32.totalorder %v1690, 1568
      %vm1819 = vcmp.lt.s32.totalorder %v1691, 1568
      %vm1820 = vcmp.lt.s32.totalorder %v1692, 1568
      %vm1821 = vcmp.lt.s32.totalorder %v1693, 1568
      %vm1822 = vcmp.lt.s32.totalorder %v1694, 1568
      %vm1823 = vcmp.lt.s32.totalorder %v1695, 1568
      %vm1824 = vcmp.lt.s32.totalorder %v1696, 1568
      %vm1825 = vcmp.lt.s32.totalorder %v1697, 1568
      %vm1826 = vcmp.lt.s32.totalorder %v1698, 1568
      %vm1827 = vcmp.lt.s32.totalorder %v1699, 1568
      %vm1828 = vcmp.lt.s32.totalorder %v1700, 1568
      %vm1829 = vcmp.lt.s32.totalorder %v1701, 1568
      %vm1830 = vcmp.lt.s32.totalorder %v1702, 1568
      %v1831 = vsel %vm1703, 1, 0
      %v1832 = vsel %vm1704, 1, 0
      %v1833 = vsel %vm1705, 1, 0
      %v1834 = vsel %vm1706, 1, 0
      %v1835 = vsel %vm1707, 1, 0
      %v1836 = vsel %vm1708, 1, 0
      %v1837 = vsel %vm1709, 1, 0
      %v1838 = vsel %vm1710, 1, 0
      %v1839 = vsel %vm1711, 1, 0
      %v1840 = vsel %vm1712, 1, 0
      %v1841 = vsel %vm1713, 1, 0
      %v1842 = vsel %vm1714, 1, 0
      %v1843 = vsel %vm1715, 1, 0
      %v1844 = vsel %vm1716, 1, 0
      %v1845 = vsel %vm1717, 1, 0
      %v1846 = vsel %vm1718, 1, 0
      %v1847 = vsel %vm1719, 1, 0
      %v1848 = vsel %vm1720, 1, 0
      %v1849 = vsel %vm1721, 1, 0
      %v1850 = vsel %vm1722, 1, 0
      %v1851 = vsel %vm1723, 1, 0
      %v1852 = vsel %vm1724, 1, 0
      %v1853 = vsel %vm1725, 1, 0
      %v1854 = vsel %vm1726, 1, 0
      %v1855 = vsel %vm1727, 1, 0
      %v1856 = vsel %vm1728, 1, 0
      %v1857 = vsel %vm1729, 1, 0
      %v1858 = vsel %vm1730, 1, 0
      %v1859 = vsel %vm1731, 1, 0
      %v1860 = vsel %vm1732, 1, 0
      %v1861 = vsel %vm1733, 1, 0
      %v1862 = vsel %vm1734, 1, 0
      %v1863 = vsel %vm1735, 1, 0
      %v1864 = vsel %vm1736, 1, 0
      %v1865 = vsel %vm1737, 1, 0
      %v1866 = vsel %vm1738, 1, 0
      %v1867 = vsel %vm1739, 1, 0
      %v1868 = vsel %vm1740, 1, 0
      %v1869 = vsel %vm1741, 1, 0
      %v1870 = vsel %vm1742, 1, 0
      %v1871 = vsel %vm1743, 1, 0
      %v1872 = vsel %vm1744, 1, 0
      %v1873 = vsel %vm1745, 1, 0
      %v1874 = vsel %vm1746, 1, 0
      %v1875 = vsel %vm1747, 1, 0
      %v1876 = vsel %vm1748, 1, 0
      %v1877 = vsel %vm1749, 1, 0
      %v1878 = vsel %vm1750, 1, 0
      %v1879 = vsel %vm1751, 1, 0
      %v1880 = vsel %vm1752, 1, 0
      %v1881 = vsel %vm1753, 1, 0
      %v1882 = vsel %vm1754, 1, 0
      %v1883 = vsel %vm1755, 1, 0
      %v1884 = vsel %vm1756, 1, 0
      %v1885 = vsel %vm1757, 1, 0
      %v1886 = vsel %vm1758, 1, 0
      %v1887 = vsel %vm1759, 1, 0
      %v1888 = vsel %vm1760, 1, 0
      %v1889 = vsel %vm1761, 1, 0
      %v1890 = vsel %vm1762, 1, 0
      %v1891 = vsel %vm1763, 1, 0
      %v1892 = vsel %vm1764, 1, 0
      %v1893 = vsel %vm1765, 1, 0
      %v1894 = vsel %vm1766, 1, 0
      %v1895 = vsel %vm1767, 1, 0
      %v1896 = vsel %vm1768, 1, 0
      %v1897 = vsel %vm1769, 1, 0
      %v1898 = vsel %vm1770, 1, 0
      %v1899 = vsel %vm1771, 1, 0
      %v1900 = vsel %vm1772, 1, 0
      %v1901 = vsel %vm1773, 1, 0
      %v1902 = vsel %vm1774, 1, 0
      %v1903 = vsel %vm1775, 1, 0
      %v1904 = vsel %vm1776, 1, 0
      %v1905 = vsel %vm1777, 1, 0
      %v1906 = vsel %vm1778, 1, 0
      %v1907 = vsel %vm1779, 1, 0
      %v1908 = vsel %vm1780, 1, 0
      %v1909 = vsel %vm1781, 1, 0
      %v1910 = vsel %vm1782, 1, 0
      %v1911 = vsel %vm1783, 1, 0
      %v1912 = vsel %vm1784, 1, 0
      %v1913 = vsel %vm1785, 1, 0
      %v1914 = vsel %vm1786, 1, 0
      %v1915 = vsel %vm1787, 1, 0
      %v1916 = vsel %vm1788, 1, 0
      %v1917 = vsel %vm1789, 1, 0
      %v1918 = vsel %vm1790, 1, 0
      %v1919 = vsel %vm1791, 1, 0
      %v1920 = vsel %vm1792, 1, 0
      %v1921 = vsel %vm1793, 1, 0
      %v1922 = vsel %vm1794, 1, 0
      %v1923 = vsel %vm1795, 1, 0
      %v1924 = vsel %vm1796, 1, 0
      %v1925 = vsel %vm1797, 1, 0
      %v1926 = vsel %vm1798, 1, 0
      %v1927 = vsel %vm1799, 1, 0
      %v1928 = vsel %vm1800, 1, 0
      %v1929 = vsel %vm1801, 1, 0
      %v1930 = vsel %vm1802, 1, 0
      %v1931 = vsel %vm1803, 1, 0
      %v1932 = vsel %vm1804, 1, 0
      %v1933 = vsel %vm1805, 1, 0
      %v1934 = vsel %vm1806, 1, 0
      %v1935 = vsel %vm1807, 1, 0
      %v1936 = vsel %vm1808, 1, 0
      %v1937 = vsel %vm1809, 1, 0
      %v1938 = vsel %vm1810, 1, 0
      %v1939 = vsel %vm1811, 1, 0
      %v1940 = vsel %vm1812, 1, 0
      %v1941 = vsel %vm1813, 1, 0
      %v1942 = vsel %vm1814, 1, 0
      %v1943 = vsel %vm1815, 1, 0
      %v1944 = vsel %vm1816, 1, 0
      %v1945 = vsel %vm1817, 1, 0
      %v1946 = vsel %vm1818, 1, 0
      %v1947 = vsel %vm1819, 1, 0
      %v1948 = vsel %vm1820, 1, 0
      %v1949 = vsel %vm1821, 1, 0
      %v1950 = vsel %vm1822, 1, 0
      %v1951 = vsel %vm1823, 1, 0
      %v1952 = vsel %vm1824, 1, 0
      %v1953 = vsel %vm1825, 1, 0
      %v1954 = vsel %vm1826, 1, 0
      %v1955 = vsel %vm1827, 1, 0
      %v1956 = vsel %vm1828, 1, 0
      %v1957 = vsel %vm1829, 1, 0
      %v1958 = vsel %vm1830, 1, 0
      %vm1959 = vcmp.eq.s32.totalorder %v1831, 1
      %vm1960 = vcmp.eq.s32.totalorder %v1832, 1
      %vm1961 = vcmp.eq.s32.totalorder %v1833, 1
      %vm1962 = vcmp.eq.s32.totalorder %v1834, 1
      %vm1963 = vcmp.eq.s32.totalorder %v1835, 1
      %vm1964 = vcmp.eq.s32.totalorder %v1836, 1
      %vm1965 = vcmp.eq.s32.totalorder %v1837, 1
      %vm1966 = vcmp.eq.s32.totalorder %v1838, 1
      %vm1967 = vcmp.eq.s32.totalorder %v1839, 1
      %vm1968 = vcmp.eq.s32.totalorder %v1840, 1
      %vm1969 = vcmp.eq.s32.totalorder %v1841, 1
      %vm1970 = vcmp.eq.s32.totalorder %v1842, 1
      %vm1971 = vcmp.eq.s32.totalorder %v1843, 1
      %vm1972 = vcmp.eq.s32.totalorder %v1844, 1
      %vm1973 = vcmp.eq.s32.totalorder %v1845, 1
      %vm1974 = vcmp.eq.s32.totalorder %v1846, 1
      %vm1975 = vcmp.eq.s32.totalorder %v1847, 1
      %vm1976 = vcmp.eq.s32.totalorder %v1848, 1
      %vm1977 = vcmp.eq.s32.totalorder %v1849, 1
      %vm1978 = vcmp.eq.s32.totalorder %v1850, 1
      %vm1979 = vcmp.eq.s32.totalorder %v1851, 1
      %vm1980 = vcmp.eq.s32.totalorder %v1852, 1
      %vm1981 = vcmp.eq.s32.totalorder %v1853, 1
      %vm1982 = vcmp.eq.s32.totalorder %v1854, 1
      %vm1983 = vcmp.eq.s32.totalorder %v1855, 1
      %vm1984 = vcmp.eq.s32.totalorder %v1856, 1
      %vm1985 = vcmp.eq.s32.totalorder %v1857, 1
      %vm1986 = vcmp.eq.s32.totalorder %v1858, 1
      %vm1987 = vcmp.eq.s32.totalorder %v1859, 1
      %vm1988 = vcmp.eq.s32.totalorder %v1860, 1
      %vm1989 = vcmp.eq.s32.totalorder %v1861, 1
      %vm1990 = vcmp.eq.s32.totalorder %v1862, 1
      %vm1991 = vcmp.eq.s32.totalorder %v1863, 1
      %vm1992 = vcmp.eq.s32.totalorder %v1864, 1
      %vm1993 = vcmp.eq.s32.totalorder %v1865, 1
      %vm1994 = vcmp.eq.s32.totalorder %v1866, 1
      %vm1995 = vcmp.eq.s32.totalorder %v1867, 1
      %vm1996 = vcmp.eq.s32.totalorder %v1868, 1
      %vm1997 = vcmp.eq.s32.totalorder %v1869, 1
      %vm1998 = vcmp.eq.s32.totalorder %v1870, 1
      %vm1999 = vcmp.eq.s32.totalorder %v1871, 1
      %vm2000 = vcmp.eq.s32.totalorder %v1872, 1
      %vm2001 = vcmp.eq.s32.totalorder %v1873, 1
      %vm2002 = vcmp.eq.s32.totalorder %v1874, 1
      %vm2003 = vcmp.eq.s32.totalorder %v1875, 1
      %vm2004 = vcmp.eq.s32.totalorder %v1876, 1
      %vm2005 = vcmp.eq.s32.totalorder %v1877, 1
      %vm2006 = vcmp.eq.s32.totalorder %v1878, 1
      %vm2007 = vcmp.eq.s32.totalorder %v1879, 1
      %vm2008 = vcmp.eq.s32.totalorder %v1880, 1
      %vm2009 = vcmp.eq.s32.totalorder %v1881, 1
      %vm2010 = vcmp.eq.s32.totalorder %v1882, 1
      %vm2011 = vcmp.eq.s32.totalorder %v1883, 1
      %vm2012 = vcmp.eq.s32.totalorder %v1884, 1
      %vm2013 = vcmp.eq.s32.totalorder %v1885, 1
      %vm2014 = vcmp.eq.s32.totalorder %v1886, 1
      %vm2015 = vcmp.eq.s32.totalorder %v1887, 1
      %vm2016 = vcmp.eq.s32.totalorder %v1888, 1
      %vm2017 = vcmp.eq.s32.totalorder %v1889, 1
      %vm2018 = vcmp.eq.s32.totalorder %v1890, 1
      %vm2019 = vcmp.eq.s32.totalorder %v1891, 1
      %vm2020 = vcmp.eq.s32.totalorder %v1892, 1
      %vm2021 = vcmp.eq.s32.totalorder %v1893, 1
      %vm2022 = vcmp.eq.s32.totalorder %v1894, 1
      %vm2023 = vcmp.eq.s32.totalorder %v1895, 1
      %vm2024 = vcmp.eq.s32.totalorder %v1896, 1
      %vm2025 = vcmp.eq.s32.totalorder %v1897, 1
      %vm2026 = vcmp.eq.s32.totalorder %v1898, 1
      %vm2027 = vcmp.eq.s32.totalorder %v1899, 1
      %vm2028 = vcmp.eq.s32.totalorder %v1900, 1
      %vm2029 = vcmp.eq.s32.totalorder %v1901, 1
      %vm2030 = vcmp.eq.s32.totalorder %v1902, 1
      %vm2031 = vcmp.eq.s32.totalorder %v1903, 1
      %vm2032 = vcmp.eq.s32.totalorder %v1904, 1
      %vm2033 = vcmp.eq.s32.totalorder %v1905, 1
      %vm2034 = vcmp.eq.s32.totalorder %v1906, 1
      %vm2035 = vcmp.eq.s32.totalorder %v1907, 1
      %vm2036 = vcmp.eq.s32.totalorder %v1908, 1
      %vm2037 = vcmp.eq.s32.totalorder %v1909, 1
      %vm2038 = vcmp.eq.s32.totalorder %v1910, 1
      %vm2039 = vcmp.eq.s32.totalorder %v1911, 1
      %vm2040 = vcmp.eq.s32.totalorder %v1912, 1
      %vm2041 = vcmp.eq.s32.totalorder %v1913, 1
      %vm2042 = vcmp.eq.s32.totalorder %v1914, 1
      %vm2043 = vcmp.eq.s32.totalorder %v1915, 1
      %vm2044 = vcmp.eq.s32.totalorder %v1916, 1
      %vm2045 = vcmp.eq.s32.totalorder %v1917, 1
      %vm2046 = vcmp.eq.s32.totalorder %v1918, 1
      %vm2047 = vcmp.eq.s32.totalorder %v1919, 1
      %vm2048 = vcmp.eq.s32.totalorder %v1920, 1
      %vm2049 = vcmp.eq.s32.totalorder %v1921, 1
      %vm2050 = vcmp.eq.s32.totalorder %v1922, 1
      %vm2051 = vcmp.eq.s32.totalorder %v1923, 1
      %vm2052 = vcmp.eq.s32.totalorder %v1924, 1
      %vm2053 = vcmp.eq.s32.totalorder %v1925, 1
      %vm2054 = vcmp.eq.s32.totalorder %v1926, 1
      %vm2055 = vcmp.eq.s32.totalorder %v1927, 1
      %vm2056 = vcmp.eq.s32.totalorder %v1928, 1
      %vm2057 = vcmp.eq.s32.totalorder %v1929, 1
      %vm2058 = vcmp.eq.s32.totalorder %v1930, 1
      %vm2059 = vcmp.eq.s32.totalorder %v1931, 1
      %vm2060 = vcmp.eq.s32.totalorder %v1932, 1
      %vm2061 = vcmp.eq.s32.totalorder %v1933, 1
      %vm2062 = vcmp.eq.s32.totalorder %v1934, 1
      %vm2063 = vcmp.eq.s32.totalorder %v1935, 1
      %vm2064 = vcmp.eq.s32.totalorder %v1936, 1
      %vm2065 = vcmp.eq.s32.totalorder %v1937, 1
      %vm2066 = vcmp.eq.s32.totalorder %v1938, 1
      %vm2067 = vcmp.eq.s32.totalorder %v1939, 1
      %vm2068 = vcmp.eq.s32.totalorder %v1940, 1
      %vm2069 = vcmp.eq.s32.totalorder %v1941, 1
      %vm2070 = vcmp.eq.s32.totalorder %v1942, 1
      %vm2071 = vcmp.eq.s32.totalorder %v1943, 1
      %vm2072 = vcmp.eq.s32.totalorder %v1944, 1
      %vm2073 = vcmp.eq.s32.totalorder %v1945, 1
      %vm2074 = vcmp.eq.s32.totalorder %v1946, 1
      %vm2075 = vcmp.eq.s32.totalorder %v1947, 1
      %vm2076 = vcmp.eq.s32.totalorder %v1948, 1
      %vm2077 = vcmp.eq.s32.totalorder %v1949, 1
      %vm2078 = vcmp.eq.s32.totalorder %v1950, 1
      %vm2079 = vcmp.eq.s32.totalorder %v1951, 1
      %vm2080 = vcmp.eq.s32.totalorder %v1952, 1
      %vm2081 = vcmp.eq.s32.totalorder %v1953, 1
      %vm2082 = vcmp.eq.s32.totalorder %v1954, 1
      %vm2083 = vcmp.eq.s32.totalorder %v1955, 1
      %vm2084 = vcmp.eq.s32.totalorder %v1956, 1
      %vm2085 = vcmp.eq.s32.totalorder %v1957, 1
      %vm2086 = vcmp.eq.s32.totalorder %v1958, 1
      %v2087 = vsel %vm1959, %v934, 0.0
      %v2088 = vsel %vm1960, %v937, 0.0
      %v2089 = vsel %vm1961, %v942, 0.0
      %v2090 = vsel %vm1962, %v945, 0.0
      %v2091 = vsel %vm1963, %v950, 0.0
      %v2092 = vsel %vm1964, %v953, 0.0
      %v2093 = vsel %vm1965, %v958, 0.0
      %v2094 = vsel %vm1966, %v961, 0.0
      %v2095 = vsel %vm1967, %v966, 0.0
      %v2096 = vsel %vm1968, %v969, 0.0
      %v2097 = vsel %vm1969, %v974, 0.0
      %v2098 = vsel %vm1970, %v977, 0.0
      %v2099 = vsel %vm1971, %v982, 0.0
      %v2100 = vsel %vm1972, %v985, 0.0
      %v2101 = vsel %vm1973, %v990, 0.0
      %v2102 = vsel %vm1974, %v993, 0.0
      %v2103 = vsel %vm1975, %v998, 0.0
      %v2104 = vsel %vm1976, %v1001, 0.0
      %v2105 = vsel %vm1977, %v1006, 0.0
      %v2106 = vsel %vm1978, %v1009, 0.0
      %v2107 = vsel %vm1979, %v1014, 0.0
      %v2108 = vsel %vm1980, %v1017, 0.0
      %v2109 = vsel %vm1981, %v1022, 0.0
      %v2110 = vsel %vm1982, %v1025, 0.0
      %v2111 = vsel %vm1983, %v1030, 0.0
      %v2112 = vsel %vm1984, %v1033, 0.0
      %v2113 = vsel %vm1985, %v1038, 0.0
      %v2114 = vsel %vm1986, %v1041, 0.0
      %v2115 = vsel %vm1987, %v1046, 0.0
      %v2116 = vsel %vm1988, %v1049, 0.0
      %v2117 = vsel %vm1989, %v1054, 0.0
      %v2118 = vsel %vm1990, %v1057, 0.0
      %v2119 = vsel %vm1991, %v1062, 0.0
      %v2120 = vsel %vm1992, %v1065, 0.0
      %v2121 = vsel %vm1993, %v1070, 0.0
      %v2122 = vsel %vm1994, %v1073, 0.0
      %v2123 = vsel %vm1995, %v1078, 0.0
      %v2124 = vsel %vm1996, %v1081, 0.0
      %v2125 = vsel %vm1997, %v1086, 0.0
      %v2126 = vsel %vm1998, %v1089, 0.0
      %v2127 = vsel %vm1999, %v1094, 0.0
      %v2128 = vsel %vm2000, %v1097, 0.0
      %v2129 = vsel %vm2001, %v1102, 0.0
      %v2130 = vsel %vm2002, %v1105, 0.0
      %v2131 = vsel %vm2003, %v1110, 0.0
      %v2132 = vsel %vm2004, %v1113, 0.0
      %v2133 = vsel %vm2005, %v1118, 0.0
      %v2134 = vsel %vm2006, %v1121, 0.0
      %v2135 = vsel %vm2007, %v1126, 0.0
      %v2136 = vsel %vm2008, %v1129, 0.0
      %v2137 = vsel %vm2009, %v1134, 0.0
      %v2138 = vsel %vm2010, %v1137, 0.0
      %v2139 = vsel %vm2011, %v1142, 0.0
      %v2140 = vsel %vm2012, %v1145, 0.0
      %v2141 = vsel %vm2013, %v1150, 0.0
      %v2142 = vsel %vm2014, %v1153, 0.0
      %v2143 = vsel %vm2015, %v1158, 0.0
      %v2144 = vsel %vm2016, %v1161, 0.0
      %v2145 = vsel %vm2017, %v1166, 0.0
      %v2146 = vsel %vm2018, %v1169, 0.0
      %v2147 = vsel %vm2019, %v1174, 0.0
      %v2148 = vsel %vm2020, %v1177, 0.0
      %v2149 = vsel %vm2021, %v1182, 0.0
      %v2150 = vsel %vm2022, %v1185, 0.0
      %v2151 = vsel %vm2023, %v1190, 0.0
      %v2152 = vsel %vm2024, %v1193, 0.0
      %v2153 = vsel %vm2025, %v1198, 0.0
      %v2154 = vsel %vm2026, %v1201, 0.0
      %v2155 = vsel %vm2027, %v1206, 0.0
      %v2156 = vsel %vm2028, %v1209, 0.0
      %v2157 = vsel %vm2029, %v1214, 0.0
      %v2158 = vsel %vm2030, %v1217, 0.0
      %v2159 = vsel %vm2031, %v1222, 0.0
      %v2160 = vsel %vm2032, %v1225, 0.0
      %v2161 = vsel %vm2033, %v1230, 0.0
      %v2162 = vsel %vm2034, %v1233, 0.0
      %v2163 = vsel %vm2035, %v1238, 0.0
      %v2164 = vsel %vm2036, %v1241, 0.0
      %v2165 = vsel %vm2037, %v1246, 0.0
      %v2166 = vsel %vm2038, %v1249, 0.0
      %v2167 = vsel %vm2039, %v1254, 0.0
      %v2168 = vsel %vm2040, %v1257, 0.0
      %v2169 = vsel %vm2041, %v1262, 0.0
      %v2170 = vsel %vm2042, %v1265, 0.0
      %v2171 = vsel %vm2043, %v1270, 0.0
      %v2172 = vsel %vm2044, %v1273, 0.0
      %v2173 = vsel %vm2045, %v1278, 0.0
      %v2174 = vsel %vm2046, %v1281, 0.0
      %v2175 = vsel %vm2047, %v1286, 0.0
      %v2176 = vsel %vm2048, %v1289, 0.0
      %v2177 = vsel %vm2049, %v1294, 0.0
      %v2178 = vsel %vm2050, %v1297, 0.0
      %v2179 = vsel %vm2051, %v1302, 0.0
      %v2180 = vsel %vm2052, %v1305, 0.0
      %v2181 = vsel %vm2053, %v1310, 0.0
      %v2182 = vsel %vm2054, %v1313, 0.0
      %v2183 = vsel %vm2055, %v1318, 0.0
      %v2184 = vsel %vm2056, %v1321, 0.0
      %v2185 = vsel %vm2057, %v1326, 0.0
      %v2186 = vsel %vm2058, %v1329, 0.0
      %v2187 = vsel %vm2059, %v1334, 0.0
      %v2188 = vsel %vm2060, %v1337, 0.0
      %v2189 = vsel %vm2061, %v1342, 0.0
      %v2190 = vsel %vm2062, %v1345, 0.0
      %v2191 = vsel %vm2063, %v1350, 0.0
      %v2192 = vsel %vm2064, %v1353, 0.0
      %v2193 = vsel %vm2065, %v1358, 0.0
      %v2194 = vsel %vm2066, %v1361, 0.0
      %v2195 = vsel %vm2067, %v1366, 0.0
      %v2196 = vsel %vm2068, %v1369, 0.0
      %v2197 = vsel %vm2069, %v1374, 0.0
      %v2198 = vsel %vm2070, %v1377, 0.0
      %v2199 = vsel %vm2071, %v1382, 0.0
      %v2200 = vsel %vm2072, %v1385, 0.0
      %v2201 = vsel %vm2073, %v1390, 0.0
      %v2202 = vsel %vm2074, %v1393, 0.0
      %v2203 = vsel %vm2075, %v1398, 0.0
      %v2204 = vsel %vm2076, %v1401, 0.0
      %v2205 = vsel %vm2077, %v1406, 0.0
      %v2206 = vsel %vm2078, %v1409, 0.0
      %v2207 = vsel %vm2079, %v1414, 0.0
      %v2208 = vsel %vm2080, %v1417, 0.0
      %v2209 = vsel %vm2081, %v1422, 0.0
      %v2210 = vsel %vm2082, %v1425, 0.0
      %v2211 = vsel %vm2083, %v1430, 0.0
      %v2212 = vsel %vm2084, %v1433, 0.0
      %v2213 = vsel %vm2085, %v1438, 0.0
      %v2214 = vsel %vm2086, %v1441, 0.0
      %v2215 = vld [vmem:[#allocation2] sm:$0x1]
      %v2216 = vadd.f32 %v2087, %v2088
      %v2217 = vadd.f32 %v2216, %v2089
      %v2218 = vadd.f32 %v2217, %v2090
      %v2219 = vadd.f32 %v2218, %v2091
      %v2220 = vadd.f32 %v2219, %v2092
      %v2221 = vadd.f32 %v2220, %v2093
      %v2222 = vadd.f32 %v2221, %v2094
      %v2223 = vadd.f32 %v2222, %v2095
      %v2224 = vadd.f32 %v2223, %v2096
      %v2225 = vadd.f32 %v2224, %v2097
      %v2226 = vadd.f32 %v2225, %v2098
      %v2227 = vadd.f32 %v2226, %v2099
      %v2228 = vadd.f32 %v2227, %v2100
      %v2229 = vadd.f32 %v2228, %v2101
      %v2230 = vadd.f32 %v2229, %v2102
      %v2231 = vadd.f32 %v2230, %v2103
      %v2232 = vadd.f32 %v2231, %v2104
      %v2233 = vadd.f32 %v2232, %v2105
      %v2234 = vadd.f32 %v2233, %v2106
      %v2235 = vadd.f32 %v2234, %v2107
      %v2236 = vadd.f32 %v2235, %v2108
      %v2237 = vadd.f32 %v2236, %v2109
      %v2238 = vadd.f32 %v2237, %v2110
      %v2239 = vadd.f32 %v2238, %v2111
      %v2240 = vadd.f32 %v2239, %v2112
      %v2241 = vadd.f32 %v2240, %v2113
      %v2242 = vadd.f32 %v2241, %v2114
      %v2243 = vadd.f32 %v2242, %v2115
      %v2244 = vadd.f32 %v2243, %v2116
      %v2245 = vadd.f32 %v2244, %v2117
      %v2246 = vadd.f32 %v2245, %v2118
      %v2247 = vadd.f32 %v2246, %v2119
      %v2248 = vadd.f32 %v2247, %v2120
      %v2249 = vadd.f32 %v2248, %v2121
      %v2250 = vadd.f32 %v2249, %v2122
      %v2251 = vadd.f32 %v2250, %v2123
      %v2252 = vadd.f32 %v2251, %v2124
      %v2253 = vadd.f32 %v2252, %v2125
      %v2254 = vadd.f32 %v2253, %v2126
      %v2255 = vadd.f32 %v2254, %v2127
      %v2256 = vadd.f32 %v2255, %v2128
      %v2257 = vadd.f32 %v2256, %v2129
      %v2258 = vadd.f32 %v2257, %v2130
      %v2259 = vadd.f32 %v2258, %v2131
      %v2260 = vadd.f32 %v2259, %v2132
      %v2261 = vadd.f32 %v2260, %v2133
      %v2262 = vadd.f32 %v2261, %v2134
      %v2263 = vadd.f32 %v2262, %v2135
      %v2264 = vadd.f32 %v2263, %v2136
      %v2265 = vadd.f32 %v2264, %v2137
      %v2266 = vadd.f32 %v2265, %v2138
      %v2267 = vadd.f32 %v2266, %v2139
      %v2268 = vadd.f32 %v2267, %v2140
      %v2269 = vadd.f32 %v2268, %v2141
      %v2270 = vadd.f32 %v2269, %v2142
      %v2271 = vadd.f32 %v2270, %v2143
      %v2272 = vadd.f32 %v2271, %v2144
      %v2273 = vadd.f32 %v2272, %v2145
      %v2274 = vadd.f32 %v2273, %v2146
      %v2275 = vadd.f32 %v2274, %v2147
      %v2276 = vadd.f32 %v2275, %v2148
      %v2277 = vadd.f32 %v2276, %v2149
      %v2278 = vadd.f32 %v2277, %v2150
      %v2279 = vadd.f32 %v2278, %v2151
      %v2280 = vadd.f32 %v2279, %v2152
      %v2281 = vadd.f32 %v2280, %v2153
      %v2282 = vadd.f32 %v2281, %v2154
      %v2283 = vadd.f32 %v2282, %v2155
      %v2284 = vadd.f32 %v2283, %v2156
      %v2285 = vadd.f32 %v2284, %v2157
      %v2286 = vadd.f32 %v2285, %v2158
      %v2287 = vadd.f32 %v2286, %v2159
      %v2288 = vadd.f32 %v2287, %v2160
      %v2289 = vadd.f32 %v2288, %v2161
      %v2290 = vadd.f32 %v2289, %v2162
      %v2291 = vadd.f32 %v2290, %v2163
      %v2292 = vadd.f32 %v2291, %v2164
      %v2293 = vadd.f32 %v2292, %v2165
      %v2294 = vadd.f32 %v2293, %v2166
      %v2295 = vadd.f32 %v2294, %v2167
      %v2296 = vadd.f32 %v2295, %v2168
      %v2297 = vadd.f32 %v2296, %v2169
      %v2298 = vadd.f32 %v2297, %v2170
      %v2299 = vadd.f32 %v2298, %v2171
      %v2300 = vadd.f32 %v2299, %v2172
      %v2301 = vadd.f32 %v2300, %v2173
      %v2302 = vadd.f32 %v2301, %v2174
      %v2303 = vadd.f32 %v2302, %v2175
      %v2304 = vadd.f32 %v2303, %v2176
      %v2305 = vadd.f32 %v2304, %v2177
      %v2306 = vadd.f32 %v2305, %v2178
      %v2307 = vadd.f32 %v2306, %v2179
      %v2308 = vadd.f32 %v2307, %v2180
      %v2309 = vadd.f32 %v2308, %v2181
      %v2310 = vadd.f32 %v2309, %v2182
      %v2311 = vadd.f32 %v2310, %v2183
      %v2312 = vadd.f32 %v2311, %v2184
      %v2313 = vadd.f32 %v2312, %v2185
      %v2314 = vadd.f32 %v2313, %v2186
      %v2315 = vadd.f32 %v2314, %v2187
      %v2316 = vadd.f32 %v2315, %v2188
      %v2317 = vadd.f32 %v2316, %v2189
      %v2318 = vadd.f32 %v2317, %v2190
      %v2319 = vadd.f32 %v2318, %v2191
      %v2320 = vadd.f32 %v2319, %v2192
      %v2321 = vadd.f32 %v2320, %v2193
      %v2322 = vadd.f32 %v2321, %v2194
      %v2323 = vadd.f32 %v2322, %v2195
      %v2324 = vadd.f32 %v2323, %v2196
      %v2325 = vadd.f32 %v2324, %v2197
      %v2326 = vadd.f32 %v2325, %v2198
      %v2327 = vadd.f32 %v2326, %v2199
      %v2328 = vadd.f32 %v2327, %v2200
      %v2329 = vadd.f32 %v2328, %v2201
      %v2330 = vadd.f32 %v2329, %v2202
      %v2331 = vadd.f32 %v2330, %v2203
      %v2332 = vadd.f32 %v2331, %v2204
      %v2333 = vadd.f32 %v2332, %v2205
      %v2334 = vadd.f32 %v2333, %v2206
      %v2335 = vadd.f32 %v2334, %v2207
      %v2336 = vadd.f32 %v2335, %v2208
      %v2337 = vadd.f32 %v2336, %v2209
      %v2338 = vadd.f32 %v2337, %v2210
      %v2339 = vadd.f32 %v2338, %v2211
      %v2340 = vadd.f32 %v2339, %v2212
      %v2341 = vadd.f32 %v2340, %v2213
      %v2342 = vadd.f32 %v2341, %v2214
      %v2343 = vrot.slane %v2342, 4
      %v2344 = vadd.f32 %v2342, %v2343
      %v2345 = vrot.slane %v2344, 2
      %v2346 = vadd.f32 %v2344, %v2345
      %v2347 = vrot.slane %v2346, 1
      %v2348 = vadd.f32 %v2346, %v2347
      %v2349 = vadd.f32 %v2215, %v2348
      %2350 = vst [vmem:[#allocation2] sm:$0x1] %v2349
      %v2351 = vld [vmem:[#allocation3] sm:$0x1]
      %v2352 = vmul.f32 %v2087, %v2087
      %v2353 = vmul.f32 %v2088, %v2088
      %v2354 = vmul.f32 %v2089, %v2089
      %v2355 = vmul.f32 %v2090, %v2090
      %v2356 = vmul.f32 %v2091, %v2091
      %v2357 = vmul.f32 %v2092, %v2092
      %v2358 = vmul.f32 %v2093, %v2093
      %v2359 = vmul.f32 %v2094, %v2094
      %v2360 = vmul.f32 %v2095, %v2095
      %v2361 = vmul.f32 %v2096, %v2096
      %v2362 = vmul.f32 %v2097, %v2097
      %v2363 = vmul.f32 %v2098, %v2098
      %v2364 = vmul.f32 %v2099, %v2099
      %v2365 = vmul.f32 %v2100, %v2100
      %v2366 = vmul.f32 %v2101, %v2101
      %v2367 = vmul.f32 %v2102, %v2102
      %v2368 = vmul.f32 %v2103, %v2103
      %v2369 = vmul.f32 %v2104, %v2104
      %v2370 = vmul.f32 %v2105, %v2105
      %v2371 = vmul.f32 %v2106, %v2106
      %v2372 = vmul.f32 %v2107, %v2107
      %v2373 = vmul.f32 %v2108, %v2108
      %v2374 = vmul.f32 %v2109, %v2109
      %v2375 = vmul.f32 %v2110, %v2110
      %v2376 = vmul.f32 %v2111, %v2111
      %v2377 = vmul.f32 %v2112, %v2112
      %v2378 = vmul.f32 %v2113, %v2113
      %v2379 = vmul.f32 %v2114, %v2114
      %v2380 = vmul.f32 %v2115, %v2115
      %v2381 = vmul.f32 %v2116, %v2116
      %v2382 = vmul.f32 %v2117, %v2117
      %v2383 = vmul.f32 %v2118, %v2118
      %v2384 = vmul.f32 %v2119, %v2119
      %v2385 = vmul.f32 %v2120, %v2120
      %v2386 = vmul.f32 %v2121, %v2121
      %v2387 = vmul.f32 %v2122, %v2122
      %v2388 = vmul.f32 %v2123, %v2123
      %v2389 = vmul.f32 %v2124, %v2124
      %v2390 = vmul.f32 %v2125, %v2125
      %v2391 = vmul.f32 %v2126, %v2126
      %v2392 = vmul.f32 %v2127, %v2127
      %v2393 = vmul.f32 %v2128, %v2128
      %v2394 = vmul.f32 %v2129, %v2129
      %v2395 = vmul.f32 %v2130, %v2130
      %v2396 = vmul.f32 %v2131, %v2131
      %v2397 = vmul.f32 %v2132, %v2132
      %v2398 = vmul.f32 %v2133, %v2133
      %v2399 = vmul.f32 %v2134, %v2134
      %v2400 = vmul.f32 %v2135, %v2135
      %v2401 = vmul.f32 %v2136, %v2136
      %v2402 = vmul.f32 %v2137, %v2137
      %v2403 = vmul.f32 %v2138, %v2138
      %v2404 = vmul.f32 %v2139, %v2139
      %v2405 = vmul.f32 %v2140, %v2140
      %v2406 = vmul.f32 %v2141, %v2141
      %v2407 = vmul.f32 %v2142, %v2142
      %v2408 = vmul.f32 %v2143, %v2143
      %v2409 = vmul.f32 %v2144, %v2144
      %v2410 = vmul.f32 %v2145, %v2145
      %v2411 = vmul.f32 %v2146, %v2146
      %v2412 = vmul.f32 %v2147, %v2147
      %v2413 = vmul.f32 %v2148, %v2148
      %v2414 = vmul.f32 %v2149, %v2149
      %v2415 = vmul.f32 %v2150, %v2150
      %v2416 = vmul.f32 %v2151, %v2151
      %v2417 = vmul.f32 %v2152, %v2152
      %v2418 = vmul.f32 %v2153, %v2153
      %v2419 = vmul.f32 %v2154, %v2154
      %v2420 = vmul.f32 %v2155, %v2155
      %v2421 = vmul.f32 %v2156, %v2156
      %v2422 = vmul.f32 %v2157, %v2157
      %v2423 = vmul.f32 %v2158, %v2158
      %v2424 = vmul.f32 %v2159, %v2159
      %v2425 = vmul.f32 %v2160, %v2160
      %v2426 = vmul.f32 %v2161, %v2161
      %v2427 = vmul.f32 %v2162, %v2162
      %v2428 = vmul.f32 %v2163, %v2163
      %v2429 = vmul.f32 %v2164, %v2164
      %v2430 = vmul.f32 %v2165, %v2165
      %v2431 = vmul.f32 %v2166, %v2166
      %v2432 = vmul.f32 %v2167, %v2167
      %v2433 = vmul.f32 %v2168, %v2168
      %v2434 = vmul.f32 %v2169, %v2169
      %v2435 = vmul.f32 %v2170, %v2170
      %v2436 = vmul.f32 %v2171, %v2171
      %v2437 = vmul.f32 %v2172, %v2172
      %v2438 = vmul.f32 %v2173, %v2173
      %v2439 = vmul.f32 %v2174, %v2174
      %v2440 = vmul.f32 %v2175, %v2175
      %v2441 = vmul.f32 %v2176, %v2176
      %v2442 = vmul.f32 %v2177, %v2177
      %v2443 = vmul.f32 %v2178, %v2178
      %v2444 = vmul.f32 %v2179, %v2179
      %v2445 = vmul.f32 %v2180, %v2180
      %v2446 = vmul.f32 %v2181, %v2181
      %v2447 = vmul.f32 %v2182, %v2182
      %v2448 = vmul.f32 %v2183, %v2183
      %v2449 = vmul.f32 %v2184, %v2184
      %v2450 = vmul.f32 %v2185, %v2185
      %v2451 = vmul.f32 %v2186, %v2186
      %v2452 = vmul.f32 %v2187, %v2187
      %v2453 = vmul.f32 %v2188, %v2188
      %v2454 = vmul.f32 %v2189, %v2189
      %v2455 = vmul.f32 %v2190, %v2190
      %v2456 = vmul.f32 %v2191, %v2191
      %v2457 = vmul.f32 %v2192, %v2192
      %v2458 = vmul.f32 %v2193, %v2193
      %v2459 = vmul.f32 %v2194, %v2194
      %v2460 = vmul.f32 %v2195, %v2195
      %v2461 = vmul.f32 %v2196, %v2196
      %v2462 = vmul.f32 %v2197, %v2197
      %v2463 = vmul.f32 %v2198, %v2198
      %v2464 = vmul.f32 %v2199, %v2199
      %v2465 = vmul.f32 %v2200, %v2200
      %v2466 = vmul.f32 %v2201, %v2201
      %v2467 = vmul.f32 %v2202, %v2202
      %v2468 = vmul.f32 %v2203, %v2203
      %v2469 = vmul.f32 %v2204, %v2204
      %v2470 = vmul.f32 %v2205, %v2205
      %v2471 = vmul.f32 %v2206, %v2206
      %v2472 = vmul.f32 %v2207, %v2207
      %v2473 = vmul.f32 %v2208, %v2208
      %v2474 = vmul.f32 %v2209, %v2209
      %v2475 = vmul.f32 %v2210, %v2210
      %v2476 = vmul.f32 %v2211, %v2211
      %v2477 = vmul.f32 %v2212, %v2212
      %v2478 = vmul.f32 %v2213, %v2213
      %v2479 = vmul.f32 %v2214, %v2214
      %v2480 = vadd.f32 %v2352, %v2353
      %v2481 = vadd.f32 %v2480, %v2354
      %v2482 = vadd.f32 %v2481, %v2355
      %v2483 = vadd.f32 %v2482, %v2356
      %v2484 = vadd.f32 %v2483, %v2357
      %v2485 = vadd.f32 %v2484, %v2358
      %v2486 = vadd.f32 %v2485, %v2359
      %v2487 = vadd.f32 %v2486, %v2360
      %v2488 = vadd.f32 %v2487, %v2361
      %v2489 = vadd.f32 %v2488, %v2362
      %v2490 = vadd.f32 %v2489, %v2363
      %v2491 = vadd.f32 %v2490, %v2364
      %v2492 = vadd.f32 %v2491, %v2365
      %v2493 = vadd.f32 %v2492, %v2366
      %v2494 = vadd.f32 %v2493, %v2367
      %v2495 = vadd.f32 %v2494, %v2368
      %v2496 = vadd.f32 %v2495, %v2369
      %v2497 = vadd.f32 %v2496, %v2370
      %v2498 = vadd.f32 %v2497, %v2371
      %v2499 = vadd.f32 %v2498, %v2372
      %v2500 = vadd.f32 %v2499, %v2373
      %v2501 = vadd.f32 %v2500, %v2374
      %v2502 = vadd.f32 %v2501, %v2375
      %v2503 = vadd.f32 %v2502, %v2376
      %v2504 = vadd.f32 %v2503, %v2377
      %v2505 = vadd.f32 %v2504, %v2378
      %v2506 = vadd.f32 %v2505, %v2379
      %v2507 = vadd.f32 %v2506, %v2380
      %v2508 = vadd.f32 %v2507, %v2381
      %v2509 = vadd.f32 %v2508, %v2382
      %v2510 = vadd.f32 %v2509, %v2383
      %v2511 = vadd.f32 %v2510, %v2384
      %v2512 = vadd.f32 %v2511, %v2385
      %v2513 = vadd.f32 %v2512, %v2386
      %v2514 = vadd.f32 %v2513, %v2387
      %v2515 = vadd.f32 %v2514, %v2388
      %v2516 = vadd.f32 %v2515, %v2389
      %v2517 = vadd.f32 %v2516, %v2390
      %v2518 = vadd.f32 %v2517, %v2391
      %v2519 = vadd.f32 %v2518, %v2392
      %v2520 = vadd.f32 %v2519, %v2393
      %v2521 = vadd.f32 %v2520, %v2394
      %v2522 = vadd.f32 %v2521, %v2395
      %v2523 = vadd.f32 %v2522, %v2396
      %v2524 = vadd.f32 %v2523, %v2397
      %v2525 = vadd.f32 %v2524, %v2398
      %v2526 = vadd.f32 %v2525, %v2399
      %v2527 = vadd.f32 %v2526, %v2400
      %v2528 = vadd.f32 %v2527, %v2401
      %v2529 = vadd.f32 %v2528, %v2402
      %v2530 = vadd.f32 %v2529, %v2403
      %v2531 = vadd.f32 %v2530, %v2404
      %v2532 = vadd.f32 %v2531, %v2405
      %v2533 = vadd.f32 %v2532, %v2406
      %v2534 = vadd.f32 %v2533, %v2407
      %v2535 = vadd.f32 %v2534, %v2408
      %v2536 = vadd.f32 %v2535, %v2409
      %v2537 = vadd.f32 %v2536, %v2410
      %v2538 = vadd.f32 %v2537, %v2411
      %v2539 = vadd.f32 %v2538, %v2412
      %v2540 = vadd.f32 %v2539, %v2413
      %v2541 = vadd.f32 %v2540, %v2414
      %v2542 = vadd.f32 %v2541, %v2415
      %v2543 = vadd.f32 %v2542, %v2416
      %v2544 = vadd.f32 %v2543, %v2417
      %v2545 = vadd.f32 %v2544, %v2418
      %v2546 = vadd.f32 %v2545, %v2419
      %v2547 = vadd.f32 %v2546, %v2420
      %v2548 = vadd.f32 %v2547, %v2421
      %v2549 = vadd.f32 %v2548, %v2422
      %v2550 = vadd.f32 %v2549, %v2423
      %v2551 = vadd.f32 %v2550, %v2424
      %v2552 = vadd.f32 %v2551, %v2425
      %v2553 = vadd.f32 %v2552, %v2426
      %v2554 = vadd.f32 %v2553, %v2427
      %v2555 = vadd.f32 %v2554, %v2428
      %v2556 = vadd.f32 %v2555, %v2429
      %v2557 = vadd.f32 %v2556, %v2430
      %v2558 = vadd.f32 %v2557, %v2431
      %v2559 = vadd.f32 %v2558, %v2432
      %v2560 = vadd.f32 %v2559, %v2433
      %v2561 = vadd.f32 %v2560, %v2434
      %v2562 = vadd.f32 %v2561, %v2435
      %v2563 = vadd.f32 %v2562, %v2436
      %v2564 = vadd.f32 %v2563, %v2437
      %v2565 = vadd.f32 %v2564, %v2438
      %v2566 = vadd.f32 %v2565, %v2439
      %v2567 = vadd.f32 %v2566, %v2440
      %v2568 = vadd.f32 %v2567, %v2441
      %v2569 = vadd.f32 %v2568, %v2442
      %v2570 = vadd.f32 %v2569, %v2443
      %v2571 = vadd.f32 %v2570, %v2444
      %v2572 = vadd.f32 %v2571, %v2445
      %v2573 = vadd.f32 %v2572, %v2446
      %v2574 = vadd.f32 %v2573, %v2447
      %v2575 = vadd.f32 %v2574, %v2448
      %v2576 = vadd.f32 %v2575, %v2449
      %v2577 = vadd.f32 %v2576, %v2450
      %v2578 = vadd.f32 %v2577, %v2451
      %v2579 = vadd.f32 %v2578, %v2452
      %v2580 = vadd.f32 %v2579, %v2453
      %v2581 = vadd.f32 %v2580, %v2454
      %v2582 = vadd.f32 %v2581, %v2455
      %v2583 = vadd.f32 %v2582, %v2456
      %v2584 = vadd.f32 %v2583, %v2457
      %v2585 = vadd.f32 %v2584, %v2458
      %v2586 = vadd.f32 %v2585, %v2459
      %v2587 = vadd.f32 %v2586, %v2460
      %v2588 = vadd.f32 %v2587, %v2461
      %v2589 = vadd.f32 %v2588, %v2462
      %v2590 = vadd.f32 %v2589, %v2463
      %v2591 = vadd.f32 %v2590, %v2464
      %v2592 = vadd.f32 %v2591, %v2465
      %v2593 = vadd.f32 %v2592, %v2466
      %v2594 = vadd.f32 %v2593, %v2467
      %v2595 = vadd.f32 %v2594, %v2468
      %v2596 = vadd.f32 %v2595, %v2469
      %v2597 = vadd.f32 %v2596, %v2470
      %v2598 = vadd.f32 %v2597, %v2471
      %v2599 = vadd.f32 %v2598, %v2472
      %v2600 = vadd.f32 %v2599, %v2473
      %v2601 = vadd.f32 %v2600, %v2474
      %v2602 = vadd.f32 %v2601, %v2475
      %v2603 = vadd.f32 %v2602, %v2476
      %v2604 = vadd.f32 %v2603, %v2477
      %v2605 = vadd.f32 %v2604, %v2478
      %v2606 = vadd.f32 %v2605, %v2479
      %v2607 = vrot.slane %v2606, 4
      %v2608 = vadd.f32 %v2606, %v2607
      %v2609 = vrot.slane %v2608, 2
      %v2610 = vadd.f32 %v2608, %v2609
      %v2611 = vrot.slane %v2610, 1
      %v2612 = vadd.f32 %v2610, %v2611
      %v2613 = vadd.f32 %v2351, %v2612
      %2614 = vst [vmem:[#allocation3] sm:$0x1] %v2613
      %v2615 = vpack.c.bf16 %v937, %v934
      %v2616 = vpack.c.bf16 %v945, %v942
      %v2617 = vpack.c.bf16 %v953, %v950
      %v2618 = vpack.c.bf16 %v961, %v958
      %v2619 = vpack.c.bf16 %v969, %v966
      %v2620 = vpack.c.bf16 %v977, %v974
      %v2621 = vpack.c.bf16 %v985, %v982
      %v2622 = vpack.c.bf16 %v993, %v990
      %v2623 = vpack.c.bf16 %v1001, %v998
      %v2624 = vpack.c.bf16 %v1009, %v1006
      %v2625 = vpack.c.bf16 %v1017, %v1014
      %v2626 = vpack.c.bf16 %v1025, %v1022
      %v2627 = vpack.c.bf16 %v1033, %v1030
      %v2628 = vpack.c.bf16 %v1041, %v1038
      %v2629 = vpack.c.bf16 %v1049, %v1046
      %v2630 = vpack.c.bf16 %v1057, %v1054
      %v2631 = vpack.c.bf16 %v1065, %v1062
      %v2632 = vpack.c.bf16 %v1073, %v1070
      %v2633 = vpack.c.bf16 %v1081, %v1078
      %v2634 = vpack.c.bf16 %v1089, %v1086
      %v2635 = vpack.c.bf16 %v1097, %v1094
      %v2636 = vpack.c.bf16 %v1105, %v1102
      %v2637 = vpack.c.bf16 %v1113, %v1110
      %v2638 = vpack.c.bf16 %v1121, %v1118
      %v2639 = vpack.c.bf16 %v1129, %v1126
      %v2640 = vpack.c.bf16 %v1137, %v1134
      %v2641 = vpack.c.bf16 %v1145, %v1142
      %v2642 = vpack.c.bf16 %v1153, %v1150
      %v2643 = vpack.c.bf16 %v1161, %v1158
      %v2644 = vpack.c.bf16 %v1169, %v1166
      %v2645 = vpack.c.bf16 %v1177, %v1174
      %v2646 = vpack.c.bf16 %v1185, %v1182
      %v2647 = vpack.c.bf16 %v1193, %v1190
      %v2648 = vpack.c.bf16 %v1201, %v1198
      %v2649 = vpack.c.bf16 %v1209, %v1206
      %v2650 = vpack.c.bf16 %v1217, %v1214
      %v2651 = vpack.c.bf16 %v1225, %v1222
      %v2652 = vpack.c.bf16 %v1233, %v1230
      %v2653 = vpack.c.bf16 %v1241, %v1238
      %v2654 = vpack.c.bf16 %v1249, %v1246
      %v2655 = vpack.c.bf16 %v1257, %v1254
      %v2656 = vpack.c.bf16 %v1265, %v1262
      %v2657 = vpack.c.bf16 %v1273, %v1270
      %v2658 = vpack.c.bf16 %v1281, %v1278
      %v2659 = vpack.c.bf16 %v1289, %v1286
      %v2660 = vpack.c.bf16 %v1297, %v1294
      %v2661 = vpack.c.bf16 %v1305, %v1302
      %v2662 = vpack.c.bf16 %v1313, %v1310
      %v2663 = vpack.c.bf16 %v1321, %v1318
      %v2664 = vpack.c.bf16 %v1329, %v1326
      %v2665 = vpack.c.bf16 %v1337, %v1334
      %v2666 = vpack.c.bf16 %v1345, %v1342
      %v2667 = vpack.c.bf16 %v1353, %v1350
      %v2668 = vpack.c.bf16 %v1361, %v1358
      %v2669 = vpack.c.bf16 %v1369, %v1366
      %v2670 = vpack.c.bf16 %v1377, %v1374
      %v2671 = vpack.c.bf16 %v1385, %v1382
      %v2672 = vpack.c.bf16 %v1393, %v1390
      %v2673 = vpack.c.bf16 %v1401, %v1398
      %v2674 = vpack.c.bf16 %v1409, %v1406
      %v2675 = vpack.c.bf16 %v1417, %v1414
      %v2676 = vpack.c.bf16 %v1425, %v1422
      %v2677 = vpack.c.bf16 %v1433, %v1430
      %v2678 = vpack.c.bf16 %v1441, %v1438
      %v2743 = vunpack.c.l.b16 %v2615
      %v2744 = vunpack.c.h.b16 %v2615
      %v2745 = vunpack.c.l.b16 %v2616
      %v2746 = vunpack.c.h.b16 %v2616
      %v2747 = vunpack.c.l.b16 %v2617
      %v2748 = vunpack.c.h.b16 %v2617
      %v2749 = vunpack.c.l.b16 %v2618
      %v2750 = vunpack.c.h.b16 %v2618
      %v2751 = vunpack.c.l.b16 %v2619
      %v2752 = vunpack.c.h.b16 %v2619
      %v2753 = vunpack.c.l.b16 %v2620
      %v2754 = vunpack.c.h.b16 %v2620
      %v2755 = vunpack.c.l.b16 %v2621
      %v2756 = vunpack.c.h.b16 %v2621
      %v2757 = vunpack.c.l.b16 %v2622
      %v2758 = vunpack.c.h.b16 %v2622
      %v2759 = vunpack.c.l.b16 %v2623
      %v2760 = vunpack.c.h.b16 %v2623
      %v2761 = vunpack.c.l.b16 %v2624
      %v2762 = vunpack.c.h.b16 %v2624
      %v2763 = vunpack.c.l.b16 %v2625
      %v2764 = vunpack.c.h.b16 %v2625
      %v2765 = vunpack.c.l.b16 %v2626
      %v2766 = vunpack.c.h.b16 %v2626
      %v2767 = vunpack.c.l.b16 %v2627
      %v2768 = vunpack.c.h.b16 %v2627
      %v2769 = vunpack.c.l.b16 %v2628
      %v2770 = vunpack.c.h.b16 %v2628
      %v2771 = vunpack.c.l.b16 %v2629
      %v2772 = vunpack.c.h.b16 %v2629
      %v2773 = vunpack.c.l.b16 %v2630
      %v2774 = vunpack.c.h.b16 %v2630
      %v2775 = vunpack.c.l.b16 %v2631
      %v2776 = vunpack.c.h.b16 %v2631
      %v2777 = vunpack.c.l.b16 %v2632
      %v2778 = vunpack.c.h.b16 %v2632
      %v2779 = vunpack.c.l.b16 %v2633
      %v2780 = vunpack.c.h.b16 %v2633
      %v2781 = vunpack.c.l.b16 %v2634
      %v2782 = vunpack.c.h.b16 %v2634
      %v2783 = vunpack.c.l.b16 %v2635
      %v2784 = vunpack.c.h.b16 %v2635
      %v2785 = vunpack.c.l.b16 %v2636
      %v2786 = vunpack.c.h.b16 %v2636
      %v2787 = vunpack.c.l.b16 %v2637
      %v2788 = vunpack.c.h.b16 %v2637
      %v2789 = vunpack.c.l.b16 %v2638
      %v2790 = vunpack.c.h.b16 %v2638
      %v2791 = vunpack.c.l.b16 %v2639
      %v2792 = vunpack.c.h.b16 %v2639
      %v2793 = vunpack.c.l.b16 %v2640
      %v2794 = vunpack.c.h.b16 %v2640
      %v2795 = vunpack.c.l.b16 %v2641
      %v2796 = vunpack.c.h.b16 %v2641
      %v2797 = vunpack.c.l.b16 %v2642
      %v2798 = vunpack.c.h.b16 %v2642
      %v2799 = vunpack.c.l.b16 %v2643
      %v2800 = vunpack.c.h.b16 %v2643
      %v2801 = vunpack.c.l.b16 %v2644
      %v2802 = vunpack.c.h.b16 %v2644
      %v2803 = vunpack.c.l.b16 %v2645
      %v2804 = vunpack.c.h.b16 %v2645
      %v2805 = vunpack.c.l.b16 %v2646
      %v2806 = vunpack.c.h.b16 %v2646
      %v2807 = vunpack.c.l.b16 %v2647
      %v2808 = vunpack.c.h.b16 %v2647
      %v2809 = vunpack.c.l.b16 %v2648
      %v2810 = vunpack.c.h.b16 %v2648
      %v2811 = vunpack.c.l.b16 %v2649
      %v2812 = vunpack.c.h.b16 %v2649
      %v2813 = vunpack.c.l.b16 %v2650
      %v2814 = vunpack.c.h.b16 %v2650
      %v2815 = vunpack.c.l.b16 %v2651
      %v2816 = vunpack.c.h.b16 %v2651
      %v2817 = vunpack.c.l.b16 %v2652
      %v2818 = vunpack.c.h.b16 %v2652
      %v2819 = vunpack.c.l.b16 %v2653
      %v2820 = vunpack.c.h.b16 %v2653
      %v2821 = vunpack.c.l.b16 %v2654
      %v2822 = vunpack.c.h.b16 %v2654
      %v2823 = vunpack.c.l.b16 %v2655
      %v2824 = vunpack.c.h.b16 %v2655
      %v2825 = vunpack.c.l.b16 %v2656
      %v2826 = vunpack.c.h.b16 %v2656
      %v2827 = vunpack.c.l.b16 %v2657
      %v2828 = vunpack.c.h.b16 %v2657
      %v2829 = vunpack.c.l.b16 %v2658
      %v2830 = vunpack.c.h.b16 %v2658
      %v2831 = vunpack.c.l.b16 %v2659
      %v2832 = vunpack.c.h.b16 %v2659
      %v2833 = vunpack.c.l.b16 %v2660
      %v2834 = vunpack.c.h.b16 %v2660
      %v2835 = vunpack.c.l.b16 %v2661
      %v2836 = vunpack.c.h.b16 %v2661
      %v2837 = vunpack.c.l.b16 %v2662
      %v2838 = vunpack.c.h.b16 %v2662
      %v2839 = vunpack.c.l.b16 %v2663
      %v2840 = vunpack.c.h.b16 %v2663
      %v2841 = vunpack.c.l.b16 %v2664
      %v2842 = vunpack.c.h.b16 %v2664
      %v2843 = vunpack.c.l.b16 %v2665
      %v2844 = vunpack.c.h.b16 %v2665
      %v2845 = vunpack.c.l.b16 %v2666
      %v2846 = vunpack.c.h.b16 %v2666
      %v2847 = vunpack.c.l.b16 %v2667
      %v2848 = vunpack.c.h.b16 %v2667
      %v2849 = vunpack.c.l.b16 %v2668
      %v2850 = vunpack.c.h.b16 %v2668
      %v2851 = vunpack.c.l.b16 %v2669
      %v2852 = vunpack.c.h.b16 %v2669
      %v2853 = vunpack.c.l.b16 %v2670
      %v2854 = vunpack.c.h.b16 %v2670
      %v2855 = vunpack.c.l.b16 %v2671
      %v2856 = vunpack.c.h.b16 %v2671
      %v2857 = vunpack.c.l.b16 %v2672
      %v2858 = vunpack.c.h.b16 %v2672
      %v2859 = vunpack.c.l.b16 %v2673
      %v2860 = vunpack.c.h.b16 %v2673
      %v2861 = vunpack.c.l.b16 %v2674
      %v2862 = vunpack.c.h.b16 %v2674
      %v2863 = vunpack.c.l.b16 %v2675
      %v2864 = vunpack.c.h.b16 %v2675
      %v2865 = vunpack.c.l.b16 %v2676
      %v2866 = vunpack.c.h.b16 %v2676
      %v2867 = vunpack.c.l.b16 %v2677
      %v2868 = vunpack.c.h.b16 %v2677
      %v2869 = vunpack.c.l.b16 %v2678
      %v2870 = vunpack.c.h.b16 %v2678
      %v2871 = vpack.c.b16 %v2743, %v2743
      %v2872 = vpack.c.b16 %v2744, %v2744
      %v2873 = vpack.c.b16 %v2745, %v2745
      %v2874 = vpack.c.b16 %v2746, %v2746
      %v2875 = vpack.c.b16 %v2747, %v2747
      %v2876 = vpack.c.b16 %v2748, %v2748
      %v2877 = vpack.c.b16 %v2749, %v2749
      %v2878 = vpack.c.b16 %v2750, %v2750
      %v2879 = vpack.c.b16 %v2751, %v2751
      %v2880 = vpack.c.b16 %v2752, %v2752
      %v2881 = vpack.c.b16 %v2753, %v2753
      %v2882 = vpack.c.b16 %v2754, %v2754
      %v2883 = vpack.c.b16 %v2755, %v2755
      %v2884 = vpack.c.b16 %v2756, %v2756
      %v2885 = vpack.c.b16 %v2757, %v2757
      %v2886 = vpack.c.b16 %v2758, %v2758
      %v2887 = vpack.c.b16 %v2759, %v2759
      %v2888 = vpack.c.b16 %v2760, %v2760
      %v2889 = vpack.c.b16 %v2761, %v2761
      %v2890 = vpack.c.b16 %v2762, %v2762
      %v2891 = vpack.c.b16 %v2763, %v2763
      %v2892 = vpack.c.b16 %v2764, %v2764
      %v2893 = vpack.c.b16 %v2765, %v2765
      %v2894 = vpack.c.b16 %v2766, %v2766
      %v2895 = vpack.c.b16 %v2767, %v2767
      %v2896 = vpack.c.b16 %v2768, %v2768
      %v2897 = vpack.c.b16 %v2769, %v2769
      %v2898 = vpack.c.b16 %v2770, %v2770
      %v2899 = vpack.c.b16 %v2771, %v2771
      %v2900 = vpack.c.b16 %v2772, %v2772
      %v2901 = vpack.c.b16 %v2773, %v2773
      %v2902 = vpack.c.b16 %v2774, %v2774
      %v2903 = vpack.c.b16 %v2775, %v2775
      %v2904 = vpack.c.b16 %v2776, %v2776
      %v2905 = vpack.c.b16 %v2777, %v2777
      %v2906 = vpack.c.b16 %v2778, %v2778
      %v2907 = vpack.c.b16 %v2779, %v2779
      %v2908 = vpack.c.b16 %v2780, %v2780
      %v2909 = vpack.c.b16 %v2781, %v2781
      %v2910 = vpack.c.b16 %v2782, %v2782
      %v2911 = vpack.c.b16 %v2783, %v2783
      %v2912 = vpack.c.b16 %v2784, %v2784
      %v2913 = vpack.c.b16 %v2785, %v2785
      %v2914 = vpack.c.b16 %v2786, %v2786
      %v2915 = vpack.c.b16 %v2787, %v2787
      %v2916 = vpack.c.b16 %v2788, %v2788
      %v2917 = vpack.c.b16 %v2789, %v2789
      %v2918 = vpack.c.b16 %v2790, %v2790
      %v2919 = vpack.c.b16 %v2791, %v2791
      %v2920 = vpack.c.b16 %v2792, %v2792
      %v2921 = vpack.c.b16 %v2793, %v2793
      %v2922 = vpack.c.b16 %v2794, %v2794
      %v2923 = vpack.c.b16 %v2795, %v2795
      %v2924 = vpack.c.b16 %v2796, %v2796
      %v2925 = vpack.c.b16 %v2797, %v2797
      %v2926 = vpack.c.b16 %v2798, %v2798
      %v2927 = vpack.c.b16 %v2799, %v2799
      %v2928 = vpack.c.b16 %v2800, %v2800
      %v2929 = vpack.c.b16 %v2801, %v2801
      %v2930 = vpack.c.b16 %v2802, %v2802
      %v2931 = vpack.c.b16 %v2803, %v2803
      %v2932 = vpack.c.b16 %v2804, %v2804
      %v2933 = vpack.c.b16 %v2805, %v2805
      %v2934 = vpack.c.b16 %v2806, %v2806
      %v2935 = vpack.c.b16 %v2807, %v2807
      %v2936 = vpack.c.b16 %v2808, %v2808
      %v2937 = vpack.c.b16 %v2809, %v2809
      %v2938 = vpack.c.b16 %v2810, %v2810
      %v2939 = vpack.c.b16 %v2811, %v2811
      %v2940 = vpack.c.b16 %v2812, %v2812
      %v2941 = vpack.c.b16 %v2813, %v2813
      %v2942 = vpack.c.b16 %v2814, %v2814
      %v2943 = vpack.c.b16 %v2815, %v2815
      %v2944 = vpack.c.b16 %v2816, %v2816
      %v2945 = vpack.c.b16 %v2817, %v2817
      %v2946 = vpack.c.b16 %v2818, %v2818
      %v2947 = vpack.c.b16 %v2819, %v2819
      %v2948 = vpack.c.b16 %v2820, %v2820
      %v2949 = vpack.c.b16 %v2821, %v2821
      %v2950 = vpack.c.b16 %v2822, %v2822
      %v2951 = vpack.c.b16 %v2823, %v2823
      %v2952 = vpack.c.b16 %v2824, %v2824
      %v2953 = vpack.c.b16 %v2825, %v2825
      %v2954 = vpack.c.b16 %v2826, %v2826
      %v2955 = vpack.c.b16 %v2827, %v2827
      %v2956 = vpack.c.b16 %v2828, %v2828
      %v2957 = vpack.c.b16 %v2829, %v2829
      %v2958 = vpack.c.b16 %v2830, %v2830
      %v2959 = vpack.c.b16 %v2831, %v2831
      %v2960 = vpack.c.b16 %v2832, %v2832
      %v2961 = vpack.c.b16 %v2833, %v2833
      %v2962 = vpack.c.b16 %v2834, %v2834
      %v2963 = vpack.c.b16 %v2835, %v2835
      %v2964 = vpack.c.b16 %v2836, %v2836
      %v2965 = vpack.c.b16 %v2837, %v2837
      %v2966 = vpack.c.b16 %v2838, %v2838
      %v2967 = vpack.c.b16 %v2839, %v2839
      %v2968 = vpack.c.b16 %v2840, %v2840
      %v2969 = vpack.c.b16 %v2841, %v2841
      %v2970 = vpack.c.b16 %v2842, %v2842
      %v2971 = vpack.c.b16 %v2843, %v2843
      %v2972 = vpack.c.b16 %v2844, %v2844
      %v2973 = vpack.c.b16 %v2845, %v2845
      %v2974 = vpack.c.b16 %v2846, %v2846
      %v2975 = vpack.c.b16 %v2847, %v2847
      %v2976 = vpack.c.b16 %v2848, %v2848
      %v2977 = vpack.c.b16 %v2849, %v2849
      %v2978 = vpack.c.b16 %v2850, %v2850
      %v2979 = vpack.c.b16 %v2851, %v2851
      %v2980 = vpack.c.b16 %v2852, %v2852
      %v2981 = vpack.c.b16 %v2853, %v2853
      %v2982 = vpack.c.b16 %v2854, %v2854
      %v2983 = vpack.c.b16 %v2855, %v2855
      %v2984 = vpack.c.b16 %v2856, %v2856
      %v2985 = vpack.c.b16 %v2857, %v2857
      %v2986 = vpack.c.b16 %v2858, %v2858
      %v2987 = vpack.c.b16 %v2859, %v2859
      %v2988 = vpack.c.b16 %v2860, %v2860
      %v2989 = vpack.c.b16 %v2861, %v2861
      %v2990 = vpack.c.b16 %v2862, %v2862
      %v2991 = vpack.c.b16 %v2863, %v2863
      %v2992 = vpack.c.b16 %v2864, %v2864
      %v2993 = vpack.c.b16 %v2865, %v2865
      %v2994 = vpack.c.b16 %v2866, %v2866
      %v2995 = vpack.c.b16 %v2867, %v2867
      %v2996 = vpack.c.b16 %v2868, %v2868
      %v2997 = vpack.c.b16 %v2869, %v2869
      %v2998 = vpack.c.b16 %v2870, %v2870
      %s3127 = sshra.s32 %s1573, 3
      %s3128 = sand.u32 %s1573, 7
      %s3129 = smul.addr %s3127, 4
      %s3130 = scalar_lea.vmem %s4, %s3129
      %3131 = vst [vmem:[%s3130] sm:$0xf] %v2871
      %3132 = vst [vmem:[%s3130 + $0x4] sm:$0xf] %v2872
      %3133 = vst [vmem:[%s3130 + $0x8] sm:$0xf] %v2873
      %3134 = vst [vmem:[%s3130 + $0xc] sm:$0xf] %v2874
      %3135 = vst [vmem:[%s3130 + $0x10] sm:$0xf] %v2875
      %3136 = vst [vmem:[%s3130 + $0x14] sm:$0xf] %v2876
      %3137 = vst [vmem:[%s3130 + $0x18] sm:$0xf] %v2877
      %3138 = vst [vmem:[%s3130 + $0x1c] sm:$0xf] %v2878
      %3139 = vst [vmem:[%s3130 + $0x20] sm:$0xf] %v2879
      %3140 = vst [vmem:[%s3130 + $0x24] sm:$0xf] %v2880
      %3141 = vst [vmem:[%s3130 + $0x28] sm:$0xf] %v2881
      %3142 = vst [vmem:[%s3130 + $0x2c] sm:$0xf] %v2882
      %3143 = vst [vmem:[%s3130 + $0x30] sm:$0xf] %v2883
      %3144 = vst [vmem:[%s3130 + $0x34] sm:$0xf] %v2884
      %3145 = vst [vmem:[%s3130 + $0x38] sm:$0xf] %v2885
      %3146 = vst [vmem:[%s3130 + $0x3c] sm:$0xf] %v2886
      %3147 = vst [vmem:[%s3130 + $0x40] sm:$0xf] %v2887
      %3148 = vst [vmem:[%s3130 + $0x44] sm:$0xf] %v2888
      %3149 = vst [vmem:[%s3130 + $0x48] sm:$0xf] %v2889
      %3150 = vst [vmem:[%s3130 + $0x4c] sm:$0xf] %v2890
      %3151 = vst [vmem:[%s3130 + $0x50] sm:$0xf] %v2891
      %3152 = vst [vmem:[%s3130 + $0x54] sm:$0xf] %v2892
      %3153 = vst [vmem:[%s3130 + $0x58] sm:$0xf] %v2893
      %3154 = vst [vmem:[%s3130 + $0x5c] sm:$0xf] %v2894
      %3155 = vst [vmem:[%s3130 + $0x60] sm:$0xf] %v2895
      %3156 = vst [vmem:[%s3130 + $0x64] sm:$0xf] %v2896
      %3157 = vst [vmem:[%s3130 + $0x68] sm:$0xf] %v2897
      %3158 = vst [vmem:[%s3130 + $0x6c] sm:$0xf] %v2898
      %3159 = vst [vmem:[%s3130 + $0x70] sm:$0xf] %v2899
      %3160 = vst [vmem:[%s3130 + $0x74] sm:$0xf] %v2900
      %3161 = vst [vmem:[%s3130 + $0x78] sm:$0xf] %v2901
      %3162 = vst [vmem:[%s3130 + $0x7c] sm:$0xf] %v2902
      %3163 = vst [vmem:[%s3130 + $0x80] sm:$0xf] %v2903
      %3164 = vst [vmem:[%s3130 + $0x84] sm:$0xf] %v2904
      %3165 = vst [vmem:[%s3130 + $0x88] sm:$0xf] %v2905
      %3166 = vst [vmem:[%s3130 + $0x8c] sm:$0xf] %v2906
      %3167 = vst [vmem:[%s3130 + $0x90] sm:$0xf] %v2907
      %3168 = vst [vmem:[%s3130 + $0x94] sm:$0xf] %v2908
      %3169 = vst [vmem:[%s3130 + $0x98] sm:$0xf] %v2909
      %3170 = vst [vmem:[%s3130 + $0x9c] sm:$0xf] %v2910
      %3171 = vst [vmem:[%s3130 + $0xa0] sm:$0xf] %v2911
      %3172 = vst [vmem:[%s3130 + $0xa4] sm:$0xf] %v2912
      %3173 = vst [vmem:[%s3130 + $0xa8] sm:$0xf] %v2913
      %3174 = vst [vmem:[%s3130 + $0xac] sm:$0xf] %v2914
      %3175 = vst [vmem:[%s3130 + $0xb0] sm:$0xf] %v2915
      %3176 = vst [vmem:[%s3130 + $0xb4] sm:$0xf] %v2916
      %3177 = vst [vmem:[%s3130 + $0xb8] sm:$0xf] %v2917
      %3178 = vst [vmem:[%s3130 + $0xbc] sm:$0xf] %v2918
      %3179 = vst [vmem:[%s3130 + $0xc0] sm:$0xf] %v2919
      %3180 = vst [vmem:[%s3130 + $0xc4] sm:$0xf] %v2920
      %3181 = vst [vmem:[%s3130 + $0xc8] sm:$0xf] %v2921
      %3182 = vst [vmem:[%s3130 + $0xcc] sm:$0xf] %v2922
      %3183 = vst [vmem:[%s3130 + $0xd0] sm:$0xf] %v2923
      %3184 = vst [vmem:[%s3130 + $0xd4] sm:$0xf] %v2924
      %3185 = vst [vmem:[%s3130 + $0xd8] sm:$0xf] %v2925
      %3186 = vst [vmem:[%s3130 + $0xdc] sm:$0xf] %v2926
      %3187 = vst [vmem:[%s3130 + $0xe0] sm:$0xf] %v2927
      %3188 = vst [vmem:[%s3130 + $0xe4] sm:$0xf] %v2928
      %3189 = vst [vmem:[%s3130 + $0xe8] sm:$0xf] %v2929
      %3190 = vst [vmem:[%s3130 + $0xec] sm:$0xf] %v2930
      %3191 = vst [vmem:[%s3130 + $0xf0] sm:$0xf] %v2931
      %3192 = vst [vmem:[%s3130 + $0xf4] sm:$0xf] %v2932
      %3193 = vst [vmem:[%s3130 + $0xf8] sm:$0xf] %v2933
      %3194 = vst [vmem:[%s3130 + $0xfc] sm:$0xf] %v2934
      %3195 = vst [vmem:[%s3130 + $0x100] sm:$0xf] %v2935
      %3196 = vst [vmem:[%s3130 + $0x104] sm:$0xf] %v2936
      %3197 = vst [vmem:[%s3130 + $0x108] sm:$0xf] %v2937
      %3198 = vst [vmem:[%s3130 + $0x10c] sm:$0xf] %v2938
      %3199 = vst [vmem:[%s3130 + $0x110] sm:$0xf] %v2939
      %3200 = vst [vmem:[%s3130 + $0x114] sm:$0xf] %v2940
      %3201 = vst [vmem:[%s3130 + $0x118] sm:$0xf] %v2941
      %3202 = vst [vmem:[%s3130 + $0x11c] sm:$0xf] %v2942
      %3203 = vst [vmem:[%s3130 + $0x120] sm:$0xf] %v2943
      %3204 = vst [vmem:[%s3130 + $0x124] sm:$0xf] %v2944
      %3205 = vst [vmem:[%s3130 + $0x128] sm:$0xf] %v2945
      %3206 = vst [vmem:[%s3130 + $0x12c] sm:$0xf] %v2946
      %3207 = vst [vmem:[%s3130 + $0x130] sm:$0xf] %v2947
      %3208 = vst [vmem:[%s3130 + $0x134] sm:$0xf] %v2948
      %3209 = vst [vmem:[%s3130 + $0x138] sm:$0xf] %v2949
      %3210 = vst [vmem:[%s3130 + $0x13c] sm:$0xf] %v2950
      %3211 = vst [vmem:[%s3130 + $0x140] sm:$0xf] %v2951
      %3212 = vst [vmem:[%s3130 + $0x144] sm:$0xf] %v2952
      %3213 = vst [vmem:[%s3130 + $0x148] sm:$0xf] %v2953
      %3214 = vst [vmem:[%s3130 + $0x14c] sm:$0xf] %v2954
      %3215 = vst [vmem:[%s3130 + $0x150] sm:$0xf] %v2955
      %3216 = vst [vmem:[%s3130 + $0x154] sm:$0xf] %v2956
      %3217 = vst [vmem:[%s3130 + $0x158] sm:$0xf] %v2957
      %3218 = vst [vmem:[%s3130 + $0x15c] sm:$0xf] %v2958
      %3219 = vst [vmem:[%s3130 + $0x160] sm:$0xf] %v2959
      %3220 = vst [vmem:[%s3130 + $0x164] sm:$0xf] %v2960
      %3221 = vst [vmem:[%s3130 + $0x168] sm:$0xf] %v2961
      %3222 = vst [vmem:[%s3130 + $0x16c] sm:$0xf] %v2962
      %3223 = vst [vmem:[%s3130 + $0x170] sm:$0xf] %v2963
      %3224 = vst [vmem:[%s3130 + $0x174] sm:$0xf] %v2964
      %3225 = vst [vmem:[%s3130 + $0x178] sm:$0xf] %v2965
      %3226 = vst [vmem:[%s3130 + $0x17c] sm:$0xf] %v2966
      %3227 = vst [vmem:[%s3130 + $0x180] sm:$0xf] %v2967
      %3228 = vst [vmem:[%s3130 + $0x184] sm:$0xf] %v2968
      %3229 = vst [vmem:[%s3130 + $0x188] sm:$0xf] %v2969
      %3230 = vst [vmem:[%s3130 + $0x18c] sm:$0xf] %v2970
      %3231 = vst [vmem:[%s3130 + $0x190] sm:$0xf] %v2971
      %3232 = vst [vmem:[%s3130 + $0x194] sm:$0xf] %v2972
      %3233 = vst [vmem:[%s3130 + $0x198] sm:$0xf] %v2973
      %3234 = vst [vmem:[%s3130 + $0x19c] sm:$0xf] %v2974
      %3235 = vst [vmem:[%s3130 + $0x1a0] sm:$0xf] %v2975
      %3236 = vst [vmem:[%s3130 + $0x1a4] sm:$0xf] %v2976
      %3237 = vst [vmem:[%s3130 + $0x1a8] sm:$0xf] %v2977
      %3238 = vst [vmem:[%s3130 + $0x1ac] sm:$0xf] %v2978
      %3239 = vst [vmem:[%s3130 + $0x1b0] sm:$0xf] %v2979
      %3240 = vst [vmem:[%s3130 + $0x1b4] sm:$0xf] %v2980
      %3241 = vst [vmem:[%s3130 + $0x1b8] sm:$0xf] %v2981
      %3242 = vst [vmem:[%s3130 + $0x1bc] sm:$0xf] %v2982
      %3243 = vst [vmem:[%s3130 + $0x1c0] sm:$0xf] %v2983
      %3244 = vst [vmem:[%s3130 + $0x1c4] sm:$0xf] %v2984
      %3245 = vst [vmem:[%s3130 + $0x1c8] sm:$0xf] %v2985
      %3246 = vst [vmem:[%s3130 + $0x1cc] sm:$0xf] %v2986
      %3247 = vst [vmem:[%s3130 + $0x1d0] sm:$0xf] %v2987
      %3248 = vst [vmem:[%s3130 + $0x1d4] sm:$0xf] %v2988
      %3249 = vst [vmem:[%s3130 + $0x1d8] sm:$0xf] %v2989
      %3250 = vst [vmem:[%s3130 + $0x1dc] sm:$0xf] %v2990
      %3251 = vst [vmem:[%s3130 + $0x1e0] sm:$0xf] %v2991
      %3252 = vst [vmem:[%s3130 + $0x1e4] sm:$0xf] %v2992
      %3253 = vst [vmem:[%s3130 + $0x1e8] sm:$0xf] %v2993
      %3254 = vst [vmem:[%s3130 + $0x1ec] sm:$0xf] %v2994
      %3255 = vst [vmem:[%s3130 + $0x1f0] sm:$0xf] %v2995
      %3256 = vst [vmem:[%s3130 + $0x1f4] sm:$0xf] %v2996
      %3257 = vst [vmem:[%s3130 + $0x1f8] sm:$0xf] %v2997
      %3258 = vst [vmem:[%s3130 + $0x1fc] sm:$0xf] %v2998
      %p3259 = scmp.eq.s32.totalorder %s15, 1
      // Predicated region
      $region41: #{dqn_forward.3} parent=35 // pred_check
        %p3260 = pneg %p3259
      $region42: #{dqn_forward.3} parent=35 // pred_check_branch
        %3262 = sbr.rel (%p3260) target = $region44
      $region43: #{dqn_forward.3} parent=35 // pred_region
        %v3263 = vld [vmem:[#allocation2] sm:$0x1]
        %v3264 = vmul.f32 %v3263, 0.0006377551
        %v3265 = vld [vmem:[#allocation3] sm:$0x1]
        %v3266 = vmul.f32 %v3265, 0.0006377551
        %v3267 = vmul.f32 %v3264, %v3264
        %v3268 = vsub.f32 %v3266, %v3267
        %v3269 = vmax.f32 %v3268, 0.0
        %v3270 = vadd.f32 %v3269, 1e-05
        %v3271 = vrsqrt.pop %v3270
        %v3272 = vld [vmem:[%s2] sm:$0x1]
        %v3273 = vmul.f32 %v3272, %v3271
        %v3274 = vld [vmem:[%s3] sm:$0x1]
        %v3275 = vmul.f32 %v3264, %v3273
        %v3276 = vsub.f32 %v3274, %v3275
        %v3277 = vld [vmem:[%s4] sm:$0xf]
        %v3278 = vld [vmem:[%s4 + $0x4] sm:$0xf]
        %v3279 = vld [vmem:[%s4 + $0x8] sm:$0xf]
        %v3280 = vld [vmem:[%s4 + $0xc] sm:$0xf]
        %v3281 = vld [vmem:[%s4 + $0x10] sm:$0xf]
        %v3282 = vld [vmem:[%s4 + $0x14] sm:$0xf]
        %v3283 = vld [vmem:[%s4 + $0x18] sm:$0xf]
        %v3284 = vld [vmem:[%s4 + $0x1c] sm:$0xf]
        %v3285 = vld [vmem:[%s4 + $0x20] sm:$0xf]
        %v3286 = vld [vmem:[%s4 + $0x24] sm:$0xf]
        %v3287 = vld [vmem:[%s4 + $0x28] sm:$0xf]
        %v3288 = vld [vmem:[%s4 + $0x2c] sm:$0xf]
        %v3289 = vld [vmem:[%s4 + $0x30] sm:$0xf]
        %v3290 = vld [vmem:[%s4 + $0x34] sm:$0xf]
        %v3291 = vld [vmem:[%s4 + $0x38] sm:$0xf]
        %v3292 = vld [vmem:[%s4 + $0x3c] sm:$0xf]
        %v3293 = vld [vmem:[%s4 + $0x40] sm:$0xf]
        %v3294 = vld [vmem:[%s4 + $0x44] sm:$0xf]
        %v3295 = vld [vmem:[%s4 + $0x48] sm:$0xf]
        %v3296 = vld [vmem:[%s4 + $0x4c] sm:$0xf]
        %v3297 = vld [vmem:[%s4 + $0x50] sm:$0xf]
        %v3298 = vld [vmem:[%s4 + $0x54] sm:$0xf]
        %v3299 = vld [vmem:[%s4 + $0x58] sm:$0xf]
        %v3300 = vld [vmem:[%s4 + $0x5c] sm:$0xf]
        %v3301 = vld [vmem:[%s4 + $0x60] sm:$0xf]
        %v3302 = vld [vmem:[%s4 + $0x64] sm:$0xf]
        %v3303 = vld [vmem:[%s4 + $0x68] sm:$0xf]
        %v3304 = vld [vmem:[%s4 + $0x6c] sm:$0xf]
        %v3305 = vld [vmem:[%s4 + $0x70] sm:$0xf]
        %v3306 = vld [vmem:[%s4 + $0x74] sm:$0xf]
        %v3307 = vld [vmem:[%s4 + $0x78] sm:$0xf]
        %v3308 = vld [vmem:[%s4 + $0x7c] sm:$0xf]
        %v3309 = vld [vmem:[%s4 + $0x80] sm:$0xf]
        %v3310 = vld [vmem:[%s4 + $0x84] sm:$0xf]
        %v3311 = vld [vmem:[%s4 + $0x88] sm:$0xf]
        %v3312 = vld [vmem:[%s4 + $0x8c] sm:$0xf]
        %v3313 = vld [vmem:[%s4 + $0x90] sm:$0xf]
        %v3314 = vld [vmem:[%s4 + $0x94] sm:$0xf]
        %v3315 = vld [vmem:[%s4 + $0x98] sm:$0xf]
        %v3316 = vld [vmem:[%s4 + $0x9c] sm:$0xf]
        %v3317 = vld [vmem:[%s4 + $0xa0] sm:$0xf]
        %v3318 = vld [vmem:[%s4 + $0xa4] sm:$0xf]
        %v3319 = vld [vmem:[%s4 + $0xa8] sm:$0xf]
        %v3320 = vld [vmem:[%s4 + $0xac] sm:$0xf]
        %v3321 = vld [vmem:[%s4 + $0xb0] sm:$0xf]
        %v3322 = vld [vmem:[%s4 + $0xb4] sm:$0xf]
        %v3323 = vld [vmem:[%s4 + $0xb8] sm:$0xf]
        %v3324 = vld [vmem:[%s4 + $0xbc] sm:$0xf]
        %v3325 = vld [vmem:[%s4 + $0xc0] sm:$0xf]
        %v3326 = vld [vmem:[%s4 + $0xc4] sm:$0xf]
        %v3327 = vld [vmem:[%s4 + $0xc8] sm:$0xf]
        %v3328 = vld [vmem:[%s4 + $0xcc] sm:$0xf]
        %v3329 = vld [vmem:[%s4 + $0xd0] sm:$0xf]
        %v3330 = vld [vmem:[%s4 + $0xd4] sm:$0xf]
        %v3331 = vld [vmem:[%s4 + $0xd8] sm:$0xf]
        %v3332 = vld [vmem:[%s4 + $0xdc] sm:$0xf]
        %v3333 = vld [vmem:[%s4 + $0xe0] sm:$0xf]
        %v3334 = vld [vmem:[%s4 + $0xe4] sm:$0xf]
        %v3335 = vld [vmem:[%s4 + $0xe8] sm:$0xf]
        %v3336 = vld [vmem:[%s4 + $0xec] sm:$0xf]
        %v3337 = vld [vmem:[%s4 + $0xf0] sm:$0xf]
        %v3338 = vld [vmem:[%s4 + $0xf4] sm:$0xf]
        %v3339 = vld [vmem:[%s4 + $0xf8] sm:$0xf]
        %v3340 = vld [vmem:[%s4 + $0xfc] sm:$0xf]
        %v3341 = vld [vmem:[%s4 + $0x100] sm:$0xf]
        %v3342 = vld [vmem:[%s4 + $0x104] sm:$0xf]
        %v3343 = vld [vmem:[%s4 + $0x108] sm:$0xf]
        %v3344 = vld [vmem:[%s4 + $0x10c] sm:$0xf]
        %v3345 = vld [vmem:[%s4 + $0x110] sm:$0xf]
        %v3346 = vld [vmem:[%s4 + $0x114] sm:$0xf]
        %v3347 = vld [vmem:[%s4 + $0x118] sm:$0xf]
        %v3348 = vld [vmem:[%s4 + $0x11c] sm:$0xf]
        %v3349 = vld [vmem:[%s4 + $0x120] sm:$0xf]
        %v3350 = vld [vmem:[%s4 + $0x124] sm:$0xf]
        %v3351 = vld [vmem:[%s4 + $0x128] sm:$0xf]
        %v3352 = vld [vmem:[%s4 + $0x12c] sm:$0xf]
        %v3353 = vld [vmem:[%s4 + $0x130] sm:$0xf]
        %v3354 = vld [vmem:[%s4 + $0x134] sm:$0xf]
        %v3355 = vld [vmem:[%s4 + $0x138] sm:$0xf]
        %v3356 = vld [vmem:[%s4 + $0x13c] sm:$0xf]
        %v3357 = vld [vmem:[%s4 + $0x140] sm:$0xf]
        %v3358 = vld [vmem:[%s4 + $0x144] sm:$0xf]
        %v3359 = vld [vmem:[%s4 + $0x148] sm:$0xf]
        %v3360 = vld [vmem:[%s4 + $0x14c] sm:$0xf]
        %v3361 = vld [vmem:[%s4 + $0x150] sm:$0xf]
        %v3362 = vld [vmem:[%s4 + $0x154] sm:$0xf]
        %v3363 = vld [vmem:[%s4 + $0x158] sm:$0xf]
        %v3364 = vld [vmem:[%s4 + $0x15c] sm:$0xf]
        %v3365 = vld [vmem:[%s4 + $0x160] sm:$0xf]
        %v3366 = vld [vmem:[%s4 + $0x164] sm:$0xf]
        %v3367 = vld [vmem:[%s4 + $0x168] sm:$0xf]
        %v3368 = vld [vmem:[%s4 + $0x16c] sm:$0xf]
        %v3369 = vld [vmem:[%s4 + $0x170] sm:$0xf]
        %v3370 = vld [vmem:[%s4 + $0x174] sm:$0xf]
        %v3371 = vld [vmem:[%s4 + $0x178] sm:$0xf]
        %v3372 = vld [vmem:[%s4 + $0x17c] sm:$0xf]
        %v3373 = vld [vmem:[%s4 + $0x180] sm:$0xf]
        %v3374 = vld [vmem:[%s4 + $0x184] sm:$0xf]
        %v3375 = vld [vmem:[%s4 + $0x188] sm:$0xf]
        %v3376 = vld [vmem:[%s4 + $0x18c] sm:$0xf]
        %v3377 = vld [vmem:[%s4 + $0x190] sm:$0xf]
        %v3378 = vld [vmem:[%s4 + $0x194] sm:$0xf]
        %v3379 = vld [vmem:[%s4 + $0x198] sm:$0xf]
        %v3380 = vld [vmem:[%s4 + $0x19c] sm:$0xf]
        %v3381 = vld [vmem:[%s4 + $0x1a0] sm:$0xf]
        %v3382 = vld [vmem:[%s4 + $0x1a4] sm:$0xf]
        %v3383 = vld [vmem:[%s4 + $0x1a8] sm:$0xf]
        %v3384 = vld [vmem:[%s4 + $0x1ac] sm:$0xf]
        %v3385 = vld [vmem:[%s4 + $0x1b0] sm:$0xf]
        %v3386 = vld [vmem:[%s4 + $0x1b4] sm:$0xf]
        %v3387 = vld [vmem:[%s4 + $0x1b8] sm:$0xf]
        %v3388 = vld [vmem:[%s4 + $0x1bc] sm:$0xf]
        %v3389 = vld [vmem:[%s4 + $0x1c0] sm:$0xf]
        %v3390 = vld [vmem:[%s4 + $0x1c4] sm:$0xf]
        %v3391 = vld [vmem:[%s4 + $0x1c8] sm:$0xf]
        %v3392 = vld [vmem:[%s4 + $0x1cc] sm:$0xf]
        %v3393 = vld [vmem:[%s4 + $0x1d0] sm:$0xf]
        %v3394 = vld [vmem:[%s4 + $0x1d4] sm:$0xf]
        %v3395 = vld [vmem:[%s4 + $0x1d8] sm:$0xf]
        %v3396 = vld [vmem:[%s4 + $0x1dc] sm:$0xf]
        %v3397 = vld [vmem:[%s4 + $0x1e0] sm:$0xf]
        %v3398 = vld [vmem:[%s4 + $0x1e4] sm:$0xf]
        %v3399 = vld [vmem:[%s4 + $0x1e8] sm:$0xf]
        %v3400 = vld [vmem:[%s4 + $0x1ec] sm:$0xf]
        %v3401 = vld [vmem:[%s4 + $0x1f0] sm:$0xf]
        %v3402 = vld [vmem:[%s4 + $0x1f4] sm:$0xf]
        %v3403 = vld [vmem:[%s4 + $0x1f8] sm:$0xf]
        %v3404 = vld [vmem:[%s4 + $0x1fc] sm:$0xf]
        %v3405 = vld [vmem:[%s4 + $0x200] sm:$0xf]
        %v3406 = vld [vmem:[%s4 + $0x204] sm:$0xf]
        %v3407 = vld [vmem:[%s4 + $0x208] sm:$0xf]
        %v3408 = vld [vmem:[%s4 + $0x20c] sm:$0xf]
        %v3409 = vld [vmem:[%s4 + $0x210] sm:$0xf]
        %v3410 = vld [vmem:[%s4 + $0x214] sm:$0xf]
        %v3411 = vld [vmem:[%s4 + $0x218] sm:$0xf]
        %v3412 = vld [vmem:[%s4 + $0x21c] sm:$0xf]
        %v3413 = vld [vmem:[%s4 + $0x220] sm:$0xf]
        %v3414 = vld [vmem:[%s4 + $0x224] sm:$0xf]
        %v3415 = vld [vmem:[%s4 + $0x228] sm:$0xf]
        %v3416 = vld [vmem:[%s4 + $0x22c] sm:$0xf]
        %v3417 = vld [vmem:[%s4 + $0x230] sm:$0xf]
        %v3418 = vld [vmem:[%s4 + $0x234] sm:$0xf]
        %v3419 = vld [vmem:[%s4 + $0x238] sm:$0xf]
        %v3420 = vld [vmem:[%s4 + $0x23c] sm:$0xf]
        %v3421 = vld [vmem:[%s4 + $0x240] sm:$0xf]
        %v3422 = vld [vmem:[%s4 + $0x244] sm:$0xf]
        %v3423 = vld [vmem:[%s4 + $0x248] sm:$0xf]
        %v3424 = vld [vmem:[%s4 + $0x24c] sm:$0xf]
        %v3425 = vld [vmem:[%s4 + $0x250] sm:$0xf]
        %v3426 = vld [vmem:[%s4 + $0x254] sm:$0xf]
        %v3427 = vld [vmem:[%s4 + $0x258] sm:$0xf]
        %v3428 = vld [vmem:[%s4 + $0x25c] sm:$0xf]
        %v3429 = vld [vmem:[%s4 + $0x260] sm:$0xf]
        %v3430 = vld [vmem:[%s4 + $0x264] sm:$0xf]
        %v3431 = vld [vmem:[%s4 + $0x268] sm:$0xf]
        %v3432 = vld [vmem:[%s4 + $0x26c] sm:$0xf]
        %v3433 = vld [vmem:[%s4 + $0x270] sm:$0xf]
        %v3434 = vld [vmem:[%s4 + $0x274] sm:$0xf]
        %v3435 = vld [vmem:[%s4 + $0x278] sm:$0xf]
        %v3436 = vld [vmem:[%s4 + $0x27c] sm:$0xf]
        %v3437 = vld [vmem:[%s4 + $0x280] sm:$0xf]
        %v3438 = vld [vmem:[%s4 + $0x284] sm:$0xf]
        %v3439 = vld [vmem:[%s4 + $0x288] sm:$0xf]
        %v3440 = vld [vmem:[%s4 + $0x28c] sm:$0xf]
        %v3441 = vld [vmem:[%s4 + $0x290] sm:$0xf]
        %v3442 = vld [vmem:[%s4 + $0x294] sm:$0xf]
        %v3443 = vld [vmem:[%s4 + $0x298] sm:$0xf]
        %v3444 = vld [vmem:[%s4 + $0x29c] sm:$0xf]
        %v3445 = vld [vmem:[%s4 + $0x2a0] sm:$0xf]
        %v3446 = vld [vmem:[%s4 + $0x2a4] sm:$0xf]
        %v3447 = vld [vmem:[%s4 + $0x2a8] sm:$0xf]
        %v3448 = vld [vmem:[%s4 + $0x2ac] sm:$0xf]
        %v3449 = vld [vmem:[%s4 + $0x2b0] sm:$0xf]
        %v3450 = vld [vmem:[%s4 + $0x2b4] sm:$0xf]
        %v3451 = vld [vmem:[%s4 + $0x2b8] sm:$0xf]
        %v3452 = vld [vmem:[%s4 + $0x2bc] sm:$0xf]
        %v3453 = vld [vmem:[%s4 + $0x2c0] sm:$0xf]
        %v3454 = vld [vmem:[%s4 + $0x2c4] sm:$0xf]
        %v3455 = vld [vmem:[%s4 + $0x2c8] sm:$0xf]
        %v3456 = vld [vmem:[%s4 + $0x2cc] sm:$0xf]
        %v3457 = vld [vmem:[%s4 + $0x2d0] sm:$0xf]
        %v3458 = vld [vmem:[%s4 + $0x2d4] sm:$0xf]
        %v3459 = vld [vmem:[%s4 + $0x2d8] sm:$0xf]
        %v3460 = vld [vmem:[%s4 + $0x2dc] sm:$0xf]
        %v3461 = vld [vmem:[%s4 + $0x2e0] sm:$0xf]
        %v3462 = vld [vmem:[%s4 + $0x2e4] sm:$0xf]
        %v3463 = vld [vmem:[%s4 + $0x2e8] sm:$0xf]
        %v3464 = vld [vmem:[%s4 + $0x2ec] sm:$0xf]
        %v3465 = vld [vmem:[%s4 + $0x2f0] sm:$0xf]
        %v3466 = vld [vmem:[%s4 + $0x2f4] sm:$0xf]
        %v3467 = vld [vmem:[%s4 + $0x2f8] sm:$0xf]
        %v3468 = vld [vmem:[%s4 + $0x2fc] sm:$0xf]
        %v3469 = vld [vmem:[%s4 + $0x300] sm:$0xf]
        %v3470 = vld [vmem:[%s4 + $0x304] sm:$0xf]
        %v3471 = vld [vmem:[%s4 + $0x308] sm:$0xf]
        %v3472 = vld [vmem:[%s4 + $0x30c] sm:$0xf]
        %v3473 = vld [vmem:[%s4 + $0x310] sm:$0xf]
        %v3474 = vld [vmem:[%s4 + $0x314] sm:$0xf]
        %v3475 = vld [vmem:[%s4 + $0x318] sm:$0xf]
        %v3476 = vld [vmem:[%s4 + $0x31c] sm:$0xf]
        %v3477 = vld [vmem:[%s4 + $0x320] sm:$0xf]
        %v3478 = vld [vmem:[%s4 + $0x324] sm:$0xf]
        %v3479 = vld [vmem:[%s4 + $0x328] sm:$0xf]
        %v3480 = vld [vmem:[%s4 + $0x32c] sm:$0xf]
        %v3481 = vld [vmem:[%s4 + $0x330] sm:$0xf]
        %v3482 = vld [vmem:[%s4 + $0x334] sm:$0xf]
        %v3483 = vld [vmem:[%s4 + $0x338] sm:$0xf]
        %v3484 = vld [vmem:[%s4 + $0x33c] sm:$0xf]
        %v3485 = vld [vmem:[%s4 + $0x340] sm:$0xf]
        %v3486 = vld [vmem:[%s4 + $0x344] sm:$0xf]
        %v3487 = vld [vmem:[%s4 + $0x348] sm:$0xf]
        %v3488 = vld [vmem:[%s4 + $0x34c] sm:$0xf]
        %v3489 = vld [vmem:[%s4 + $0x350] sm:$0xf]
        %v3490 = vld [vmem:[%s4 + $0x354] sm:$0xf]
        %v3491 = vld [vmem:[%s4 + $0x358] sm:$0xf]
        %v3492 = vld [vmem:[%s4 + $0x35c] sm:$0xf]
        %v3493 = vld [vmem:[%s4 + $0x360] sm:$0xf]
        %v3494 = vld [vmem:[%s4 + $0x364] sm:$0xf]
        %v3495 = vld [vmem:[%s4 + $0x368] sm:$0xf]
        %v3496 = vld [vmem:[%s4 + $0x36c] sm:$0xf]
        %v3497 = vld [vmem:[%s4 + $0x370] sm:$0xf]
        %v3498 = vld [vmem:[%s4 + $0x374] sm:$0xf]
        %v3499 = vld [vmem:[%s4 + $0x378] sm:$0xf]
        %v3500 = vld [vmem:[%s4 + $0x37c] sm:$0xf]
        %v3501 = vld [vmem:[%s4 + $0x380] sm:$0xf]
        %v3502 = vld [vmem:[%s4 + $0x384] sm:$0xf]
        %v3503 = vld [vmem:[%s4 + $0x388] sm:$0xf]
        %v3504 = vld [vmem:[%s4 + $0x38c] sm:$0xf]
        %v3505 = vld [vmem:[%s4 + $0x390] sm:$0xf]
        %v3506 = vld [vmem:[%s4 + $0x394] sm:$0xf]
        %v3507 = vld [vmem:[%s4 + $0x398] sm:$0xf]
        %v3508 = vld [vmem:[%s4 + $0x39c] sm:$0xf]
        %v3509 = vld [vmem:[%s4 + $0x3a0] sm:$0xf]
        %v3510 = vld [vmem:[%s4 + $0x3a4] sm:$0xf]
        %v3511 = vld [vmem:[%s4 + $0x3a8] sm:$0xf]
        %v3512 = vld [vmem:[%s4 + $0x3ac] sm:$0xf]
        %v3513 = vld [vmem:[%s4 + $0x3b0] sm:$0xf]
        %v3514 = vld [vmem:[%s4 + $0x3b4] sm:$0xf]
        %v3515 = vld [vmem:[%s4 + $0x3b8] sm:$0xf]
        %v3516 = vld [vmem:[%s4 + $0x3bc] sm:$0xf]
        %v3517 = vld [vmem:[%s4 + $0x3c0] sm:$0xf]
        %v3518 = vld [vmem:[%s4 + $0x3c4] sm:$0xf]
        %v3519 = vld [vmem:[%s4 + $0x3c8] sm:$0xf]
        %v3520 = vld [vmem:[%s4 + $0x3cc] sm:$0xf]
        %v3521 = vld [vmem:[%s4 + $0x3d0] sm:$0xf]
        %v3522 = vld [vmem:[%s4 + $0x3d4] sm:$0xf]
        %v3523 = vld [vmem:[%s4 + $0x3d8] sm:$0xf]
        %v3524 = vld [vmem:[%s4 + $0x3dc] sm:$0xf]
        %v3525 = vld [vmem:[%s4 + $0x3e0] sm:$0xf]
        %v3526 = vld [vmem:[%s4 + $0x3e4] sm:$0xf]
        %v3527 = vld [vmem:[%s4 + $0x3e8] sm:$0xf]
        %v3528 = vld [vmem:[%s4 + $0x3ec] sm:$0xf]
        %v3529 = vld [vmem:[%s4 + $0x3f0] sm:$0xf]
        %v3530 = vld [vmem:[%s4 + $0x3f4] sm:$0xf]
        %v3531 = vld [vmem:[%s4 + $0x3f8] sm:$0xf]
        %v3532 = vld [vmem:[%s4 + $0x3fc] sm:$0xf]
        %v3533 = vunpack.c.l.bf16 %v3277
        %v3534 = vunpack.c.l.bf16 %v3278
        %v3535 = vunpack.c.l.bf16 %v3279
        %v3536 = vunpack.c.l.bf16 %v3280
        %v3537 = vunpack.c.l.bf16 %v3281
        %v3538 = vunpack.c.l.bf16 %v3282
        %v3539 = vunpack.c.l.bf16 %v3283
        %v3540 = vunpack.c.l.bf16 %v3284
        %v3541 = vunpack.c.l.bf16 %v3285
        %v3542 = vunpack.c.l.bf16 %v3286
        %v3543 = vunpack.c.l.bf16 %v3287
        %v3544 = vunpack.c.l.bf16 %v3288
        %v3545 = vunpack.c.l.bf16 %v3289
        %v3546 = vunpack.c.l.bf16 %v3290
        %v3547 = vunpack.c.l.bf16 %v3291
        %v3548 = vunpack.c.l.bf16 %v3292
        %v3549 = vunpack.c.l.bf16 %v3293
        %v3550 = vunpack.c.l.bf16 %v3294
        %v3551 = vunpack.c.l.bf16 %v3295
        %v3552 = vunpack.c.l.bf16 %v3296
        %v3553 = vunpack.c.l.bf16 %v3297
        %v3554 = vunpack.c.l.bf16 %v3298
        %v3555 = vunpack.c.l.bf16 %v3299
        %v3556 = vunpack.c.l.bf16 %v3300
        %v3557 = vunpack.c.l.bf16 %v3301
        %v3558 = vunpack.c.l.bf16 %v3302
        %v3559 = vunpack.c.l.bf16 %v3303
        %v3560 = vunpack.c.l.bf16 %v3304
        %v3561 = vunpack.c.l.bf16 %v3305
        %v3562 = vunpack.c.l.bf16 %v3306
        %v3563 = vunpack.c.l.bf16 %v3307
        %v3564 = vunpack.c.l.bf16 %v3308
        %v3565 = vunpack.c.l.bf16 %v3309
        %v3566 = vunpack.c.l.bf16 %v3310
        %v3567 = vunpack.c.l.bf16 %v3311
        %v3568 = vunpack.c.l.bf16 %v3312
        %v3569 = vunpack.c.l.bf16 %v3313
        %v3570 = vunpack.c.l.bf16 %v3314
        %v3571 = vunpack.c.l.bf16 %v3315
        %v3572 = vunpack.c.l.bf16 %v3316
        %v3573 = vunpack.c.l.bf16 %v3317
        %v3574 = vunpack.c.l.bf16 %v3318
        %v3575 = vunpack.c.l.bf16 %v3319
        %v3576 = vunpack.c.l.bf16 %v3320
        %v3577 = vunpack.c.l.bf16 %v3321
        %v3578 = vunpack.c.l.bf16 %v3322
        %v3579 = vunpack.c.l.bf16 %v3323
        %v3580 = vunpack.c.l.bf16 %v3324
        %v3581 = vunpack.c.l.bf16 %v3325
        %v3582 = vunpack.c.l.bf16 %v3326
        %v3583 = vunpack.c.l.bf16 %v3327
        %v3584 = vunpack.c.l.bf16 %v3328
        %v3585 = vunpack.c.l.bf16 %v3329
        %v3586 = vunpack.c.l.bf16 %v3330
        %v3587 = vunpack.c.l.bf16 %v3331
        %v3588 = vunpack.c.l.bf16 %v3332
        %v3589 = vunpack.c.l.bf16 %v3333
        %v3590 = vunpack.c.l.bf16 %v3334
        %v3591 = vunpack.c.l.bf16 %v3335
        %v3592 = vunpack.c.l.bf16 %v3336
        %v3593 = vunpack.c.l.bf16 %v3337
        %v3594 = vunpack.c.l.bf16 %v3338
        %v3595 = vunpack.c.l.bf16 %v3339
        %v3596 = vunpack.c.l.bf16 %v3340
        %v3597 = vunpack.c.l.bf16 %v3341
        %v3598 = vunpack.c.l.bf16 %v3342
        %v3599 = vunpack.c.l.bf16 %v3343
        %v3600 = vunpack.c.l.bf16 %v3344
        %v3601 = vunpack.c.l.bf16 %v3345
        %v3602 = vunpack.c.l.bf16 %v3346
        %v3603 = vunpack.c.l.bf16 %v3347
        %v3604 = vunpack.c.l.bf16 %v3348
        %v3605 = vunpack.c.l.bf16 %v3349
        %v3606 = vunpack.c.l.bf16 %v3350
        %v3607 = vunpack.c.l.bf16 %v3351
        %v3608 = vunpack.c.l.bf16 %v3352
        %v3609 = vunpack.c.l.bf16 %v3353
        %v3610 = vunpack.c.l.bf16 %v3354
        %v3611 = vunpack.c.l.bf16 %v3355
        %v3612 = vunpack.c.l.bf16 %v3356
        %v3613 = vunpack.c.l.bf16 %v3357
        %v3614 = vunpack.c.l.bf16 %v3358
        %v3615 = vunpack.c.l.bf16 %v3359
        %v3616 = vunpack.c.l.bf16 %v3360
        %v3617 = vunpack.c.l.bf16 %v3361
        %v3618 = vunpack.c.l.bf16 %v3362
        %v3619 = vunpack.c.l.bf16 %v3363
        %v3620 = vunpack.c.l.bf16 %v3364
        %v3621 = vunpack.c.l.bf16 %v3365
        %v3622 = vunpack.c.l.bf16 %v3366
        %v3623 = vunpack.c.l.bf16 %v3367
        %v3624 = vunpack.c.l.bf16 %v3368
        %v3625 = vunpack.c.l.bf16 %v3369
        %v3626 = vunpack.c.l.bf16 %v3370
        %v3627 = vunpack.c.l.bf16 %v3371
        %v3628 = vunpack.c.l.bf16 %v3372
        %v3629 = vunpack.c.l.bf16 %v3373
        %v3630 = vunpack.c.l.bf16 %v3374
        %v3631 = vunpack.c.l.bf16 %v3375
        %v3632 = vunpack.c.l.bf16 %v3376
        %v3633 = vunpack.c.l.bf16 %v3377
        %v3634 = vunpack.c.l.bf16 %v3378
        %v3635 = vunpack.c.l.bf16 %v3379
        %v3636 = vunpack.c.l.bf16 %v3380
        %v3637 = vunpack.c.l.bf16 %v3381
        %v3638 = vunpack.c.l.bf16 %v3382
        %v3639 = vunpack.c.l.bf16 %v3383
        %v3640 = vunpack.c.l.bf16 %v3384
        %v3641 = vunpack.c.l.bf16 %v3385
        %v3642 = vunpack.c.l.bf16 %v3386
        %v3643 = vunpack.c.l.bf16 %v3387
        %v3644 = vunpack.c.l.bf16 %v3388
        %v3645 = vunpack.c.l.bf16 %v3389
        %v3646 = vunpack.c.l.bf16 %v3390
        %v3647 = vunpack.c.l.bf16 %v3391
        %v3648 = vunpack.c.l.bf16 %v3392
        %v3649 = vunpack.c.l.bf16 %v3393
        %v3650 = vunpack.c.l.bf16 %v3394
        %v3651 = vunpack.c.l.bf16 %v3395
        %v3652 = vunpack.c.l.bf16 %v3396
        %v3653 = vunpack.c.l.bf16 %v3397
        %v3654 = vunpack.c.l.bf16 %v3398
        %v3655 = vunpack.c.l.bf16 %v3399
        %v3656 = vunpack.c.l.bf16 %v3400
        %v3657 = vunpack.c.l.bf16 %v3401
        %v3658 = vunpack.c.l.bf16 %v3402
        %v3659 = vunpack.c.l.bf16 %v3403
        %v3660 = vunpack.c.l.bf16 %v3404
        %v3661 = vunpack.c.l.bf16 %v3405
        %v3662 = vunpack.c.l.bf16 %v3406
        %v3663 = vunpack.c.l.bf16 %v3407
        %v3664 = vunpack.c.l.bf16 %v3408
        %v3665 = vunpack.c.l.bf16 %v3409
        %v3666 = vunpack.c.l.bf16 %v3410
        %v3667 = vunpack.c.l.bf16 %v3411
        %v3668 = vunpack.c.l.bf16 %v3412
        %v3669 = vunpack.c.l.bf16 %v3413
        %v3670 = vunpack.c.l.bf16 %v3414
        %v3671 = vunpack.c.l.bf16 %v3415
        %v3672 = vunpack.c.l.bf16 %v3416
        %v3673 = vunpack.c.l.bf16 %v3417
        %v3674 = vunpack.c.l.bf16 %v3418
        %v3675 = vunpack.c.l.bf16 %v3419
        %v3676 = vunpack.c.l.bf16 %v3420
        %v3677 = vunpack.c.l.bf16 %v3421
        %v3678 = vunpack.c.l.bf16 %v3422
        %v3679 = vunpack.c.l.bf16 %v3423
        %v3680 = vunpack.c.l.bf16 %v3424
        %v3681 = vunpack.c.l.bf16 %v3425
        %v3682 = vunpack.c.l.bf16 %v3426
        %v3683 = vunpack.c.l.bf16 %v3427
        %v3684 = vunpack.c.l.bf16 %v3428
        %v3685 = vunpack.c.l.bf16 %v3429
        %v3686 = vunpack.c.l.bf16 %v3430
        %v3687 = vunpack.c.l.bf16 %v3431
        %v3688 = vunpack.c.l.bf16 %v3432
        %v3689 = vunpack.c.l.bf16 %v3433
        %v3690 = vunpack.c.l.bf16 %v3434
        %v3691 = vunpack.c.l.bf16 %v3435
        %v3692 = vunpack.c.l.bf16 %v3436
        %v3693 = vunpack.c.l.bf16 %v3437
        %v3694 = vunpack.c.l.bf16 %v3438
        %v3695 = vunpack.c.l.bf16 %v3439
        %v3696 = vunpack.c.l.bf16 %v3440
        %v3697 = vunpack.c.l.bf16 %v3441
        %v3698 = vunpack.c.l.bf16 %v3442
        %v3699 = vunpack.c.l.bf16 %v3443
        %v3700 = vunpack.c.l.bf16 %v3444
        %v3701 = vunpack.c.l.bf16 %v3445
        %v3702 = vunpack.c.l.bf16 %v3446
        %v3703 = vunpack.c.l.bf16 %v3447
        %v3704 = vunpack.c.l.bf16 %v3448
        %v3705 = vunpack.c.l.bf16 %v3449
        %v3706 = vunpack.c.l.bf16 %v3450
        %v3707 = vunpack.c.l.bf16 %v3451
        %v3708 = vunpack.c.l.bf16 %v3452
        %v3709 = vunpack.c.l.bf16 %v3453
        %v3710 = vunpack.c.l.bf16 %v3454
        %v3711 = vunpack.c.l.bf16 %v3455
        %v3712 = vunpack.c.l.bf16 %v3456
        %v3713 = vunpack.c.l.bf16 %v3457
        %v3714 = vunpack.c.l.bf16 %v3458
        %v3715 = vunpack.c.l.bf16 %v3459
        %v3716 = vunpack.c.l.bf16 %v3460
        %v3717 = vunpack.c.l.bf16 %v3461
        %v3718 = vunpack.c.l.bf16 %v3462
        %v3719 = vunpack.c.l.bf16 %v3463
        %v3720 = vunpack.c.l.bf16 %v3464
        %v3721 = vunpack.c.l.bf16 %v3465
        %v3722 = vunpack.c.l.bf16 %v3466
        %v3723 = vunpack.c.l.bf16 %v3467
        %v3724 = vunpack.c.l.bf16 %v3468
        %v3725 = vunpack.c.l.bf16 %v3469
        %v3726 = vunpack.c.l.bf16 %v3470
        %v3727 = vunpack.c.l.bf16 %v3471
        %v3728 = vunpack.c.l.bf16 %v3472
        %v3729 = vunpack.c.l.bf16 %v3473
        %v3730 = vunpack.c.l.bf16 %v3474
        %v3731 = vunpack.c.l.bf16 %v3475
        %v3732 = vunpack.c.l.bf16 %v3476
        %v3733 = vunpack.c.l.bf16 %v3477
        %v3734 = vunpack.c.l.bf16 %v3478
        %v3735 = vunpack.c.l.bf16 %v3479
        %v3736 = vunpack.c.l.bf16 %v3480
        %v3737 = vunpack.c.l.bf16 %v3481
        %v3738 = vunpack.c.l.bf16 %v3482
        %v3739 = vunpack.c.l.bf16 %v3483
        %v3740 = vunpack.c.l.bf16 %v3484
        %v3741 = vunpack.c.l.bf16 %v3485
        %v3742 = vunpack.c.l.bf16 %v3486
        %v3743 = vunpack.c.l.bf16 %v3487
        %v3744 = vunpack.c.l.bf16 %v3488
        %v3745 = vunpack.c.l.bf16 %v3489
        %v3746 = vunpack.c.l.bf16 %v3490
        %v3747 = vunpack.c.l.bf16 %v3491
        %v3748 = vunpack.c.l.bf16 %v3492
        %v3749 = vunpack.c.l.bf16 %v3493
        %v3750 = vunpack.c.l.bf16 %v3494
        %v3751 = vunpack.c.l.bf16 %v3495
        %v3752 = vunpack.c.l.bf16 %v3496
        %v3753 = vunpack.c.l.bf16 %v3497
        %v3754 = vunpack.c.l.bf16 %v3498
        %v3755 = vunpack.c.l.bf16 %v3499
        %v3756 = vunpack.c.l.bf16 %v3500
        %v3757 = vunpack.c.l.bf16 %v3501
        %v3758 = vunpack.c.l.bf16 %v3502
        %v3759 = vunpack.c.l.bf16 %v3503
        %v3760 = vunpack.c.l.bf16 %v3504
        %v3761 = vunpack.c.l.bf16 %v3505
        %v3762 = vunpack.c.l.bf16 %v3506
        %v3763 = vunpack.c.l.bf16 %v3507
        %v3764 = vunpack.c.l.bf16 %v3508
        %v3765 = vunpack.c.l.bf16 %v3509
        %v3766 = vunpack.c.l.bf16 %v3510
        %v3767 = vunpack.c.l.bf16 %v3511
        %v3768 = vunpack.c.l.bf16 %v3512
        %v3769 = vunpack.c.l.bf16 %v3513
        %v3770 = vunpack.c.l.bf16 %v3514
        %v3771 = vunpack.c.l.bf16 %v3515
        %v3772 = vunpack.c.l.bf16 %v3516
        %v3773 = vunpack.c.l.bf16 %v3517
        %v3774 = vunpack.c.l.bf16 %v3518
        %v3775 = vunpack.c.l.bf16 %v3519
        %v3776 = vunpack.c.l.bf16 %v3520
        %v3777 = vunpack.c.l.bf16 %v3521
        %v3778 = vunpack.c.l.bf16 %v3522
        %v3779 = vunpack.c.l.bf16 %v3523
        %v3780 = vunpack.c.l.bf16 %v3524
        %v3781 = vunpack.c.l.bf16 %v3525
        %v3782 = vunpack.c.l.bf16 %v3526
        %v3783 = vunpack.c.l.bf16 %v3527
        %v3784 = vunpack.c.l.bf16 %v3528
        %v3785 = vunpack.c.l.bf16 %v3529
        %v3786 = vunpack.c.l.bf16 %v3530
        %v3787 = vunpack.c.l.bf16 %v3531
        %v3788 = vunpack.c.l.bf16 %v3532
        %v3790 = vlaneseq
        %v3791 = vshrl.u32 %v3790, 7
        %v3792 = vsub.s32 0, %v3791
        %v3793 = vrot.slane %v3273, %v3792
        %v3795 = vmul.f32 %v3533, %v3793
        %v3796 = vmul.f32 %v3534, %v3793
        %v3797 = vmul.f32 %v3535, %v3793
        %v3798 = vmul.f32 %v3536, %v3793
        %v3799 = vmul.f32 %v3537, %v3793
        %v3800 = vmul.f32 %v3538, %v3793
        %v3801 = vmul.f32 %v3539, %v3793
        %v3802 = vmul.f32 %v3540, %v3793
        %v3803 = vmul.f32 %v3541, %v3793
        %v3804 = vmul.f32 %v3542, %v3793
        %v3805 = vmul.f32 %v3543, %v3793
        %v3806 = vmul.f32 %v3544, %v3793
        %v3807 = vmul.f32 %v3545, %v3793
        %v3808 = vmul.f32 %v3546, %v3793
        %v3809 = vmul.f32 %v3547, %v3793
        %v3810 = vmul.f32 %v3548, %v3793
        %v3811 = vmul.f32 %v3549, %v3793
        %v3812 = vmul.f32 %v3550, %v3793
        %v3813 = vmul.f32 %v3551, %v3793
        %v3814 = vmul.f32 %v3552, %v3793
        %v3815 = vmul.f32 %v3553, %v3793
        %v3816 = vmul.f32 %v3554, %v3793
        %v3817 = vmul.f32 %v3555, %v3793
        %v3818 = vmul.f32 %v3556, %v3793
        %v3819 = vmul.f32 %v3557, %v3793
        %v3820 = vmul.f32 %v3558, %v3793
        %v3821 = vmul.f32 %v3559, %v3793
        %v3822 = vmul.f32 %v3560, %v3793
        %v3823 = vmul.f32 %v3561, %v3793
        %v3824 = vmul.f32 %v3562, %v3793
        %v3825 = vmul.f32 %v3563, %v3793
        %v3826 = vmul.f32 %v3564, %v3793
        %v3827 = vmul.f32 %v3565, %v3793
        %v3828 = vmul.f32 %v3566, %v3793
        %v3829 = vmul.f32 %v3567, %v3793
        %v3830 = vmul.f32 %v3568, %v3793
        %v3831 = vmul.f32 %v3569, %v3793
        %v3832 = vmul.f32 %v3570, %v3793
        %v3833 = vmul.f32 %v3571, %v3793
        %v3834 = vmul.f32 %v3572, %v3793
        %v3835 = vmul.f32 %v3573, %v3793
        %v3836 = vmul.f32 %v3574, %v3793
        %v3837 = vmul.f32 %v3575, %v3793
        %v3838 = vmul.f32 %v3576, %v3793
        %v3839 = vmul.f32 %v3577, %v3793
        %v3840 = vmul.f32 %v3578, %v3793
        %v3841 = vmul.f32 %v3579, %v3793
        %v3842 = vmul.f32 %v3580, %v3793
        %v3843 = vmul.f32 %v3581, %v3793
        %v3844 = vmul.f32 %v3582, %v3793
        %v3845 = vmul.f32 %v3583, %v3793
        %v3846 = vmul.f32 %v3584, %v3793
        %v3847 = vmul.f32 %v3585, %v3793
        %v3848 = vmul.f32 %v3586, %v3793
        %v3849 = vmul.f32 %v3587, %v3793
        %v3850 = vmul.f32 %v3588, %v3793
        %v3851 = vmul.f32 %v3589, %v3793
        %v3852 = vmul.f32 %v3590, %v3793
        %v3853 = vmul.f32 %v3591, %v3793
        %v3854 = vmul.f32 %v3592, %v3793
        %v3855 = vmul.f32 %v3593, %v3793
        %v3856 = vmul.f32 %v3594, %v3793
        %v3857 = vmul.f32 %v3595, %v3793
        %v3858 = vmul.f32 %v3596, %v3793
        %v3859 = vmul.f32 %v3597, %v3793
        %v3860 = vmul.f32 %v3598, %v3793
        %v3861 = vmul.f32 %v3599, %v3793
        %v3862 = vmul.f32 %v3600, %v3793
        %v3863 = vmul.f32 %v3601, %v3793
        %v3864 = vmul.f32 %v3602, %v3793
        %v3865 = vmul.f32 %v3603, %v3793
        %v3866 = vmul.f32 %v3604, %v3793
        %v3867 = vmul.f32 %v3605, %v3793
        %v3868 = vmul.f32 %v3606, %v3793
        %v3869 = vmul.f32 %v3607, %v3793
        %v3870 = vmul.f32 %v3608, %v3793
        %v3871 = vmul.f32 %v3609, %v3793
        %v3872 = vmul.f32 %v3610, %v3793
        %v3873 = vmul.f32 %v3611, %v3793
        %v3874 = vmul.f32 %v3612, %v3793
        %v3875 = vmul.f32 %v3613, %v3793
        %v3876 = vmul.f32 %v3614, %v3793
        %v3877 = vmul.f32 %v3615, %v3793
        %v3878 = vmul.f32 %v3616, %v3793
        %v3879 = vmul.f32 %v3617, %v3793
        %v3880 = vmul.f32 %v3618, %v3793
        %v3881 = vmul.f32 %v3619, %v3793
        %v3882 = vmul.f32 %v3620, %v3793
        %v3883 = vmul.f32 %v3621, %v3793
        %v3884 = vmul.f32 %v3622, %v3793
        %v3885 = vmul.f32 %v3623, %v3793
        %v3886 = vmul.f32 %v3624, %v3793
        %v3887 = vmul.f32 %v3625, %v3793
        %v3888 = vmul.f32 %v3626, %v3793
        %v3889 = vmul.f32 %v3627, %v3793
        %v3890 = vmul.f32 %v3628, %v3793
        %v3891 = vmul.f32 %v3629, %v3793
        %v3892 = vmul.f32 %v3630, %v3793
        %v3893 = vmul.f32 %v3631, %v3793
        %v3894 = vmul.f32 %v3632, %v3793
        %v3895 = vmul.f32 %v3633, %v3793
        %v3896 = vmul.f32 %v3634, %v3793
        %v3897 = vmul.f32 %v3635, %v3793
        %v3898 = vmul.f32 %v3636, %v3793
        %v3899 = vmul.f32 %v3637, %v3793
        %v3900 = vmul.f32 %v3638, %v3793
        %v3901 = vmul.f32 %v3639, %v3793
        %v3902 = vmul.f32 %v3640, %v3793
        %v3903 = vmul.f32 %v3641, %v3793
        %v3904 = vmul.f32 %v3642, %v3793
        %v3905 = vmul.f32 %v3643, %v3793
        %v3906 = vmul.f32 %v3644, %v3793
        %v3907 = vmul.f32 %v3645, %v3793
        %v3908 = vmul.f32 %v3646, %v3793
        %v3909 = vmul.f32 %v3647, %v3793
        %v3910 = vmul.f32 %v3648, %v3793
        %v3911 = vmul.f32 %v3649, %v3793
        %v3912 = vmul.f32 %v3650, %v3793
        %v3913 = vmul.f32 %v3651, %v3793
        %v3914 = vmul.f32 %v3652, %v3793
        %v3915 = vmul.f32 %v3653, %v3793
        %v3916 = vmul.f32 %v3654, %v3793
        %v3917 = vmul.f32 %v3655, %v3793
        %v3918 = vmul.f32 %v3656, %v3793
        %v3919 = vmul.f32 %v3657, %v3793
        %v3920 = vmul.f32 %v3658, %v3793
        %v3921 = vmul.f32 %v3659, %v3793
        %v3922 = vmul.f32 %v3660, %v3793
        %v3923 = vmul.f32 %v3661, %v3793
        %v3924 = vmul.f32 %v3662, %v3793
        %v3925 = vmul.f32 %v3663, %v3793
        %v3926 = vmul.f32 %v3664, %v3793
        %v3927 = vmul.f32 %v3665, %v3793
        %v3928 = vmul.f32 %v3666, %v3793
        %v3929 = vmul.f32 %v3667, %v3793
        %v3930 = vmul.f32 %v3668, %v3793
        %v3931 = vmul.f32 %v3669, %v3793
        %v3932 = vmul.f32 %v3670, %v3793
        %v3933 = vmul.f32 %v3671, %v3793
        %v3934 = vmul.f32 %v3672, %v3793
        %v3935 = vmul.f32 %v3673, %v3793
        %v3936 = vmul.f32 %v3674, %v3793
        %v3937 = vmul.f32 %v3675, %v3793
        %v3938 = vmul.f32 %v3676, %v3793
        %v3939 = vmul.f32 %v3677, %v3793
        %v3940 = vmul.f32 %v3678, %v3793
        %v3941 = vmul.f32 %v3679, %v3793
        %v3942 = vmul.f32 %v3680, %v3793
        %v3943 = vmul.f32 %v3681, %v3793
        %v3944 = vmul.f32 %v3682, %v3793
        %v3945 = vmul.f32 %v3683, %v3793
        %v3946 = vmul.f32 %v3684, %v3793
        %v3947 = vmul.f32 %v3685, %v3793
        %v3948 = vmul.f32 %v3686, %v3793
        %v3949 = vmul.f32 %v3687, %v3793
        %v3950 = vmul.f32 %v3688, %v3793
        %v3951 = vmul.f32 %v3689, %v3793
        %v3952 = vmul.f32 %v3690, %v3793
        %v3953 = vmul.f32 %v3691, %v3793
        %v3954 = vmul.f32 %v3692, %v3793
        %v3955 = vmul.f32 %v3693, %v3793
        %v3956 = vmul.f32 %v3694, %v3793
        %v3957 = vmul.f32 %v3695, %v3793
        %v3958 = vmul.f32 %v3696, %v3793
        %v3959 = vmul.f32 %v3697, %v3793
        %v3960 = vmul.f32 %v3698, %v3793
        %v3961 = vmul.f32 %v3699, %v3793
        %v3962 = vmul.f32 %v3700, %v3793
        %v3963 = vmul.f32 %v3701, %v3793
        %v3964 = vmul.f32 %v3702, %v3793
        %v3965 = vmul.f32 %v3703, %v3793
        %v3966 = vmul.f32 %v3704, %v3793
        %v3967 = vmul.f32 %v3705, %v3793
        %v3968 = vmul.f32 %v3706, %v3793
        %v3969 = vmul.f32 %v3707, %v3793
        %v3970 = vmul.f32 %v3708, %v3793
        %v3971 = vmul.f32 %v3709, %v3793
        %v3972 = vmul.f32 %v3710, %v3793
        %v3973 = vmul.f32 %v3711, %v3793
        %v3974 = vmul.f32 %v3712, %v3793
        %v3975 = vmul.f32 %v3713, %v3793
        %v3976 = vmul.f32 %v3714, %v3793
        %v3977 = vmul.f32 %v3715, %v3793
        %v3978 = vmul.f32 %v3716, %v3793
        %v3979 = vmul.f32 %v3717, %v3793
        %v3980 = vmul.f32 %v3718, %v3793
        %v3981 = vmul.f32 %v3719, %v3793
        %v3982 = vmul.f32 %v3720, %v3793
        %v3983 = vmul.f32 %v3721, %v3793
        %v3984 = vmul.f32 %v3722, %v3793
        %v3985 = vmul.f32 %v3723, %v3793
        %v3986 = vmul.f32 %v3724, %v3793
        %v3987 = vmul.f32 %v3725, %v3793
        %v3988 = vmul.f32 %v3726, %v3793
        %v3989 = vmul.f32 %v3727, %v3793
        %v3990 = vmul.f32 %v3728, %v3793
        %v3991 = vmul.f32 %v3729, %v3793
        %v3992 = vmul.f32 %v3730, %v3793
        %v3993 = vmul.f32 %v3731, %v3793
        %v3994 = vmul.f32 %v3732, %v3793
        %v3995 = vmul.f32 %v3733, %v3793
        %v3996 = vmul.f32 %v3734, %v3793
        %v3997 = vmul.f32 %v3735, %v3793
        %v3998 = vmul.f32 %v3736, %v3793
        %v3999 = vmul.f32 %v3737, %v3793
        %v4000 = vmul.f32 %v3738, %v3793
        %v4001 = vmul.f32 %v3739, %v3793
        %v4002 = vmul.f32 %v3740, %v3793
        %v4003 = vmul.f32 %v3741, %v3793
        %v4004 = vmul.f32 %v3742, %v3793
        %v4005 = vmul.f32 %v3743, %v3793
        %v4006 = vmul.f32 %v3744, %v3793
        %v4007 = vmul.f32 %v3745, %v3793
        %v4008 = vmul.f32 %v3746, %v3793
        %v4009 = vmul.f32 %v3747, %v3793
        %v4010 = vmul.f32 %v3748, %v3793
        %v4011 = vmul.f32 %v3749, %v3793
        %v4012 = vmul.f32 %v3750, %v3793
        %v4013 = vmul.f32 %v3751, %v3793
        %v4014 = vmul.f32 %v3752, %v3793
        %v4015 = vmul.f32 %v3753, %v3793
        %v4016 = vmul.f32 %v3754, %v3793
        %v4017 = vmul.f32 %v3755, %v3793
        %v4018 = vmul.f32 %v3756, %v3793
        %v4019 = vmul.f32 %v3757, %v3793
        %v4020 = vmul.f32 %v3758, %v3793
        %v4021 = vmul.f32 %v3759, %v3793
        %v4022 = vmul.f32 %v3760, %v3793
        %v4023 = vmul.f32 %v3761, %v3793
        %v4024 = vmul.f32 %v3762, %v3793
        %v4025 = vmul.f32 %v3763, %v3793
        %v4026 = vmul.f32 %v3764, %v3793
        %v4027 = vmul.f32 %v3765, %v3793
        %v4028 = vmul.f32 %v3766, %v3793
        %v4029 = vmul.f32 %v3767, %v3793
        %v4030 = vmul.f32 %v3768, %v3793
        %v4031 = vmul.f32 %v3769, %v3793
        %v4032 = vmul.f32 %v3770, %v3793
        %v4033 = vmul.f32 %v3771, %v3793
        %v4034 = vmul.f32 %v3772, %v3793
        %v4035 = vmul.f32 %v3773, %v3793
        %v4036 = vmul.f32 %v3774, %v3793
        %v4037 = vmul.f32 %v3775, %v3793
        %v4038 = vmul.f32 %v3776, %v3793
        %v4039 = vmul.f32 %v3777, %v3793
        %v4040 = vmul.f32 %v3778, %v3793
        %v4041 = vmul.f32 %v3779, %v3793
        %v4042 = vmul.f32 %v3780, %v3793
        %v4043 = vmul.f32 %v3781, %v3793
        %v4044 = vmul.f32 %v3782, %v3793
        %v4045 = vmul.f32 %v3783, %v3793
        %v4046 = vmul.f32 %v3784, %v3793
        %v4047 = vmul.f32 %v3785, %v3793
        %v4048 = vmul.f32 %v3786, %v3793
        %v4049 = vmul.f32 %v3787, %v3793
        %v4050 = vmul.f32 %v3788, %v3793
        %v4052 = vlaneseq
        %v4053 = vshrl.u32 %v4052, 7
        %v4054 = vsub.s32 0, %v4053
        %v4055 = vrot.slane %v3276, %v4054
        %v4057 = vadd.f32 %v3795, %v4055
        %v4058 = vadd.f32 %v3796, %v4055
        %v4059 = vadd.f32 %v3797, %v4055
        %v4060 = vadd.f32 %v3798, %v4055
        %v4061 = vadd.f32 %v3799, %v4055
        %v4062 = vadd.f32 %v3800, %v4055
        %v4063 = vadd.f32 %v3801, %v4055
        %v4064 = vadd.f32 %v3802, %v4055
        %v4065 = vadd.f32 %v3803, %v4055
        %v4066 = vadd.f32 %v3804, %v4055
        %v4067 = vadd.f32 %v3805, %v4055
        %v4068 = vadd.f32 %v3806, %v4055
        %v4069 = vadd.f32 %v3807, %v4055
        %v4070 = vadd.f32 %v3808, %v4055
        %v4071 = vadd.f32 %v3809, %v4055
        %v4072 = vadd.f32 %v3810, %v4055
        %v4073 = vadd.f32 %v3811, %v4055
        %v4074 = vadd.f32 %v3812, %v4055
        %v4075 = vadd.f32 %v3813, %v4055
        %v4076 = vadd.f32 %v3814, %v4055
        %v4077 = vadd.f32 %v3815, %v4055
        %v4078 = vadd.f32 %v3816, %v4055
        %v4079 = vadd.f32 %v3817, %v4055
        %v4080 = vadd.f32 %v3818, %v4055
        %v4081 = vadd.f32 %v3819, %v4055
        %v4082 = vadd.f32 %v3820, %v4055
        %v4083 = vadd.f32 %v3821, %v4055
        %v4084 = vadd.f32 %v3822, %v4055
        %v4085 = vadd.f32 %v3823, %v4055
        %v4086 = vadd.f32 %v3824, %v4055
        %v4087 = vadd.f32 %v3825, %v4055
        %v4088 = vadd.f32 %v3826, %v4055
        %v4089 = vadd.f32 %v3827, %v4055
        %v4090 = vadd.f32 %v3828, %v4055
        %v4091 = vadd.f32 %v3829, %v4055
        %v4092 = vadd.f32 %v3830, %v4055
        %v4093 = vadd.f32 %v3831, %v4055
        %v4094 = vadd.f32 %v3832, %v4055
        %v4095 = vadd.f32 %v3833, %v4055
        %v4096 = vadd.f32 %v3834, %v4055
        %v4097 = vadd.f32 %v3835, %v4055
        %v4098 = vadd.f32 %v3836, %v4055
        %v4099 = vadd.f32 %v3837, %v4055
        %v4100 = vadd.f32 %v3838, %v4055
        %v4101 = vadd.f32 %v3839, %v4055
        %v4102 = vadd.f32 %v3840, %v4055
        %v4103 = vadd.f32 %v3841, %v4055
        %v4104 = vadd.f32 %v3842, %v4055
        %v4105 = vadd.f32 %v3843, %v4055
        %v4106 = vadd.f32 %v3844, %v4055
        %v4107 = vadd.f32 %v3845, %v4055
        %v4108 = vadd.f32 %v3846, %v4055
        %v4109 = vadd.f32 %v3847, %v4055
        %v4110 = vadd.f32 %v3848, %v4055
        %v4111 = vadd.f32 %v3849, %v4055
        %v4112 = vadd.f32 %v3850, %v4055
        %v4113 = vadd.f32 %v3851, %v4055
        %v4114 = vadd.f32 %v3852, %v4055
        %v4115 = vadd.f32 %v3853, %v4055
        %v4116 = vadd.f32 %v3854, %v4055
        %v4117 = vadd.f32 %v3855, %v4055
        %v4118 = vadd.f32 %v3856, %v4055
        %v4119 = vadd.f32 %v3857, %v4055
        %v4120 = vadd.f32 %v3858, %v4055
        %v4121 = vadd.f32 %v3859, %v4055
        %v4122 = vadd.f32 %v3860, %v4055
        %v4123 = vadd.f32 %v3861, %v4055
        %v4124 = vadd.f32 %v3862, %v4055
        %v4125 = vadd.f32 %v3863, %v4055
        %v4126 = vadd.f32 %v3864, %v4055
        %v4127 = vadd.f32 %v3865, %v4055
        %v4128 = vadd.f32 %v3866, %v4055
        %v4129 = vadd.f32 %v3867, %v4055
        %v4130 = vadd.f32 %v3868, %v4055
        %v4131 = vadd.f32 %v3869, %v4055
        %v4132 = vadd.f32 %v3870, %v4055
        %v4133 = vadd.f32 %v3871, %v4055
        %v4134 = vadd.f32 %v3872, %v4055
        %v4135 = vadd.f32 %v3873, %v4055
        %v4136 = vadd.f32 %v3874, %v4055
        %v4137 = vadd.f32 %v3875, %v4055
        %v4138 = vadd.f32 %v3876, %v4055
        %v4139 = vadd.f32 %v3877, %v4055
        %v4140 = vadd.f32 %v3878, %v4055
        %v4141 = vadd.f32 %v3879, %v4055
        %v4142 = vadd.f32 %v3880, %v4055
        %v4143 = vadd.f32 %v3881, %v4055
        %v4144 = vadd.f32 %v3882, %v4055
        %v4145 = vadd.f32 %v3883, %v4055
        %v4146 = vadd.f32 %v3884, %v4055
        %v4147 = vadd.f32 %v3885, %v4055
        %v4148 = vadd.f32 %v3886, %v4055
        %v4149 = vadd.f32 %v3887, %v4055
        %v4150 = vadd.f32 %v3888, %v4055
        %v4151 = vadd.f32 %v3889, %v4055
        %v4152 = vadd.f32 %v3890, %v4055
        %v4153 = vadd.f32 %v3891, %v4055
        %v4154 = vadd.f32 %v3892, %v4055
        %v4155 = vadd.f32 %v3893, %v4055
        %v4156 = vadd.f32 %v3894, %v4055
        %v4157 = vadd.f32 %v3895, %v4055
        %v4158 = vadd.f32 %v3896, %v4055
        %v4159 = vadd.f32 %v3897, %v4055
        %v4160 = vadd.f32 %v3898, %v4055
        %v4161 = vadd.f32 %v3899, %v4055
        %v4162 = vadd.f32 %v3900, %v4055
        %v4163 = vadd.f32 %v3901, %v4055
        %v4164 = vadd.f32 %v3902, %v4055
        %v4165 = vadd.f32 %v3903, %v4055
        %v4166 = vadd.f32 %v3904, %v4055
        %v4167 = vadd.f32 %v3905, %v4055
        %v4168 = vadd.f32 %v3906, %v4055
        %v4169 = vadd.f32 %v3907, %v4055
        %v4170 = vadd.f32 %v3908, %v4055
        %v4171 = vadd.f32 %v3909, %v4055
        %v4172 = vadd.f32 %v3910, %v4055
        %v4173 = vadd.f32 %v3911, %v4055
        %v4174 = vadd.f32 %v3912, %v4055
        %v4175 = vadd.f32 %v3913, %v4055
        %v4176 = vadd.f32 %v3914, %v4055
        %v4177 = vadd.f32 %v3915, %v4055
        %v4178 = vadd.f32 %v3916, %v4055
        %v4179 = vadd.f32 %v3917, %v4055
        %v4180 = vadd.f32 %v3918, %v4055
        %v4181 = vadd.f32 %v3919, %v4055
        %v4182 = vadd.f32 %v3920, %v4055
        %v4183 = vadd.f32 %v3921, %v4055
        %v4184 = vadd.f32 %v3922, %v4055
        %v4185 = vadd.f32 %v3923, %v4055
        %v4186 = vadd.f32 %v3924, %v4055
        %v4187 = vadd.f32 %v3925, %v4055
        %v4188 = vadd.f32 %v3926, %v4055
        %v4189 = vadd.f32 %v3927, %v4055
        %v4190 = vadd.f32 %v3928, %v4055
        %v4191 = vadd.f32 %v3929, %v4055
        %v4192 = vadd.f32 %v3930, %v4055
        %v4193 = vadd.f32 %v3931, %v4055
        %v4194 = vadd.f32 %v3932, %v4055
        %v4195 = vadd.f32 %v3933, %v4055
        %v4196 = vadd.f32 %v3934, %v4055
        %v4197 = vadd.f32 %v3935, %v4055
        %v4198 = vadd.f32 %v3936, %v4055
        %v4199 = vadd.f32 %v3937, %v4055
        %v4200 = vadd.f32 %v3938, %v4055
        %v4201 = vadd.f32 %v3939, %v4055
        %v4202 = vadd.f32 %v3940, %v4055
        %v4203 = vadd.f32 %v3941, %v4055
        %v4204 = vadd.f32 %v3942, %v4055
        %v4205 = vadd.f32 %v3943, %v4055
        %v4206 = vadd.f32 %v3944, %v4055
        %v4207 = vadd.f32 %v3945, %v4055
        %v4208 = vadd.f32 %v3946, %v4055
        %v4209 = vadd.f32 %v3947, %v4055
        %v4210 = vadd.f32 %v3948, %v4055
        %v4211 = vadd.f32 %v3949, %v4055
        %v4212 = vadd.f32 %v3950, %v4055
        %v4213 = vadd.f32 %v3951, %v4055
        %v4214 = vadd.f32 %v3952, %v4055
        %v4215 = vadd.f32 %v3953, %v4055
        %v4216 = vadd.f32 %v3954, %v4055
        %v4217 = vadd.f32 %v3955, %v4055
        %v4218 = vadd.f32 %v3956, %v4055
        %v4219 = vadd.f32 %v3957, %v4055
        %v4220 = vadd.f32 %v3958, %v4055
        %v4221 = vadd.f32 %v3959, %v4055
        %v4222 = vadd.f32 %v3960, %v4055
        %v4223 = vadd.f32 %v3961, %v4055
        %v4224 = vadd.f32 %v3962, %v4055
        %v4225 = vadd.f32 %v3963, %v4055
        %v4226 = vadd.f32 %v3964, %v4055
        %v4227 = vadd.f32 %v3965, %v4055
        %v4228 = vadd.f32 %v3966, %v4055
        %v4229 = vadd.f32 %v3967, %v4055
        %v4230 = vadd.f32 %v3968, %v4055
        %v4231 = vadd.f32 %v3969, %v4055
        %v4232 = vadd.f32 %v3970, %v4055
        %v4233 = vadd.f32 %v3971, %v4055
        %v4234 = vadd.f32 %v3972, %v4055
        %v4235 = vadd.f32 %v3973, %v4055
        %v4236 = vadd.f32 %v3974, %v4055
        %v4237 = vadd.f32 %v3975, %v4055
        %v4238 = vadd.f32 %v3976, %v4055
        %v4239 = vadd.f32 %v3977, %v4055
        %v4240 = vadd.f32 %v3978, %v4055
        %v4241 = vadd.f32 %v3979, %v4055
        %v4242 = vadd.f32 %v3980, %v4055
        %v4243 = vadd.f32 %v3981, %v4055
        %v4244 = vadd.f32 %v3982, %v4055
        %v4245 = vadd.f32 %v3983, %v4055
        %v4246 = vadd.f32 %v3984, %v4055
        %v4247 = vadd.f32 %v3985, %v4055
        %v4248 = vadd.f32 %v3986, %v4055
        %v4249 = vadd.f32 %v3987, %v4055
        %v4250 = vadd.f32 %v3988, %v4055
        %v4251 = vadd.f32 %v3989, %v4055
        %v4252 = vadd.f32 %v3990, %v4055
        %v4253 = vadd.f32 %v3991, %v4055
        %v4254 = vadd.f32 %v3992, %v4055
        %v4255 = vadd.f32 %v3993, %v4055
        %v4256 = vadd.f32 %v3994, %v4055
        %v4257 = vadd.f32 %v3995, %v4055
        %v4258 = vadd.f32 %v3996, %v4055
        %v4259 = vadd.f32 %v3997, %v4055
        %v4260 = vadd.f32 %v3998, %v4055
        %v4261 = vadd.f32 %v3999, %v4055
        %v4262 = vadd.f32 %v4000, %v4055
        %v4263 = vadd.f32 %v4001, %v4055
        %v4264 = vadd.f32 %v4002, %v4055
        %v4265 = vadd.f32 %v4003, %v4055
        %v4266 = vadd.f32 %v4004, %v4055
        %v4267 = vadd.f32 %v4005, %v4055
        %v4268 = vadd.f32 %v4006, %v4055
        %v4269 = vadd.f32 %v4007, %v4055
        %v4270 = vadd.f32 %v4008, %v4055
        %v4271 = vadd.f32 %v4009, %v4055
        %v4272 = vadd.f32 %v4010, %v4055
        %v4273 = vadd.f32 %v4011, %v4055
        %v4274 = vadd.f32 %v4012, %v4055
        %v4275 = vadd.f32 %v4013, %v4055
        %v4276 = vadd.f32 %v4014, %v4055
        %v4277 = vadd.f32 %v4015, %v4055
        %v4278 = vadd.f32 %v4016, %v4055
        %v4279 = vadd.f32 %v4017, %v4055
        %v4280 = vadd.f32 %v4018, %v4055
        %v4281 = vadd.f32 %v4019, %v4055
        %v4282 = vadd.f32 %v4020, %v4055
        %v4283 = vadd.f32 %v4021, %v4055
        %v4284 = vadd.f32 %v4022, %v4055
        %v4285 = vadd.f32 %v4023, %v4055
        %v4286 = vadd.f32 %v4024, %v4055
        %v4287 = vadd.f32 %v4025, %v4055
        %v4288 = vadd.f32 %v4026, %v4055
        %v4289 = vadd.f32 %v4027, %v4055
        %v4290 = vadd.f32 %v4028, %v4055
        %v4291 = vadd.f32 %v4029, %v4055
        %v4292 = vadd.f32 %v4030, %v4055
        %v4293 = vadd.f32 %v4031, %v4055
        %v4294 = vadd.f32 %v4032, %v4055
        %v4295 = vadd.f32 %v4033, %v4055
        %v4296 = vadd.f32 %v4034, %v4055
        %v4297 = vadd.f32 %v4035, %v4055
        %v4298 = vadd.f32 %v4036, %v4055
        %v4299 = vadd.f32 %v4037, %v4055
        %v4300 = vadd.f32 %v4038, %v4055
        %v4301 = vadd.f32 %v4039, %v4055
        %v4302 = vadd.f32 %v4040, %v4055
        %v4303 = vadd.f32 %v4041, %v4055
        %v4304 = vadd.f32 %v4042, %v4055
        %v4305 = vadd.f32 %v4043, %v4055
        %v4306 = vadd.f32 %v4044, %v4055
        %v4307 = vadd.f32 %v4045, %v4055
        %v4308 = vadd.f32 %v4046, %v4055
        %v4309 = vadd.f32 %v4047, %v4055
        %v4310 = vadd.f32 %v4048, %v4055
        %v4311 = vadd.f32 %v4049, %v4055
        %v4312 = vadd.f32 %v4050, %v4055
        %v4313 = vpack.c.bf16 %v4058, %v4057
        %v4314 = vpack.c.bf16 %v4060, %v4059
        %v4315 = vpack.c.bf16 %v4062, %v4061
        %v4316 = vpack.c.bf16 %v4064, %v4063
        %v4317 = vpack.c.bf16 %v4066, %v4065
        %v4318 = vpack.c.bf16 %v4068, %v4067
        %v4319 = vpack.c.bf16 %v4070, %v4069
        %v4320 = vpack.c.bf16 %v4072, %v4071
        %v4321 = vpack.c.bf16 %v4074, %v4073
        %v4322 = vpack.c.bf16 %v4076, %v4075
        %v4323 = vpack.c.bf16 %v4078, %v4077
        %v4324 = vpack.c.bf16 %v4080, %v4079
        %v4325 = vpack.c.bf16 %v4082, %v4081
        %v4326 = vpack.c.bf16 %v4084, %v4083
        %v4327 = vpack.c.bf16 %v4086, %v4085
        %v4328 = vpack.c.bf16 %v4088, %v4087
        %v4329 = vpack.c.bf16 %v4090, %v4089
        %v4330 = vpack.c.bf16 %v4092, %v4091
        %v4331 = vpack.c.bf16 %v4094, %v4093
        %v4332 = vpack.c.bf16 %v4096, %v4095
        %v4333 = vpack.c.bf16 %v4098, %v4097
        %v4334 = vpack.c.bf16 %v4100, %v4099
        %v4335 = vpack.c.bf16 %v4102, %v4101
        %v4336 = vpack.c.bf16 %v4104, %v4103
        %v4337 = vpack.c.bf16 %v4106, %v4105
        %v4338 = vpack.c.bf16 %v4108, %v4107
        %v4339 = vpack.c.bf16 %v4110, %v4109
        %v4340 = vpack.c.bf16 %v4112, %v4111
        %v4341 = vpack.c.bf16 %v4114, %v4113
        %v4342 = vpack.c.bf16 %v4116, %v4115
        %v4343 = vpack.c.bf16 %v4118, %v4117
        %v4344 = vpack.c.bf16 %v4120, %v4119
        %v4345 = vpack.c.bf16 %v4122, %v4121
        %v4346 = vpack.c.bf16 %v4124, %v4123
        %v4347 = vpack.c.bf16 %v4126, %v4125
        %v4348 = vpack.c.bf16 %v4128, %v4127
        %v4349 = vpack.c.bf16 %v4130, %v4129
        %v4350 = vpack.c.bf16 %v4132, %v4131
        %v4351 = vpack.c.bf16 %v4134, %v4133
        %v4352 = vpack.c.bf16 %v4136, %v4135
        %v4353 = vpack.c.bf16 %v4138, %v4137
        %v4354 = vpack.c.bf16 %v4140, %v4139
        %v4355 = vpack.c.bf16 %v4142, %v4141
        %v4356 = vpack.c.bf16 %v4144, %v4143
        %v4357 = vpack.c.bf16 %v4146, %v4145
        %v4358 = vpack.c.bf16 %v4148, %v4147
        %v4359 = vpack.c.bf16 %v4150, %v4149
        %v4360 = vpack.c.bf16 %v4152, %v4151
        %v4361 = vpack.c.bf16 %v4154, %v4153
        %v4362 = vpack.c.bf16 %v4156, %v4155
        %v4363 = vpack.c.bf16 %v4158, %v4157
        %v4364 = vpack.c.bf16 %v4160, %v4159
        %v4365 = vpack.c.bf16 %v4162, %v4161
        %v4366 = vpack.c.bf16 %v4164, %v4163
        %v4367 = vpack.c.bf16 %v4166, %v4165
        %v4368 = vpack.c.bf16 %v4168, %v4167
        %v4369 = vpack.c.bf16 %v4170, %v4169
        %v4370 = vpack.c.bf16 %v4172, %v4171
        %v4371 = vpack.c.bf16 %v4174, %v4173
        %v4372 = vpack.c.bf16 %v4176, %v4175
        %v4373 = vpack.c.bf16 %v4178, %v4177
        %v4374 = vpack.c.bf16 %v4180, %v4179
        %v4375 = vpack.c.bf16 %v4182, %v4181
        %v4376 = vpack.c.bf16 %v4184, %v4183
        %v4377 = vpack.c.bf16 %v4186, %v4185
        %v4378 = vpack.c.bf16 %v4188, %v4187
        %v4379 = vpack.c.bf16 %v4190, %v4189
        %v4380 = vpack.c.bf16 %v4192, %v4191
        %v4381 = vpack.c.bf16 %v4194, %v4193
        %v4382 = vpack.c.bf16 %v4196, %v4195
        %v4383 = vpack.c.bf16 %v4198, %v4197
        %v4384 = vpack.c.bf16 %v4200, %v4199
        %v4385 = vpack.c.bf16 %v4202, %v4201
        %v4386 = vpack.c.bf16 %v4204, %v4203
        %v4387 = vpack.c.bf16 %v4206, %v4205
        %v4388 = vpack.c.bf16 %v4208, %v4207
        %v4389 = vpack.c.bf16 %v4210, %v4209
        %v4390 = vpack.c.bf16 %v4212, %v4211
        %v4391 = vpack.c.bf16 %v4214, %v4213
        %v4392 = vpack.c.bf16 %v4216, %v4215
        %v4393 = vpack.c.bf16 %v4218, %v4217
        %v4394 = vpack.c.bf16 %v4220, %v4219
        %v4395 = vpack.c.bf16 %v4222, %v4221
        %v4396 = vpack.c.bf16 %v4224, %v4223
        %v4397 = vpack.c.bf16 %v4226, %v4225
        %v4398 = vpack.c.bf16 %v4228, %v4227
        %v4399 = vpack.c.bf16 %v4230, %v4229
        %v4400 = vpack.c.bf16 %v4232, %v4231
        %v4401 = vpack.c.bf16 %v4234, %v4233
        %v4402 = vpack.c.bf16 %v4236, %v4235
        %v4403 = vpack.c.bf16 %v4238, %v4237
        %v4404 = vpack.c.bf16 %v4240, %v4239
        %v4405 = vpack.c.bf16 %v4242, %v4241
        %v4406 = vpack.c.bf16 %v4244, %v4243
        %v4407 = vpack.c.bf16 %v4246, %v4245
        %v4408 = vpack.c.bf16 %v4248, %v4247
        %v4409 = vpack.c.bf16 %v4250, %v4249
        %v4410 = vpack.c.bf16 %v4252, %v4251
        %v4411 = vpack.c.bf16 %v4254, %v4253
        %v4412 = vpack.c.bf16 %v4256, %v4255
        %v4413 = vpack.c.bf16 %v4258, %v4257
        %v4414 = vpack.c.bf16 %v4260, %v4259
        %v4415 = vpack.c.bf16 %v4262, %v4261
        %v4416 = vpack.c.bf16 %v4264, %v4263
        %v4417 = vpack.c.bf16 %v4266, %v4265
        %v4418 = vpack.c.bf16 %v4268, %v4267
        %v4419 = vpack.c.bf16 %v4270, %v4269
        %v4420 = vpack.c.bf16 %v4272, %v4271
        %v4421 = vpack.c.bf16 %v4274, %v4273
        %v4422 = vpack.c.bf16 %v4276, %v4275
        %v4423 = vpack.c.bf16 %v4278, %v4277
        %v4424 = vpack.c.bf16 %v4280, %v4279
        %v4425 = vpack.c.bf16 %v4282, %v4281
        %v4426 = vpack.c.bf16 %v4284, %v4283
        %v4427 = vpack.c.bf16 %v4286, %v4285
        %v4428 = vpack.c.bf16 %v4288, %v4287
        %v4429 = vpack.c.bf16 %v4290, %v4289
        %v4430 = vpack.c.bf16 %v4292, %v4291
        %v4431 = vpack.c.bf16 %v4294, %v4293
        %v4432 = vpack.c.bf16 %v4296, %v4295
        %v4433 = vpack.c.bf16 %v4298, %v4297
        %v4434 = vpack.c.bf16 %v4300, %v4299
        %v4435 = vpack.c.bf16 %v4302, %v4301
        %v4436 = vpack.c.bf16 %v4304, %v4303
        %v4437 = vpack.c.bf16 %v4306, %v4305
        %v4438 = vpack.c.bf16 %v4308, %v4307
        %v4439 = vpack.c.bf16 %v4310, %v4309
        %v4440 = vpack.c.bf16 %v4312, %v4311
        %v4569 = vunpack.c.l.b16 %v4313
        %v4570 = vunpack.c.h.b16 %v4313
        %v4571 = vunpack.c.l.b16 %v4314
        %v4572 = vunpack.c.h.b16 %v4314
        %v4573 = vunpack.c.l.b16 %v4315
        %v4574 = vunpack.c.h.b16 %v4315
        %v4575 = vunpack.c.l.b16 %v4316
        %v4576 = vunpack.c.h.b16 %v4316
        %v4577 = vunpack.c.l.b16 %v4317
        %v4578 = vunpack.c.h.b16 %v4317
        %v4579 = vunpack.c.l.b16 %v4318
        %v4580 = vunpack.c.h.b16 %v4318
        %v4581 = vunpack.c.l.b16 %v4319
        %v4582 = vunpack.c.h.b16 %v4319
        %v4583 = vunpack.c.l.b16 %v4320
        %v4584 = vunpack.c.h.b16 %v4320
        %v4585 = vunpack.c.l.b16 %v4321
        %v4586 = vunpack.c.h.b16 %v4321
        %v4587 = vunpack.c.l.b16 %v4322
        %v4588 = vunpack.c.h.b16 %v4322
        %v4589 = vunpack.c.l.b16 %v4323
        %v4590 = vunpack.c.h.b16 %v4323
        %v4591 = vunpack.c.l.b16 %v4324
        %v4592 = vunpack.c.h.b16 %v4324
        %v4593 = vunpack.c.l.b16 %v4325
        %v4594 = vunpack.c.h.b16 %v4325
        %v4595 = vunpack.c.l.b16 %v4326
        %v4596 = vunpack.c.h.b16 %v4326
        %v4597 = vunpack.c.l.b16 %v4327
        %v4598 = vunpack.c.h.b16 %v4327
        %v4599 = vunpack.c.l.b16 %v4328
        %v4600 = vunpack.c.h.b16 %v4328
        %v4601 = vunpack.c.l.b16 %v4329
        %v4602 = vunpack.c.h.b16 %v4329
        %v4603 = vunpack.c.l.b16 %v4330
        %v4604 = vunpack.c.h.b16 %v4330
        %v4605 = vunpack.c.l.b16 %v4331
        %v4606 = vunpack.c.h.b16 %v4331
        %v4607 = vunpack.c.l.b16 %v4332
        %v4608 = vunpack.c.h.b16 %v4332
        %v4609 = vunpack.c.l.b16 %v4333
        %v4610 = vunpack.c.h.b16 %v4333
        %v4611 = vunpack.c.l.b16 %v4334
        %v4612 = vunpack.c.h.b16 %v4334
        %v4613 = vunpack.c.l.b16 %v4335
        %v4614 = vunpack.c.h.b16 %v4335
        %v4615 = vunpack.c.l.b16 %v4336
        %v4616 = vunpack.c.h.b16 %v4336
        %v4617 = vunpack.c.l.b16 %v4337
        %v4618 = vunpack.c.h.b16 %v4337
        %v4619 = vunpack.c.l.b16 %v4338
        %v4620 = vunpack.c.h.b16 %v4338
        %v4621 = vunpack.c.l.b16 %v4339
        %v4622 = vunpack.c.h.b16 %v4339
        %v4623 = vunpack.c.l.b16 %v4340
        %v4624 = vunpack.c.h.b16 %v4340
        %v4625 = vunpack.c.l.b16 %v4341
        %v4626 = vunpack.c.h.b16 %v4341
        %v4627 = vunpack.c.l.b16 %v4342
        %v4628 = vunpack.c.h.b16 %v4342
        %v4629 = vunpack.c.l.b16 %v4343
        %v4630 = vunpack.c.h.b16 %v4343
        %v4631 = vunpack.c.l.b16 %v4344
        %v4632 = vunpack.c.h.b16 %v4344
        %v4633 = vunpack.c.l.b16 %v4345
        %v4634 = vunpack.c.h.b16 %v4345
        %v4635 = vunpack.c.l.b16 %v4346
        %v4636 = vunpack.c.h.b16 %v4346
        %v4637 = vunpack.c.l.b16 %v4347
        %v4638 = vunpack.c.h.b16 %v4347
        %v4639 = vunpack.c.l.b16 %v4348
        %v4640 = vunpack.c.h.b16 %v4348
        %v4641 = vunpack.c.l.b16 %v4349
        %v4642 = vunpack.c.h.b16 %v4349
        %v4643 = vunpack.c.l.b16 %v4350
        %v4644 = vunpack.c.h.b16 %v4350
        %v4645 = vunpack.c.l.b16 %v4351
        %v4646 = vunpack.c.h.b16 %v4351
        %v4647 = vunpack.c.l.b16 %v4352
        %v4648 = vunpack.c.h.b16 %v4352
        %v4649 = vunpack.c.l.b16 %v4353
        %v4650 = vunpack.c.h.b16 %v4353
        %v4651 = vunpack.c.l.b16 %v4354
        %v4652 = vunpack.c.h.b16 %v4354
        %v4653 = vunpack.c.l.b16 %v4355
        %v4654 = vunpack.c.h.b16 %v4355
        %v4655 = vunpack.c.l.b16 %v4356
        %v4656 = vunpack.c.h.b16 %v4356
        %v4657 = vunpack.c.l.b16 %v4357
        %v4658 = vunpack.c.h.b16 %v4357
        %v4659 = vunpack.c.l.b16 %v4358
        %v4660 = vunpack.c.h.b16 %v4358
        %v4661 = vunpack.c.l.b16 %v4359
        %v4662 = vunpack.c.h.b16 %v4359
        %v4663 = vunpack.c.l.b16 %v4360
        %v4664 = vunpack.c.h.b16 %v4360
        %v4665 = vunpack.c.l.b16 %v4361
        %v4666 = vunpack.c.h.b16 %v4361
        %v4667 = vunpack.c.l.b16 %v4362
        %v4668 = vunpack.c.h.b16 %v4362
        %v4669 = vunpack.c.l.b16 %v4363
        %v4670 = vunpack.c.h.b16 %v4363
        %v4671 = vunpack.c.l.b16 %v4364
        %v4672 = vunpack.c.h.b16 %v4364
        %v4673 = vunpack.c.l.b16 %v4365
        %v4674 = vunpack.c.h.b16 %v4365
        %v4675 = vunpack.c.l.b16 %v4366
        %v4676 = vunpack.c.h.b16 %v4366
        %v4677 = vunpack.c.l.b16 %v4367
        %v4678 = vunpack.c.h.b16 %v4367
        %v4679 = vunpack.c.l.b16 %v4368
        %v4680 = vunpack.c.h.b16 %v4368
        %v4681 = vunpack.c.l.b16 %v4369
        %v4682 = vunpack.c.h.b16 %v4369
        %v4683 = vunpack.c.l.b16 %v4370
        %v4684 = vunpack.c.h.b16 %v4370
        %v4685 = vunpack.c.l.b16 %v4371
        %v4686 = vunpack.c.h.b16 %v4371
        %v4687 = vunpack.c.l.b16 %v4372
        %v4688 = vunpack.c.h.b16 %v4372
        %v4689 = vunpack.c.l.b16 %v4373
        %v4690 = vunpack.c.h.b16 %v4373
        %v4691 = vunpack.c.l.b16 %v4374
        %v4692 = vunpack.c.h.b16 %v4374
        %v4693 = vunpack.c.l.b16 %v4375
        %v4694 = vunpack.c.h.b16 %v4375
        %v4695 = vunpack.c.l.b16 %v4376
        %v4696 = vunpack.c.h.b16 %v4376
        %v4697 = vunpack.c.l.b16 %v4377
        %v4698 = vunpack.c.h.b16 %v4377
        %v4699 = vunpack.c.l.b16 %v4378
        %v4700 = vunpack.c.h.b16 %v4378
        %v4701 = vunpack.c.l.b16 %v4379
        %v4702 = vunpack.c.h.b16 %v4379
        %v4703 = vunpack.c.l.b16 %v4380
        %v4704 = vunpack.c.h.b16 %v4380
        %v4705 = vunpack.c.l.b16 %v4381
        %v4706 = vunpack.c.h.b16 %v4381
        %v4707 = vunpack.c.l.b16 %v4382
        %v4708 = vunpack.c.h.b16 %v4382
        %v4709 = vunpack.c.l.b16 %v4383
        %v4710 = vunpack.c.h.b16 %v4383
        %v4711 = vunpack.c.l.b16 %v4384
        %v4712 = vunpack.c.h.b16 %v4384
        %v4713 = vunpack.c.l.b16 %v4385
        %v4714 = vunpack.c.h.b16 %v4385
        %v4715 = vunpack.c.l.b16 %v4386
        %v4716 = vunpack.c.h.b16 %v4386
        %v4717 = vunpack.c.l.b16 %v4387
        %v4718 = vunpack.c.h.b16 %v4387
        %v4719 = vunpack.c.l.b16 %v4388
        %v4720 = vunpack.c.h.b16 %v4388
        %v4721 = vunpack.c.l.b16 %v4389
        %v4722 = vunpack.c.h.b16 %v4389
        %v4723 = vunpack.c.l.b16 %v4390
        %v4724 = vunpack.c.h.b16 %v4390
        %v4725 = vunpack.c.l.b16 %v4391
        %v4726 = vunpack.c.h.b16 %v4391
        %v4727 = vunpack.c.l.b16 %v4392
        %v4728 = vunpack.c.h.b16 %v4392
        %v4729 = vunpack.c.l.b16 %v4393
        %v4730 = vunpack.c.h.b16 %v4393
        %v4731 = vunpack.c.l.b16 %v4394
        %v4732 = vunpack.c.h.b16 %v4394
        %v4733 = vunpack.c.l.b16 %v4395
        %v4734 = vunpack.c.h.b16 %v4395
        %v4735 = vunpack.c.l.b16 %v4396
        %v4736 = vunpack.c.h.b16 %v4396
        %v4737 = vunpack.c.l.b16 %v4397
        %v4738 = vunpack.c.h.b16 %v4397
        %v4739 = vunpack.c.l.b16 %v4398
        %v4740 = vunpack.c.h.b16 %v4398
        %v4741 = vunpack.c.l.b16 %v4399
        %v4742 = vunpack.c.h.b16 %v4399
        %v4743 = vunpack.c.l.b16 %v4400
        %v4744 = vunpack.c.h.b16 %v4400
        %v4745 = vunpack.c.l.b16 %v4401
        %v4746 = vunpack.c.h.b16 %v4401
        %v4747 = vunpack.c.l.b16 %v4402
        %v4748 = vunpack.c.h.b16 %v4402
        %v4749 = vunpack.c.l.b16 %v4403
        %v4750 = vunpack.c.h.b16 %v4403
        %v4751 = vunpack.c.l.b16 %v4404
        %v4752 = vunpack.c.h.b16 %v4404
        %v4753 = vunpack.c.l.b16 %v4405
        %v4754 = vunpack.c.h.b16 %v4405
        %v4755 = vunpack.c.l.b16 %v4406
        %v4756 = vunpack.c.h.b16 %v4406
        %v4757 = vunpack.c.l.b16 %v4407
        %v4758 = vunpack.c.h.b16 %v4407
        %v4759 = vunpack.c.l.b16 %v4408
        %v4760 = vunpack.c.h.b16 %v4408
        %v4761 = vunpack.c.l.b16 %v4409
        %v4762 = vunpack.c.h.b16 %v4409
        %v4763 = vunpack.c.l.b16 %v4410
        %v4764 = vunpack.c.h.b16 %v4410
        %v4765 = vunpack.c.l.b16 %v4411
        %v4766 = vunpack.c.h.b16 %v4411
        %v4767 = vunpack.c.l.b16 %v4412
        %v4768 = vunpack.c.h.b16 %v4412
        %v4769 = vunpack.c.l.b16 %v4413
        %v4770 = vunpack.c.h.b16 %v4413
        %v4771 = vunpack.c.l.b16 %v4414
        %v4772 = vunpack.c.h.b16 %v4414
        %v4773 = vunpack.c.l.b16 %v4415
        %v4774 = vunpack.c.h.b16 %v4415
        %v4775 = vunpack.c.l.b16 %v4416
        %v4776 = vunpack.c.h.b16 %v4416
        %v4777 = vunpack.c.l.b16 %v4417
        %v4778 = vunpack.c.h.b16 %v4417
        %v4779 = vunpack.c.l.b16 %v4418
        %v4780 = vunpack.c.h.b16 %v4418
        %v4781 = vunpack.c.l.b16 %v4419
        %v4782 = vunpack.c.h.b16 %v4419
        %v4783 = vunpack.c.l.b16 %v4420
        %v4784 = vunpack.c.h.b16 %v4420
        %v4785 = vunpack.c.l.b16 %v4421
        %v4786 = vunpack.c.h.b16 %v4421
        %v4787 = vunpack.c.l.b16 %v4422
        %v4788 = vunpack.c.h.b16 %v4422
        %v4789 = vunpack.c.l.b16 %v4423
        %v4790 = vunpack.c.h.b16 %v4423
        %v4791 = vunpack.c.l.b16 %v4424
        %v4792 = vunpack.c.h.b16 %v4424
        %v4793 = vunpack.c.l.b16 %v4425
        %v4794 = vunpack.c.h.b16 %v4425
        %v4795 = vunpack.c.l.b16 %v4426
        %v4796 = vunpack.c.h.b16 %v4426
        %v4797 = vunpack.c.l.b16 %v4427
        %v4798 = vunpack.c.h.b16 %v4427
        %v4799 = vunpack.c.l.b16 %v4428
        %v4800 = vunpack.c.h.b16 %v4428
        %v4801 = vunpack.c.l.b16 %v4429
        %v4802 = vunpack.c.h.b16 %v4429
        %v4803 = vunpack.c.l.b16 %v4430
        %v4804 = vunpack.c.h.b16 %v4430
        %v4805 = vunpack.c.l.b16 %v4431
        %v4806 = vunpack.c.h.b16 %v4431
        %v4807 = vunpack.c.l.b16 %v4432
        %v4808 = vunpack.c.h.b16 %v4432
        %v4809 = vunpack.c.l.b16 %v4433
        %v4810 = vunpack.c.h.b16 %v4433
        %v4811 = vunpack.c.l.b16 %v4434
        %v4812 = vunpack.c.h.b16 %v4434
        %v4813 = vunpack.c.l.b16 %v4435
        %v4814 = vunpack.c.h.b16 %v4435
        %v4815 = vunpack.c.l.b16 %v4436
        %v4816 = vunpack.c.h.b16 %v4436
        %v4817 = vunpack.c.l.b16 %v4437
        %v4818 = vunpack.c.h.b16 %v4437
        %v4819 = vunpack.c.l.b16 %v4438
        %v4820 = vunpack.c.h.b16 %v4438
        %v4821 = vunpack.c.l.b16 %v4439
        %v4822 = vunpack.c.h.b16 %v4439
        %v4823 = vunpack.c.l.b16 %v4440
        %v4824 = vunpack.c.h.b16 %v4440
        %v4825 = vpack.c.b16 %v4569, %v4569
        %v4826 = vpack.c.b16 %v4570, %v4570
        %v4827 = vpack.c.b16 %v4571, %v4571
        %v4828 = vpack.c.b16 %v4572, %v4572
        %v4829 = vpack.c.b16 %v4573, %v4573
        %v4830 = vpack.c.b16 %v4574, %v4574
        %v4831 = vpack.c.b16 %v4575, %v4575
        %v4832 = vpack.c.b16 %v4576, %v4576
        %v4833 = vpack.c.b16 %v4577, %v4577
        %v4834 = vpack.c.b16 %v4578, %v4578
        %v4835 = vpack.c.b16 %v4579, %v4579
        %v4836 = vpack.c.b16 %v4580, %v4580
        %v4837 = vpack.c.b16 %v4581, %v4581
        %v4838 = vpack.c.b16 %v4582, %v4582
        %v4839 = vpack.c.b16 %v4583, %v4583
        %v4840 = vpack.c.b16 %v4584, %v4584
        %v4841 = vpack.c.b16 %v4585, %v4585
        %v4842 = vpack.c.b16 %v4586, %v4586
        %v4843 = vpack.c.b16 %v4587, %v4587
        %v4844 = vpack.c.b16 %v4588, %v4588
        %v4845 = vpack.c.b16 %v4589, %v4589
        %v4846 = vpack.c.b16 %v4590, %v4590
        %v4847 = vpack.c.b16 %v4591, %v4591
        %v4848 = vpack.c.b16 %v4592, %v4592
        %v4849 = vpack.c.b16 %v4593, %v4593
        %v4850 = vpack.c.b16 %v4594, %v4594
        %v4851 = vpack.c.b16 %v4595, %v4595
        %v4852 = vpack.c.b16 %v4596, %v4596
        %v4853 = vpack.c.b16 %v4597, %v4597
        %v4854 = vpack.c.b16 %v4598, %v4598
        %v4855 = vpack.c.b16 %v4599, %v4599
        %v4856 = vpack.c.b16 %v4600, %v4600
        %v4857 = vpack.c.b16 %v4601, %v4601
        %v4858 = vpack.c.b16 %v4602, %v4602
        %v4859 = vpack.c.b16 %v4603, %v4603
        %v4860 = vpack.c.b16 %v4604, %v4604
        %v4861 = vpack.c.b16 %v4605, %v4605
        %v4862 = vpack.c.b16 %v4606, %v4606
        %v4863 = vpack.c.b16 %v4607, %v4607
        %v4864 = vpack.c.b16 %v4608, %v4608
        %v4865 = vpack.c.b16 %v4609, %v4609
        %v4866 = vpack.c.b16 %v4610, %v4610
        %v4867 = vpack.c.b16 %v4611, %v4611
        %v4868 = vpack.c.b16 %v4612, %v4612
        %v4869 = vpack.c.b16 %v4613, %v4613
        %v4870 = vpack.c.b16 %v4614, %v4614
        %v4871 = vpack.c.b16 %v4615, %v4615
        %v4872 = vpack.c.b16 %v4616, %v4616
        %v4873 = vpack.c.b16 %v4617, %v4617
        %v4874 = vpack.c.b16 %v4618, %v4618
        %v4875 = vpack.c.b16 %v4619, %v4619
        %v4876 = vpack.c.b16 %v4620, %v4620
        %v4877 = vpack.c.b16 %v4621, %v4621
        %v4878 = vpack.c.b16 %v4622, %v4622
        %v4879 = vpack.c.b16 %v4623, %v4623
        %v4880 = vpack.c.b16 %v4624, %v4624
        %v4881 = vpack.c.b16 %v4625, %v4625
        %v4882 = vpack.c.b16 %v4626, %v4626
        %v4883 = vpack.c.b16 %v4627, %v4627
        %v4884 = vpack.c.b16 %v4628, %v4628
        %v4885 = vpack.c.b16 %v4629, %v4629
        %v4886 = vpack.c.b16 %v4630, %v4630
        %v4887 = vpack.c.b16 %v4631, %v4631
        %v4888 = vpack.c.b16 %v4632, %v4632
        %v4889 = vpack.c.b16 %v4633, %v4633
        %v4890 = vpack.c.b16 %v4634, %v4634
        %v4891 = vpack.c.b16 %v4635, %v4635
        %v4892 = vpack.c.b16 %v4636, %v4636
        %v4893 = vpack.c.b16 %v4637, %v4637
        %v4894 = vpack.c.b16 %v4638, %v4638
        %v4895 = vpack.c.b16 %v4639, %v4639
        %v4896 = vpack.c.b16 %v4640, %v4640
        %v4897 = vpack.c.b16 %v4641, %v4641
        %v4898 = vpack.c.b16 %v4642, %v4642
        %v4899 = vpack.c.b16 %v4643, %v4643
        %v4900 = vpack.c.b16 %v4644, %v4644
        %v4901 = vpack.c.b16 %v4645, %v4645
        %v4902 = vpack.c.b16 %v4646, %v4646
        %v4903 = vpack.c.b16 %v4647, %v4647
        %v4904 = vpack.c.b16 %v4648, %v4648
        %v4905 = vpack.c.b16 %v4649, %v4649
        %v4906 = vpack.c.b16 %v4650, %v4650
        %v4907 = vpack.c.b16 %v4651, %v4651
        %v4908 = vpack.c.b16 %v4652, %v4652
        %v4909 = vpack.c.b16 %v4653, %v4653
        %v4910 = vpack.c.b16 %v4654, %v4654
        %v4911 = vpack.c.b16 %v4655, %v4655
        %v4912 = vpack.c.b16 %v4656, %v4656
        %v4913 = vpack.c.b16 %v4657, %v4657
        %v4914 = vpack.c.b16 %v4658, %v4658
        %v4915 = vpack.c.b16 %v4659, %v4659
        %v4916 = vpack.c.b16 %v4660, %v4660
        %v4917 = vpack.c.b16 %v4661, %v4661
        %v4918 = vpack.c.b16 %v4662, %v4662
        %v4919 = vpack.c.b16 %v4663, %v4663
        %v4920 = vpack.c.b16 %v4664, %v4664
        %v4921 = vpack.c.b16 %v4665, %v4665
        %v4922 = vpack.c.b16 %v4666, %v4666
        %v4923 = vpack.c.b16 %v4667, %v4667
        %v4924 = vpack.c.b16 %v4668, %v4668
        %v4925 = vpack.c.b16 %v4669, %v4669
        %v4926 = vpack.c.b16 %v4670, %v4670
        %v4927 = vpack.c.b16 %v4671, %v4671
        %v4928 = vpack.c.b16 %v4672, %v4672
        %v4929 = vpack.c.b16 %v4673, %v4673
        %v4930 = vpack.c.b16 %v4674, %v4674
        %v4931 = vpack.c.b16 %v4675, %v4675
        %v4932 = vpack.c.b16 %v4676, %v4676
        %v4933 = vpack.c.b16 %v4677, %v4677
        %v4934 = vpack.c.b16 %v4678, %v4678
        %v4935 = vpack.c.b16 %v4679, %v4679
        %v4936 = vpack.c.b16 %v4680, %v4680
        %v4937 = vpack.c.b16 %v4681, %v4681
        %v4938 = vpack.c.b16 %v4682, %v4682
        %v4939 = vpack.c.b16 %v4683, %v4683
        %v4940 = vpack.c.b16 %v4684, %v4684
        %v4941 = vpack.c.b16 %v4685, %v4685
        %v4942 = vpack.c.b16 %v4686, %v4686
        %v4943 = vpack.c.b16 %v4687, %v4687
        %v4944 = vpack.c.b16 %v4688, %v4688
        %v4945 = vpack.c.b16 %v4689, %v4689
        %v4946 = vpack.c.b16 %v4690, %v4690
        %v4947 = vpack.c.b16 %v4691, %v4691
        %v4948 = vpack.c.b16 %v4692, %v4692
        %v4949 = vpack.c.b16 %v4693, %v4693
        %v4950 = vpack.c.b16 %v4694, %v4694
        %v4951 = vpack.c.b16 %v4695, %v4695
        %v4952 = vpack.c.b16 %v4696, %v4696
        %v4953 = vpack.c.b16 %v4697, %v4697
        %v4954 = vpack.c.b16 %v4698, %v4698
        %v4955 = vpack.c.b16 %v4699, %v4699
        %v4956 = vpack.c.b16 %v4700, %v4700
        %v4957 = vpack.c.b16 %v4701, %v4701
        %v4958 = vpack.c.b16 %v4702, %v4702
        %v4959 = vpack.c.b16 %v4703, %v4703
        %v4960 = vpack.c.b16 %v4704, %v4704
        %v4961 = vpack.c.b16 %v4705, %v4705
        %v4962 = vpack.c.b16 %v4706, %v4706
        %v4963 = vpack.c.b16 %v4707, %v4707
        %v4964 = vpack.c.b16 %v4708, %v4708
        %v4965 = vpack.c.b16 %v4709, %v4709
        %v4966 = vpack.c.b16 %v4710, %v4710
        %v4967 = vpack.c.b16 %v4711, %v4711
        %v4968 = vpack.c.b16 %v4712, %v4712
        %v4969 = vpack.c.b16 %v4713, %v4713
        %v4970 = vpack.c.b16 %v4714, %v4714
        %v4971 = vpack.c.b16 %v4715, %v4715
        %v4972 = vpack.c.b16 %v4716, %v4716
        %v4973 = vpack.c.b16 %v4717, %v4717
        %v4974 = vpack.c.b16 %v4718, %v4718
        %v4975 = vpack.c.b16 %v4719, %v4719
        %v4976 = vpack.c.b16 %v4720, %v4720
        %v4977 = vpack.c.b16 %v4721, %v4721
        %v4978 = vpack.c.b16 %v4722, %v4722
        %v4979 = vpack.c.b16 %v4723, %v4723
        %v4980 = vpack.c.b16 %v4724, %v4724
        %v4981 = vpack.c.b16 %v4725, %v4725
        %v4982 = vpack.c.b16 %v4726, %v4726
        %v4983 = vpack.c.b16 %v4727, %v4727
        %v4984 = vpack.c.b16 %v4728, %v4728
        %v4985 = vpack.c.b16 %v4729, %v4729
        %v4986 = vpack.c.b16 %v4730, %v4730
        %v4987 = vpack.c.b16 %v4731, %v4731
        %v4988 = vpack.c.b16 %v4732, %v4732
        %v4989 = vpack.c.b16 %v4733, %v4733
        %v4990 = vpack.c.b16 %v4734, %v4734
        %v4991 = vpack.c.b16 %v4735, %v4735
        %v4992 = vpack.c.b16 %v4736, %v4736
        %v4993 = vpack.c.b16 %v4737, %v4737
        %v4994 = vpack.c.b16 %v4738, %v4738
        %v4995 = vpack.c.b16 %v4739, %v4739
        %v4996 = vpack.c.b16 %v4740, %v4740
        %v4997 = vpack.c.b16 %v4741, %v4741
        %v4998 = vpack.c.b16 %v4742, %v4742
        %v4999 = vpack.c.b16 %v4743, %v4743
        %v5000 = vpack.c.b16 %v4744, %v4744
        %v5001 = vpack.c.b16 %v4745, %v4745
        %v5002 = vpack.c.b16 %v4746, %v4746
        %v5003 = vpack.c.b16 %v4747, %v4747
        %v5004 = vpack.c.b16 %v4748, %v4748
        %v5005 = vpack.c.b16 %v4749, %v4749
        %v5006 = vpack.c.b16 %v4750, %v4750
        %v5007 = vpack.c.b16 %v4751, %v4751
        %v5008 = vpack.c.b16 %v4752, %v4752
        %v5009 = vpack.c.b16 %v4753, %v4753
        %v5010 = vpack.c.b16 %v4754, %v4754
        %v5011 = vpack.c.b16 %v4755, %v4755
        %v5012 = vpack.c.b16 %v4756, %v4756
        %v5013 = vpack.c.b16 %v4757, %v4757
        %v5014 = vpack.c.b16 %v4758, %v4758
        %v5015 = vpack.c.b16 %v4759, %v4759
        %v5016 = vpack.c.b16 %v4760, %v4760
        %v5017 = vpack.c.b16 %v4761, %v4761
        %v5018 = vpack.c.b16 %v4762, %v4762
        %v5019 = vpack.c.b16 %v4763, %v4763
        %v5020 = vpack.c.b16 %v4764, %v4764
        %v5021 = vpack.c.b16 %v4765, %v4765
        %v5022 = vpack.c.b16 %v4766, %v4766
        %v5023 = vpack.c.b16 %v4767, %v4767
        %v5024 = vpack.c.b16 %v4768, %v4768
        %v5025 = vpack.c.b16 %v4769, %v4769
        %v5026 = vpack.c.b16 %v4770, %v4770
        %v5027 = vpack.c.b16 %v4771, %v4771
        %v5028 = vpack.c.b16 %v4772, %v4772
        %v5029 = vpack.c.b16 %v4773, %v4773
        %v5030 = vpack.c.b16 %v4774, %v4774
        %v5031 = vpack.c.b16 %v4775, %v4775
        %v5032 = vpack.c.b16 %v4776, %v4776
        %v5033 = vpack.c.b16 %v4777, %v4777
        %v5034 = vpack.c.b16 %v4778, %v4778
        %v5035 = vpack.c.b16 %v4779, %v4779
        %v5036 = vpack.c.b16 %v4780, %v4780
        %v5037 = vpack.c.b16 %v4781, %v4781
        %v5038 = vpack.c.b16 %v4782, %v4782
        %v5039 = vpack.c.b16 %v4783, %v4783
        %v5040 = vpack.c.b16 %v4784, %v4784
        %v5041 = vpack.c.b16 %v4785, %v4785
        %v5042 = vpack.c.b16 %v4786, %v4786
        %v5043 = vpack.c.b16 %v4787, %v4787
        %v5044 = vpack.c.b16 %v4788, %v4788
        %v5045 = vpack.c.b16 %v4789, %v4789
        %v5046 = vpack.c.b16 %v4790, %v4790
        %v5047 = vpack.c.b16 %v4791, %v4791
        %v5048 = vpack.c.b16 %v4792, %v4792
        %v5049 = vpack.c.b16 %v4793, %v4793
        %v5050 = vpack.c.b16 %v4794, %v4794
        %v5051 = vpack.c.b16 %v4795, %v4795
        %v5052 = vpack.c.b16 %v4796, %v4796
        %v5053 = vpack.c.b16 %v4797, %v4797
        %v5054 = vpack.c.b16 %v4798, %v4798
        %v5055 = vpack.c.b16 %v4799, %v4799
        %v5056 = vpack.c.b16 %v4800, %v4800
        %v5057 = vpack.c.b16 %v4801, %v4801
        %v5058 = vpack.c.b16 %v4802, %v4802
        %v5059 = vpack.c.b16 %v4803, %v4803
        %v5060 = vpack.c.b16 %v4804, %v4804
        %v5061 = vpack.c.b16 %v4805, %v4805
        %v5062 = vpack.c.b16 %v4806, %v4806
        %v5063 = vpack.c.b16 %v4807, %v4807
        %v5064 = vpack.c.b16 %v4808, %v4808
        %v5065 = vpack.c.b16 %v4809, %v4809
        %v5066 = vpack.c.b16 %v4810, %v4810
        %v5067 = vpack.c.b16 %v4811, %v4811
        %v5068 = vpack.c.b16 %v4812, %v4812
        %v5069 = vpack.c.b16 %v4813, %v4813
        %v5070 = vpack.c.b16 %v4814, %v4814
        %v5071 = vpack.c.b16 %v4815, %v4815
        %v5072 = vpack.c.b16 %v4816, %v4816
        %v5073 = vpack.c.b16 %v4817, %v4817
        %v5074 = vpack.c.b16 %v4818, %v4818
        %v5075 = vpack.c.b16 %v4819, %v4819
        %v5076 = vpack.c.b16 %v4820, %v4820
        %v5077 = vpack.c.b16 %v4821, %v4821
        %v5078 = vpack.c.b16 %v4822, %v4822
        %v5079 = vpack.c.b16 %v4823, %v4823
        %v5080 = vpack.c.b16 %v4824, %v4824
        %5337 = vst [vmem:[%s4] sm:$0xf] %v4825
        %5338 = vst [vmem:[%s4 + $0x4] sm:$0xf] %v4826
        %5339 = vst [vmem:[%s4 + $0x8] sm:$0xf] %v4827
        %5340 = vst [vmem:[%s4 + $0xc] sm:$0xf] %v4828
        %5341 = vst [vmem:[%s4 + $0x10] sm:$0xf] %v4829
        %5342 = vst [vmem:[%s4 + $0x14] sm:$0xf] %v4830
        %5343 = vst [vmem:[%s4 + $0x18] sm:$0xf] %v4831
        %5344 = vst [vmem:[%s4 + $0x1c] sm:$0xf] %v4832
        %5345 = vst [vmem:[%s4 + $0x20] sm:$0xf] %v4833
        %5346 = vst [vmem:[%s4 + $0x24] sm:$0xf] %v4834
        %5347 = vst [vmem:[%s4 + $0x28] sm:$0xf] %v4835
        %5348 = vst [vmem:[%s4 + $0x2c] sm:$0xf] %v4836
        %5349 = vst [vmem:[%s4 + $0x30] sm:$0xf] %v4837
        %5350 = vst [vmem:[%s4 + $0x34] sm:$0xf] %v4838
        %5351 = vst [vmem:[%s4 + $0x38] sm:$0xf] %v4839
        %5352 = vst [vmem:[%s4 + $0x3c] sm:$0xf] %v4840
        %5353 = vst [vmem:[%s4 + $0x40] sm:$0xf] %v4841
        %5354 = vst [vmem:[%s4 + $0x44] sm:$0xf] %v4842
        %5355 = vst [vmem:[%s4 + $0x48] sm:$0xf] %v4843
        %5356 = vst [vmem:[%s4 + $0x4c] sm:$0xf] %v4844
        %5357 = vst [vmem:[%s4 + $0x50] sm:$0xf] %v4845
        %5358 = vst [vmem:[%s4 + $0x54] sm:$0xf] %v4846
        %5359 = vst [vmem:[%s4 + $0x58] sm:$0xf] %v4847
        %5360 = vst [vmem:[%s4 + $0x5c] sm:$0xf] %v4848
        %5361 = vst [vmem:[%s4 + $0x60] sm:$0xf] %v4849
        %5362 = vst [vmem:[%s4 + $0x64] sm:$0xf] %v4850
        %5363 = vst [vmem:[%s4 + $0x68] sm:$0xf] %v4851
        %5364 = vst [vmem:[%s4 + $0x6c] sm:$0xf] %v4852
        %5365 = vst [vmem:[%s4 + $0x70] sm:$0xf] %v4853
        %5366 = vst [vmem:[%s4 + $0x74] sm:$0xf] %v4854
        %5367 = vst [vmem:[%s4 + $0x78] sm:$0xf] %v4855
        %5368 = vst [vmem:[%s4 + $0x7c] sm:$0xf] %v4856
        %5369 = vst [vmem:[%s4 + $0x80] sm:$0xf] %v4857
        %5370 = vst [vmem:[%s4 + $0x84] sm:$0xf] %v4858
        %5371 = vst [vmem:[%s4 + $0x88] sm:$0xf] %v4859
        %5372 = vst [vmem:[%s4 + $0x8c] sm:$0xf] %v4860
        %5373 = vst [vmem:[%s4 + $0x90] sm:$0xf] %v4861
        %5374 = vst [vmem:[%s4 + $0x94] sm:$0xf] %v4862
        %5375 = vst [vmem:[%s4 + $0x98] sm:$0xf] %v4863
        %5376 = vst [vmem:[%s4 + $0x9c] sm:$0xf] %v4864
        %5377 = vst [vmem:[%s4 + $0xa0] sm:$0xf] %v4865
        %5378 = vst [vmem:[%s4 + $0xa4] sm:$0xf] %v4866
        %5379 = vst [vmem:[%s4 + $0xa8] sm:$0xf] %v4867
        %5380 = vst [vmem:[%s4 + $0xac] sm:$0xf] %v4868
        %5381 = vst [vmem:[%s4 + $0xb0] sm:$0xf] %v4869
        %5382 = vst [vmem:[%s4 + $0xb4] sm:$0xf] %v4870
        %5383 = vst [vmem:[%s4 + $0xb8] sm:$0xf] %v4871
        %5384 = vst [vmem:[%s4 + $0xbc] sm:$0xf] %v4872
        %5385 = vst [vmem:[%s4 + $0xc0] sm:$0xf] %v4873
        %5386 = vst [vmem:[%s4 + $0xc4] sm:$0xf] %v4874
        %5387 = vst [vmem:[%s4 + $0xc8] sm:$0xf] %v4875
        %5388 = vst [vmem:[%s4 + $0xcc] sm:$0xf] %v4876
        %5389 = vst [vmem:[%s4 + $0xd0] sm:$0xf] %v4877
        %5390 = vst [vmem:[%s4 + $0xd4] sm:$0xf] %v4878
        %5391 = vst [vmem:[%s4 + $0xd8] sm:$0xf] %v4879
        %5392 = vst [vmem:[%s4 + $0xdc] sm:$0xf] %v4880
        %5393 = vst [vmem:[%s4 + $0xe0] sm:$0xf] %v4881
        %5394 = vst [vmem:[%s4 + $0xe4] sm:$0xf] %v4882
        %5395 = vst [vmem:[%s4 + $0xe8] sm:$0xf] %v4883
        %5396 = vst [vmem:[%s4 + $0xec] sm:$0xf] %v4884
        %5397 = vst [vmem:[%s4 + $0xf0] sm:$0xf] %v4885
        %5398 = vst [vmem:[%s4 + $0xf4] sm:$0xf] %v4886
        %5399 = vst [vmem:[%s4 + $0xf8] sm:$0xf] %v4887
        %5400 = vst [vmem:[%s4 + $0xfc] sm:$0xf] %v4888
        %5401 = vst [vmem:[%s4 + $0x100] sm:$0xf] %v4889
        %5402 = vst [vmem:[%s4 + $0x104] sm:$0xf] %v4890
        %5403 = vst [vmem:[%s4 + $0x108] sm:$0xf] %v4891
        %5404 = vst [vmem:[%s4 + $0x10c] sm:$0xf] %v4892
        %5405 = vst [vmem:[%s4 + $0x110] sm:$0xf] %v4893
        %5406 = vst [vmem:[%s4 + $0x114] sm:$0xf] %v4894
        %5407 = vst [vmem:[%s4 + $0x118] sm:$0xf] %v4895
        %5408 = vst [vmem:[%s4 + $0x11c] sm:$0xf] %v4896
        %5409 = vst [vmem:[%s4 + $0x120] sm:$0xf] %v4897
        %5410 = vst [vmem:[%s4 + $0x124] sm:$0xf] %v4898
        %5411 = vst [vmem:[%s4 + $0x128] sm:$0xf] %v4899
        %5412 = vst [vmem:[%s4 + $0x12c] sm:$0xf] %v4900
        %5413 = vst [vmem:[%s4 + $0x130] sm:$0xf] %v4901
        %5414 = vst [vmem:[%s4 + $0x134] sm:$0xf] %v4902
        %5415 = vst [vmem:[%s4 + $0x138] sm:$0xf] %v4903
        %5416 = vst [vmem:[%s4 + $0x13c] sm:$0xf] %v4904
        %5417 = vst [vmem:[%s4 + $0x140] sm:$0xf] %v4905
        %5418 = vst [vmem:[%s4 + $0x144] sm:$0xf] %v4906
        %5419 = vst [vmem:[%s4 + $0x148] sm:$0xf] %v4907
        %5420 = vst [vmem:[%s4 + $0x14c] sm:$0xf] %v4908
        %5421 = vst [vmem:[%s4 + $0x150] sm:$0xf] %v4909
        %5422 = vst [vmem:[%s4 + $0x154] sm:$0xf] %v4910
        %5423 = vst [vmem:[%s4 + $0x158] sm:$0xf] %v4911
        %5424 = vst [vmem:[%s4 + $0x15c] sm:$0xf] %v4912
        %5425 = vst [vmem:[%s4 + $0x160] sm:$0xf] %v4913
        %5426 = vst [vmem:[%s4 + $0x164] sm:$0xf] %v4914
        %5427 = vst [vmem:[%s4 + $0x168] sm:$0xf] %v4915
        %5428 = vst [vmem:[%s4 + $0x16c] sm:$0xf] %v4916
        %5429 = vst [vmem:[%s4 + $0x170] sm:$0xf] %v4917
        %5430 = vst [vmem:[%s4 + $0x174] sm:$0xf] %v4918
        %5431 = vst [vmem:[%s4 + $0x178] sm:$0xf] %v4919
        %5432 = vst [vmem:[%s4 + $0x17c] sm:$0xf] %v4920
        %5433 = vst [vmem:[%s4 + $0x180] sm:$0xf] %v4921
        %5434 = vst [vmem:[%s4 + $0x184] sm:$0xf] %v4922
        %5435 = vst [vmem:[%s4 + $0x188] sm:$0xf] %v4923
        %5436 = vst [vmem:[%s4 + $0x18c] sm:$0xf] %v4924
        %5437 = vst [vmem:[%s4 + $0x190] sm:$0xf] %v4925
        %5438 = vst [vmem:[%s4 + $0x194] sm:$0xf] %v4926
        %5439 = vst [vmem:[%s4 + $0x198] sm:$0xf] %v4927
        %5440 = vst [vmem:[%s4 + $0x19c] sm:$0xf] %v4928
        %5441 = vst [vmem:[%s4 + $0x1a0] sm:$0xf] %v4929
        %5442 = vst [vmem:[%s4 + $0x1a4] sm:$0xf] %v4930
        %5443 = vst [vmem:[%s4 + $0x1a8] sm:$0xf] %v4931
        %5444 = vst [vmem:[%s4 + $0x1ac] sm:$0xf] %v4932
        %5445 = vst [vmem:[%s4 + $0x1b0] sm:$0xf] %v4933
        %5446 = vst [vmem:[%s4 + $0x1b4] sm:$0xf] %v4934
        %5447 = vst [vmem:[%s4 + $0x1b8] sm:$0xf] %v4935
        %5448 = vst [vmem:[%s4 + $0x1bc] sm:$0xf] %v4936
        %5449 = vst [vmem:[%s4 + $0x1c0] sm:$0xf] %v4937
        %5450 = vst [vmem:[%s4 + $0x1c4] sm:$0xf] %v4938
        %5451 = vst [vmem:[%s4 + $0x1c8] sm:$0xf] %v4939
        %5452 = vst [vmem:[%s4 + $0x1cc] sm:$0xf] %v4940
        %5453 = vst [vmem:[%s4 + $0x1d0] sm:$0xf] %v4941
        %5454 = vst [vmem:[%s4 + $0x1d4] sm:$0xf] %v4942
        %5455 = vst [vmem:[%s4 + $0x1d8] sm:$0xf] %v4943
        %5456 = vst [vmem:[%s4 + $0x1dc] sm:$0xf] %v4944
        %5457 = vst [vmem:[%s4 + $0x1e0] sm:$0xf] %v4945
        %5458 = vst [vmem:[%s4 + $0x1e4] sm:$0xf] %v4946
        %5459 = vst [vmem:[%s4 + $0x1e8] sm:$0xf] %v4947
        %5460 = vst [vmem:[%s4 + $0x1ec] sm:$0xf] %v4948
        %5461 = vst [vmem:[%s4 + $0x1f0] sm:$0xf] %v4949
        %5462 = vst [vmem:[%s4 + $0x1f4] sm:$0xf] %v4950
        %5463 = vst [vmem:[%s4 + $0x1f8] sm:$0xf] %v4951
        %5464 = vst [vmem:[%s4 + $0x1fc] sm:$0xf] %v4952
        %5465 = vst [vmem:[%s4 + $0x200] sm:$0xf] %v4953
        %5466 = vst [vmem:[%s4 + $0x204] sm:$0xf] %v4954
        %5467 = vst [vmem:[%s4 + $0x208] sm:$0xf] %v4955
        %5468 = vst [vmem:[%s4 + $0x20c] sm:$0xf] %v4956
        %5469 = vst [vmem:[%s4 + $0x210] sm:$0xf] %v4957
        %5470 = vst [vmem:[%s4 + $0x214] sm:$0xf] %v4958
        %5471 = vst [vmem:[%s4 + $0x218] sm:$0xf] %v4959
        %5472 = vst [vmem:[%s4 + $0x21c] sm:$0xf] %v4960
        %5473 = vst [vmem:[%s4 + $0x220] sm:$0xf] %v4961
        %5474 = vst [vmem:[%s4 + $0x224] sm:$0xf] %v4962
        %5475 = vst [vmem:[%s4 + $0x228] sm:$0xf] %v4963
        %5476 = vst [vmem:[%s4 + $0x22c] sm:$0xf] %v4964
        %5477 = vst [vmem:[%s4 + $0x230] sm:$0xf] %v4965
        %5478 = vst [vmem:[%s4 + $0x234] sm:$0xf] %v4966
        %5479 = vst [vmem:[%s4 + $0x238] sm:$0xf] %v4967
        %5480 = vst [vmem:[%s4 + $0x23c] sm:$0xf] %v4968
        %5481 = vst [vmem:[%s4 + $0x240] sm:$0xf] %v4969
        %5482 = vst [vmem:[%s4 + $0x244] sm:$0xf] %v4970
        %5483 = vst [vmem:[%s4 + $0x248] sm:$0xf] %v4971
        %5484 = vst [vmem:[%s4 + $0x24c] sm:$0xf] %v4972
        %5485 = vst [vmem:[%s4 + $0x250] sm:$0xf] %v4973
        %5486 = vst [vmem:[%s4 + $0x254] sm:$0xf] %v4974
        %5487 = vst [vmem:[%s4 + $0x258] sm:$0xf] %v4975
        %5488 = vst [vmem:[%s4 + $0x25c] sm:$0xf] %v4976
        %5489 = vst [vmem:[%s4 + $0x260] sm:$0xf] %v4977
        %5490 = vst [vmem:[%s4 + $0x264] sm:$0xf] %v4978
        %5491 = vst [vmem:[%s4 + $0x268] sm:$0xf] %v4979
        %5492 = vst [vmem:[%s4 + $0x26c] sm:$0xf] %v4980
        %5493 = vst [vmem:[%s4 + $0x270] sm:$0xf] %v4981
        %5494 = vst [vmem:[%s4 + $0x274] sm:$0xf] %v4982
        %5495 = vst [vmem:[%s4 + $0x278] sm:$0xf] %v4983
        %5496 = vst [vmem:[%s4 + $0x27c] sm:$0xf] %v4984
        %5497 = vst [vmem:[%s4 + $0x280] sm:$0xf] %v4985
        %5498 = vst [vmem:[%s4 + $0x284] sm:$0xf] %v4986
        %5499 = vst [vmem:[%s4 + $0x288] sm:$0xf] %v4987
        %5500 = vst [vmem:[%s4 + $0x28c] sm:$0xf] %v4988
        %5501 = vst [vmem:[%s4 + $0x290] sm:$0xf] %v4989
        %5502 = vst [vmem:[%s4 + $0x294] sm:$0xf] %v4990
        %5503 = vst [vmem:[%s4 + $0x298] sm:$0xf] %v4991
        %5504 = vst [vmem:[%s4 + $0x29c] sm:$0xf] %v4992
        %5505 = vst [vmem:[%s4 + $0x2a0] sm:$0xf] %v4993
        %5506 = vst [vmem:[%s4 + $0x2a4] sm:$0xf] %v4994
        %5507 = vst [vmem:[%s4 + $0x2a8] sm:$0xf] %v4995
        %5508 = vst [vmem:[%s4 + $0x2ac] sm:$0xf] %v4996
        %5509 = vst [vmem:[%s4 + $0x2b0] sm:$0xf] %v4997
        %5510 = vst [vmem:[%s4 + $0x2b4] sm:$0xf] %v4998
        %5511 = vst [vmem:[%s4 + $0x2b8] sm:$0xf] %v4999
        %5512 = vst [vmem:[%s4 + $0x2bc] sm:$0xf] %v5000
        %5513 = vst [vmem:[%s4 + $0x2c0] sm:$0xf] %v5001
        %5514 = vst [vmem:[%s4 + $0x2c4] sm:$0xf] %v5002
        %5515 = vst [vmem:[%s4 + $0x2c8] sm:$0xf] %v5003
        %5516 = vst [vmem:[%s4 + $0x2cc] sm:$0xf] %v5004
        %5517 = vst [vmem:[%s4 + $0x2d0] sm:$0xf] %v5005
        %5518 = vst [vmem:[%s4 + $0x2d4] sm:$0xf] %v5006
        %5519 = vst [vmem:[%s4 + $0x2d8] sm:$0xf] %v5007
        %5520 = vst [vmem:[%s4 + $0x2dc] sm:$0xf] %v5008
        %5521 = vst [vmem:[%s4 + $0x2e0] sm:$0xf] %v5009
        %5522 = vst [vmem:[%s4 + $0x2e4] sm:$0xf] %v5010
        %5523 = vst [vmem:[%s4 + $0x2e8] sm:$0xf] %v5011
        %5524 = vst [vmem:[%s4 + $0x2ec] sm:$0xf] %v5012
        %5525 = vst [vmem:[%s4 + $0x2f0] sm:$0xf] %v5013
        %5526 = vst [vmem:[%s4 + $0x2f4] sm:$0xf] %v5014
        %5527 = vst [vmem:[%s4 + $0x2f8] sm:$0xf] %v5015
        %5528 = vst [vmem:[%s4 + $0x2fc] sm:$0xf] %v5016
        %5529 = vst [vmem:[%s4 + $0x300] sm:$0xf] %v5017
        %5530 = vst [vmem:[%s4 + $0x304] sm:$0xf] %v5018
        %5531 = vst [vmem:[%s4 + $0x308] sm:$0xf] %v5019
        %5532 = vst [vmem:[%s4 + $0x30c] sm:$0xf] %v5020
        %5533 = vst [vmem:[%s4 + $0x310] sm:$0xf] %v5021
        %5534 = vst [vmem:[%s4 + $0x314] sm:$0xf] %v5022
        %5535 = vst [vmem:[%s4 + $0x318] sm:$0xf] %v5023
        %5536 = vst [vmem:[%s4 + $0x31c] sm:$0xf] %v5024
        %5537 = vst [vmem:[%s4 + $0x320] sm:$0xf] %v5025
        %5538 = vst [vmem:[%s4 + $0x324] sm:$0xf] %v5026
        %5539 = vst [vmem:[%s4 + $0x328] sm:$0xf] %v5027
        %5540 = vst [vmem:[%s4 + $0x32c] sm:$0xf] %v5028
        %5541 = vst [vmem:[%s4 + $0x330] sm:$0xf] %v5029
        %5542 = vst [vmem:[%s4 + $0x334] sm:$0xf] %v5030
        %5543 = vst [vmem:[%s4 + $0x338] sm:$0xf] %v5031
        %5544 = vst [vmem:[%s4 + $0x33c] sm:$0xf] %v5032
        %5545 = vst [vmem:[%s4 + $0x340] sm:$0xf] %v5033
        %5546 = vst [vmem:[%s4 + $0x344] sm:$0xf] %v5034
        %5547 = vst [vmem:[%s4 + $0x348] sm:$0xf] %v5035
        %5548 = vst [vmem:[%s4 + $0x34c] sm:$0xf] %v5036
        %5549 = vst [vmem:[%s4 + $0x350] sm:$0xf] %v5037
        %5550 = vst [vmem:[%s4 + $0x354] sm:$0xf] %v5038
        %5551 = vst [vmem:[%s4 + $0x358] sm:$0xf] %v5039
        %5552 = vst [vmem:[%s4 + $0x35c] sm:$0xf] %v5040
        %5553 = vst [vmem:[%s4 + $0x360] sm:$0xf] %v5041
        %5554 = vst [vmem:[%s4 + $0x364] sm:$0xf] %v5042
        %5555 = vst [vmem:[%s4 + $0x368] sm:$0xf] %v5043
        %5556 = vst [vmem:[%s4 + $0x36c] sm:$0xf] %v5044
        %5557 = vst [vmem:[%s4 + $0x370] sm:$0xf] %v5045
        %5558 = vst [vmem:[%s4 + $0x374] sm:$0xf] %v5046
        %5559 = vst [vmem:[%s4 + $0x378] sm:$0xf] %v5047
        %5560 = vst [vmem:[%s4 + $0x37c] sm:$0xf] %v5048
        %5561 = vst [vmem:[%s4 + $0x380] sm:$0xf] %v5049
        %5562 = vst [vmem:[%s4 + $0x384] sm:$0xf] %v5050
        %5563 = vst [vmem:[%s4 + $0x388] sm:$0xf] %v5051
        %5564 = vst [vmem:[%s4 + $0x38c] sm:$0xf] %v5052
        %5565 = vst [vmem:[%s4 + $0x390] sm:$0xf] %v5053
        %5566 = vst [vmem:[%s4 + $0x394] sm:$0xf] %v5054
        %5567 = vst [vmem:[%s4 + $0x398] sm:$0xf] %v5055
        %5568 = vst [vmem:[%s4 + $0x39c] sm:$0xf] %v5056
        %5569 = vst [vmem:[%s4 + $0x3a0] sm:$0xf] %v5057
        %5570 = vst [vmem:[%s4 + $0x3a4] sm:$0xf] %v5058
        %5571 = vst [vmem:[%s4 + $0x3a8] sm:$0xf] %v5059
        %5572 = vst [vmem:[%s4 + $0x3ac] sm:$0xf] %v5060
        %5573 = vst [vmem:[%s4 + $0x3b0] sm:$0xf] %v5061
        %5574 = vst [vmem:[%s4 + $0x3b4] sm:$0xf] %v5062
        %5575 = vst [vmem:[%s4 + $0x3b8] sm:$0xf] %v5063
        %5576 = vst [vmem:[%s4 + $0x3bc] sm:$0xf] %v5064
        %5577 = vst [vmem:[%s4 + $0x3c0] sm:$0xf] %v5065
        %5578 = vst [vmem:[%s4 + $0x3c4] sm:$0xf] %v5066
        %5579 = vst [vmem:[%s4 + $0x3c8] sm:$0xf] %v5067
        %5580 = vst [vmem:[%s4 + $0x3cc] sm:$0xf] %v5068
        %5581 = vst [vmem:[%s4 + $0x3d0] sm:$0xf] %v5069
        %5582 = vst [vmem:[%s4 + $0x3d4] sm:$0xf] %v5070
        %5583 = vst [vmem:[%s4 + $0x3d8] sm:$0xf] %v5071
        %5584 = vst [vmem:[%s4 + $0x3dc] sm:$0xf] %v5072
        %5585 = vst [vmem:[%s4 + $0x3e0] sm:$0xf] %v5073
        %5586 = vst [vmem:[%s4 + $0x3e4] sm:$0xf] %v5074
        %5587 = vst [vmem:[%s4 + $0x3e8] sm:$0xf] %v5075
        %5588 = vst [vmem:[%s4 + $0x3ec] sm:$0xf] %v5076
        %5589 = vst [vmem:[%s4 + $0x3f0] sm:$0xf] %v5077
        %5590 = vst [vmem:[%s4 + $0x3f4] sm:$0xf] %v5078
        %5591 = vst [vmem:[%s4 + $0x3f8] sm:$0xf] %v5079
        %5592 = vst [vmem:[%s4 + $0x3fc] sm:$0xf] %v5080
      $region44: #{dqn_forward.3} parent=35 // pred_fallthru
        _
      // Predicated region
      $region45: #{dqn_forward.3} parent=35 // pred_check
        %p5593 = pneg %p117
      $region46: #{dqn_forward.3} parent=35 // pred_check_branch
        %5595 = sbr.rel (%p5593) target = $region48
      $region47: #{dqn_forward.3} parent=35 // pred_region
        _
      $region48: #{dqn_forward.3} parent=35 // pred_fallthru
        _
      // Predicated region
      $region49: #{dqn_forward.3} parent=35 // pred_check
        %p5596 = pneg %p117
      $region50: #{dqn_forward.3} parent=35 // pred_check_branch
        %5598 = sbr.rel (%p5596) target = $region52
      $region51: #{dqn_forward.3} parent=35 // pred_region
        _
      $region52: #{dqn_forward.3} parent=35 // pred_fallthru
        _
    $region36: #{dqn_forward.3} parent=5 // pred_fallthru
      _
    %p5599 = scmp.le.s32.totalorder 2, %s10
    // Predicated region
    $region53: #{dqn_forward.3} parent=5 // pred_check
      %p5600 = pneg %p5599
    $region54: #{dqn_forward.3} parent=5 // pred_check_branch
      %5602 = sbr.rel (%p5600) target = $region56
    $region55: #{dqn_forward.3} parent=5 // pred_region
      %s5603 = ssub.s32 %s10, 2
    $region56: #{dqn_forward.3} parent=5 // pred_fallthru
      _
  $region6: #{dqn_forward.3} parent=0 // loop_footer
    %s14 = sadd.s32 1, %s10
  $region7: #{dqn_forward.3} parent=0 // loop_footer_branch
    %9 = sbr.rel target = $region3
  $region8: #{dqn_forward.3} parent=0 // loop_exit
    _

// kernel: dqn_forward.4
$region0: #{dqn_forward.4}
  #allocation0 [shape = 'u32[]', space=smem, size = 0x4, offset = 0x4, fixed_abs, tag = 'smem constant byte address 0x4 - core index']
  #allocation1 [shape = 'u32[144,128]{1,0:T(1,128)}', space=vmem, size = 0x12000, scoped, tag = 'internal scratch']
  #allocation2 [shape = 'f32[1,128]{1,0:T(1,128)}', space=vmem, size = 0x200, scoped, tag = 'scratch operand']
  #allocation3 [shape = 'f32[1,128]{1,0:T(1,128)}', space=vmem, size = 0x200, scoped, tag = 'scratch operand']
  %s0 = inlined_call_operand.vmem [shape: bf16[200,400], index: 0, kind: input, shape index: {}]
  %s1 = inlined_call_operand.vmem [shape: bf16[400,128], index: 1, kind: input, shape index: {}]
  %s2 = inlined_call_operand.vmem [shape: f32[1,128], index: 2, kind: input, shape index: {}]
  %s3 = inlined_call_operand.vmem [shape: f32[1,128], index: 3, kind: input, shape index: {}]
  %s4 = inlined_call_operand.vmem [shape: bf16[208,128], index: 4, kind: output, shape index: {}]
  %s5 = sld [smem:[#allocation0]]
  $region34: #{dqn_forward.4} parent=0
    _
  %s7 = ssub.s32 1, %s5
  %s8 = scalar_select 0, %s7, %s5
  // Predicated region
  $region2: #{dqn_forward.4} parent=0 // pred_check
    _
  $region3: #{dqn_forward.4} parent=0 // pred_check_branch
    %10 = sbr.rel (0) target = $region5
  $region4: #{dqn_forward.4} parent=0 // pred_region
    _
  $region5: #{dqn_forward.4} parent=0 // pred_fallthru
    _
  // Predicated region
  $region6: #{dqn_forward.4} parent=0 // pred_check
    _
  $region7: #{dqn_forward.4} parent=0 // pred_check_branch
    %12 = sbr.rel (0) target = $region9
  $region8: #{dqn_forward.4} parent=0 // pred_region
    _
  $region9: #{dqn_forward.4} parent=0 // pred_fallthru
    _
  // Predicated region
  $region10: #{dqn_forward.4} parent=0 // pred_check
    _
  $region11: #{dqn_forward.4} parent=0 // pred_check_branch
    %14 = sbr.rel (0) target = $region13
  $region12: #{dqn_forward.4} parent=0 // pred_region
    _
  $region13: #{dqn_forward.4} parent=0 // pred_fallthru
    _
  // Predicated region
  $region14: #{dqn_forward.4} parent=0 // pred_check
    _
  $region15: #{dqn_forward.4} parent=0 // pred_check_branch
    %16 = sbr.rel (0) target = $region17
  $region16: #{dqn_forward.4} parent=0 // pred_region
    _
  $region17: #{dqn_forward.4} parent=0 // pred_fallthru
    _
  %p18 = scmp.eq.s32.totalorder 0, 0
  // Predicated region
  $region18: #{dqn_forward.4} parent=0 // pred_check
    %p19 = pneg %p18
  $region19: #{dqn_forward.4} parent=0 // pred_check_branch
    %21 = sbr.rel (%p19) target = $region21
  $region20: #{dqn_forward.4} parent=0 // pred_region
    %22 = vst [vmem:[#allocation2] sm:$0x1] 0.0
    %23 = vst [vmem:[#allocation3] sm:$0x1] 0.0
  $region21: #{dqn_forward.4} parent=0 // pred_fallthru
    _
  %v24 = vld [vmem:[%s0] sm:$0xff]
  %v25 = vld [vmem:[%s0 + $0x8] sm:$0xff]
  %v26 = vld [vmem:[%s0 + $0x10] sm:$0xff]
  %v27 = vld [vmem:[%s0 + $0x18] sm:$0xff]
  %v28 = vld [vmem:[%s0 + $0x20] sm:$0xff]
  %v29 = vld [vmem:[%s0 + $0x28] sm:$0xff]
  %v30 = vld [vmem:[%s0 + $0x30] sm:$0xff]
  %v31 = vld [vmem:[%s0 + $0x38] sm:$0xff]
  %v32 = vld [vmem:[%s0 + $0x40] sm:$0xff]
  %v33 = vld [vmem:[%s0 + $0x48] sm:$0xff]
  %v34 = vld [vmem:[%s0 + $0x50] sm:$0xff]
  %v35 = vld [vmem:[%s0 + $0x58] sm:$0xff]
  %v36 = vld [vmem:[%s0 + $0x60] sm:$0xff]
  %v37 = vld [vmem:[%s0 + $0x68] sm:$0xff]
  %v38 = vld [vmem:[%s0 + $0x70] sm:$0xff]
  %v39 = vld [vmem:[%s0 + $0x78] sm:$0xff]
  %v40 = vld [vmem:[%s0 + $0x80] sm:$0xff]
  %v41 = vld [vmem:[%s0 + $0x88] sm:$0xff]
  %v42 = vld [vmem:[%s0 + $0x90] sm:$0xff]
  %v43 = vld [vmem:[%s0 + $0x98] sm:$0xff]
  %v44 = vld [vmem:[%s0 + $0xa0] sm:$0xff]
  %v45 = vld [vmem:[%s0 + $0xa8] sm:$0xff]
  %v46 = vld [vmem:[%s0 + $0xb0] sm:$0xff]
  %v47 = vld [vmem:[%s0 + $0xb8] sm:$0xff]
  %v48 = vld [vmem:[%s0 + $0xc0] sm:$0xff]
  %v49 = vld [vmem:[%s0 + $0xc8] sm:$0xff]
  %v50 = vld [vmem:[%s0 + $0xd0] sm:$0xff]
  %v51 = vld [vmem:[%s0 + $0xd8] sm:$0xff]
  %v52 = vld [vmem:[%s0 + $0xe0] sm:$0xff]
  %v53 = vld [vmem:[%s0 + $0xe8] sm:$0xff]
  %v54 = vld [vmem:[%s0 + $0xf0] sm:$0xff]
  %v55 = vld [vmem:[%s0 + $0xf8] sm:$0xff]
  %v56 = vld [vmem:[%s0 + $0x100] sm:$0xff]
  %v57 = vld [vmem:[%s0 + $0x108] sm:$0xff]
  %v58 = vld [vmem:[%s0 + $0x110] sm:$0xff]
  %v59 = vld [vmem:[%s0 + $0x118] sm:$0xff]
  %v60 = vld [vmem:[%s0 + $0x120] sm:$0xff]
  %v61 = vld [vmem:[%s0 + $0x128] sm:$0xff]
  %v62 = vld [vmem:[%s0 + $0x130] sm:$0xff]
  %v63 = vld [vmem:[%s0 + $0x138] sm:$0xff]
  %v64 = vld [vmem:[%s0 + $0x140] sm:$0xff]
  %v65 = vld [vmem:[%s0 + $0x148] sm:$0xff]
  %v66 = vld [vmem:[%s0 + $0x150] sm:$0xff]
  %v67 = vld [vmem:[%s0 + $0x158] sm:$0xff]
  %v68 = vld [vmem:[%s0 + $0x160] sm:$0xff]
  %v69 = vld [vmem:[%s0 + $0x168] sm:$0xff]
  %v70 = vld [vmem:[%s0 + $0x170] sm:$0xff]
  %v71 = vld [vmem:[%s0 + $0x178] sm:$0xff]
  %v72 = vld [vmem:[%s0 + $0x180] sm:$0xff]
  %v73 = vld [vmem:[%s0 + $0x188] sm:$0xff]
  %v74 = vld [vmem:[%s0 + $0x190] sm:$0xff]
  %v75 = vld [vmem:[%s0 + $0x198] sm:$0xff]
  %v76 = vld [vmem:[%s1] sm:$0xf]
  %v77 = vld [vmem:[%s1 + $0x4] sm:$0xf]
  %v78 = vld [vmem:[%s1 + $0x8] sm:$0xf]
  %v79 = vld [vmem:[%s1 + $0xc] sm:$0xf]
  %v80 = vld [vmem:[%s1 + $0x10] sm:$0xf]
  %v81 = vld [vmem:[%s1 + $0x14] sm:$0xf]
  %v82 = vld [vmem:[%s1 + $0x18] sm:$0xf]
  %v83 = vld [vmem:[%s1 + $0x1c] sm:$0xf]
  %v84 = vld [vmem:[%s1 + $0x20] sm:$0xf]
  %v85 = vld [vmem:[%s1 + $0x24] sm:$0xf]
  %v86 = vld [vmem:[%s1 + $0x28] sm:$0xf]
  %v87 = vld [vmem:[%s1 + $0x2c] sm:$0xf]
  %v88 = vld [vmem:[%s1 + $0x30] sm:$0xf]
  %v89 = vld [vmem:[%s1 + $0x34] sm:$0xf]
  %v90 = vld [vmem:[%s1 + $0x38] sm:$0xf]
  %v91 = vld [vmem:[%s1 + $0x3c] sm:$0xf]
  %v92 = vld [vmem:[%s1 + $0x40] sm:$0xf]
  %v93 = vld [vmem:[%s1 + $0x44] sm:$0xf]
  %v94 = vld [vmem:[%s1 + $0x48] sm:$0xf]
  %v95 = vld [vmem:[%s1 + $0x4c] sm:$0xf]
  %v96 = vld [vmem:[%s1 + $0x50] sm:$0xf]
  %v97 = vld [vmem:[%s1 + $0x54] sm:$0xf]
  %v98 = vld [vmem:[%s1 + $0x58] sm:$0xf]
  %v99 = vld [vmem:[%s1 + $0x5c] sm:$0xf]
  %v100 = vld [vmem:[%s1 + $0x60] sm:$0xf]
  %v101 = vld [vmem:[%s1 + $0x64] sm:$0xf]
  %v102 = vld [vmem:[%s1 + $0x68] sm:$0xf]
  %v103 = vld [vmem:[%s1 + $0x6c] sm:$0xf]
  %v104 = vld [vmem:[%s1 + $0x70] sm:$0xf]
  %v105 = vld [vmem:[%s1 + $0x74] sm:$0xf]
  %v106 = vld [vmem:[%s1 + $0x78] sm:$0xf]
  %v107 = vld [vmem:[%s1 + $0x7c] sm:$0xf]
  %v108 = vld [vmem:[%s1 + $0x80] sm:$0xf]
  %v109 = vld [vmem:[%s1 + $0x84] sm:$0xf]
  %v110 = vld [vmem:[%s1 + $0x88] sm:$0xf]
  %v111 = vld [vmem:[%s1 + $0x8c] sm:$0xf]
  %v112 = vld [vmem:[%s1 + $0x90] sm:$0xf]
  %v113 = vld [vmem:[%s1 + $0x94] sm:$0xf]
  %v114 = vld [vmem:[%s1 + $0x98] sm:$0xf]
  %v115 = vld [vmem:[%s1 + $0x9c] sm:$0xf]
  %v116 = vld [vmem:[%s1 + $0xa0] sm:$0xf]
  %v117 = vld [vmem:[%s1 + $0xa4] sm:$0xf]
  %v118 = vld [vmem:[%s1 + $0xa8] sm:$0xf]
  %v119 = vld [vmem:[%s1 + $0xac] sm:$0xf]
  %v120 = vld [vmem:[%s1 + $0xb0] sm:$0xf]
  %v121 = vld [vmem:[%s1 + $0xb4] sm:$0xf]
  %v122 = vld [vmem:[%s1 + $0xb8] sm:$0xf]
  %v123 = vld [vmem:[%s1 + $0xbc] sm:$0xf]
  %v124 = vld [vmem:[%s1 + $0xc0] sm:$0xf]
  %v125 = vld [vmem:[%s1 + $0xc4] sm:$0xf]
  %v178 = vunpack.c.l.b16 %v24
  %v179 = vunpack.c.h.b16 %v24
  %v180 = vunpack.c.l.b16 %v25
  %v181 = vunpack.c.h.b16 %v25
  %v182 = vunpack.c.l.b16 %v26
  %v183 = vunpack.c.h.b16 %v26
  %v184 = vunpack.c.l.b16 %v27
  %v185 = vunpack.c.h.b16 %v27
  %v186 = vunpack.c.l.b16 %v28
  %v187 = vunpack.c.h.b16 %v28
  %v188 = vunpack.c.l.b16 %v29
  %v189 = vunpack.c.h.b16 %v29
  %v190 = vunpack.c.l.b16 %v30
  %v191 = vunpack.c.h.b16 %v30
  %v192 = vunpack.c.l.b16 %v31
  %v193 = vunpack.c.h.b16 %v31
  %v194 = vunpack.c.l.b16 %v32
  %v195 = vunpack.c.h.b16 %v32
  %v196 = vunpack.c.l.b16 %v33
  %v197 = vunpack.c.h.b16 %v33
  %v198 = vunpack.c.l.b16 %v34
  %v199 = vunpack.c.h.b16 %v34
  %v200 = vunpack.c.l.b16 %v35
  %v201 = vunpack.c.h.b16 %v35
  %v202 = vunpack.c.l.b16 %v36
  %v203 = vunpack.c.h.b16 %v36
  %v204 = vunpack.c.l.b16 %v37
  %v205 = vunpack.c.h.b16 %v37
  %v206 = vunpack.c.l.b16 %v38
  %v207 = vunpack.c.h.b16 %v38
  %v208 = vunpack.c.l.b16 %v39
  %v209 = vunpack.c.h.b16 %v39
  %v210 = vunpack.c.l.b16 %v40
  %v211 = vunpack.c.h.b16 %v40
  %v212 = vunpack.c.l.b16 %v41
  %v213 = vunpack.c.h.b16 %v41
  %v214 = vunpack.c.l.b16 %v42
  %v215 = vunpack.c.h.b16 %v42
  %v216 = vunpack.c.l.b16 %v43
  %v217 = vunpack.c.h.b16 %v43
  %v218 = vunpack.c.l.b16 %v44
  %v219 = vunpack.c.h.b16 %v44
  %v220 = vunpack.c.l.b16 %v45
  %v221 = vunpack.c.h.b16 %v45
  %v222 = vunpack.c.l.b16 %v46
  %v223 = vunpack.c.h.b16 %v46
  %v224 = vunpack.c.l.b16 %v47
  %v225 = vunpack.c.h.b16 %v47
  %v226 = vunpack.c.l.b16 %v48
  %v227 = vunpack.c.h.b16 %v48
  %v228 = vunpack.c.l.b16 %v49
  %v229 = vunpack.c.h.b16 %v49
  %v230 = vunpack.c.l.b16 %v50
  %v231 = vunpack.c.h.b16 %v50
  %v232 = vunpack.c.l.b16 %v51
  %v233 = vunpack.c.h.b16 %v51
  %v234 = vunpack.c.l.b16 %v52
  %v235 = vunpack.c.h.b16 %v52
  %v236 = vunpack.c.l.b16 %v53
  %v237 = vunpack.c.h.b16 %v53
  %v238 = vunpack.c.l.b16 %v54
  %v239 = vunpack.c.h.b16 %v54
  %v240 = vunpack.c.l.b16 %v55
  %v241 = vunpack.c.h.b16 %v55
  %v242 = vunpack.c.l.b16 %v56
  %v243 = vunpack.c.h.b16 %v56
  %v244 = vunpack.c.l.b16 %v57
  %v245 = vunpack.c.h.b16 %v57
  %v246 = vunpack.c.l.b16 %v58
  %v247 = vunpack.c.h.b16 %v58
  %v248 = vunpack.c.l.b16 %v59
  %v249 = vunpack.c.h.b16 %v59
  %v250 = vunpack.c.l.b16 %v60
  %v251 = vunpack.c.h.b16 %v60
  %v252 = vunpack.c.l.b16 %v61
  %v253 = vunpack.c.h.b16 %v61
  %v254 = vunpack.c.l.b16 %v62
  %v255 = vunpack.c.h.b16 %v62
  %v256 = vunpack.c.l.b16 %v63
  %v257 = vunpack.c.h.b16 %v63
  %v258 = vunpack.c.l.b16 %v64
  %v259 = vunpack.c.h.b16 %v64
  %v260 = vunpack.c.l.b16 %v65
  %v261 = vunpack.c.h.b16 %v65
  %v262 = vunpack.c.l.b16 %v66
  %v263 = vunpack.c.h.b16 %v66
  %v264 = vunpack.c.l.b16 %v67
  %v265 = vunpack.c.h.b16 %v67
  %v266 = vunpack.c.l.b16 %v68
  %v267 = vunpack.c.h.b16 %v68
  %v268 = vunpack.c.l.b16 %v69
  %v269 = vunpack.c.h.b16 %v69
  %v270 = vunpack.c.l.b16 %v70
  %v271 = vunpack.c.h.b16 %v70
  %v272 = vunpack.c.l.b16 %v71
  %v273 = vunpack.c.h.b16 %v71
  %v274 = vunpack.c.l.b16 %v72
  %v275 = vunpack.c.h.b16 %v72
  %v276 = vunpack.c.l.b16 %v73
  %v277 = vunpack.c.h.b16 %v73
  %v278 = vunpack.c.l.b16 %v74
  %v279 = vunpack.c.h.b16 %v74
  %v280 = vunpack.c.l.b16 %v75
  %v281 = vunpack.c.h.b16 %v75
  %v282 = vpack.c.b16 %v182, %v178
  %v283 = vpack.c.b16 %v183, %v179
  %v284 = vpack.c.b16 %v184, %v180
  %v285 = vpack.c.b16 %v185, %v181
  %v286 = vpack.c.b16 %v190, %v186
  %v287 = vpack.c.b16 %v191, %v187
  %v288 = vpack.c.b16 %v192, %v188
  %v289 = vpack.c.b16 %v193, %v189
  %v290 = vpack.c.b16 %v198, %v194
  %v291 = vpack.c.b16 %v199, %v195
  %v292 = vpack.c.b16 %v200, %v196
  %v293 = vpack.c.b16 %v201, %v197
  %v294 = vpack.c.b16 %v206, %v202
  %v295 = vpack.c.b16 %v207, %v203
  %v296 = vpack.c.b16 %v208, %v204
  %v297 = vpack.c.b16 %v209, %v205
  %v298 = vpack.c.b16 %v214, %v210
  %v299 = vpack.c.b16 %v215, %v211
  %v300 = vpack.c.b16 %v216, %v212
  %v301 = vpack.c.b16 %v217, %v213
  %v302 = vpack.c.b16 %v222, %v218
  %v303 = vpack.c.b16 %v223, %v219
  %v304 = vpack.c.b16 %v224, %v220
  %v305 = vpack.c.b16 %v225, %v221
  %v306 = vpack.c.b16 %v230, %v226
  %v307 = vpack.c.b16 %v231, %v227
  %v308 = vpack.c.b16 %v232, %v228
  %v309 = vpack.c.b16 %v233, %v229
  %v310 = vpack.c.b16 %v238, %v234
  %v311 = vpack.c.b16 %v239, %v235
  %v312 = vpack.c.b16 %v240, %v236
  %v313 = vpack.c.b16 %v241, %v237
  %v314 = vpack.c.b16 %v246, %v242
  %v315 = vpack.c.b16 %v247, %v243
  %v316 = vpack.c.b16 %v248, %v244
  %v317 = vpack.c.b16 %v249, %v245
  %v318 = vpack.c.b16 %v254, %v250
  %v319 = vpack.c.b16 %v255, %v251
  %v320 = vpack.c.b16 %v256, %v252
  %v321 = vpack.c.b16 %v257, %v253
  %v322 = vpack.c.b16 %v262, %v258
  %v323 = vpack.c.b16 %v263, %v259
  %v324 = vpack.c.b16 %v264, %v260
  %v325 = vpack.c.b16 %v265, %v261
  %v326 = vpack.c.b16 %v270, %v266
  %v327 = vpack.c.b16 %v271, %v267
  %v328 = vpack.c.b16 %v272, %v268
  %v329 = vpack.c.b16 %v273, %v269
  %v330 = vpack.c.b16 %v278, %v274
  %v331 = vpack.c.b16 %v279, %v275
  %v332 = vpack.c.b16 %v280, %v276
  %v333 = vpack.c.b16 %v281, %v277
  %v423 = vunpack.c.l.b16 %v76
  %v424 = vunpack.c.l.b16 %v77
  %v425 = vunpack.c.l.b16 %v78
  %v426 = vunpack.c.l.b16 %v79
  %v427 = vunpack.c.l.b16 %v80
  %v428 = vunpack.c.l.b16 %v81
  %v429 = vunpack.c.l.b16 %v82
  %v430 = vunpack.c.l.b16 %v83
  %v431 = vunpack.c.l.b16 %v84
  %v432 = vunpack.c.l.b16 %v85
  %v433 = vunpack.c.l.b16 %v86
  %v434 = vunpack.c.l.b16 %v87
  %v435 = vunpack.c.l.b16 %v88
  %v436 = vunpack.c.l.b16 %v89
  %v437 = vunpack.c.l.b16 %v90
  %v438 = vunpack.c.l.b16 %v91
  %v439 = vunpack.c.l.b16 %v92
  %v440 = vunpack.c.l.b16 %v93
  %v441 = vunpack.c.l.b16 %v94
  %v442 = vunpack.c.l.b16 %v95
  %v443 = vunpack.c.l.b16 %v96
  %v444 = vunpack.c.l.b16 %v97
  %v445 = vunpack.c.l.b16 %v98
  %v446 = vunpack.c.l.b16 %v99
  %v447 = vunpack.c.l.b16 %v100
  %v448 = vunpack.c.l.b16 %v101
  %v449 = vunpack.c.l.b16 %v102
  %v450 = vunpack.c.l.b16 %v103
  %v451 = vunpack.c.l.b16 %v104
  %v452 = vunpack.c.l.b16 %v105
  %v453 = vunpack.c.l.b16 %v106
  %v454 = vunpack.c.l.b16 %v107
  %v455 = vunpack.c.l.b16 %v108
  %v456 = vunpack.c.l.b16 %v109
  %v457 = vunpack.c.l.b16 %v110
  %v458 = vunpack.c.l.b16 %v111
  %v459 = vunpack.c.l.b16 %v112
  %v460 = vunpack.c.l.b16 %v113
  %v461 = vunpack.c.l.b16 %v114
  %v462 = vunpack.c.l.b16 %v115
  %v463 = vunpack.c.l.b16 %v116
  %v464 = vunpack.c.l.b16 %v117
  %v465 = vunpack.c.l.b16 %v118
  %v466 = vunpack.c.l.b16 %v119
  %v467 = vunpack.c.l.b16 %v120
  %v468 = vunpack.c.l.b16 %v121
  %v469 = vunpack.c.l.b16 %v122
  %v470 = vunpack.c.l.b16 %v123
  %v471 = vunpack.c.l.b16 %v124
  %v472 = vunpack.c.l.b16 %v125
  %v473 = vpack.c.b16 %v424, %v423
  %v474 = vpack.c.b16 %v426, %v425
  %v475 = vpack.c.b16 %v428, %v427
  %v476 = vpack.c.b16 %v430, %v429
  %v477 = vpack.c.b16 %v432, %v431
  %v478 = vpack.c.b16 %v434, %v433
  %v479 = vpack.c.b16 %v436, %v435
  %v480 = vpack.c.b16 %v438, %v437
  %v481 = vpack.c.b16 %v440, %v439
  %v482 = vpack.c.b16 %v442, %v441
  %v483 = vpack.c.b16 %v444, %v443
  %v484 = vpack.c.b16 %v446, %v445
  %v485 = vpack.c.b16 %v448, %v447
  %v486 = vpack.c.b16 %v450, %v449
  %v487 = vpack.c.b16 %v452, %v451
  %v488 = vpack.c.b16 %v454, %v453
  %v489 = vpack.c.b16 %v456, %v455
  %v490 = vpack.c.b16 %v458, %v457
  %v491 = vpack.c.b16 %v460, %v459
  %v492 = vpack.c.b16 %v462, %v461
  %v493 = vpack.c.b16 %v464, %v463
  %v494 = vpack.c.b16 %v466, %v465
  %v495 = vpack.c.b16 %v468, %v467
  %v496 = vpack.c.b16 %v470, %v469
  %v497 = vpack.c.b16 %v472, %v471
  %vm523 = vcmask 130048
  %v525 = vsel %vm523, %v285, 0
  %v528 = vsel %vm523, %v289, 0
  %v531 = vsel %vm523, %v293, 0
  %v534 = vsel %vm523, %v297, 0
  %v537 = vsel %vm523, %v301, 0
  %v540 = vsel %vm523, %v305, 0
  %v543 = vsel %vm523, %v309, 0
  %v546 = vsel %vm523, %v313, 0
  %v549 = vsel %vm523, %v317, 0
  %v552 = vsel %vm523, %v321, 0
  %v555 = vsel %vm523, %v325, 0
  %v558 = vsel %vm523, %v329, 0
  %v561 = vsel %vm523, %v333, 0
  %563 = vmatprep.subr.bf16.mxu0 0
  %564 = vmatpush1.bf16.msra.mxu0 %v480
  %565 = vmatprep.subr.bf16.mxu0 0
  %566 = vmatpush1.bf16.msra.mxu0 %v479
  %567 = vmatprep.subr.bf16.mxu0 0
  %568 = vmatpush1.bf16.msra.mxu0 %v478
  %569 = vmatprep.subr.bf16.mxu0 0
  %570 = vmatpush1.bf16.msra.mxu0 %v477
  %571 = vmatprep.subr.bf16.mxu0 0
  %572 = vmatpush1.bf16.msra.mxu0 %v476
  %573 = vmatprep.subr.bf16.mxu0 0
  %574 = vmatpush1.bf16.msra.mxu0 %v475
  %575 = vmatprep.subr.bf16.mxu0 0
  %576 = vmatpush1.bf16.msra.mxu0 %v474
  %577 = vmatprep.subr.bf16.mxu0 0
  %578 = vmatpush1.bf16.msra.mxu0 %v473
  %579 = vmatprep.subr.bf16.mxu0 0
  %580 = vmatpush2.bf16.msra.mxu0 %v488
  %581 = vmatprep.subr.bf16.mxu0 0
  %582 = vmatpush2.bf16.msra.mxu0 %v487
  %583 = vmatprep.subr.bf16.mxu0 0
  %584 = vmatpush2.bf16.msra.mxu0 %v486
  %585 = vmatprep.subr.bf16.mxu0 0
  %586 = vmatpush2.bf16.msra.mxu0 %v485
  %587 = vmatprep.subr.bf16.mxu0 0
  %588 = vmatpush2.bf16.msra.mxu0 %v484
  %589 = vmatprep.subr.bf16.mxu0 0
  %590 = vmatpush2.bf16.msra.mxu0 %v483
  %591 = vmatprep.subr.bf16.mxu0 0
  %592 = vmatpush2.bf16.msra.mxu0 %v482
  %593 = vmatprep.subr.bf16.mxu0 0
  %594 = vmatpush2.bf16.msra.mxu0 %v481
  %595 = vmatprep.mubr.bf16.mxu0 %v283
  %596 = vmatmul.mubr.bf16.gmra.mxu0 %v282
  %v597 = vpop.f32.mrf.mxu0
  %v598 = vadd.f32 0.0, %v597
  %v599 = vpop.f32.mrf.mxu0
  %v600 = vpop.f32.mrf.mxu0
  %v601 = vadd.f32 0.0, %v600
  %v602 = vpop.f32.mrf.mxu0
  %603 = vmatprep.mubr.bf16.mxu0 %v287
  %604 = vmatmul.mubr.bf16.gmra.mxu0 %v286
  %v605 = vpop.f32.mrf.mxu0
  %v606 = vadd.f32 0.0, %v605
  %v607 = vpop.f32.mrf.mxu0
  %v608 = vpop.f32.mrf.mxu0
  %v609 = vadd.f32 0.0, %v608
  %v610 = vpop.f32.mrf.mxu0
  %611 = vmatprep.mubr.bf16.mxu0 %v291
  %612 = vmatmul.mubr.bf16.gmra.mxu0 %v290
  %v613 = vpop.f32.mrf.mxu0
  %v614 = vadd.f32 0.0, %v613
  %v615 = vpop.f32.mrf.mxu0
  %v616 = vpop.f32.mrf.mxu0
  %v617 = vadd.f32 0.0, %v616
  %v618 = vpop.f32.mrf.mxu0
  %619 = vmatprep.mubr.bf16.mxu0 %v295
  %620 = vmatmul.mubr.bf16.gmra.mxu0 %v294
  %v621 = vpop.f32.mrf.mxu0
  %v622 = vadd.f32 0.0, %v621
  %v623 = vpop.f32.mrf.mxu0
  %v624 = vpop.f32.mrf.mxu0
  %v625 = vadd.f32 0.0, %v624
  %v626 = vpop.f32.mrf.mxu0
  %627 = vmatprep.mubr.bf16.mxu0 %v299
  %628 = vmatmul.mubr.bf16.gmra.mxu0 %v298
  %v629 = vpop.f32.mrf.mxu0
  %v630 = vadd.f32 0.0, %v629
  %v631 = vpop.f32.mrf.mxu0
  %v632 = vpop.f32.mrf.mxu0
  %v633 = vadd.f32 0.0, %v632
  %v634 = vpop.f32.mrf.mxu0
  %635 = vmatprep.mubr.bf16.mxu0 %v303
  %636 = vmatmul.mubr.bf16.gmra.mxu0 %v302
  %v637 = vpop.f32.mrf.mxu0
  %v638 = vadd.f32 0.0, %v637
  %v639 = vpop.f32.mrf.mxu0
  %v640 = vpop.f32.mrf.mxu0
  %v641 = vadd.f32 0.0, %v640
  %v642 = vpop.f32.mrf.mxu0
  %643 = vmatprep.mubr.bf16.mxu0 %v307
  %644 = vmatmul.mubr.bf16.gmra.mxu0 %v306
  %v645 = vpop.f32.mrf.mxu0
  %v646 = vadd.f32 0.0, %v645
  %v647 = vpop.f32.mrf.mxu0
  %v648 = vpop.f32.mrf.mxu0
  %v649 = vadd.f32 0.0, %v648
  %v650 = vpop.f32.mrf.mxu0
  %651 = vmatprep.mubr.bf16.mxu0 %v311
  %652 = vmatmul.mubr.bf16.gmra.mxu0 %v310
  %v653 = vpop.f32.mrf.mxu0
  %v654 = vadd.f32 0.0, %v653
  %v655 = vpop.f32.mrf.mxu0
  %v656 = vpop.f32.mrf.mxu0
  %v657 = vadd.f32 0.0, %v656
  %v658 = vpop.f32.mrf.mxu0
  %659 = vmatprep.mubr.bf16.mxu0 %v315
  %660 = vmatmul.mubr.bf16.gmra.mxu0 %v314
  %v661 = vpop.f32.mrf.mxu0
  %v662 = vadd.f32 0.0, %v661
  %v663 = vpop.f32.mrf.mxu0
  %v664 = vpop.f32.mrf.mxu0
  %v665 = vadd.f32 0.0, %v664
  %v666 = vpop.f32.mrf.mxu0
  %667 = vmatprep.mubr.bf16.mxu0 %v319
  %668 = vmatmul.mubr.bf16.gmra.mxu0 %v318
  %v669 = vpop.f32.mrf.mxu0
  %v670 = vadd.f32 0.0, %v669
  %v671 = vpop.f32.mrf.mxu0
  %v672 = vpop.f32.mrf.mxu0
  %v673 = vadd.f32 0.0, %v672
  %v674 = vpop.f32.mrf.mxu0
  %675 = vmatprep.mubr.bf16.mxu0 %v323
  %676 = vmatmul.mubr.bf16.gmra.mxu0 %v322
  %v677 = vpop.f32.mrf.mxu0
  %v678 = vadd.f32 0.0, %v677
  %v679 = vpop.f32.mrf.mxu0
  %v680 = vpop.f32.mrf.mxu0
  %v681 = vadd.f32 0.0, %v680
  %v682 = vpop.f32.mrf.mxu0
  %683 = vmatprep.mubr.bf16.mxu0 %v327
  %684 = vmatmul.mubr.bf16.gmra.mxu0 %v326
  %v685 = vpop.f32.mrf.mxu0
  %v686 = vadd.f32 0.0, %v685
  %v687 = vpop.f32.mrf.mxu0
  %v688 = vpop.f32.mrf.mxu0
  %v689 = vadd.f32 0.0, %v688
  %v690 = vpop.f32.mrf.mxu0
  %691 = vmatprep.mubr.bf16.mxu0 %v331
  %692 = vmatmul.mubr.bf16.gmra.mxu0 %v330
  %v693 = vpop.f32.mrf.mxu0
  %v694 = vadd.f32 0.0, %v693
  %v695 = vpop.f32.mrf.mxu0
  %v696 = vpop.f32.mrf.mxu0
  %v697 = vadd.f32 0.0, %v696
  %v698 = vpop.f32.mrf.mxu0
  %699 = vdwg.mxu0
  %700 = vmatprep.subr.bf16.mxu0 0
  %701 = vmatpush1.bf16.msra.mxu0 %v496
  %702 = vmatprep.subr.bf16.mxu0 0
  %703 = vmatpush1.bf16.msra.mxu0 %v495
  %704 = vmatprep.subr.bf16.mxu0 0
  %705 = vmatpush1.bf16.msra.mxu0 %v494
  %706 = vmatprep.subr.bf16.mxu0 0
  %707 = vmatpush1.bf16.msra.mxu0 %v493
  %708 = vmatprep.subr.bf16.mxu0 0
  %709 = vmatpush1.bf16.msra.mxu0 %v492
  %710 = vmatprep.subr.bf16.mxu0 0
  %711 = vmatpush1.bf16.msra.mxu0 %v491
  %712 = vmatprep.subr.bf16.mxu0 0
  %713 = vmatpush1.bf16.msra.mxu0 %v490
  %714 = vmatprep.subr.bf16.mxu0 0
  %715 = vmatpush1.bf16.msra.mxu0 %v489
  %716 = vmatprep.subr.bf16.mxu0 0
  %717 = vmatpush2.bf16.msra.mxu0 0
  %718 = vmatprep.subr.bf16.mxu0 0
  %719 = vmatpush2.bf16.msra.mxu0 0
  %720 = vmatprep.subr.bf16.mxu0 0
  %721 = vmatpush2.bf16.msra.mxu0 0
  %722 = vmatprep.subr.bf16.mxu0 0
  %723 = vmatpush2.bf16.msra.mxu0 0
  %724 = vmatprep.subr.bf16.mxu0 0
  %725 = vmatpush2.bf16.msra.mxu0 0
  %726 = vmatprep.subr.bf16.mxu0 0
  %727 = vmatpush2.bf16.msra.mxu0 0
  %728 = vmatprep.subr.bf16.mxu0 0
  %729 = vmatpush2.bf16.msra.mxu0 0
  %730 = vmatprep.subr.bf16.mxu0 0
  %731 = vmatpush2.bf16.msra.mxu0 %v497
  %732 = vmatprep.mubr.bf16.mxu0 %v525
  %733 = vmatmul.mubr.bf16.gmra.mxu0 %v284
  %v734 = vpop.f32.mrf.mxu0
  %v735 = vadd.f32 %v598, %v734
  %v736 = vpop.f32.mrf.mxu0
  %v737 = vpop.f32.mrf.mxu0
  %v738 = vadd.f32 %v601, %v737
  %v739 = vpop.f32.mrf.mxu0
  %740 = vmatprep.mubr.bf16.mxu0 %v528
  %741 = vmatmul.mubr.bf16.gmra.mxu0 %v288
  %v742 = vpop.f32.mrf.mxu0
  %v743 = vadd.f32 %v606, %v742
  %v744 = vpop.f32.mrf.mxu0
  %v745 = vpop.f32.mrf.mxu0
  %v746 = vadd.f32 %v609, %v745
  %v747 = vpop.f32.mrf.mxu0
  %748 = vmatprep.mubr.bf16.mxu0 %v531
  %749 = vmatmul.mubr.bf16.gmra.mxu0 %v292
  %v750 = vpop.f32.mrf.mxu0
  %v751 = vadd.f32 %v614, %v750
  %v752 = vpop.f32.mrf.mxu0
  %v753 = vpop.f32.mrf.mxu0
  %v754 = vadd.f32 %v617, %v753
  %v755 = vpop.f32.mrf.mxu0
  %756 = vmatprep.mubr.bf16.mxu0 %v534
  %757 = vmatmul.mubr.bf16.gmra.mxu0 %v296
  %v758 = vpop.f32.mrf.mxu0
  %v759 = vadd.f32 %v622, %v758
  %v760 = vpop.f32.mrf.mxu0
  %v761 = vpop.f32.mrf.mxu0
  %v762 = vadd.f32 %v625, %v761
  %v763 = vpop.f32.mrf.mxu0
  %764 = vmatprep.mubr.bf16.mxu0 %v537
  %765 = vmatmul.mubr.bf16.gmra.mxu0 %v300
  %v766 = vpop.f32.mrf.mxu0
  %v767 = vadd.f32 %v630, %v766
  %v768 = vpop.f32.mrf.mxu0
  %v769 = vpop.f32.mrf.mxu0
  %v770 = vadd.f32 %v633, %v769
  %v771 = vpop.f32.mrf.mxu0
  %772 = vmatprep.mubr.bf16.mxu0 %v540
  %773 = vmatmul.mubr.bf16.gmra.mxu0 %v304
  %v774 = vpop.f32.mrf.mxu0
  %v775 = vadd.f32 %v638, %v774
  %v776 = vpop.f32.mrf.mxu0
  %v777 = vpop.f32.mrf.mxu0
  %v778 = vadd.f32 %v641, %v777
  %v779 = vpop.f32.mrf.mxu0
  %780 = vmatprep.mubr.bf16.mxu0 %v543
  %781 = vmatmul.mubr.bf16.gmra.mxu0 %v308
  %v782 = vpop.f32.mrf.mxu0
  %v783 = vadd.f32 %v646, %v782
  %v784 = vpop.f32.mrf.mxu0
  %v785 = vpop.f32.mrf.mxu0
  %v786 = vadd.f32 %v649, %v785
  %v787 = vpop.f32.mrf.mxu0
  %788 = vmatprep.mubr.bf16.mxu0 %v546
  %789 = vmatmul.mubr.bf16.gmra.mxu0 %v312
  %v790 = vpop.f32.mrf.mxu0
  %v791 = vadd.f32 %v654, %v790
  %v792 = vpop.f32.mrf.mxu0
  %v793 = vpop.f32.mrf.mxu0
  %v794 = vadd.f32 %v657, %v793
  %v795 = vpop.f32.mrf.mxu0
  %796 = vmatprep.mubr.bf16.mxu0 %v549
  %797 = vmatmul.mubr.bf16.gmra.mxu0 %v316
  %v798 = vpop.f32.mrf.mxu0
  %v799 = vadd.f32 %v662, %v798
  %v800 = vpop.f32.mrf.mxu0
  %v801 = vpop.f32.mrf.mxu0
  %v802 = vadd.f32 %v665, %v801
  %v803 = vpop.f32.mrf.mxu0
  %804 = vmatprep.mubr.bf16.mxu0 %v552
  %805 = vmatmul.mubr.bf16.gmra.mxu0 %v320
  %v806 = vpop.f32.mrf.mxu0
  %v807 = vadd.f32 %v670, %v806
  %v808 = vpop.f32.mrf.mxu0
  %v809 = vpop.f32.mrf.mxu0
  %v810 = vadd.f32 %v673, %v809
  %v811 = vpop.f32.mrf.mxu0
  %812 = vmatprep.mubr.bf16.mxu0 %v555
  %813 = vmatmul.mubr.bf16.gmra.mxu0 %v324
  %v814 = vpop.f32.mrf.mxu0
  %v815 = vadd.f32 %v678, %v814
  %v816 = vpop.f32.mrf.mxu0
  %v817 = vpop.f32.mrf.mxu0
  %v818 = vadd.f32 %v681, %v817
  %v819 = vpop.f32.mrf.mxu0
  %820 = vmatprep.mubr.bf16.mxu0 %v558
  %821 = vmatmul.mubr.bf16.gmra.mxu0 %v328
  %v822 = vpop.f32.mrf.mxu0
  %v823 = vadd.f32 %v686, %v822
  %v824 = vpop.f32.mrf.mxu0
  %v825 = vpop.f32.mrf.mxu0
  %v826 = vadd.f32 %v689, %v825
  %v827 = vpop.f32.mrf.mxu0
  %828 = vmatprep.mubr.bf16.mxu0 %v561
  %829 = vmatmul.mubr.bf16.gmra.mxu0 %v332
  %v830 = vpop.f32.mrf.mxu0
  %v831 = vadd.f32 %v694, %v830
  %v832 = vpop.f32.mrf.mxu0
  %v833 = vpop.f32.mrf.mxu0
  %v834 = vadd.f32 %v697, %v833
  %v835 = vpop.f32.mrf.mxu0
  %836 = vdwg.mxu0
  %v837 = vlaneseq
  %v838 = vshrl.u32 %v837, 7
  %v839 = vadd.s32 %v838, 8
  %v840 = vadd.s32 %v838, 16
  %v841 = vadd.s32 %v838, 24
  %v842 = vadd.s32 %v838, 32
  %v843 = vadd.s32 %v838, 40
  %v844 = vadd.s32 %v838, 48
  %v845 = vadd.s32 %v838, 56
  %v846 = vadd.s32 %v838, 64
  %v847 = vadd.s32 %v838, 72
  %v848 = vadd.s32 %v838, 80
  %v849 = vadd.s32 %v838, 88
  %v850 = vadd.s32 %v838, 96
  %v851 = vadd.s32 %v838, 104
  %v852 = vadd.s32 %v838, 112
  %v853 = vadd.s32 %v838, 120
  %v854 = vadd.s32 %v838, 128
  %v855 = vadd.s32 %v838, 136
  %v856 = vadd.s32 %v838, 144
  %v857 = vadd.s32 %v838, 152
  %v858 = vadd.s32 %v838, 160
  %v859 = vadd.s32 %v838, 168
  %v860 = vadd.s32 %v838, 176
  %v861 = vadd.s32 %v838, 184
  %v862 = vadd.s32 %v838, 192
  %v863 = vadd.s32 %v838, 200
  %s864 = smul.u32 0, 208
  %v865 = vstv %s864
  %v866 = vadd.s32 %v838, %v865
  %v867 = vadd.s32 %v839, %v865
  %v868 = vadd.s32 %v840, %v865
  %v869 = vadd.s32 %v841, %v865
  %v870 = vadd.s32 %v842, %v865
  %v871 = vadd.s32 %v843, %v865
  %v872 = vadd.s32 %v844, %v865
  %v873 = vadd.s32 %v845, %v865
  %v874 = vadd.s32 %v846, %v865
  %v875 = vadd.s32 %v847, %v865
  %v876 = vadd.s32 %v848, %v865
  %v877 = vadd.s32 %v849, %v865
  %v878 = vadd.s32 %v850, %v865
  %v879 = vadd.s32 %v851, %v865
  %v880 = vadd.s32 %v852, %v865
  %v881 = vadd.s32 %v853, %v865
  %v882 = vadd.s32 %v854, %v865
  %v883 = vadd.s32 %v855, %v865
  %v884 = vadd.s32 %v856, %v865
  %v885 = vadd.s32 %v857, %v865
  %v886 = vadd.s32 %v858, %v865
  %v887 = vadd.s32 %v859, %v865
  %v888 = vadd.s32 %v860, %v865
  %v889 = vadd.s32 %v861, %v865
  %v890 = vadd.s32 %v862, %v865
  %v891 = vadd.s32 %v863, %v865
  %vm892 = vcmp.lt.s32.totalorder %v866, 200
  %vm893 = vcmp.lt.s32.totalorder %v867, 200
  %vm894 = vcmp.lt.s32.totalorder %v868, 200
  %vm895 = vcmp.lt.s32.totalorder %v869, 200
  %vm896 = vcmp.lt.s32.totalorder %v870, 200
  %vm897 = vcmp.lt.s32.totalorder %v871, 200
  %vm898 = vcmp.lt.s32.totalorder %v872, 200
  %vm899 = vcmp.lt.s32.totalorder %v873, 200
  %vm900 = vcmp.lt.s32.totalorder %v874, 200
  %vm901 = vcmp.lt.s32.totalorder %v875, 200
  %vm902 = vcmp.lt.s32.totalorder %v876, 200
  %vm903 = vcmp.lt.s32.totalorder %v877, 200
  %vm904 = vcmp.lt.s32.totalorder %v878, 200
  %vm905 = vcmp.lt.s32.totalorder %v879, 200
  %vm906 = vcmp.lt.s32.totalorder %v880, 200
  %vm907 = vcmp.lt.s32.totalorder %v881, 200
  %vm908 = vcmp.lt.s32.totalorder %v882, 200
  %vm909 = vcmp.lt.s32.totalorder %v883, 200
  %vm910 = vcmp.lt.s32.totalorder %v884, 200
  %vm911 = vcmp.lt.s32.totalorder %v885, 200
  %vm912 = vcmp.lt.s32.totalorder %v886, 200
  %vm913 = vcmp.lt.s32.totalorder %v887, 200
  %vm914 = vcmp.lt.s32.totalorder %v888, 200
  %vm915 = vcmp.lt.s32.totalorder %v889, 200
  %vm916 = vcmp.lt.s32.totalorder %v890, 200
  %vm917 = vcmp.lt.s32.totalorder %v891, 200
  %v918 = vsel %vm892, 1, 0
  %v919 = vsel %vm893, 1, 0
  %v920 = vsel %vm894, 1, 0
  %v921 = vsel %vm895, 1, 0
  %v922 = vsel %vm896, 1, 0
  %v923 = vsel %vm897, 1, 0
  %v924 = vsel %vm898, 1, 0
  %v925 = vsel %vm899, 1, 0
  %v926 = vsel %vm900, 1, 0
  %v927 = vsel %vm901, 1, 0
  %v928 = vsel %vm902, 1, 0
  %v929 = vsel %vm903, 1, 0
  %v930 = vsel %vm904, 1, 0
  %v931 = vsel %vm905, 1, 0
  %v932 = vsel %vm906, 1, 0
  %v933 = vsel %vm907, 1, 0
  %v934 = vsel %vm908, 1, 0
  %v935 = vsel %vm909, 1, 0
  %v936 = vsel %vm910, 1, 0
  %v937 = vsel %vm911, 1, 0
  %v938 = vsel %vm912, 1, 0
  %v939 = vsel %vm913, 1, 0
  %v940 = vsel %vm914, 1, 0
  %v941 = vsel %vm915, 1, 0
  %v942 = vsel %vm916, 1, 0
  %v943 = vsel %vm917, 1, 0
  %vm944 = vcmp.eq.s32.totalorder %v918, 1
  %vm945 = vcmp.eq.s32.totalorder %v919, 1
  %vm946 = vcmp.eq.s32.totalorder %v920, 1
  %vm947 = vcmp.eq.s32.totalorder %v921, 1
  %vm948 = vcmp.eq.s32.totalorder %v922, 1
  %vm949 = vcmp.eq.s32.totalorder %v923, 1
  %vm950 = vcmp.eq.s32.totalorder %v924, 1
  %vm951 = vcmp.eq.s32.totalorder %v925, 1
  %vm952 = vcmp.eq.s32.totalorder %v926, 1
  %vm953 = vcmp.eq.s32.totalorder %v927, 1
  %vm954 = vcmp.eq.s32.totalorder %v928, 1
  %vm955 = vcmp.eq.s32.totalorder %v929, 1
  %vm956 = vcmp.eq.s32.totalorder %v930, 1
  %vm957 = vcmp.eq.s32.totalorder %v931, 1
  %vm958 = vcmp.eq.s32.totalorder %v932, 1
  %vm959 = vcmp.eq.s32.totalorder %v933, 1
  %vm960 = vcmp.eq.s32.totalorder %v934, 1
  %vm961 = vcmp.eq.s32.totalorder %v935, 1
  %vm962 = vcmp.eq.s32.totalorder %v936, 1
  %vm963 = vcmp.eq.s32.totalorder %v937, 1
  %vm964 = vcmp.eq.s32.totalorder %v938, 1
  %vm965 = vcmp.eq.s32.totalorder %v939, 1
  %vm966 = vcmp.eq.s32.totalorder %v940, 1
  %vm967 = vcmp.eq.s32.totalorder %v941, 1
  %vm968 = vcmp.eq.s32.totalorder %v942, 1
  %vm969 = vcmp.eq.s32.totalorder %v943, 1
  %v970 = vsel %vm944, %v735, 0.0
  %v971 = vsel %vm945, %v738, 0.0
  %v972 = vsel %vm946, %v743, 0.0
  %v973 = vsel %vm947, %v746, 0.0
  %v974 = vsel %vm948, %v751, 0.0
  %v975 = vsel %vm949, %v754, 0.0
  %v976 = vsel %vm950, %v759, 0.0
  %v977 = vsel %vm951, %v762, 0.0
  %v978 = vsel %vm952, %v767, 0.0
  %v979 = vsel %vm953, %v770, 0.0
  %v980 = vsel %vm954, %v775, 0.0
  %v981 = vsel %vm955, %v778, 0.0
  %v982 = vsel %vm956, %v783, 0.0
  %v983 = vsel %vm957, %v786, 0.0
  %v984 = vsel %vm958, %v791, 0.0
  %v985 = vsel %vm959, %v794, 0.0
  %v986 = vsel %vm960, %v799, 0.0
  %v987 = vsel %vm961, %v802, 0.0
  %v988 = vsel %vm962, %v807, 0.0
  %v989 = vsel %vm963, %v810, 0.0
  %v990 = vsel %vm964, %v815, 0.0
  %v991 = vsel %vm965, %v818, 0.0
  %v992 = vsel %vm966, %v823, 0.0
  %v993 = vsel %vm967, %v826, 0.0
  %v994 = vsel %vm968, %v831, 0.0
  %v995 = vsel %vm969, %v834, 0.0
  %v996 = vld [vmem:[#allocation2] sm:$0x1]
  %v997 = vadd.f32 %v970, %v971
  %v998 = vadd.f32 %v997, %v972
  %v999 = vadd.f32 %v998, %v973
  %v1000 = vadd.f32 %v999, %v974
  %v1001 = vadd.f32 %v1000, %v975
  %v1002 = vadd.f32 %v1001, %v976
  %v1003 = vadd.f32 %v1002, %v977
  %v1004 = vadd.f32 %v1003, %v978
  %v1005 = vadd.f32 %v1004, %v979
  %v1006 = vadd.f32 %v1005, %v980
  %v1007 = vadd.f32 %v1006, %v981
  %v1008 = vadd.f32 %v1007, %v982
  %v1009 = vadd.f32 %v1008, %v983
  %v1010 = vadd.f32 %v1009, %v984
  %v1011 = vadd.f32 %v1010, %v985
  %v1012 = vadd.f32 %v1011, %v986
  %v1013 = vadd.f32 %v1012, %v987
  %v1014 = vadd.f32 %v1013, %v988
  %v1015 = vadd.f32 %v1014, %v989
  %v1016 = vadd.f32 %v1015, %v990
  %v1017 = vadd.f32 %v1016, %v991
  %v1018 = vadd.f32 %v1017, %v992
  %v1019 = vadd.f32 %v1018, %v993
  %v1020 = vadd.f32 %v1019, %v994
  %v1021 = vadd.f32 %v1020, %v995
  %v1022 = vrot.slane %v1021, 4
  %v1023 = vadd.f32 %v1021, %v1022
  %v1024 = vrot.slane %v1023, 2
  %v1025 = vadd.f32 %v1023, %v1024
  %v1026 = vrot.slane %v1025, 1
  %v1027 = vadd.f32 %v1025, %v1026
  %v1028 = vadd.f32 %v996, %v1027
  %1029 = vst [vmem:[#allocation2] sm:$0x1] %v1028
  %v1030 = vld [vmem:[#allocation3] sm:$0x1]
  %v1031 = vmul.f32 %v970, %v970
  %v1032 = vmul.f32 %v971, %v971
  %v1033 = vmul.f32 %v972, %v972
  %v1034 = vmul.f32 %v973, %v973
  %v1035 = vmul.f32 %v974, %v974
  %v1036 = vmul.f32 %v975, %v975
  %v1037 = vmul.f32 %v976, %v976
  %v1038 = vmul.f32 %v977, %v977
  %v1039 = vmul.f32 %v978, %v978
  %v1040 = vmul.f32 %v979, %v979
  %v1041 = vmul.f32 %v980, %v980
  %v1042 = vmul.f32 %v981, %v981
  %v1043 = vmul.f32 %v982, %v982
  %v1044 = vmul.f32 %v983, %v983
  %v1045 = vmul.f32 %v984, %v984
  %v1046 = vmul.f32 %v985, %v985
  %v1047 = vmul.f32 %v986, %v986
  %v1048 = vmul.f32 %v987, %v987
  %v1049 = vmul.f32 %v988, %v988
  %v1050 = vmul.f32 %v989, %v989
  %v1051 = vmul.f32 %v990, %v990
  %v1052 = vmul.f32 %v991, %v991
  %v1053 = vmul.f32 %v992, %v992
  %v1054 = vmul.f32 %v993, %v993
  %v1055 = vmul.f32 %v994, %v994
  %v1056 = vmul.f32 %v995, %v995
  %v1057 = vadd.f32 %v1031, %v1032
  %v1058 = vadd.f32 %v1057, %v1033
  %v1059 = vadd.f32 %v1058, %v1034
  %v1060 = vadd.f32 %v1059, %v1035
  %v1061 = vadd.f32 %v1060, %v1036
  %v1062 = vadd.f32 %v1061, %v1037
  %v1063 = vadd.f32 %v1062, %v1038
  %v1064 = vadd.f32 %v1063, %v1039
  %v1065 = vadd.f32 %v1064, %v1040
  %v1066 = vadd.f32 %v1065, %v1041
  %v1067 = vadd.f32 %v1066, %v1042
  %v1068 = vadd.f32 %v1067, %v1043
  %v1069 = vadd.f32 %v1068, %v1044
  %v1070 = vadd.f32 %v1069, %v1045
  %v1071 = vadd.f32 %v1070, %v1046
  %v1072 = vadd.f32 %v1071, %v1047
  %v1073 = vadd.f32 %v1072, %v1048
  %v1074 = vadd.f32 %v1073, %v1049
  %v1075 = vadd.f32 %v1074, %v1050
  %v1076 = vadd.f32 %v1075, %v1051
  %v1077 = vadd.f32 %v1076, %v1052
  %v1078 = vadd.f32 %v1077, %v1053
  %v1079 = vadd.f32 %v1078, %v1054
  %v1080 = vadd.f32 %v1079, %v1055
  %v1081 = vadd.f32 %v1080, %v1056
  %v1082 = vrot.slane %v1081, 4
  %v1083 = vadd.f32 %v1081, %v1082
  %v1084 = vrot.slane %v1083, 2
  %v1085 = vadd.f32 %v1083, %v1084
  %v1086 = vrot.slane %v1085, 1
  %v1087 = vadd.f32 %v1085, %v1086
  %v1088 = vadd.f32 %v1030, %v1087
  %1089 = vst [vmem:[#allocation3] sm:$0x1] %v1088
  %v1090 = vpack.c.bf16 %v738, %v735
  %v1091 = vpack.c.bf16 %v746, %v743
  %v1092 = vpack.c.bf16 %v754, %v751
  %v1093 = vpack.c.bf16 %v762, %v759
  %v1094 = vpack.c.bf16 %v770, %v767
  %v1095 = vpack.c.bf16 %v778, %v775
  %v1096 = vpack.c.bf16 %v786, %v783
  %v1097 = vpack.c.bf16 %v794, %v791
  %v1098 = vpack.c.bf16 %v802, %v799
  %v1099 = vpack.c.bf16 %v810, %v807
  %v1100 = vpack.c.bf16 %v818, %v815
  %v1101 = vpack.c.bf16 %v826, %v823
  %v1102 = vpack.c.bf16 %v834, %v831
  %v1116 = vunpack.c.l.b16 %v1090
  %v1117 = vunpack.c.h.b16 %v1090
  %v1118 = vunpack.c.l.b16 %v1091
  %v1119 = vunpack.c.h.b16 %v1091
  %v1120 = vunpack.c.l.b16 %v1092
  %v1121 = vunpack.c.h.b16 %v1092
  %v1122 = vunpack.c.l.b16 %v1093
  %v1123 = vunpack.c.h.b16 %v1093
  %v1124 = vunpack.c.l.b16 %v1094
  %v1125 = vunpack.c.h.b16 %v1094
  %v1126 = vunpack.c.l.b16 %v1095
  %v1127 = vunpack.c.h.b16 %v1095
  %v1128 = vunpack.c.l.b16 %v1096
  %v1129 = vunpack.c.h.b16 %v1096
  %v1130 = vunpack.c.l.b16 %v1097
  %v1131 = vunpack.c.h.b16 %v1097
  %v1132 = vunpack.c.l.b16 %v1098
  %v1133 = vunpack.c.h.b16 %v1098
  %v1134 = vunpack.c.l.b16 %v1099
  %v1135 = vunpack.c.h.b16 %v1099
  %v1136 = vunpack.c.l.b16 %v1100
  %v1137 = vunpack.c.h.b16 %v1100
  %v1138 = vunpack.c.l.b16 %v1101
  %v1139 = vunpack.c.h.b16 %v1101
  %v1140 = vunpack.c.l.b16 %v1102
  %v1141 = vunpack.c.h.b16 %v1102
  %v1142 = vpack.c.b16 %v1116, %v1116
  %v1143 = vpack.c.b16 %v1117, %v1117
  %v1144 = vpack.c.b16 %v1118, %v1118
  %v1145 = vpack.c.b16 %v1119, %v1119
  %v1146 = vpack.c.b16 %v1120, %v1120
  %v1147 = vpack.c.b16 %v1121, %v1121
  %v1148 = vpack.c.b16 %v1122, %v1122
  %v1149 = vpack.c.b16 %v1123, %v1123
  %v1150 = vpack.c.b16 %v1124, %v1124
  %v1151 = vpack.c.b16 %v1125, %v1125
  %v1152 = vpack.c.b16 %v1126, %v1126
  %v1153 = vpack.c.b16 %v1127, %v1127
  %v1154 = vpack.c.b16 %v1128, %v1128
  %v1155 = vpack.c.b16 %v1129, %v1129
  %v1156 = vpack.c.b16 %v1130, %v1130
  %v1157 = vpack.c.b16 %v1131, %v1131
  %v1158 = vpack.c.b16 %v1132, %v1132
  %v1159 = vpack.c.b16 %v1133, %v1133
  %v1160 = vpack.c.b16 %v1134, %v1134
  %v1161 = vpack.c.b16 %v1135, %v1135
  %v1162 = vpack.c.b16 %v1136, %v1136
  %v1163 = vpack.c.b16 %v1137, %v1137
  %v1164 = vpack.c.b16 %v1138, %v1138
  %v1165 = vpack.c.b16 %v1139, %v1139
  %v1166 = vpack.c.b16 %v1140, %v1140
  %v1167 = vpack.c.b16 %v1141, %v1141
  %s1194 = sshra.s32 %s864, 3
  %s1195 = sand.u32 %s864, 7
  %s1196 = smul.addr %s1194, 4
  %s1197 = scalar_lea.vmem %s4, %s1196
  %1198 = vst [vmem:[%s1197] sm:$0xf] %v1142
  %1199 = vst [vmem:[%s1197 + $0x4] sm:$0xf] %v1143
  %1200 = vst [vmem:[%s1197 + $0x8] sm:$0xf] %v1144
  %1201 = vst [vmem:[%s1197 + $0xc] sm:$0xf] %v1145
  %1202 = vst [vmem:[%s1197 + $0x10] sm:$0xf] %v1146
  %1203 = vst [vmem:[%s1197 + $0x14] sm:$0xf] %v1147
  %1204 = vst [vmem:[%s1197 + $0x18] sm:$0xf] %v1148
  %1205 = vst [vmem:[%s1197 + $0x1c] sm:$0xf] %v1149
  %1206 = vst [vmem:[%s1197 + $0x20] sm:$0xf] %v1150
  %1207 = vst [vmem:[%s1197 + $0x24] sm:$0xf] %v1151
  %1208 = vst [vmem:[%s1197 + $0x28] sm:$0xf] %v1152
  %1209 = vst [vmem:[%s1197 + $0x2c] sm:$0xf] %v1153
  %1210 = vst [vmem:[%s1197 + $0x30] sm:$0xf] %v1154
  %1211 = vst [vmem:[%s1197 + $0x34] sm:$0xf] %v1155
  %1212 = vst [vmem:[%s1197 + $0x38] sm:$0xf] %v1156
  %1213 = vst [vmem:[%s1197 + $0x3c] sm:$0xf] %v1157
  %1214 = vst [vmem:[%s1197 + $0x40] sm:$0xf] %v1158
  %1215 = vst [vmem:[%s1197 + $0x44] sm:$0xf] %v1159
  %1216 = vst [vmem:[%s1197 + $0x48] sm:$0xf] %v1160
  %1217 = vst [vmem:[%s1197 + $0x4c] sm:$0xf] %v1161
  %1218 = vst [vmem:[%s1197 + $0x50] sm:$0xf] %v1162
  %1219 = vst [vmem:[%s1197 + $0x54] sm:$0xf] %v1163
  %1220 = vst [vmem:[%s1197 + $0x58] sm:$0xf] %v1164
  %1221 = vst [vmem:[%s1197 + $0x5c] sm:$0xf] %v1165
  %1222 = vst [vmem:[%s1197 + $0x60] sm:$0xf] %v1166
  %1223 = vst [vmem:[%s1197 + $0x64] sm:$0xf] %v1167
  // Predicated region
  $region22: #{dqn_forward.4} parent=0 // pred_check
    %p1224 = pneg %p18
  $region23: #{dqn_forward.4} parent=0 // pred_check_branch
    %1226 = sbr.rel (%p1224) target = $region25
  $region24: #{dqn_forward.4} parent=0 // pred_region
    %v1227 = vld [vmem:[#allocation2] sm:$0x1]
    %v1228 = vmul.f32 %v1227, 0.005
    %v1229 = vld [vmem:[#allocation3] sm:$0x1]
    %v1230 = vmul.f32 %v1229, 0.005
    %v1231 = vmul.f32 %v1228, %v1228
    %v1232 = vsub.f32 %v1230, %v1231
    %v1233 = vmax.f32 %v1232, 0.0
    %v1234 = vadd.f32 %v1233, 1e-05
    %v1235 = vrsqrt.pop %v1234
    %v1236 = vld [vmem:[%s2] sm:$0x1]
    %v1237 = vmul.f32 %v1236, %v1235
    %v1238 = vld [vmem:[%s3] sm:$0x1]
    %v1239 = vmul.f32 %v1228, %v1237
    %v1240 = vsub.f32 %v1238, %v1239
    %v1241 = vld [vmem:[%s4] sm:$0xf]
    %v1242 = vld [vmem:[%s4 + $0x4] sm:$0xf]
    %v1243 = vld [vmem:[%s4 + $0x8] sm:$0xf]
    %v1244 = vld [vmem:[%s4 + $0xc] sm:$0xf]
    %v1245 = vld [vmem:[%s4 + $0x10] sm:$0xf]
    %v1246 = vld [vmem:[%s4 + $0x14] sm:$0xf]
    %v1247 = vld [vmem:[%s4 + $0x18] sm:$0xf]
    %v1248 = vld [vmem:[%s4 + $0x1c] sm:$0xf]
    %v1249 = vld [vmem:[%s4 + $0x20] sm:$0xf]
    %v1250 = vld [vmem:[%s4 + $0x24] sm:$0xf]
    %v1251 = vld [vmem:[%s4 + $0x28] sm:$0xf]
    %v1252 = vld [vmem:[%s4 + $0x2c] sm:$0xf]
    %v1253 = vld [vmem:[%s4 + $0x30] sm:$0xf]
    %v1254 = vld [vmem:[%s4 + $0x34] sm:$0xf]
    %v1255 = vld [vmem:[%s4 + $0x38] sm:$0xf]
    %v1256 = vld [vmem:[%s4 + $0x3c] sm:$0xf]
    %v1257 = vld [vmem:[%s4 + $0x40] sm:$0xf]
    %v1258 = vld [vmem:[%s4 + $0x44] sm:$0xf]
    %v1259 = vld [vmem:[%s4 + $0x48] sm:$0xf]
    %v1260 = vld [vmem:[%s4 + $0x4c] sm:$0xf]
    %v1261 = vld [vmem:[%s4 + $0x50] sm:$0xf]
    %v1262 = vld [vmem:[%s4 + $0x54] sm:$0xf]
    %v1263 = vld [vmem:[%s4 + $0x58] sm:$0xf]
    %v1264 = vld [vmem:[%s4 + $0x5c] sm:$0xf]
    %v1265 = vld [vmem:[%s4 + $0x60] sm:$0xf]
    %v1266 = vld [vmem:[%s4 + $0x64] sm:$0xf]
    %v1267 = vunpack.c.l.bf16 %v1241
    %v1268 = vunpack.c.l.bf16 %v1242
    %v1269 = vunpack.c.l.bf16 %v1243
    %v1270 = vunpack.c.l.bf16 %v1244
    %v1271 = vunpack.c.l.bf16 %v1245
    %v1272 = vunpack.c.l.bf16 %v1246
    %v1273 = vunpack.c.l.bf16 %v1247
    %v1274 = vunpack.c.l.bf16 %v1248
    %v1275 = vunpack.c.l.bf16 %v1249
    %v1276 = vunpack.c.l.bf16 %v1250
    %v1277 = vunpack.c.l.bf16 %v1251
    %v1278 = vunpack.c.l.bf16 %v1252
    %v1279 = vunpack.c.l.bf16 %v1253
    %v1280 = vunpack.c.l.bf16 %v1254
    %v1281 = vunpack.c.l.bf16 %v1255
    %v1282 = vunpack.c.l.bf16 %v1256
    %v1283 = vunpack.c.l.bf16 %v1257
    %v1284 = vunpack.c.l.bf16 %v1258
    %v1285 = vunpack.c.l.bf16 %v1259
    %v1286 = vunpack.c.l.bf16 %v1260
    %v1287 = vunpack.c.l.bf16 %v1261
    %v1288 = vunpack.c.l.bf16 %v1262
    %v1289 = vunpack.c.l.bf16 %v1263
    %v1290 = vunpack.c.l.bf16 %v1264
    %v1291 = vunpack.c.l.bf16 %v1265
    %v1292 = vunpack.c.l.bf16 %v1266
    %v1294 = vlaneseq
    %v1295 = vshrl.u32 %v1294, 7
    %v1296 = vsub.s32 0, %v1295
    %v1297 = vrot.slane %v1237, %v1296
    %v1299 = vmul.f32 %v1267, %v1297
    %v1300 = vmul.f32 %v1268, %v1297
    %v1301 = vmul.f32 %v1269, %v1297
    %v1302 = vmul.f32 %v1270, %v1297
    %v1303 = vmul.f32 %v1271, %v1297
    %v1304 = vmul.f32 %v1272, %v1297
    %v1305 = vmul.f32 %v1273, %v1297
    %v1306 = vmul.f32 %v1274, %v1297
    %v1307 = vmul.f32 %v1275, %v1297
    %v1308 = vmul.f32 %v1276, %v1297
    %v1309 = vmul.f32 %v1277, %v1297
    %v1310 = vmul.f32 %v1278, %v1297
    %v1311 = vmul.f32 %v1279, %v1297
    %v1312 = vmul.f32 %v1280, %v1297
    %v1313 = vmul.f32 %v1281, %v1297
    %v1314 = vmul.f32 %v1282, %v1297
    %v1315 = vmul.f32 %v1283, %v1297
    %v1316 = vmul.f32 %v1284, %v1297
    %v1317 = vmul.f32 %v1285, %v1297
    %v1318 = vmul.f32 %v1286, %v1297
    %v1319 = vmul.f32 %v1287, %v1297
    %v1320 = vmul.f32 %v1288, %v1297
    %v1321 = vmul.f32 %v1289, %v1297
    %v1322 = vmul.f32 %v1290, %v1297
    %v1323 = vmul.f32 %v1291, %v1297
    %v1324 = vmul.f32 %v1292, %v1297
    %v1326 = vlaneseq
    %v1327 = vshrl.u32 %v1326, 7
    %v1328 = vsub.s32 0, %v1327
    %v1329 = vrot.slane %v1240, %v1328
    %v1331 = vadd.f32 %v1299, %v1329
    %v1332 = vadd.f32 %v1300, %v1329
    %v1333 = vadd.f32 %v1301, %v1329
    %v1334 = vadd.f32 %v1302, %v1329
    %v1335 = vadd.f32 %v1303, %v1329
    %v1336 = vadd.f32 %v1304, %v1329
    %v1337 = vadd.f32 %v1305, %v1329
    %v1338 = vadd.f32 %v1306, %v1329
    %v1339 = vadd.f32 %v1307, %v1329
    %v1340 = vadd.f32 %v1308, %v1329
    %v1341 = vadd.f32 %v1309, %v1329
    %v1342 = vadd.f32 %v1310, %v1329
    %v1343 = vadd.f32 %v1311, %v1329
    %v1344 = vadd.f32 %v1312, %v1329
    %v1345 = vadd.f32 %v1313, %v1329
    %v1346 = vadd.f32 %v1314, %v1329
    %v1347 = vadd.f32 %v1315, %v1329
    %v1348 = vadd.f32 %v1316, %v1329
    %v1349 = vadd.f32 %v1317, %v1329
    %v1350 = vadd.f32 %v1318, %v1329
    %v1351 = vadd.f32 %v1319, %v1329
    %v1352 = vadd.f32 %v1320, %v1329
    %v1353 = vadd.f32 %v1321, %v1329
    %v1354 = vadd.f32 %v1322, %v1329
    %v1355 = vadd.f32 %v1323, %v1329
    %v1356 = vadd.f32 %v1324, %v1329
    %v1357 = vpack.c.bf16 %v1332, %v1331
    %v1358 = vpack.c.bf16 %v1334, %v1333
    %v1359 = vpack.c.bf16 %v1336, %v1335
    %v1360 = vpack.c.bf16 %v1338, %v1337
    %v1361 = vpack.c.bf16 %v1340, %v1339
    %v1362 = vpack.c.bf16 %v1342, %v1341
    %v1363 = vpack.c.bf16 %v1344, %v1343
    %v1364 = vpack.c.bf16 %v1346, %v1345
    %v1365 = vpack.c.bf16 %v1348, %v1347
    %v1366 = vpack.c.bf16 %v1350, %v1349
    %v1367 = vpack.c.bf16 %v1352, %v1351
    %v1368 = vpack.c.bf16 %v1354, %v1353
    %v1369 = vpack.c.bf16 %v1356, %v1355
    %v1383 = vunpack.c.l.b16 %v1357
    %v1384 = vunpack.c.h.b16 %v1357
    %v1385 = vunpack.c.l.b16 %v1358
    %v1386 = vunpack.c.h.b16 %v1358
    %v1387 = vunpack.c.l.b16 %v1359
    %v1388 = vunpack.c.h.b16 %v1359
    %v1389 = vunpack.c.l.b16 %v1360
    %v1390 = vunpack.c.h.b16 %v1360
    %v1391 = vunpack.c.l.b16 %v1361
    %v1392 = vunpack.c.h.b16 %v1361
    %v1393 = vunpack.c.l.b16 %v1362
    %v1394 = vunpack.c.h.b16 %v1362
    %v1395 = vunpack.c.l.b16 %v1363
    %v1396 = vunpack.c.h.b16 %v1363
    %v1397 = vunpack.c.l.b16 %v1364
    %v1398 = vunpack.c.h.b16 %v1364
    %v1399 = vunpack.c.l.b16 %v1365
    %v1400 = vunpack.c.h.b16 %v1365
    %v1401 = vunpack.c.l.b16 %v1366
    %v1402 = vunpack.c.h.b16 %v1366
    %v1403 = vunpack.c.l.b16 %v1367
    %v1404 = vunpack.c.h.b16 %v1367
    %v1405 = vunpack.c.l.b16 %v1368
    %v1406 = vunpack.c.h.b16 %v1368
    %v1407 = vunpack.c.l.b16 %v1369
    %v1408 = vunpack.c.h.b16 %v1369
    %v1409 = vpack.c.b16 %v1383, %v1383
    %v1410 = vpack.c.b16 %v1384, %v1384
    %v1411 = vpack.c.b16 %v1385, %v1385
    %v1412 = vpack.c.b16 %v1386, %v1386
    %v1413 = vpack.c.b16 %v1387, %v1387
    %v1414 = vpack.c.b16 %v1388, %v1388
    %v1415 = vpack.c.b16 %v1389, %v1389
    %v1416 = vpack.c.b16 %v1390, %v1390
    %v1417 = vpack.c.b16 %v1391, %v1391
    %v1418 = vpack.c.b16 %v1392, %v1392
    %v1419 = vpack.c.b16 %v1393, %v1393
    %v1420 = vpack.c.b16 %v1394, %v1394
    %v1421 = vpack.c.b16 %v1395, %v1395
    %v1422 = vpack.c.b16 %v1396, %v1396
    %v1423 = vpack.c.b16 %v1397, %v1397
    %v1424 = vpack.c.b16 %v1398, %v1398
    %v1425 = vpack.c.b16 %v1399, %v1399
    %v1426 = vpack.c.b16 %v1400, %v1400
    %v1427 = vpack.c.b16 %v1401, %v1401
    %v1428 = vpack.c.b16 %v1402, %v1402
    %v1429 = vpack.c.b16 %v1403, %v1403
    %v1430 = vpack.c.b16 %v1404, %v1404
    %v1431 = vpack.c.b16 %v1405, %v1405
    %v1432 = vpack.c.b16 %v1406, %v1406
    %v1433 = vpack.c.b16 %v1407, %v1407
    %v1434 = vpack.c.b16 %v1408, %v1408
    %1461 = vst [vmem:[%s4] sm:$0xf] %v1409
    %1462 = vst [vmem:[%s4 + $0x4] sm:$0xf] %v1410
    %1463 = vst [vmem:[%s4 + $0x8] sm:$0xf] %v1411
    %1464 = vst [vmem:[%s4 + $0xc] sm:$0xf] %v1412
    %1465 = vst [vmem:[%s4 + $0x10] sm:$0xf] %v1413
    %1466 = vst [vmem:[%s4 + $0x14] sm:$0xf] %v1414
    %1467 = vst [vmem:[%s4 + $0x18] sm:$0xf] %v1415
    %1468 = vst [vmem:[%s4 + $0x1c] sm:$0xf] %v1416
    %1469 = vst [vmem:[%s4 + $0x20] sm:$0xf] %v1417
    %1470 = vst [vmem:[%s4 + $0x24] sm:$0xf] %v1418
    %1471 = vst [vmem:[%s4 + $0x28] sm:$0xf] %v1419
    %1472 = vst [vmem:[%s4 + $0x2c] sm:$0xf] %v1420
    %1473 = vst [vmem:[%s4 + $0x30] sm:$0xf] %v1421
    %1474 = vst [vmem:[%s4 + $0x34] sm:$0xf] %v1422
    %1475 = vst [vmem:[%s4 + $0x38] sm:$0xf] %v1423
    %1476 = vst [vmem:[%s4 + $0x3c] sm:$0xf] %v1424
    %1477 = vst [vmem:[%s4 + $0x40] sm:$0xf] %v1425
    %1478 = vst [vmem:[%s4 + $0x44] sm:$0xf] %v1426
    %1479 = vst [vmem:[%s4 + $0x48] sm:$0xf] %v1427
    %1480 = vst [vmem:[%s4 + $0x4c] sm:$0xf] %v1428
    %1481 = vst [vmem:[%s4 + $0x50] sm:$0xf] %v1429
    %1482 = vst [vmem:[%s4 + $0x54] sm:$0xf] %v1430
    %1483 = vst [vmem:[%s4 + $0x58] sm:$0xf] %v1431
    %1484 = vst [vmem:[%s4 + $0x5c] sm:$0xf] %v1432
    %1485 = vst [vmem:[%s4 + $0x60] sm:$0xf] %v1433
    %1486 = vst [vmem:[%s4 + $0x64] sm:$0xf] %v1434
  $region25: #{dqn_forward.4} parent=0 // pred_fallthru
    _
  // Predicated region
  $region26: #{dqn_forward.4} parent=0 // pred_check
    _
  $region27: #{dqn_forward.4} parent=0 // pred_check_branch
    %1488 = sbr.rel (0) target = $region29
  $region28: #{dqn_forward.4} parent=0 // pred_region
    _
  $region29: #{dqn_forward.4} parent=0 // pred_fallthru
    _
  // Predicated region
  $region30: #{dqn_forward.4} parent=0 // pred_check
    _
  $region31: #{dqn_forward.4} parent=0 // pred_check_branch
    %1490 = sbr.rel (0) target = $region33
  $region32: #{dqn_forward.4} parent=0 // pred_region
    _
  $region33: #{dqn_forward.4} parent=0 // pred_fallthru
    _

// kernel: dqn_forward.5
$region0: #{dqn_forward.5}
  #allocation0 [shape = 'u32[]', space=smem, size = 0x4, offset = 0x4, fixed_abs, tag = 'smem constant byte address 0x4 - core index']
  #allocation1 [shape = 'u32[144,128]{1,0:T(1,128)}', space=vmem, size = 0x12000, scoped, tag = 'internal scratch']
  #allocation2 [shape = 'bf16[16,128]{1,0:T(8,128)(2,1)}', space=vmem, size = 0x1000, scoped, tag = 'scratch operand']
  #allocation3 [shape = 'f32[1,128]{1,0:T(1,128)}', space=vmem, size = 0x200, scoped, tag = 'scratch operand']
  #allocation4 [shape = 'f32[1,128]{1,0:T(1,128)}', space=vmem, size = 0x200, scoped, tag = 'scratch operand']
  %s0 = inlined_call_operand.vmem [shape: bf16[8,800], index: 0, kind: input, shape index: {}]
  %s1 = inlined_call_operand.vmem [shape: bf16[800,128], index: 1, kind: input, shape index: {}]
  %s2 = inlined_call_operand.vmem [shape: f32[1,128], index: 2, kind: input, shape index: {}]
  %s3 = inlined_call_operand.vmem [shape: f32[1,128], index: 3, kind: input, shape index: {}]
  %s4 = inlined_call_operand.vmem [shape: bf16[128,128], index: 4, kind: input, shape index: {}]
  %s5 = inlined_call_operand.vmem [shape: f32[1,128], index: 5, kind: input, shape index: {}]
  %s6 = inlined_call_operand.vmem [shape: f32[16,128], index: 6, kind: output, shape index: {}]
  %s7 = sld [smem:[#allocation0]]
  $region42: #{dqn_forward.5} parent=0
    _
  %s9 = ssub.s32 1, %s7
  %s10 = scalar_select 0, %s9, %s7
  // Predicated region
  $region2: #{dqn_forward.5} parent=0 // pred_check
    _
  $region3: #{dqn_forward.5} parent=0 // pred_check_branch
    %12 = sbr.rel (0) target = $region5
  $region4: #{dqn_forward.5} parent=0 // pred_region
    _
  $region5: #{dqn_forward.5} parent=0 // pred_fallthru
    _
  // Predicated region
  $region6: #{dqn_forward.5} parent=0 // pred_check
    _
  $region7: #{dqn_forward.5} parent=0 // pred_check_branch
    %14 = sbr.rel (0) target = $region9
  $region8: #{dqn_forward.5} parent=0 // pred_region
    _
  $region9: #{dqn_forward.5} parent=0 // pred_fallthru
    _
  // Predicated region
  $region10: #{dqn_forward.5} parent=0 // pred_check
    _
  $region11: #{dqn_forward.5} parent=0 // pred_check_branch
    %16 = sbr.rel (0) target = $region13
  $region12: #{dqn_forward.5} parent=0 // pred_region
    _
  $region13: #{dqn_forward.5} parent=0 // pred_fallthru
    _
  // Predicated region
  $region14: #{dqn_forward.5} parent=0 // pred_check
    _
  $region15: #{dqn_forward.5} parent=0 // pred_check_branch
    %18 = sbr.rel (0) target = $region17
  $region16: #{dqn_forward.5} parent=0 // pred_region
    _
  $region17: #{dqn_forward.5} parent=0 // pred_fallthru
    _
  // Predicated region
  $region18: #{dqn_forward.5} parent=0 // pred_check
    _
  $region19: #{dqn_forward.5} parent=0 // pred_check_branch
    %20 = sbr.rel (0) target = $region21
  $region20: #{dqn_forward.5} parent=0 // pred_region
    _
  $region21: #{dqn_forward.5} parent=0 // pred_fallthru
    _
  // Predicated region
  $region22: #{dqn_forward.5} parent=0 // pred_check
    _
  $region23: #{dqn_forward.5} parent=0 // pred_check_branch
    %22 = sbr.rel (0) target = $region25
  $region24: #{dqn_forward.5} parent=0 // pred_region
    _
  $region25: #{dqn_forward.5} parent=0 // pred_fallthru
    _
  %p24 = scmp.eq.s32.totalorder 0, 0
  // Predicated region
  $region26: #{dqn_forward.5} parent=0 // pred_check
    %p25 = pneg %p24
  $region27: #{dqn_forward.5} parent=0 // pred_check_branch
    %27 = sbr.rel (%p25) target = $region29
  $region28: #{dqn_forward.5} parent=0 // pred_region
    %28 = vst [vmem:[#allocation3] sm:$0x1] 0.0
    %29 = vst [vmem:[#allocation4] sm:$0x1] 0.0
  $region29: #{dqn_forward.5} parent=0 // pred_fallthru
    _
  %v30 = vld [vmem:[%s0] sm:$0xff]
  %v31 = vld [vmem:[%s0 + $0x8] sm:$0xff]
  %v32 = vld [vmem:[%s0 + $0x10] sm:$0xff]
  %v33 = vld [vmem:[%s0 + $0x18] sm:$0xf]
  %v34 = vld [vmem:[%s0 + $0x1c] sm:$0xff]
  %v35 = vld [vmem:[%s0 + $0x24] sm:$0xff]
  %v36 = vld [vmem:[%s0 + $0x2c] sm:$0xff]
  %v37 = vld [vmem:[%s0 + $0x34] sm:$0xf]
  %v38 = vld [vmem:[%s1] sm:$0xf]
  %v39 = vld [vmem:[%s1 + $0x4] sm:$0xf]
  %v40 = vld [vmem:[%s1 + $0x8] sm:$0xf]
  %v41 = vld [vmem:[%s1 + $0xc] sm:$0xf]
  %v42 = vld [vmem:[%s1 + $0x10] sm:$0xf]
  %v43 = vld [vmem:[%s1 + $0x14] sm:$0xf]
  %v44 = vld [vmem:[%s1 + $0x18] sm:$0xf]
  %v45 = vld [vmem:[%s1 + $0x1c] sm:$0xf]
  %v46 = vld [vmem:[%s1 + $0x20] sm:$0xf]
  %v47 = vld [vmem:[%s1 + $0x24] sm:$0xf]
  %v48 = vld [vmem:[%s1 + $0x28] sm:$0xf]
  %v49 = vld [vmem:[%s1 + $0x2c] sm:$0xf]
  %v50 = vld [vmem:[%s1 + $0x30] sm:$0xf]
  %v51 = vld [vmem:[%s1 + $0x34] sm:$0xf]
  %v52 = vld [vmem:[%s1 + $0x38] sm:$0xf]
  %v53 = vld [vmem:[%s1 + $0x3c] sm:$0xf]
  %v54 = vld [vmem:[%s1 + $0x40] sm:$0xf]
  %v55 = vld [vmem:[%s1 + $0x44] sm:$0xf]
  %v56 = vld [vmem:[%s1 + $0x48] sm:$0xf]
  %v57 = vld [vmem:[%s1 + $0x4c] sm:$0xf]
  %v58 = vld [vmem:[%s1 + $0x50] sm:$0xf]
  %v59 = vld [vmem:[%s1 + $0x54] sm:$0xf]
  %v60 = vld [vmem:[%s1 + $0x58] sm:$0xf]
  %v61 = vld [vmem:[%s1 + $0x5c] sm:$0xf]
  %v62 = vld [vmem:[%s1 + $0x60] sm:$0xf]
  %v63 = vld [vmem:[%s1 + $0x64] sm:$0xf]
  %v64 = vld [vmem:[%s1 + $0x68] sm:$0xf]
  %v65 = vld [vmem:[%s1 + $0x6c] sm:$0xf]
  %v66 = vld [vmem:[%s1 + $0x70] sm:$0xf]
  %v67 = vld [vmem:[%s1 + $0x74] sm:$0xf]
  %v68 = vld [vmem:[%s1 + $0x78] sm:$0xf]
  %v69 = vld [vmem:[%s1 + $0x7c] sm:$0xf]
  %v70 = vld [vmem:[%s1 + $0x80] sm:$0xf]
  %v71 = vld [vmem:[%s1 + $0x84] sm:$0xf]
  %v72 = vld [vmem:[%s1 + $0x88] sm:$0xf]
  %v73 = vld [vmem:[%s1 + $0x8c] sm:$0xf]
  %v74 = vld [vmem:[%s1 + $0x90] sm:$0xf]
  %v75 = vld [vmem:[%s1 + $0x94] sm:$0xf]
  %v76 = vld [vmem:[%s1 + $0x98] sm:$0xf]
  %v77 = vld [vmem:[%s1 + $0x9c] sm:$0xf]
  %v78 = vld [vmem:[%s1 + $0xa0] sm:$0xf]
  %v79 = vld [vmem:[%s1 + $0xa4] sm:$0xf]
  %v80 = vld [vmem:[%s1 + $0xa8] sm:$0xf]
  %v81 = vld [vmem:[%s1 + $0xac] sm:$0xf]
  %v82 = vld [vmem:[%s1 + $0xb0] sm:$0xf]
  %v83 = vld [vmem:[%s1 + $0xb4] sm:$0xf]
  %v84 = vld [vmem:[%s1 + $0xb8] sm:$0xf]
  %v85 = vld [vmem:[%s1 + $0xbc] sm:$0xf]
  %v86 = vld [vmem:[%s1 + $0xc0] sm:$0xf]
  %v87 = vld [vmem:[%s1 + $0xc4] sm:$0xf]
  %v88 = vld [vmem:[%s1 + $0xc8] sm:$0xf]
  %v89 = vld [vmem:[%s1 + $0xcc] sm:$0xf]
  %v90 = vld [vmem:[%s1 + $0xd0] sm:$0xf]
  %v91 = vld [vmem:[%s1 + $0xd4] sm:$0xf]
  %v92 = vld [vmem:[%s1 + $0xd8] sm:$0xf]
  %v93 = vld [vmem:[%s1 + $0xdc] sm:$0xf]
  %v94 = vld [vmem:[%s1 + $0xe0] sm:$0xf]
  %v95 = vld [vmem:[%s1 + $0xe4] sm:$0xf]
  %v96 = vld [vmem:[%s1 + $0xe8] sm:$0xf]
  %v97 = vld [vmem:[%s1 + $0xec] sm:$0xf]
  %v98 = vld [vmem:[%s1 + $0xf0] sm:$0xf]
  %v99 = vld [vmem:[%s1 + $0xf4] sm:$0xf]
  %v100 = vld [vmem:[%s1 + $0xf8] sm:$0xf]
  %v101 = vld [vmem:[%s1 + $0xfc] sm:$0xf]
  %v102 = vld [vmem:[%s1 + $0x100] sm:$0xf]
  %v103 = vld [vmem:[%s1 + $0x104] sm:$0xf]
  %v104 = vld [vmem:[%s1 + $0x108] sm:$0xf]
  %v105 = vld [vmem:[%s1 + $0x10c] sm:$0xf]
  %v106 = vld [vmem:[%s1 + $0x110] sm:$0xf]
  %v107 = vld [vmem:[%s1 + $0x114] sm:$0xf]
  %v108 = vld [vmem:[%s1 + $0x118] sm:$0xf]
  %v109 = vld [vmem:[%s1 + $0x11c] sm:$0xf]
  %v110 = vld [vmem:[%s1 + $0x120] sm:$0xf]
  %v111 = vld [vmem:[%s1 + $0x124] sm:$0xf]
  %v112 = vld [vmem:[%s1 + $0x128] sm:$0xf]
  %v113 = vld [vmem:[%s1 + $0x12c] sm:$0xf]
  %v114 = vld [vmem:[%s1 + $0x130] sm:$0xf]
  %v115 = vld [vmem:[%s1 + $0x134] sm:$0xf]
  %v116 = vld [vmem:[%s1 + $0x138] sm:$0xf]
  %v117 = vld [vmem:[%s1 + $0x13c] sm:$0xf]
  %v118 = vld [vmem:[%s1 + $0x140] sm:$0xf]
  %v119 = vld [vmem:[%s1 + $0x144] sm:$0xf]
  %v120 = vld [vmem:[%s1 + $0x148] sm:$0xf]
  %v121 = vld [vmem:[%s1 + $0x14c] sm:$0xf]
  %v122 = vld [vmem:[%s1 + $0x150] sm:$0xf]
  %v123 = vld [vmem:[%s1 + $0x154] sm:$0xf]
  %v124 = vld [vmem:[%s1 + $0x158] sm:$0xf]
  %v125 = vld [vmem:[%s1 + $0x15c] sm:$0xf]
  %v126 = vld [vmem:[%s1 + $0x160] sm:$0xf]
  %v127 = vld [vmem:[%s1 + $0x164] sm:$0xf]
  %v128 = vld [vmem:[%s1 + $0x168] sm:$0xf]
  %v129 = vld [vmem:[%s1 + $0x16c] sm:$0xf]
  %v130 = vld [vmem:[%s1 + $0x170] sm:$0xf]
  %v131 = vld [vmem:[%s1 + $0x174] sm:$0xf]
  %v132 = vld [vmem:[%s1 + $0x178] sm:$0xf]
  %v133 = vld [vmem:[%s1 + $0x17c] sm:$0xf]
  %v134 = vld [vmem:[%s1 + $0x180] sm:$0xf]
  %v135 = vld [vmem:[%s1 + $0x184] sm:$0xf]
  %v136 = vld [vmem:[%s1 + $0x188] sm:$0xf]
  %v137 = vld [vmem:[%s1 + $0x18c] sm:$0xf]
  %v146 = vunpack.c.l.b16 %v30
  %v147 = vunpack.c.h.b16 %v30
  %v148 = vunpack.c.l.b16 %v31
  %v149 = vunpack.c.h.b16 %v31
  %v150 = vunpack.c.l.b16 %v32
  %v151 = vunpack.c.h.b16 %v32
  %v152 = vunpack.c.l.b16 %v33
  %v153 = vunpack.c.l.b16 %v34
  %v154 = vunpack.c.h.b16 %v34
  %v155 = vunpack.c.l.b16 %v35
  %v156 = vunpack.c.h.b16 %v35
  %v157 = vunpack.c.l.b16 %v36
  %v158 = vunpack.c.h.b16 %v36
  %v159 = vunpack.c.l.b16 %v37
  %v160 = vpack.c.b16 %v153, %v146
  %v161 = vpack.c.b16 %v154, %v147
  %v162 = vpack.c.b16 %v155, %v148
  %v163 = vpack.c.b16 %v156, %v149
  %v164 = vpack.c.b16 %v157, %v150
  %v165 = vpack.c.b16 %v158, %v151
  %v166 = vpack.c.b16 %v159, %v152
  %v273 = vunpack.c.l.b16 %v38
  %v274 = vunpack.c.l.b16 %v39
  %v275 = vunpack.c.l.b16 %v40
  %v276 = vunpack.c.l.b16 %v41
  %v277 = vunpack.c.l.b16 %v42
  %v278 = vunpack.c.l.b16 %v43
  %v279 = vunpack.c.l.b16 %v44
  %v280 = vunpack.c.l.b16 %v45
  %v281 = vunpack.c.l.b16 %v46
  %v282 = vunpack.c.l.b16 %v47
  %v283 = vunpack.c.l.b16 %v48
  %v284 = vunpack.c.l.b16 %v49
  %v285 = vunpack.c.l.b16 %v50
  %v286 = vunpack.c.l.b16 %v51
  %v287 = vunpack.c.l.b16 %v52
  %v288 = vunpack.c.l.b16 %v53
  %v289 = vunpack.c.l.b16 %v54
  %v290 = vunpack.c.l.b16 %v55
  %v291 = vunpack.c.l.b16 %v56
  %v292 = vunpack.c.l.b16 %v57
  %v293 = vunpack.c.l.b16 %v58
  %v294 = vunpack.c.l.b16 %v59
  %v295 = vunpack.c.l.b16 %v60
  %v296 = vunpack.c.l.b16 %v61
  %v297 = vunpack.c.l.b16 %v62
  %v298 = vunpack.c.l.b16 %v63
  %v299 = vunpack.c.l.b16 %v64
  %v300 = vunpack.c.l.b16 %v65
  %v301 = vunpack.c.l.b16 %v66
  %v302 = vunpack.c.l.b16 %v67
  %v303 = vunpack.c.l.b16 %v68
  %v304 = vunpack.c.l.b16 %v69
  %v305 = vunpack.c.l.b16 %v70
  %v306 = vunpack.c.l.b16 %v71
  %v307 = vunpack.c.l.b16 %v72
  %v308 = vunpack.c.l.b16 %v73
  %v309 = vunpack.c.l.b16 %v74
  %v310 = vunpack.c.l.b16 %v75
  %v311 = vunpack.c.l.b16 %v76
  %v312 = vunpack.c.l.b16 %v77
  %v313 = vunpack.c.l.b16 %v78
  %v314 = vunpack.c.l.b16 %v79
  %v315 = vunpack.c.l.b16 %v80
  %v316 = vunpack.c.l.b16 %v81
  %v317 = vunpack.c.l.b16 %v82
  %v318 = vunpack.c.l.b16 %v83
  %v319 = vunpack.c.l.b16 %v84
  %v320 = vunpack.c.l.b16 %v85
  %v321 = vunpack.c.l.b16 %v86
  %v322 = vunpack.c.l.b16 %v87
  %v323 = vunpack.c.l.b16 %v88
  %v324 = vunpack.c.l.b16 %v89
  %v325 = vunpack.c.l.b16 %v90
  %v326 = vunpack.c.l.b16 %v91
  %v327 = vunpack.c.l.b16 %v92
  %v328 = vunpack.c.l.b16 %v93
  %v329 = vunpack.c.l.b16 %v94
  %v330 = vunpack.c.l.b16 %v95
  %v331 = vunpack.c.l.b16 %v96
  %v332 = vunpack.c.l.b16 %v97
  %v333 = vunpack.c.l.b16 %v98
  %v334 = vunpack.c.l.b16 %v99
  %v335 = vunpack.c.l.b16 %v100
  %v336 = vunpack.c.l.b16 %v101
  %v337 = vunpack.c.l.b16 %v102
  %v338 = vunpack.c.l.b16 %v103
  %v339 = vunpack.c.l.b16 %v104
  %v340 = vunpack.c.l.b16 %v105
  %v341 = vunpack.c.l.b16 %v106
  %v342 = vunpack.c.l.b16 %v107
  %v343 = vunpack.c.l.b16 %v108
  %v344 = vunpack.c.l.b16 %v109
  %v345 = vunpack.c.l.b16 %v110
  %v346 = vunpack.c.l.b16 %v111
  %v347 = vunpack.c.l.b16 %v112
  %v348 = vunpack.c.l.b16 %v113
  %v349 = vunpack.c.l.b16 %v114
  %v350 = vunpack.c.l.b16 %v115
  %v351 = vunpack.c.l.b16 %v116
  %v352 = vunpack.c.l.b16 %v117
  %v353 = vunpack.c.l.b16 %v118
  %v354 = vunpack.c.l.b16 %v119
  %v355 = vunpack.c.l.b16 %v120
  %v356 = vunpack.c.l.b16 %v121
  %v357 = vunpack.c.l.b16 %v122
  %v358 = vunpack.c.l.b16 %v123
  %v359 = vunpack.c.l.b16 %v124
  %v360 = vunpack.c.l.b16 %v125
  %v361 = vunpack.c.l.b16 %v126
  %v362 = vunpack.c.l.b16 %v127
  %v363 = vunpack.c.l.b16 %v128
  %v364 = vunpack.c.l.b16 %v129
  %v365 = vunpack.c.l.b16 %v130
  %v366 = vunpack.c.l.b16 %v131
  %v367 = vunpack.c.l.b16 %v132
  %v368 = vunpack.c.l.b16 %v133
  %v369 = vunpack.c.l.b16 %v134
  %v370 = vunpack.c.l.b16 %v135
  %v371 = vunpack.c.l.b16 %v136
  %v372 = vunpack.c.l.b16 %v137
  %v373 = vpack.c.b16 %v274, %v273
  %v374 = vpack.c.b16 %v276, %v275
  %v375 = vpack.c.b16 %v278, %v277
  %v376 = vpack.c.b16 %v280, %v279
  %v377 = vpack.c.b16 %v282, %v281
  %v378 = vpack.c.b16 %v284, %v283
  %v379 = vpack.c.b16 %v286, %v285
  %v380 = vpack.c.b16 %v288, %v287
  %v381 = vpack.c.b16 %v290, %v289
  %v382 = vpack.c.b16 %v292, %v291
  %v383 = vpack.c.b16 %v294, %v293
  %v384 = vpack.c.b16 %v296, %v295
  %v385 = vpack.c.b16 %v298, %v297
  %v386 = vpack.c.b16 %v300, %v299
  %v387 = vpack.c.b16 %v302, %v301
  %v388 = vpack.c.b16 %v304, %v303
  %v389 = vpack.c.b16 %v306, %v305
  %v390 = vpack.c.b16 %v308, %v307
  %v391 = vpack.c.b16 %v310, %v309
  %v392 = vpack.c.b16 %v312, %v311
  %v393 = vpack.c.b16 %v314, %v313
  %v394 = vpack.c.b16 %v316, %v315
  %v395 = vpack.c.b16 %v318, %v317
  %v396 = vpack.c.b16 %v320, %v319
  %v397 = vpack.c.b16 %v322, %v321
  %v398 = vpack.c.b16 %v324, %v323
  %v399 = vpack.c.b16 %v326, %v325
  %v400 = vpack.c.b16 %v328, %v327
  %v401 = vpack.c.b16 %v330, %v329
  %v402 = vpack.c.b16 %v332, %v331
  %v403 = vpack.c.b16 %v334, %v333
  %v404 = vpack.c.b16 %v336, %v335
  %v405 = vpack.c.b16 %v338, %v337
  %v406 = vpack.c.b16 %v340, %v339
  %v407 = vpack.c.b16 %v342, %v341
  %v408 = vpack.c.b16 %v344, %v343
  %v409 = vpack.c.b16 %v346, %v345
  %v410 = vpack.c.b16 %v348, %v347
  %v411 = vpack.c.b16 %v350, %v349
  %v412 = vpack.c.b16 %v352, %v351
  %v413 = vpack.c.b16 %v354, %v353
  %v414 = vpack.c.b16 %v356, %v355
  %v415 = vpack.c.b16 %v358, %v357
  %v416 = vpack.c.b16 %v360, %v359
  %v417 = vpack.c.b16 %v362, %v361
  %v418 = vpack.c.b16 %v364, %v363
  %v419 = vpack.c.b16 %v366, %v365
  %v420 = vpack.c.b16 %v368, %v367
  %v421 = vpack.c.b16 %v370, %v369
  %v422 = vpack.c.b16 %v372, %v371
  %vm473 = vcmask 261120
  %v475 = vsel %vm473, %v166, 0
  %477 = vmatprep.subr.bf16.mxu0 0
  %478 = vmatpush1.bf16.msra.mxu0 %v380
  %479 = vmatprep.subr.bf16.mxu0 0
  %480 = vmatpush1.bf16.msra.mxu0 %v379
  %481 = vmatprep.subr.bf16.mxu0 0
  %482 = vmatpush1.bf16.msra.mxu0 %v378
  %483 = vmatprep.subr.bf16.mxu0 0
  %484 = vmatpush1.bf16.msra.mxu0 %v377
  %485 = vmatprep.subr.bf16.mxu0 0
  %486 = vmatpush1.bf16.msra.mxu0 %v376
  %487 = vmatprep.subr.bf16.mxu0 0
  %488 = vmatpush1.bf16.msra.mxu0 %v375
  %489 = vmatprep.subr.bf16.mxu0 0
  %490 = vmatpush1.bf16.msra.mxu0 %v374
  %491 = vmatprep.subr.bf16.mxu0 0
  %492 = vmatpush1.bf16.msra.mxu0 %v373
  %493 = vmatprep.subr.bf16.mxu0 0
  %494 = vmatpush2.bf16.msra.mxu0 %v388
  %495 = vmatprep.subr.bf16.mxu0 0
  %496 = vmatpush2.bf16.msra.mxu0 %v387
  %497 = vmatprep.subr.bf16.mxu0 0
  %498 = vmatpush2.bf16.msra.mxu0 %v386
  %499 = vmatprep.subr.bf16.mxu0 0
  %500 = vmatpush2.bf16.msra.mxu0 %v385
  %501 = vmatprep.subr.bf16.mxu0 0
  %502 = vmatpush2.bf16.msra.mxu0 %v384
  %503 = vmatprep.subr.bf16.mxu0 0
  %504 = vmatpush2.bf16.msra.mxu0 %v383
  %505 = vmatprep.subr.bf16.mxu0 0
  %506 = vmatpush2.bf16.msra.mxu0 %v382
  %507 = vmatprep.subr.bf16.mxu0 0
  %508 = vmatpush2.bf16.msra.mxu0 %v381
  %509 = vmatprep.mubr.bf16.mxu0 %v161
  %510 = vmatmul.mubr.bf16.gmra.mxu0 %v160
  %v511 = vpop.f32.mrf.mxu0
  %v512 = vadd.f32 0.0, %v511
  %v513 = vpop.f32.mrf.mxu0
  %v514 = vpop.f32.mrf.mxu0
  %v515 = vadd.f32 0.0, %v514
  %v516 = vpop.f32.mrf.mxu0
  %517 = vdwg.mxu0
  %518 = vmatprep.subr.bf16.mxu0 0
  %519 = vmatpush1.bf16.msra.mxu0 %v396
  %520 = vmatprep.subr.bf16.mxu0 0
  %521 = vmatpush1.bf16.msra.mxu0 %v395
  %522 = vmatprep.subr.bf16.mxu0 0
  %523 = vmatpush1.bf16.msra.mxu0 %v394
  %524 = vmatprep.subr.bf16.mxu0 0
  %525 = vmatpush1.bf16.msra.mxu0 %v393
  %526 = vmatprep.subr.bf16.mxu0 0
  %527 = vmatpush1.bf16.msra.mxu0 %v392
  %528 = vmatprep.subr.bf16.mxu0 0
  %529 = vmatpush1.bf16.msra.mxu0 %v391
  %530 = vmatprep.subr.bf16.mxu0 0
  %531 = vmatpush1.bf16.msra.mxu0 %v390
  %532 = vmatprep.subr.bf16.mxu0 0
  %533 = vmatpush1.bf16.msra.mxu0 %v389
  %534 = vmatprep.subr.bf16.mxu0 0
  %535 = vmatpush2.bf16.msra.mxu0 %v404
  %536 = vmatprep.subr.bf16.mxu0 0
  %537 = vmatpush2.bf16.msra.mxu0 %v403
  %538 = vmatprep.subr.bf16.mxu0 0
  %539 = vmatpush2.bf16.msra.mxu0 %v402
  %540 = vmatprep.subr.bf16.mxu0 0
  %541 = vmatpush2.bf16.msra.mxu0 %v401
  %542 = vmatprep.subr.bf16.mxu0 0
  %543 = vmatpush2.bf16.msra.mxu0 %v400
  %544 = vmatprep.subr.bf16.mxu0 0
  %545 = vmatpush2.bf16.msra.mxu0 %v399
  %546 = vmatprep.subr.bf16.mxu0 0
  %547 = vmatpush2.bf16.msra.mxu0 %v398
  %548 = vmatprep.subr.bf16.mxu0 0
  %549 = vmatpush2.bf16.msra.mxu0 %v397
  %550 = vmatprep.mubr.bf16.mxu0 %v163
  %551 = vmatmul.mubr.bf16.gmra.mxu0 %v162
  %v552 = vpop.f32.mrf.mxu0
  %v553 = vadd.f32 %v512, %v552
  %v554 = vpop.f32.mrf.mxu0
  %v555 = vpop.f32.mrf.mxu0
  %v556 = vadd.f32 %v515, %v555
  %v557 = vpop.f32.mrf.mxu0
  %558 = vdwg.mxu0
  %559 = vmatprep.subr.bf16.mxu0 0
  %560 = vmatpush1.bf16.msra.mxu0 %v412
  %561 = vmatprep.subr.bf16.mxu0 0
  %562 = vmatpush1.bf16.msra.mxu0 %v411
  %563 = vmatprep.subr.bf16.mxu0 0
  %564 = vmatpush1.bf16.msra.mxu0 %v410
  %565 = vmatprep.subr.bf16.mxu0 0
  %566 = vmatpush1.bf16.msra.mxu0 %v409
  %567 = vmatprep.subr.bf16.mxu0 0
  %568 = vmatpush1.bf16.msra.mxu0 %v408
  %569 = vmatprep.subr.bf16.mxu0 0
  %570 = vmatpush1.bf16.msra.mxu0 %v407
  %571 = vmatprep.subr.bf16.mxu0 0
  %572 = vmatpush1.bf16.msra.mxu0 %v406
  %573 = vmatprep.subr.bf16.mxu0 0
  %574 = vmatpush1.bf16.msra.mxu0 %v405
  %575 = vmatprep.subr.bf16.mxu0 0
  %576 = vmatpush2.bf16.msra.mxu0 %v420
  %577 = vmatprep.subr.bf16.mxu0 0
  %578 = vmatpush2.bf16.msra.mxu0 %v419
  %579 = vmatprep.subr.bf16.mxu0 0
  %580 = vmatpush2.bf16.msra.mxu0 %v418
  %581 = vmatprep.subr.bf16.mxu0 0
  %582 = vmatpush2.bf16.msra.mxu0 %v417
  %583 = vmatprep.subr.bf16.mxu0 0
  %584 = vmatpush2.bf16.msra.mxu0 %v416
  %585 = vmatprep.subr.bf16.mxu0 0
  %586 = vmatpush2.bf16.msra.mxu0 %v415
  %587 = vmatprep.subr.bf16.mxu0 0
  %588 = vmatpush2.bf16.msra.mxu0 %v414
  %589 = vmatprep.subr.bf16.mxu0 0
  %590 = vmatpush2.bf16.msra.mxu0 %v413
  %591 = vmatprep.mubr.bf16.mxu0 %v165
  %592 = vmatmul.mubr.bf16.gmra.mxu0 %v164
  %v593 = vpop.f32.mrf.mxu0
  %v594 = vadd.f32 %v553, %v593
  %v595 = vpop.f32.mrf.mxu0
  %v596 = vpop.f32.mrf.mxu0
  %v597 = vadd.f32 %v556, %v596
  %v598 = vpop.f32.mrf.mxu0
  %599 = vdwg.mxu0
  %600 = vmatprep.subr.bf16.mxu0 0
  %601 = vmatpush1.bf16.msra.mxu0 0
  %602 = vmatprep.subr.bf16.mxu0 0
  %603 = vmatpush1.bf16.msra.mxu0 0
  %604 = vmatprep.subr.bf16.mxu0 0
  %605 = vmatpush1.bf16.msra.mxu0 0
  %606 = vmatprep.subr.bf16.mxu0 0
  %607 = vmatpush1.bf16.msra.mxu0 0
  %608 = vmatprep.subr.bf16.mxu0 0
  %609 = vmatpush1.bf16.msra.mxu0 0
  %610 = vmatprep.subr.bf16.mxu0 0
  %611 = vmatpush1.bf16.msra.mxu0 0
  %612 = vmatprep.subr.bf16.mxu0 0
  %613 = vmatpush1.bf16.msra.mxu0 %v422
  %614 = vmatprep.subr.bf16.mxu0 0
  %615 = vmatpush1.bf16.msra.mxu0 %v421
  %616 = vmatprep.subr.bf16.mxu0 0
  %617 = vmatpush2.bf16.msra.mxu0 0
  %618 = vmatprep.subr.bf16.mxu0 0
  %619 = vmatpush2.bf16.msra.mxu0 0
  %620 = vmatprep.subr.bf16.mxu0 0
  %621 = vmatpush2.bf16.msra.mxu0 0
  %622 = vmatprep.subr.bf16.mxu0 0
  %623 = vmatpush2.bf16.msra.mxu0 0
  %624 = vmatprep.subr.bf16.mxu0 0
  %625 = vmatpush2.bf16.msra.mxu0 0
  %626 = vmatprep.subr.bf16.mxu0 0
  %627 = vmatpush2.bf16.msra.mxu0 0
  %628 = vmatprep.subr.bf16.mxu0 0
  %629 = vmatpush2.bf16.msra.mxu0 0
  %630 = vmatprep.subr.bf16.mxu0 0
  %631 = vmatpush2.bf16.msra.mxu0 0
  %632 = vmatprep.mubr.bf16.mxu0 0
  %633 = vmatmul.mubr.bf16.gmra.mxu0 %v475
  %v634 = vpop.f32.mrf.mxu0
  %v635 = vadd.f32 %v594, %v634
  %v636 = vpop.f32.mrf.mxu0
  %v637 = vpop.f32.mrf.mxu0
  %v638 = vadd.f32 %v597, %v637
  %v639 = vpop.f32.mrf.mxu0
  %640 = vdwg.mxu0
  %v641 = vlaneseq
  %v642 = vshrl.u32 %v641, 7
  %v643 = vadd.s32 %v642, 8
  %s644 = smul.u32 0, 16
  %v645 = vstv %s644
  %v646 = vadd.s32 %v642, %v645
  %v647 = vadd.s32 %v643, %v645
  %vm648 = vcmp.lt.s32.totalorder %v646, 8
  %vm649 = vcmp.lt.s32.totalorder %v647, 8
  %v650 = vsel %vm648, 1, 0
  %v651 = vsel %vm649, 1, 0
  %vm652 = vcmp.eq.s32.totalorder %v650, 1
  %vm653 = vcmp.eq.s32.totalorder %v651, 1
  %v654 = vsel %vm652, %v635, 0.0
  %v655 = vsel %vm653, %v638, 0.0
  %v656 = vld [vmem:[#allocation3] sm:$0x1]
  %v657 = vadd.f32 %v654, %v655
  %v658 = vrot.slane %v657, 4
  %v659 = vadd.f32 %v657, %v658
  %v660 = vrot.slane %v659, 2
  %v661 = vadd.f32 %v659, %v660
  %v662 = vrot.slane %v661, 1
  %v663 = vadd.f32 %v661, %v662
  %v664 = vadd.f32 %v656, %v663
  %665 = vst [vmem:[#allocation3] sm:$0x1] %v664
  %v666 = vld [vmem:[#allocation4] sm:$0x1]
  %v667 = vmul.f32 %v654, %v654
  %v668 = vmul.f32 %v655, %v655
  %v669 = vadd.f32 %v667, %v668
  %v670 = vrot.slane %v669, 4
  %v671 = vadd.f32 %v669, %v670
  %v672 = vrot.slane %v671, 2
  %v673 = vadd.f32 %v671, %v672
  %v674 = vrot.slane %v673, 1
  %v675 = vadd.f32 %v673, %v674
  %v676 = vadd.f32 %v666, %v675
  %677 = vst [vmem:[#allocation4] sm:$0x1] %v676
  %v678 = vpack.c.bf16 %v638, %v635
  %v680 = vunpack.c.l.b16 %v678
  %v681 = vunpack.c.h.b16 %v678
  %v682 = vpack.c.b16 %v680, %v680
  %v683 = vpack.c.b16 %v681, %v681
  %s686 = sshra.s32 %s644, 3
  %s687 = sand.u32 %s644, 7
  %s688 = smul.addr %s686, 4
  %s689 = scalar_lea.vmem [#allocation2], %s688
  %690 = vst [vmem:[%s689] sm:$0xf] %v682
  %691 = vst [vmem:[%s689 + $0x4] sm:$0xf] %v683
  // Predicated region
  $region30: #{dqn_forward.5} parent=0 // pred_check
    %p692 = pneg %p24
  $region31: #{dqn_forward.5} parent=0 // pred_check_branch
    %694 = sbr.rel (%p692) target = $region33
  $region32: #{dqn_forward.5} parent=0 // pred_region
    %v695 = vld [vmem:[#allocation3] sm:$0x1]
    %v696 = vmul.f32 %v695, 0.125
    %v697 = vld [vmem:[#allocation4] sm:$0x1]
    %v698 = vmul.f32 %v697, 0.125
    %v699 = vmul.f32 %v696, %v696
    %v700 = vsub.f32 %v698, %v699
    %v701 = vmax.f32 %v700, 0.0
    %v702 = vadd.f32 %v701, 1e-05
    %v703 = vrsqrt.pop %v702
    %v704 = vld [vmem:[%s2] sm:$0x1]
    %v705 = vmul.f32 %v704, %v703
    %v706 = vld [vmem:[%s3] sm:$0x1]
    %v707 = vmul.f32 %v696, %v705
    %v708 = vsub.f32 %v706, %v707
    %v709 = vld [vmem:[#allocation2] sm:$0xf]
    %v710 = vld [vmem:[#allocation2 + $0x4] sm:$0xf]
    %v711 = vunpack.c.l.bf16 %v709
    %v712 = vunpack.c.l.bf16 %v710
    %v714 = vlaneseq
    %v715 = vshrl.u32 %v714, 7
    %v716 = vsub.s32 0, %v715
    %v717 = vrot.slane %v705, %v716
    %v719 = vmul.f32 %v711, %v717
    %v720 = vmul.f32 %v712, %v717
    %v722 = vlaneseq
    %v723 = vshrl.u32 %v722, 7
    %v724 = vsub.s32 0, %v723
    %v725 = vrot.slane %v708, %v724
    %v727 = vadd.f32 %v719, %v725
    %v728 = vadd.f32 %v720, %v725
    %v729 = vpack.c.bf16 %v728, %v727
    %v730 = vld [vmem:[%s4] sm:$0xf]
    %v731 = vld [vmem:[%s4 + $0x4] sm:$0xf]
    %v732 = vld [vmem:[%s4 + $0x8] sm:$0xf]
    %v733 = vld [vmem:[%s4 + $0xc] sm:$0xf]
    %v734 = vld [vmem:[%s4 + $0x10] sm:$0xf]
    %v735 = vld [vmem:[%s4 + $0x14] sm:$0xf]
    %v736 = vld [vmem:[%s4 + $0x18] sm:$0xf]
    %v737 = vld [vmem:[%s4 + $0x1c] sm:$0xf]
    %v738 = vld [vmem:[%s4 + $0x20] sm:$0xf]
    %v739 = vld [vmem:[%s4 + $0x24] sm:$0xf]
    %v740 = vld [vmem:[%s4 + $0x28] sm:$0xf]
    %v741 = vld [vmem:[%s4 + $0x2c] sm:$0xf]
    %v742 = vld [vmem:[%s4 + $0x30] sm:$0xf]
    %v743 = vld [vmem:[%s4 + $0x34] sm:$0xf]
    %v744 = vld [vmem:[%s4 + $0x38] sm:$0xf]
    %v745 = vld [vmem:[%s4 + $0x3c] sm:$0xf]
    %v746 = vld [vmem:[%s5] sm:$0x1]
    %v748 = vlaneseq
    %v749 = vshrl.u32 %v748, 7
    %v750 = vsub.s32 0, %v749
    %v751 = vrot.slane %v746, %v750
    %v769 = vunpack.c.l.b16 %v730
    %v770 = vunpack.c.l.b16 %v731
    %v771 = vunpack.c.l.b16 %v732
    %v772 = vunpack.c.l.b16 %v733
    %v773 = vunpack.c.l.b16 %v734
    %v774 = vunpack.c.l.b16 %v735
    %v775 = vunpack.c.l.b16 %v736
    %v776 = vunpack.c.l.b16 %v737
    %v777 = vunpack.c.l.b16 %v738
    %v778 = vunpack.c.l.b16 %v739
    %v779 = vunpack.c.l.b16 %v740
    %v780 = vunpack.c.l.b16 %v741
    %v781 = vunpack.c.l.b16 %v742
    %v782 = vunpack.c.l.b16 %v743
    %v783 = vunpack.c.l.b16 %v744
    %v784 = vunpack.c.l.b16 %v745
    %v785 = vpack.c.b16 %v770, %v769
    %v786 = vpack.c.b16 %v772, %v771
    %v787 = vpack.c.b16 %v774, %v773
    %v788 = vpack.c.b16 %v776, %v775
    %v789 = vpack.c.b16 %v778, %v777
    %v790 = vpack.c.b16 %v780, %v779
    %v791 = vpack.c.b16 %v782, %v781
    %v792 = vpack.c.b16 %v784, %v783
    %801 = vmatprep.subr.bf16.mxu0 0
    %802 = vmatpush1.bf16.msra.mxu0 %v792
    %803 = vmatprep.subr.bf16.mxu0 0
    %804 = vmatpush1.bf16.msra.mxu0 %v791
    %805 = vmatprep.subr.bf16.mxu0 0
    %806 = vmatpush1.bf16.msra.mxu0 %v790
    %807 = vmatprep.subr.bf16.mxu0 0
    %808 = vmatpush1.bf16.msra.mxu0 %v789
    %809 = vmatprep.subr.bf16.mxu0 0
    %810 = vmatpush1.bf16.msra.mxu0 %v788
    %811 = vmatprep.subr.bf16.mxu0 0
    %812 = vmatpush1.bf16.msra.mxu0 %v787
    %813 = vmatprep.subr.bf16.mxu0 0
    %814 = vmatpush1.bf16.msra.mxu0 %v786
    %815 = vmatprep.subr.bf16.mxu0 0
    %816 = vmatpush1.bf16.msra.mxu0 %v785
    %817 = vmatprep.subr.bf16.mxu0 0
    %818 = vmatpush2.bf16.msra.mxu0 0
    %819 = vmatprep.subr.bf16.mxu0 0
    %820 = vmatpush2.bf16.msra.mxu0 0
    %821 = vmatprep.subr.bf16.mxu0 0
    %822 = vmatpush2.bf16.msra.mxu0 0
    %823 = vmatprep.subr.bf16.mxu0 0
    %824 = vmatpush2.bf16.msra.mxu0 0
    %825 = vmatprep.subr.bf16.mxu0 0
    %826 = vmatpush2.bf16.msra.mxu0 0
    %827 = vmatprep.subr.bf16.mxu0 0
    %828 = vmatpush2.bf16.msra.mxu0 0
    %829 = vmatprep.subr.bf16.mxu0 0
    %830 = vmatpush2.bf16.msra.mxu0 0
    %831 = vmatprep.subr.bf16.mxu0 0
    %832 = vmatpush2.bf16.msra.mxu0 0
    %833 = vmatprep.mubr.bf16.mxu0 0
    %834 = vmatmul.mubr.bf16.gmra.mxu0 %v729
    %v835 = vpop.f32.mrf.mxu0
    %v836 = vadd.f32 %v751, %v835
    %v837 = vpop.f32.mrf.mxu0
    %v838 = vpop.f32.mrf.mxu0
    %v839 = vadd.f32 %v751, %v838
    %v840 = vpop.f32.mrf.mxu0
    %841 = vdwg.mxu0
    %842 = vst [vmem:[%s6] sm:$0xff] %v836
    %843 = vst [vmem:[%s6 + $0x8] sm:$0xff] %v839
  $region33: #{dqn_forward.5} parent=0 // pred_fallthru
    _
  // Predicated region
  $region34: #{dqn_forward.5} parent=0 // pred_check
    _
  $region35: #{dqn_forward.5} parent=0 // pred_check_branch
    %845 = sbr.rel (0) target = $region37
  $region36: #{dqn_forward.5} parent=0 // pred_region
    _
  $region37: #{dqn_forward.5} parent=0 // pred_fallthru
    _
  // Predicated region
  $region38: #{dqn_forward.5} parent=0 // pred_check
    _
  $region39: #{dqn_forward.5} parent=0 // pred_check_branch
    %847 = sbr.rel (0) target = $region41
  $region40: #{dqn_forward.5} parent=0 // pred_region
    _
  $region41: #{dqn_forward.5} parent=0 // pred_fallthru
    _

</llo_original>
